<compile_context>
chip_gen: v5e
topology: v5e:2x2
jax: 0.10.0
libtpu: 0.0.40
codegen_flags: <defaults>
</compile_context>

<pallas_src>
import functools

import jax
import jax.numpy as jnp
from jax.experimental import pallas as pl
from jax.experimental.pallas import tpu as pltpu


def _round_up(x, m):
    return (x + m - 1) // m * m


# --------------------------------------------------------------------------- #
# Fused BasicBlock Pallas kernel (one batch image per grid step)
# --------------------------------------------------------------------------- #
def _basic_block_kernel(x_ref, w1_ref, b1_ref, w2_ref, b2_ref, *rest,
                        stride, ho, wo, downsample):
    """Refs:
      x_ref : (H+2, W+2, Cinp)    bf16  spatially zero-padded, channel-padded input
      w1_ref: (9, Cinp, Coutp)    bf16  conv1 weights, BN1 scale folded in
      b1_ref: (1, Coutp)          f32   BN1 bias
      w2_ref: (9, Coutp, Coutp)   bf16  conv2 weights, BN2 scale folded in
      b2_ref: (1, Coutp)          f32   BN2 bias
      [wsc_ref (Cinp, Coutp) bf16, bsc_ref (1, Coutp) f32]  if projection shortcut
      o_ref : (Ho, Wo, Coutp)     f32   output block
      h1_ref: (Ho+2, Wo+2, Coutp) bf16  VMEM scratch: zero-halo conv1 activation
    """
    if downsample:
        wsc_ref, bsc_ref, o_ref, h1_ref = rest
    else:
        o_ref, h1_ref = rest

    cinp = x_ref.shape[-1]
    coutp = w1_ref.shape[-1]
    m = ho * wo

    def window(ref, dh, dw, s):
        if s == 1:
            return ref[dh:dh + ho, dw:dw + wo, :]
        return ref[pl.ds(dh, ho, s), pl.ds(dw, wo, s), :]

    # ---- conv1 (3x3, stride) + BN1 + ReLU : 9 shifted MXU matmuls ----------- #
    acc1 = jnp.zeros((m, coutp), jnp.float32)
    for dh in range(3):
        for dw in range(3):
            win = window(x_ref, dh, dw, stride).reshape(m, cinp)
            acc1 += jnp.dot(win, w1_ref[dh * 3 + dw],
                            preferred_element_type=jnp.float32)
    out1 = jnp.maximum(acc1 + b1_ref[...], 0.0)

    # Stage conv1 output into a zero-halo VMEM scratch for the second conv.
    # (Borders stay zero -> conv2's implicit padding; whole-scratch zeroing is
    #  cheap and keeps correctness under megacore grid sharding.)
    h1_ref[...] = jnp.zeros_like(h1_ref)
    h1_ref[1:ho + 1, 1:wo + 1, :] = out1.reshape(ho, wo, coutp).astype(h1_ref.dtype)

    # ---- conv2 (3x3, stride 1) + BN2 ---------------------------------------- #
    acc2 = jnp.zeros((m, coutp), jnp.float32)
    for dh in range(3):
        for dw in range(3):
            win = h1_ref[dh:dh + ho, dw:dw + wo, :].reshape(m, coutp)
            acc2 += jnp.dot(win, w2_ref[dh * 3 + dw],
                            preferred_element_type=jnp.float32)
    y = acc2 + b2_ref[...]

    # ---- shortcut (fused: identity or 1x1 conv + BN) ------------------------ #
    xs = window(x_ref, 1, 1, stride).reshape(m, cinp)   # strided original input
    if downsample:
        sc = jnp.dot(xs, wsc_ref[...], preferred_element_type=jnp.float32)
        sc = sc + bsc_ref[...]
    else:
        sc = xs.astype(jnp.float32)

    # ---- residual add + ReLU, lane-dense store ------------------------------ #
    out = jnp.maximum(y + sc, 0.0)
    o_ref[...] = out.reshape(ho, wo, coutp).astype(o_ref.dtype)


# --------------------------------------------------------------------------- #
# Parameter preparation (plain JAX, done once per call)
# --------------------------------------------------------------------------- #
def fold_bn(gamma, beta, running_mean, running_var, eps=1e-5):
    scale = gamma / jnp.sqrt(running_var + eps)
    bias = beta - running_mean * scale
    return scale, bias


def _prep_w3x3(w_oihw, scale, cinp, coutp):
    """PyTorch (Cout, Cin, 3, 3) -> (9, Cinp, Coutp) bf16, BN scale folded in."""
    cout, cin = w_oihw.shape[0], w_oihw.shape[1]
    w = jnp.transpose(w_oihw, (2, 3, 1, 0)) * scale          # (3, 3, Cin, Cout)
    w = jnp.pad(w, ((0, 0), (0, 0), (0, cinp - cin), (0, coutp - cout)))
    return w.reshape(9, cinp, coutp).astype(jnp.bfloat16)


def _prep_w1x1(w_oihw, scale, cinp, coutp):
    """PyTorch (Cout, Cin, 1, 1) -> (Cinp, Coutp) bf16, BN scale folded in."""
    cout, cin = w_oihw.shape[0], w_oihw.shape[1]
    w = w_oihw.reshape(cout, cin).T * scale                   # (Cin, Cout)
    w = jnp.pad(w, ((0, cinp - cin), (0, coutp - cout)))
    return w.astype(jnp.bfloat16)


def _prep_bias(bias, coutp):
    return jnp.pad(bias, (0, coutp - bias.shape[0])).reshape(1, coutp).astype(jnp.float32)


# --------------------------------------------------------------------------- #
# BasicBlock forward (NCHW in / NCHW out, mirrors the PyTorch module)
# --------------------------------------------------------------------------- #
@functools.partial(jax.jit, static_argnames=("stride",))
def basic_block_forward(x_nchw, params, stride):
    x = jnp.transpose(x_nchw, (0, 2, 3, 1)).astype(jnp.float32)   # NCHW -> NHWC
    n, h, w, cin = x.shape
    planes = params["conv1_w"].shape[0]
    ho = (h + 2 - 3) // stride + 1
    wo = (w + 2 - 3) // stride + 1
    cinp = _round_up(cin, 128)        # lane-dense channels
    coutp = _round_up(planes, 128)
    downsample = (stride != 1) or (cin != planes)
    if not downsample:
        assert cinp == coutp

    # Spatial halo (+1 each side) and channel zero-padding; bf16 for the MXU.
    xpad = jnp.pad(x, ((0, 0), (1, 1), (1, 1), (0, cinp - cin))).astype(jnp.bfloat16)

    s1, b1 = fold_bn(*params["bn1"])
    s2, b2 = fold_bn(*params["bn2"])
    w1 = _prep_w3x3(params["conv1_w"], s1, cinp, coutp)
    w2 = _prep_w3x3(params["conv2_w"], s2, coutp, coutp)
    b1p = _prep_bias(b1, coutp)
    b2p = _prep_bias(b2, coutp)

    args = [xpad, w1, b1p, w2, b2p]
    in_specs = [
        pl.BlockSpec((None, h + 2, w + 2, cinp), lambda i: (i, 0, 0, 0)),
        pl.BlockSpec((9, cinp, coutp), lambda i: (0, 0, 0)),
        pl.BlockSpec((1, coutp), lambda i: (0, 0)),
        pl.BlockSpec((9, coutp, coutp), lambda i: (0, 0, 0)),
        pl.BlockSpec((1, coutp), lambda i: (0, 0)),
    ]
    if downsample:
        ssc, bsc = fold_bn(*params["sc_bn"])
        wsc = _prep_w1x1(params["sc_conv_w"], ssc, cinp, coutp)
        bscp = _prep_bias(bsc, coutp)
        args += [wsc, bscp]
        in_specs += [
            pl.BlockSpec((cinp, coutp), lambda i: (0, 0)),
            pl.BlockSpec((1, coutp), lambda i: (0, 0)),
        ]

    m = ho * wo
    # VMEM budget: double-buffered in/out blocks, resident weights, halo
    # scratch, f32 live values, plus slack.  Capped below v7x's 64 MiB/TC.
    x_blk = (h + 2) * (w + 2) * cinp * 2
    out_blk = ho * wo * coutp * 4
    w_bytes = sum(int(a.size) * a.dtype.itemsize for a in args[1:])
    h1_bytes = (ho + 2) * (wo + 2) * coutp * 2
    est = 2 * (x_blk + out_blk) + 2 * w_bytes + h1_bytes + 8 * m * coutp * 4 + (4 << 20)
    vmem_limit = int(min(56 << 20, max(16 << 20, est)))

    flops = 2 * m * 9 * cinp * coutp + 2 * m * 9 * coutp * coutp
    if downsample:
        flops += 2 * m * cinp * coutp
    cost = pl.CostEstimate(flops=n * flops, transcendentals=0,
                           bytes_accessed=int(xpad.size) * 2 + w_bytes + n * out_blk)

    kernel = functools.partial(_basic_block_kernel, stride=stride, ho=ho, wo=wo,
                               downsample=downsample)
    out = pl.pallas_call(
        kernel,
        out_shape=jax.ShapeDtypeStruct((n, ho, wo, coutp), jnp.float32),
        grid_spec=pltpu.PrefetchScalarGridSpec(
            num_scalar_prefetch=0,
            grid=(n,),
            in_specs=in_specs,
            out_specs=pl.BlockSpec((None, ho, wo, coutp), lambda i: (i, 0, 0, 0)),
            scratch_shapes=[pltpu.VMEM((ho + 2, wo + 2, coutp), jnp.bfloat16)],
        ),
        compiler_params=pltpu.CompilerParams(
            dimension_semantics=("parallel",),
            vmem_limit_bytes=vmem_limit,
        ),
        cost_estimate=cost,
    )(*args)

    out = out[..., :planes]                      # strip channel padding
    return jnp.transpose(out, (0, 3, 1, 2))      # NHWC -> NCHW


# --------------------------------------------------------------------------- #
# Plain-JAX f32 reference (correctness check)
# --------------------------------------------------------------------------- #
def _ref_conv3x3(x_nhwc, w_oihw, stride):
    w = jnp.transpose(w_oihw, (2, 3, 1, 0))  # HWIO
    return jax.lax.conv_general_dilated(
        x_nhwc, w, window_strides=(stride, stride), padding=((1, 1), (1, 1)),
        dimension_numbers=("NHWC", "HWIO", "NHWC"))


def _ref_forward(x_nchw, params, stride):
    x = jnp.transpose(x_nchw, (0, 2, 3, 1)).astype(jnp.float32)
    s1, b1 = fold_bn(*params["bn1"])
    o = jnp.maximum(_ref_conv3x3(x, params["conv1_w"], stride) * s1 + b1, 0.0)
    s2, b2 = fold_bn(*params["bn2"])
    o = _ref_conv3x3(o, params["conv2_w"], 1) * s2 + b2
    planes = params["conv1_w"].shape[0]
    if stride != 1 or x.shape[-1] != planes:
        wsc = jnp.transpose(params["sc_conv_w"], (2, 3, 1, 0))
        sc = jax.lax.conv_general_dilated(
            x, wsc, (stride, stride), "VALID",
            dimension_numbers=("NHWC", "HWIO", "NHWC"))
        ssc, bsc = fold_bn(*params["sc_bn"])
        sc = sc * ssc + bsc
    else:
        sc = x
    o = jnp.maximum(o + sc, 0.0)
    return jnp.transpose(o, (0, 3, 1, 2))


# --------------------------------------------------------------------------- #
# Main
# --------------------------------------------------------------------------- #
if __name__ == "__main__":
    key = jax.random.PRNGKey(0)

    def bn_params(k, c):
        k1, k2, k3, k4 = jax.random.split(k, 4)
        return (1.0 + 0.1 * jax.random.normal(k1, (c,), jnp.float32),   # gamma
                0.1 * jax.random.normal(k2, (c,), jnp.float32),         # beta
                0.05 * jax.random.normal(k3, (c,), jnp.float32),        # running_mean
                1.0 + 0.1 * jax.random.uniform(k4, (c,), jnp.float32))  # running_var

    def make_params(k, in_planes, planes, need_sc):
        ks = jax.random.split(k, 6)
        p = {
            "conv1_w": 0.1 * jax.random.normal(ks[0], (planes, in_planes, 3, 3), jnp.float32),
            "bn1": bn_params(ks[1], planes),
            "conv2_w": 0.1 * jax.random.normal(ks[2], (planes, planes, 3, 3), jnp.float32),
            "bn2": bn_params(ks[3], planes),
        }
        if need_sc:
            p["sc_conv_w"] = 0.1 * jax.random.normal(ks[4], (planes, in_planes, 1, 1), jnp.float32)
            p["sc_bn"] = bn_params(ks[5], planes)
        return p

    N, H, W = 2, 16, 16
    configs = [
        (4, 8, 1),   # in_planes != planes -> projection shortcut fused in-kernel
        (8, 8, 1),   # identity shortcut
    ]
    for idx, (in_planes, planes, stride) in enumerate(configs):
        kk = jax.random.fold_in(key, idx)
        k_p, k_x = jax.random.split(kk)
        need_sc = (stride != 1) or (in_planes != planes)
        params = make_params(k_p, in_planes, planes, need_sc)
        x = jax.random.normal(k_x, (N, in_planes, H, W), jnp.float32)

        out = jax.block_until_ready(basic_block_forward(x, params, stride=stride))
        ref = _ref_forward(x, params, stride)

        assert out.shape == (N, planes, H // stride, W // stride)
        # bf16 matmul inputs (f32 accumulation) -> loosened tolerance vs f32 reference.
        assert jnp.allclose(out, ref, atol=5e-2, rtol=5e-2), (
            f"mismatch vs JAX reference (config {idx}): "
            f"max abs err {float(jnp.max(jnp.abs(out - ref)))}")

    print("KERNEL_OK")
</pallas_src>

<mosaic_0001>
module attributes {stable_mosaic.version = 11 : i64} {
  func.func @_basic_block_kernel(%arg0: i32, %arg1: memref<1x18x18x128xbf16, #tpu.memory_space<vmem>>, %arg2: memref<9x128x128xbf16, #tpu.memory_space<vmem>>, %arg3: memref<1x128xf32, #tpu.memory_space<vmem>>, %arg4: memref<9x128x128xbf16, #tpu.memory_space<vmem>>, %arg5: memref<1x128xf32, #tpu.memory_space<vmem>>, %arg6: memref<128x128xbf16, #tpu.memory_space<vmem>>, %arg7: memref<1x128xf32, #tpu.memory_space<vmem>>, %arg8: memref<1x16x16x128xf32, #tpu.memory_space<vmem>>, %arg9: memref<18x18x128xbf16, #tpu.memory_space<vmem>>) attributes {dimension_semantics = [#tpu.dimension_semantics<parallel>], iteration_bounds = array<i64: 2>, scalar_prefetch = 0 : i64, scratch_operands = 1 : i64, tpu.core_type = #tpu.core_type<tc>, window_params = [{transform_indices = @transform_0, window_bounds = array<i64: 1, 18, 18, 128>}, {pipeline_mode = #tpu.pipeline_mode<synchronous>, transform_indices = @transform_1, window_bounds = array<i64: 9, 128, 128>}, {pipeline_mode = #tpu.pipeline_mode<synchronous>, transform_indices = @transform_2, window_bounds = array<i64: 1, 128>}, {pipeline_mode = #tpu.pipeline_mode<synchronous>, transform_indices = @transform_3, window_bounds = array<i64: 9, 128, 128>}, {pipeline_mode = #tpu.pipeline_mode<synchronous>, transform_indices = @transform_4, window_bounds = array<i64: 1, 128>}, {pipeline_mode = #tpu.pipeline_mode<synchronous>, transform_indices = @transform_5, window_bounds = array<i64: 128, 128>}, {pipeline_mode = #tpu.pipeline_mode<synchronous>, transform_indices = @transform_6, window_bounds = array<i64: 1, 128>}, {transform_indices = @transform_7, window_bounds = array<i64: 1, 16, 16, 128>}]} {
    %cst = arith.constant 0.000000e+00 : f32
    %0 = vector.broadcast %cst : f32 to vector<256x128xf32>
    %c0 = arith.constant 0 : index
    %c0_0 = arith.constant 0 : index
    %c0_1 = arith.constant 0 : index
    %c0_2 = arith.constant 0 : index
    %1 = vector.load %arg1[%c0, %c0_0, %c0_1, %c0_2] : memref<1x18x18x128xbf16, #tpu.memory_space<vmem>>, vector<1x16x16x128xbf16>
    %2 = vector.shape_cast %1 : vector<1x16x16x128xbf16> to vector<16x16x128xbf16>
    %3 = vector.shape_cast %2 : vector<16x16x128xbf16> to vector<256x128xbf16>
    %c0_3 = arith.constant 0 : index
    %c0_4 = arith.constant 0 : index
    %c0_5 = arith.constant 0 : index
    %4 = vector.load %arg2[%c0_3, %c0_4, %c0_5] : memref<9x128x128xbf16, #tpu.memory_space<vmem>>, vector<1x128x128xbf16>
    %5 = vector.shape_cast %4 : vector<1x128x128xbf16> to vector<128x128xbf16>
    %cst_6 = arith.constant dense<0.000000e+00> : vector<256x128xf32>
    %6 = tpu.matmul %3, %5, %cst_6 {dimension_numbers = #tpu.dot_dimension_numbers<[1], [0], [0], [1], [0, 0, 1, 1], [], []>} : vector<256x128xbf16>, vector<128x128xbf16>, vector<256x128xf32> -> vector<256x128xf32>
    %7 = arith.addf %0, %6 : vector<256x128xf32>
    %c0_7 = arith.constant 0 : index
    %c0_8 = arith.constant 0 : index
    %c1 = arith.constant 1 : index
    %c0_9 = arith.constant 0 : index
    %8 = vector.load %arg1[%c0_7, %c0_8, %c1, %c0_9] : memref<1x18x18x128xbf16, #tpu.memory_space<vmem>>, vector<1x16x16x128xbf16>
    %9 = vector.shape_cast %8 : vector<1x16x16x128xbf16> to vector<16x16x128xbf16>
    %10 = vector.shape_cast %9 : vector<16x16x128xbf16> to vector<256x128xbf16>
    %c1_10 = arith.constant 1 : index
    %c0_11 = arith.constant 0 : index
    %c0_12 = arith.constant 0 : index
    %11 = vector.load %arg2[%c1_10, %c0_11, %c0_12] : memref<9x128x128xbf16, #tpu.memory_space<vmem>>, vector<1x128x128xbf16>
    %12 = vector.shape_cast %11 : vector<1x128x128xbf16> to vector<128x128xbf16>
    %cst_13 = arith.constant dense<0.000000e+00> : vector<256x128xf32>
    %13 = tpu.matmul %10, %12, %cst_13 {dimension_numbers = #tpu.dot_dimension_numbers<[1], [0], [0], [1], [0, 0, 1, 1], [], []>} : vector<256x128xbf16>, vector<128x128xbf16>, vector<256x128xf32> -> vector<256x128xf32>
    %14 = arith.addf %7, %13 : vector<256x128xf32>
    %c0_14 = arith.constant 0 : index
    %c0_15 = arith.constant 0 : index
    %c2 = arith.constant 2 : index
    %c0_16 = arith.constant 0 : index
    %15 = vector.load %arg1[%c0_14, %c0_15, %c2, %c0_16] : memref<1x18x18x128xbf16, #tpu.memory_space<vmem>>, vector<1x16x16x128xbf16>
    %16 = vector.shape_cast %15 : vector<1x16x16x128xbf16> to vector<16x16x128xbf16>
    %17 = vector.shape_cast %16 : vector<16x16x128xbf16> to vector<256x128xbf16>
    %c2_17 = arith.constant 2 : index
    %c0_18 = arith.constant 0 : index
    %c0_19 = arith.constant 0 : index
    %18 = vector.load %arg2[%c2_17, %c0_18, %c0_19] : memref<9x128x128xbf16, #tpu.memory_space<vmem>>, vector<1x128x128xbf16>
    %19 = vector.shape_cast %18 : vector<1x128x128xbf16> to vector<128x128xbf16>
    %cst_20 = arith.constant dense<0.000000e+00> : vector<256x128xf32>
    %20 = tpu.matmul %17, %19, %cst_20 {dimension_numbers = #tpu.dot_dimension_numbers<[1], [0], [0], [1], [0, 0, 1, 1], [], []>} : vector<256x128xbf16>, vector<128x128xbf16>, vector<256x128xf32> -> vector<256x128xf32>
    %21 = arith.addf %14, %20 : vector<256x128xf32>
    %c0_21 = arith.constant 0 : index
    %c1_22 = arith.constant 1 : index
    %c0_23 = arith.constant 0 : index
    %c0_24 = arith.constant 0 : index
    %22 = vector.load %arg1[%c0_21, %c1_22, %c0_23, %c0_24] : memref<1x18x18x128xbf16, #tpu.memory_space<vmem>>, vector<1x16x16x128xbf16>
    %23 = vector.shape_cast %22 : vector<1x16x16x128xbf16> to vector<16x16x128xbf16>
    %24 = vector.shape_cast %23 : vector<16x16x128xbf16> to vector<256x128xbf16>
    %c3 = arith.constant 3 : index
    %c0_25 = arith.constant 0 : index
    %c0_26 = arith.constant 0 : index
    %25 = vector.load %arg2[%c3, %c0_25, %c0_26] : memref<9x128x128xbf16, #tpu.memory_space<vmem>>, vector<1x128x128xbf16>
    %26 = vector.shape_cast %25 : vector<1x128x128xbf16> to vector<128x128xbf16>
    %cst_27 = arith.constant dense<0.000000e+00> : vector<256x128xf32>
    %27 = tpu.matmul %24, %26, %cst_27 {dimension_numbers = #tpu.dot_dimension_numbers<[1], [0], [0], [1], [0, 0, 1, 1], [], []>} : vector<256x128xbf16>, vector<128x128xbf16>, vector<256x128xf32> -> vector<256x128xf32>
    %28 = arith.addf %21, %27 : vector<256x128xf32>
    %c0_28 = arith.constant 0 : index
    %c1_29 = arith.constant 1 : index
    %c1_30 = arith.constant 1 : index
    %c0_31 = arith.constant 0 : index
    %29 = vector.load %arg1[%c0_28, %c1_29, %c1_30, %c0_31] : memref<1x18x18x128xbf16, #tpu.memory_space<vmem>>, vector<1x16x16x128xbf16>
    %30 = vector.shape_cast %29 : vector<1x16x16x128xbf16> to vector<16x16x128xbf16>
    %31 = vector.shape_cast %30 : vector<16x16x128xbf16> to vector<256x128xbf16>
    %c4 = arith.constant 4 : index
    %c0_32 = arith.constant 0 : index
    %c0_33 = arith.constant 0 : index
    %32 = vector.load %arg2[%c4, %c0_32, %c0_33] : memref<9x128x128xbf16, #tpu.memory_space<vmem>>, vector<1x128x128xbf16>
    %33 = vector.shape_cast %32 : vector<1x128x128xbf16> to vector<128x128xbf16>
    %cst_34 = arith.constant dense<0.000000e+00> : vector<256x128xf32>
    %34 = tpu.matmul %31, %33, %cst_34 {dimension_numbers = #tpu.dot_dimension_numbers<[1], [0], [0], [1], [0, 0, 1, 1], [], []>} : vector<256x128xbf16>, vector<128x128xbf16>, vector<256x128xf32> -> vector<256x128xf32>
    %35 = arith.addf %28, %34 : vector<256x128xf32>
    %c0_35 = arith.constant 0 : index
    %c1_36 = arith.constant 1 : index
    %c2_37 = arith.constant 2 : index
    %c0_38 = arith.constant 0 : index
    %36 = vector.load %arg1[%c0_35, %c1_36, %c2_37, %c0_38] : memref<1x18x18x128xbf16, #tpu.memory_space<vmem>>, vector<1x16x16x128xbf16>
    %37 = vector.shape_cast %36 : vector<1x16x16x128xbf16> to vector<16x16x128xbf16>
    %38 = vector.shape_cast %37 : vector<16x16x128xbf16> to vector<256x128xbf16>
    %c5 = arith.constant 5 : index
    %c0_39 = arith.constant 0 : index
    %c0_40 = arith.constant 0 : index
    %39 = vector.load %arg2[%c5, %c0_39, %c0_40] : memref<9x128x128xbf16, #tpu.memory_space<vmem>>, vector<1x128x128xbf16>
    %40 = vector.shape_cast %39 : vector<1x128x128xbf16> to vector<128x128xbf16>
    %cst_41 = arith.constant dense<0.000000e+00> : vector<256x128xf32>
    %41 = tpu.matmul %38, %40, %cst_41 {dimension_numbers = #tpu.dot_dimension_numbers<[1], [0], [0], [1], [0, 0, 1, 1], [], []>} : vector<256x128xbf16>, vector<128x128xbf16>, vector<256x128xf32> -> vector<256x128xf32>
    %42 = arith.addf %35, %41 : vector<256x128xf32>
    %c0_42 = arith.constant 0 : index
    %c2_43 = arith.constant 2 : index
    %c0_44 = arith.constant 0 : index
    %c0_45 = arith.constant 0 : index
    %43 = vector.load %arg1[%c0_42, %c2_43, %c0_44, %c0_45] : memref<1x18x18x128xbf16, #tpu.memory_space<vmem>>, vector<1x16x16x128xbf16>
    %44 = vector.shape_cast %43 : vector<1x16x16x128xbf16> to vector<16x16x128xbf16>
    %45 = vector.shape_cast %44 : vector<16x16x128xbf16> to vector<256x128xbf16>
    %c6 = arith.constant 6 : index
    %c0_46 = arith.constant 0 : index
    %c0_47 = arith.constant 0 : index
    %46 = vector.load %arg2[%c6, %c0_46, %c0_47] : memref<9x128x128xbf16, #tpu.memory_space<vmem>>, vector<1x128x128xbf16>
    %47 = vector.shape_cast %46 : vector<1x128x128xbf16> to vector<128x128xbf16>
    %cst_48 = arith.constant dense<0.000000e+00> : vector<256x128xf32>
    %48 = tpu.matmul %45, %47, %cst_48 {dimension_numbers = #tpu.dot_dimension_numbers<[1], [0], [0], [1], [0, 0, 1, 1], [], []>} : vector<256x128xbf16>, vector<128x128xbf16>, vector<256x128xf32> -> vector<256x128xf32>
    %49 = arith.addf %42, %48 : vector<256x128xf32>
    %c0_49 = arith.constant 0 : index
    %c2_50 = arith.constant 2 : index
    %c1_51 = arith.constant 1 : index
    %c0_52 = arith.constant 0 : index
    %50 = vector.load %arg1[%c0_49, %c2_50, %c1_51, %c0_52] : memref<1x18x18x128xbf16, #tpu.memory_space<vmem>>, vector<1x16x16x128xbf16>
    %51 = vector.shape_cast %50 : vector<1x16x16x128xbf16> to vector<16x16x128xbf16>
    %52 = vector.shape_cast %51 : vector<16x16x128xbf16> to vector<256x128xbf16>
    %c7 = arith.constant 7 : index
    %c0_53 = arith.constant 0 : index
    %c0_54 = arith.constant 0 : index
    %53 = vector.load %arg2[%c7, %c0_53, %c0_54] : memref<9x128x128xbf16, #tpu.memory_space<vmem>>, vector<1x128x128xbf16>
    %54 = vector.shape_cast %53 : vector<1x128x128xbf16> to vector<128x128xbf16>
    %cst_55 = arith.constant dense<0.000000e+00> : vector<256x128xf32>
    %55 = tpu.matmul %52, %54, %cst_55 {dimension_numbers = #tpu.dot_dimension_numbers<[1], [0], [0], [1], [0, 0, 1, 1], [], []>} : vector<256x128xbf16>, vector<128x128xbf16>, vector<256x128xf32> -> vector<256x128xf32>
    %56 = arith.addf %49, %55 : vector<256x128xf32>
    %c0_56 = arith.constant 0 : index
    %c2_57 = arith.constant 2 : index
    %c2_58 = arith.constant 2 : index
    %c0_59 = arith.constant 0 : index
    %57 = vector.load %arg1[%c0_56, %c2_57, %c2_58, %c0_59] : memref<1x18x18x128xbf16, #tpu.memory_space<vmem>>, vector<1x16x16x128xbf16>
    %58 = vector.shape_cast %57 : vector<1x16x16x128xbf16> to vector<16x16x128xbf16>
    %59 = vector.shape_cast %58 : vector<16x16x128xbf16> to vector<256x128xbf16>
    %c8 = arith.constant 8 : index
    %c0_60 = arith.constant 0 : index
    %c0_61 = arith.constant 0 : index
    %60 = vector.load %arg2[%c8, %c0_60, %c0_61] : memref<9x128x128xbf16, #tpu.memory_space<vmem>>, vector<1x128x128xbf16>
    %61 = vector.shape_cast %60 : vector<1x128x128xbf16> to vector<128x128xbf16>
    %cst_62 = arith.constant dense<0.000000e+00> : vector<256x128xf32>
    %62 = tpu.matmul %59, %61, %cst_62 {dimension_numbers = #tpu.dot_dimension_numbers<[1], [0], [0], [1], [0, 0, 1, 1], [], []>} : vector<256x128xbf16>, vector<128x128xbf16>, vector<256x128xf32> -> vector<256x128xf32>
    %63 = arith.addf %56, %62 : vector<256x128xf32>
    %c0_63 = arith.constant 0 : index
    %c0_64 = arith.constant 0 : index
    %64 = vector.load %arg3[%c0_63, %c0_64] : memref<1x128xf32, #tpu.memory_space<vmem>>, vector<1x128xf32>
    %65 = vector.broadcast %64 : vector<1x128xf32> to vector<256x128xf32>
    %66 = arith.addf %63, %65 : vector<256x128xf32>
    %cst_65 = arith.constant 0.000000e+00 : f32
    %67 = vector.broadcast %cst_65 : f32 to vector<256x128xf32>
    %68 = arith.maximumf %66, %67 : vector<256x128xf32>
    %cst_66 = arith.constant 0.000000e+00 : bf16
    %69 = vector.broadcast %cst_66 : bf16 to vector<18x18x128xbf16>
    %c0_67 = arith.constant 0 : index
    %c0_68 = arith.constant 0 : index
    %c0_69 = arith.constant 0 : index
    %70 = vector.load %arg9[%c0_67, %c0_68, %c0_69] : memref<18x18x128xbf16, #tpu.memory_space<vmem>>, vector<18x18x128xbf16>
    tpu.vector_store %arg9[%c0_67, %c0_68, %c0_69], %69 {strides = array<i32>} : memref<18x18x128xbf16, #tpu.memory_space<vmem>>, vector<18x18x128xbf16>,
    %71 = vector.shape_cast %68 : vector<256x128xf32> to vector<16x16x128xf32>
    %72 = arith.truncf %71 : vector<16x16x128xf32> to vector<16x16x128xbf16>
    %c1_70 = arith.constant 1 : index
    %c1_71 = arith.constant 1 : index
    %c0_72 = arith.constant 0 : index
    %73 = vector.load %arg9[%c1_70, %c1_71, %c0_72] : memref<18x18x128xbf16, #tpu.memory_space<vmem>>, vector<16x16x128xbf16>
    tpu.vector_store %arg9[%c1_70, %c1_71, %c0_72], %72 {strides = array<i32>} : memref<18x18x128xbf16, #tpu.memory_space<vmem>>, vector<16x16x128xbf16>,
    %cst_73 = arith.constant 0.000000e+00 : f32
    %74 = vector.broadcast %cst_73 : f32 to vector<256x128xf32>
    %c0_74 = arith.constant 0 : index
    %c0_75 = arith.constant 0 : index
    %c0_76 = arith.constant 0 : index
    %75 = vector.load %arg9[%c0_74, %c0_75, %c0_76] : memref<18x18x128xbf16, #tpu.memory_space<vmem>>, vector<16x16x128xbf16>
    %76 = vector.shape_cast %75 : vector<16x16x128xbf16> to vector<256x128xbf16>
    %c0_77 = arith.constant 0 : index
    %c0_78 = arith.constant 0 : index
    %c0_79 = arith.constant 0 : index
    %77 = vector.load %arg4[%c0_77, %c0_78, %c0_79] : memref<9x128x128xbf16, #tpu.memory_space<vmem>>, vector<1x128x128xbf16>
    %78 = vector.shape_cast %77 : vector<1x128x128xbf16> to vector<128x128xbf16>
    %cst_80 = arith.constant dense<0.000000e+00> : vector<256x128xf32>
    %79 = tpu.matmul %76, %78, %cst_80 {dimension_numbers = #tpu.dot_dimension_numbers<[1], [0], [0], [1], [0, 0, 1, 1], [], []>} : vector<256x128xbf16>, vector<128x128xbf16>, vector<256x128xf32> -> vector<256x128xf32>
    %80 = arith.addf %74, %79 : vector<256x128xf32>
    %c0_81 = arith.constant 0 : index
    %c1_82 = arith.constant 1 : index
    %c0_83 = arith.constant 0 : index
    %81 = vector.load %arg9[%c0_81, %c1_82, %c0_83] : memref<18x18x128xbf16, #tpu.memory_space<vmem>>, vector<16x16x128xbf16>
    %82 = vector.shape_cast %81 : vector<16x16x128xbf16> to vector<256x128xbf16>
    %c1_84 = arith.constant 1 : index
    %c0_85 = arith.constant 0 : index
    %c0_86 = arith.constant 0 : index
    %83 = vector.load %arg4[%c1_84, %c0_85, %c0_86] : memref<9x128x128xbf16, #tpu.memory_space<vmem>>, vector<1x128x128xbf16>
    %84 = vector.shape_cast %83 : vector<1x128x128xbf16> to vector<128x128xbf16>
    %cst_87 = arith.constant dense<0.000000e+00> : vector<256x128xf32>
    %85 = tpu.matmul %82, %84, %cst_87 {dimension_numbers = #tpu.dot_dimension_numbers<[1], [0], [0], [1], [0, 0, 1, 1], [], []>} : vector<256x128xbf16>, vector<128x128xbf16>, vector<256x128xf32> -> vector<256x128xf32>
    %86 = arith.addf %80, %85 : vector<256x128xf32>
    %c0_88 = arith.constant 0 : index
    %c2_89 = arith.constant 2 : index
    %c0_90 = arith.constant 0 : index
    %87 = vector.load %arg9[%c0_88, %c2_89, %c0_90] : memref<18x18x128xbf16, #tpu.memory_space<vmem>>, vector<16x16x128xbf16>
    %88 = vector.shape_cast %87 : vector<16x16x128xbf16> to vector<256x128xbf16>
    %c2_91 = arith.constant 2 : index
    %c0_92 = arith.constant 0 : index
    %c0_93 = arith.constant 0 : index
    %89 = vector.load %arg4[%c2_91, %c0_92, %c0_93] : memref<9x128x128xbf16, #tpu.memory_space<vmem>>, vector<1x128x128xbf16>
    %90 = vector.shape_cast %89 : vector<1x128x128xbf16> to vector<128x128xbf16>
    %cst_94 = arith.constant dense<0.000000e+00> : vector<256x128xf32>
    %91 = tpu.matmul %88, %90, %cst_94 {dimension_numbers = #tpu.dot_dimension_numbers<[1], [0], [0], [1], [0, 0, 1, 1], [], []>} : vector<256x128xbf16>, vector<128x128xbf16>, vector<256x128xf32> -> vector<256x128xf32>
    %92 = arith.addf %86, %91 : vector<256x128xf32>
    %c1_95 = arith.constant 1 : index
    %c0_96 = arith.constant 0 : index
    %c0_97 = arith.constant 0 : index
    %93 = vector.load %arg9[%c1_95, %c0_96, %c0_97] : memref<18x18x128xbf16, #tpu.memory_space<vmem>>, vector<16x16x128xbf16>
    %94 = vector.shape_cast %93 : vector<16x16x128xbf16> to vector<256x128xbf16>
    %c3_98 = arith.constant 3 : index
    %c0_99 = arith.constant 0 : index
    %c0_100 = arith.constant 0 : index
    %95 = vector.load %arg4[%c3_98, %c0_99, %c0_100] : memref<9x128x128xbf16, #tpu.memory_space<vmem>>, vector<1x128x128xbf16>
    %96 = vector.shape_cast %95 : vector<1x128x128xbf16> to vector<128x128xbf16>
    %cst_101 = arith.constant dense<0.000000e+00> : vector<256x128xf32>
    %97 = tpu.matmul %94, %96, %cst_101 {dimension_numbers = #tpu.dot_dimension_numbers<[1], [0], [0], [1], [0, 0, 1, 1], [], []>} : vector<256x128xbf16>, vector<128x128xbf16>, vector<256x128xf32> -> vector<256x128xf32>
    %98 = arith.addf %92, %97 : vector<256x128xf32>
    %c1_102 = arith.constant 1 : index
    %c1_103 = arith.constant 1 : index
    %c0_104 = arith.constant 0 : index
    %99 = vector.load %arg9[%c1_102, %c1_103, %c0_104] : memref<18x18x128xbf16, #tpu.memory_space<vmem>>, vector<16x16x128xbf16>
    %100 = vector.shape_cast %99 : vector<16x16x128xbf16> to vector<256x128xbf16>
    %c4_105 = arith.constant 4 : index
    %c0_106 = arith.constant 0 : index
    %c0_107 = arith.constant 0 : index
    %101 = vector.load %arg4[%c4_105, %c0_106, %c0_107] : memref<9x128x128xbf16, #tpu.memory_space<vmem>>, vector<1x128x128xbf16>
    %102 = vector.shape_cast %101 : vector<1x128x128xbf16> to vector<128x128xbf16>
    %cst_108 = arith.constant dense<0.000000e+00> : vector<256x128xf32>
    %103 = tpu.matmul %100, %102, %cst_108 {dimension_numbers = #tpu.dot_dimension_numbers<[1], [0], [0], [1], [0, 0, 1, 1], [], []>} : vector<256x128xbf16>, vector<128x128xbf16>, vector<256x128xf32> -> vector<256x128xf32>
    %104 = arith.addf %98, %103 : vector<256x128xf32>
    %c1_109 = arith.constant 1 : index
    %c2_110 = arith.constant 2 : index
    %c0_111 = arith.constant 0 : index
    %105 = vector.load %arg9[%c1_109, %c2_110, %c0_111] : memref<18x18x128xbf16, #tpu.memory_space<vmem>>, vector<16x16x128xbf16>
    %106 = vector.shape_cast %105 : vector<16x16x128xbf16> to vector<256x128xbf16>
    %c5_112 = arith.constant 5 : index
    %c0_113 = arith.constant 0 : index
    %c0_114 = arith.constant 0 : index
    %107 = vector.load %arg4[%c5_112, %c0_113, %c0_114] : memref<9x128x128xbf16, #tpu.memory_space<vmem>>, vector<1x128x128xbf16>
    %108 = vector.shape_cast %107 : vector<1x128x128xbf16> to vector<128x128xbf16>
    %cst_115 = arith.constant dense<0.000000e+00> : vector<256x128xf32>
    %109 = tpu.matmul %106, %108, %cst_115 {dimension_numbers = #tpu.dot_dimension_numbers<[1], [0], [0], [1], [0, 0, 1, 1], [], []>} : vector<256x128xbf16>, vector<128x128xbf16>, vector<256x128xf32> -> vector<256x128xf32>
    %110 = arith.addf %104, %109 : vector<256x128xf32>
    %c2_116 = arith.constant 2 : index
    %c0_117 = arith.constant 0 : index
    %c0_118 = arith.constant 0 : index
    %111 = vector.load %arg9[%c2_116, %c0_117, %c0_118] : memref<18x18x128xbf16, #tpu.memory_space<vmem>>, vector<16x16x128xbf16>
    %112 = vector.shape_cast %111 : vector<16x16x128xbf16> to vector<256x128xbf16>
    %c6_119 = arith.constant 6 : index
    %c0_120 = arith.constant 0 : index
    %c0_121 = arith.constant 0 : index
    %113 = vector.load %arg4[%c6_119, %c0_120, %c0_121] : memref<9x128x128xbf16, #tpu.memory_space<vmem>>, vector<1x128x128xbf16>
    %114 = vector.shape_cast %113 : vector<1x128x128xbf16> to vector<128x128xbf16>
    %cst_122 = arith.constant dense<0.000000e+00> : vector<256x128xf32>
    %115 = tpu.matmul %112, %114, %cst_122 {dimension_numbers = #tpu.dot_dimension_numbers<[1], [0], [0], [1], [0, 0, 1, 1], [], []>} : vector<256x128xbf16>, vector<128x128xbf16>, vector<256x128xf32> -> vector<256x128xf32>
    %116 = arith.addf %110, %115 : vector<256x128xf32>
    %c2_123 = arith.constant 2 : index
    %c1_124 = arith.constant 1 : index
    %c0_125 = arith.constant 0 : index
    %117 = vector.load %arg9[%c2_123, %c1_124, %c0_125] : memref<18x18x128xbf16, #tpu.memory_space<vmem>>, vector<16x16x128xbf16>
    %118 = vector.shape_cast %117 : vector<16x16x128xbf16> to vector<256x128xbf16>
    %c7_126 = arith.constant 7 : index
    %c0_127 = arith.constant 0 : index
    %c0_128 = arith.constant 0 : index
    %119 = vector.load %arg4[%c7_126, %c0_127, %c0_128] : memref<9x128x128xbf16, #tpu.memory_space<vmem>>, vector<1x128x128xbf16>
    %120 = vector.shape_cast %119 : vector<1x128x128xbf16> to vector<128x128xbf16>
    %cst_129 = arith.constant dense<0.000000e+00> : vector<256x128xf32>
    %121 = tpu.matmul %118, %120, %cst_129 {dimension_numbers = #tpu.dot_dimension_numbers<[1], [0], [0], [1], [0, 0, 1, 1], [], []>} : vector<256x128xbf16>, vector<128x128xbf16>, vector<256x128xf32> -> vector<256x128xf32>
    %122 = arith.addf %116, %121 : vector<256x128xf32>
    %c2_130 = arith.constant 2 : index
    %c2_131 = arith.constant 2 : index
    %c0_132 = arith.constant 0 : index
    %123 = vector.load %arg9[%c2_130, %c2_131, %c0_132] : memref<18x18x128xbf16, #tpu.memory_space<vmem>>, vector<16x16x128xbf16>
    %124 = vector.shape_cast %123 : vector<16x16x128xbf16> to vector<256x128xbf16>
    %c8_133 = arith.constant 8 : index
    %c0_134 = arith.constant 0 : index
    %c0_135 = arith.constant 0 : index
    %125 = vector.load %arg4[%c8_133, %c0_134, %c0_135] : memref<9x128x128xbf16, #tpu.memory_space<vmem>>, vector<1x128x128xbf16>
    %126 = vector.shape_cast %125 : vector<1x128x128xbf16> to vector<128x128xbf16>
    %cst_136 = arith.constant dense<0.000000e+00> : vector<256x128xf32>
    %127 = tpu.matmul %124, %126, %cst_136 {dimension_numbers = #tpu.dot_dimension_numbers<[1], [0], [0], [1], [0, 0, 1, 1], [], []>} : vector<256x128xbf16>, vector<128x128xbf16>, vector<256x128xf32> -> vector<256x128xf32>
    %128 = arith.addf %122, %127 : vector<256x128xf32>
    %c0_137 = arith.constant 0 : index
    %c0_138 = arith.constant 0 : index
    %129 = vector.load %arg5[%c0_137, %c0_138] : memref<1x128xf32, #tpu.memory_space<vmem>>, vector<1x128xf32>
    %130 = vector.broadcast %129 : vector<1x128xf32> to vector<256x128xf32>
    %131 = arith.addf %128, %130 : vector<256x128xf32>
    %c0_139 = arith.constant 0 : index
    %c1_140 = arith.constant 1 : index
    %c1_141 = arith.constant 1 : index
    %c0_142 = arith.constant 0 : index
    %132 = vector.load %arg1[%c0_139, %c1_140, %c1_141, %c0_142] : memref<1x18x18x128xbf16, #tpu.memory_space<vmem>>, vector<1x16x16x128xbf16>
    %133 = vector.shape_cast %132 : vector<1x16x16x128xbf16> to vector<16x16x128xbf16>
    %134 = vector.shape_cast %133 : vector<16x16x128xbf16> to vector<256x128xbf16>
    %c0_143 = arith.constant 0 : index
    %c0_144 = arith.constant 0 : index
    %135 = vector.load %arg6[%c0_143, %c0_144] : memref<128x128xbf16, #tpu.memory_space<vmem>>, vector<128x128xbf16>
    %cst_145 = arith.constant dense<0.000000e+00> : vector<256x128xf32>
    %136 = tpu.matmul %134, %135, %cst_145 {dimension_numbers = #tpu.dot_dimension_numbers<[1], [0], [0], [1], [0, 0, 1, 1], [], []>} : vector<256x128xbf16>, vector<128x128xbf16>, vector<256x128xf32> -> vector<256x128xf32>
    %c0_146 = arith.constant 0 : index
    %c0_147 = arith.constant 0 : index
    %137 = vector.load %arg7[%c0_146, %c0_147] : memref<1x128xf32, #tpu.memory_space<vmem>>, vector<1x128xf32>
    %138 = vector.broadcast %137 : vector<1x128xf32> to vector<256x128xf32>
    %139 = arith.addf %136, %138 : vector<256x128xf32>
    %140 = arith.addf %131, %139 : vector<256x128xf32>
    %cst_148 = arith.constant 0.000000e+00 : f32
    %141 = vector.broadcast %cst_148 : f32 to vector<256x128xf32>
    %142 = arith.maximumf %140, %141 : vector<256x128xf32>
    %143 = vector.shape_cast %142 : vector<256x128xf32> to vector<16x16x128xf32>
    %c0_149 = arith.constant 0 : index
    %c0_150 = arith.constant 0 : index
    %c0_151 = arith.constant 0 : index
    %c0_152 = arith.constant 0 : index
    %144 = vector.load %arg8[%c0_149, %c0_150, %c0_151, %c0_152] : memref<1x16x16x128xf32, #tpu.memory_space<vmem>>, vector<1x16x16x128xf32>
    %145 = vector.shape_cast %144 : vector<1x16x16x128xf32> to vector<16x16x128xf32>
    %146 = vector.shape_cast %143 : vector<16x16x128xf32> to vector<1x16x16x128xf32>
    tpu.vector_store %arg8[%c0_149, %c0_150, %c0_151, %c0_152], %146 {strides = array<i32>} : memref<1x16x16x128xf32, #tpu.memory_space<vmem>>, vector<1x16x16x128xf32>,
    return
  }
  func.func @transform_0(%arg0: i32) -> (i32, i32, i32, i32) {
    %c0_i32 = arith.constant 0 : i32
    %c0_i32_0 = arith.constant 0 : i32
    %c0_i32_1 = arith.constant 0 : i32
    %c0_i32_2 = arith.constant 0 : i32
    return %arg0, %c0_i32, %c0_i32_0, %c0_i32_1 : i32, i32, i32, i32
  }
  func.func @transform_1(%arg0: i32) -> (i32, i32, i32) {
    %c0_i32 = arith.constant 0 : i32
    %c0_i32_0 = arith.constant 0 : i32
    %c0_i32_1 = arith.constant 0 : i32
    %c0_i32_2 = arith.constant 0 : i32
    return %c0_i32, %c0_i32_0, %c0_i32_1 : i32, i32, i32
  }
  func.func @transform_2(%arg0: i32) -> (i32, i32) {
    %c0_i32 = arith.constant 0 : i32
    %c0_i32_0 = arith.constant 0 : i32
    %c0_i32_1 = arith.constant 0 : i32
    return %c0_i32, %c0_i32_0 : i32, i32
  }
  func.func @transform_3(%arg0: i32) -> (i32, i32, i32) {
    %c0_i32 = arith.constant 0 : i32
    %c0_i32_0 = arith.constant 0 : i32
    %c0_i32_1 = arith.constant 0 : i32
    %c0_i32_2 = arith.constant 0 : i32
    return %c0_i32, %c0_i32_0, %c0_i32_1 : i32, i32, i32
  }
  func.func @transform_4(%arg0: i32) -> (i32, i32) {
    %c0_i32 = arith.constant 0 : i32
    %c0_i32_0 = arith.constant 0 : i32
    %c0_i32_1 = arith.constant 0 : i32
    return %c0_i32, %c0_i32_0 : i32, i32
  }
  func.func @transform_5(%arg0: i32) -> (i32, i32) {
    %c0_i32 = arith.constant 0 : i32
    %c0_i32_0 = arith.constant 0 : i32
    %c0_i32_1 = arith.constant 0 : i32
    return %c0_i32, %c0_i32_0 : i32, i32
  }
  func.func @transform_6(%arg0: i32) -> (i32, i32) {
    %c0_i32 = arith.constant 0 : i32
    %c0_i32_0 = arith.constant 0 : i32
    %c0_i32_1 = arith.constant 0 : i32
    return %c0_i32, %c0_i32_0 : i32, i32
  }
  func.func @transform_7(%arg0: i32) -> (i32, i32, i32, i32) {
    %c0_i32 = arith.constant 0 : i32
    %c0_i32_0 = arith.constant 0 : i32
    %c0_i32_1 = arith.constant 0 : i32
    %c0_i32_2 = arith.constant 0 : i32
    return %arg0, %c0_i32, %c0_i32_0, %c0_i32_1 : i32, i32, i32, i32
  }
}

</mosaic_0001>

<llo_original>
// kernel: basic_block_forward.1
$region0: #{basic_block_forward.1}
  #allocation0 [shape = 'u32[]', space=smem, size = 0x4, offset = 0x4, fixed_abs, tag = 'smem constant byte address 0x4 - core index']
  #allocation1 [shape = 'u32[72,128]{1,0:T(1,128)}', space=vmem, size = 0x9000, scoped, tag = 'internal scratch']
  #allocation2 [shape = 'bf16[18,18,128]{2,1,0:T(8,128)(2,1)}', space=vmem, size = 0x1b000, scoped, tag = 'scratch operand']
  %s0 = inlined_call_operand.vmem [shape: bf16[2,18,18,128], index: 0, kind: input, shape index: {}]
  %s1 = inlined_call_operand.vmem [shape: bf16[9,128,128], index: 1, kind: input, shape index: {}]
  %s2 = inlined_call_operand.vmem [shape: f32[1,128], index: 2, kind: input, shape index: {}]
  %s3 = inlined_call_operand.vmem [shape: bf16[9,128,128], index: 3, kind: input, shape index: {}]
  %s4 = inlined_call_operand.vmem [shape: f32[1,128], index: 4, kind: input, shape index: {}]
  %s5 = inlined_call_operand.vmem [shape: bf16[128,128], index: 5, kind: input, shape index: {}]
  %s6 = inlined_call_operand.vmem [shape: f32[1,128], index: 6, kind: input, shape index: {}]
  %s7 = inlined_call_operand.vmem [shape: f32[2,16,16,128], index: 7, kind: output, shape index: {}]
  %s8 = sld [smem:[#allocation0]]
  $region61: #{basic_block_forward.1} parent=0
    _
  %s10 = ssub.s32 1, %s8
  %s11 = scalar_select 0, %s10, %s8
  loop: start=0, step=1, limit=4
  $region2: #{basic_block_forward.1} parent=0 // loop_pre_header
    _
  $region3: #{basic_block_forward.1} parent=0 // loop_header
    %s13 = sphi 0, %s17
    %p14 = scmp.ge.s32.totalorder %s13, 4
    %s23 = sphi 0, %s25
    %s26 = sphi 0, %s23
    %s27 = sphi 0, %s26
    %s43 = sphi 0, %s27
    %s47 = sphi 0, %s47
    %s49 = sphi 0, %s47
    %s50 = sphi 0, %s49
    %s64 = sphi 0, %s50
    %s68 = sphi 0, %s68
    %s70 = sphi 0, %s68
    %s71 = sphi 0, %s70
    %s85 = sphi 0, %s71
    %s89 = sphi 0, %s89
    %s91 = sphi 0, %s89
    %s92 = sphi 0, %s91
    %s106 = sphi 0, %s92
    %s110 = sphi 0, %s110
    %s112 = sphi 0, %s110
    %s113 = sphi 0, %s112
    %s127 = sphi 0, %s113
    %s131 = sphi 0, %s131
    %s133 = sphi 0, %s131
    %s134 = sphi 0, %s133
    %s148 = sphi 0, %s134
    %s152 = sphi 0, %s152
    %s154 = sphi 0, %s152
    %s155 = sphi 0, %s154
    %s169 = sphi 0, %s155
    %s175 = sphi 0, %s177
    %s178 = sphi 0, %s175
    %s179 = sphi 0, %s178
    %s195 = sphi 0, %s179
  $region4: #{basic_block_forward.1} parent=0 // loop_header_branch
    %16 = sbr.rel (%p14) target = $region8
  $region5: #{basic_block_forward.1} parent=0 // loop_body
    %s18 = ssub.s32 %s13, 1
    %s19 = ssub.s32 %s13, 2
    %s20 = sadd.s32 %s13, 1
    %s21 = ssub.s32 %s13, %s20
    %p22 = scmp.eq.s32.totalorder %s21, 0
    %s24 = sadd.s32 %s23, 1
    %s25 = scalar_select %p22, %s23, %s24
    %p28 = pneg %p22
    %p29 = scmp.eq.s32.totalorder %s13, 1
    %p30 = por %p28, %p29
    %p31 = scmp.ne.s32.totalorder %s23, %s26
    %p32 = scmp.eq.s32.totalorder %s13, 0
    %p33 = por %p31, %p32
    %p34 = scmp.ne.s32.totalorder %s23, %s26
    %p35 = scmp.eq.s32.totalorder %s18, 1
    %p36 = por %p34, %p35
    %p37 = scmp.ne.s32.totalorder %s26, %s27
    %p38 = scmp.eq.s32.totalorder %s18, 0
    %p39 = por %p37, %p38
    %p40 = scmp.ne.s32.totalorder %s26, %s27
    %p41 = scmp.eq.s32.totalorder %s19, 1
    %p42 = por %p40, %p41
    %p44 = scmp.ne.s32.totalorder %s27, %s43
    %p45 = scmp.eq.s32.totalorder %s19, 0
    %p46 = por %p44, %p45
    %s48 = sadd.s32 %s47, 1
    %p51 = scmp.eq.s32.totalorder %s13, 1
    %p52 = scmp.ne.s32.totalorder %s47, %s49
    %p53 = scmp.eq.s32.totalorder %s13, 0
    %p54 = por %p52, %p53
    %p55 = scmp.ne.s32.totalorder %s47, %s49
    %p56 = scmp.eq.s32.totalorder %s18, 1
    %p57 = por %p55, %p56
    %p58 = scmp.ne.s32.totalorder %s49, %s50
    %p59 = scmp.eq.s32.totalorder %s18, 0
    %p60 = por %p58, %p59
    %p61 = scmp.ne.s32.totalorder %s49, %s50
    %p62 = scmp.eq.s32.totalorder %s19, 1
    %p63 = por %p61, %p62
    %p65 = scmp.ne.s32.totalorder %s50, %s64
    %p66 = scmp.eq.s32.totalorder %s19, 0
    %p67 = por %p65, %p66
    %s69 = sadd.s32 %s68, 1
    %p72 = scmp.eq.s32.totalorder %s13, 1
    %p73 = scmp.ne.s32.totalorder %s68, %s70
    %p74 = scmp.eq.s32.totalorder %s13, 0
    %p75 = por %p73, %p74
    %p76 = scmp.ne.s32.totalorder %s68, %s70
    %p77 = scmp.eq.s32.totalorder %s18, 1
    %p78 = por %p76, %p77
    %p79 = scmp.ne.s32.totalorder %s70, %s71
    %p80 = scmp.eq.s32.totalorder %s18, 0
    %p81 = por %p79, %p80
    %p82 = scmp.ne.s32.totalorder %s70, %s71
    %p83 = scmp.eq.s32.totalorder %s19, 1
    %p84 = por %p82, %p83
    %p86 = scmp.ne.s32.totalorder %s71, %s85
    %p87 = scmp.eq.s32.totalorder %s19, 0
    %p88 = por %p86, %p87
    %s90 = sadd.s32 %s89, 1
    %p93 = scmp.eq.s32.totalorder %s13, 1
    %p94 = scmp.ne.s32.totalorder %s89, %s91
    %p95 = scmp.eq.s32.totalorder %s13, 0
    %p96 = por %p94, %p95
    %p97 = scmp.ne.s32.totalorder %s89, %s91
    %p98 = scmp.eq.s32.totalorder %s18, 1
    %p99 = por %p97, %p98
    %p100 = scmp.ne.s32.totalorder %s91, %s92
    %p101 = scmp.eq.s32.totalorder %s18, 0
    %p102 = por %p100, %p101
    %p103 = scmp.ne.s32.totalorder %s91, %s92
    %p104 = scmp.eq.s32.totalorder %s19, 1
    %p105 = por %p103, %p104
    %p107 = scmp.ne.s32.totalorder %s92, %s106
    %p108 = scmp.eq.s32.totalorder %s19, 0
    %p109 = por %p107, %p108
    %s111 = sadd.s32 %s110, 1
    %p114 = scmp.eq.s32.totalorder %s13, 1
    %p115 = scmp.ne.s32.totalorder %s110, %s112
    %p116 = scmp.eq.s32.totalorder %s13, 0
    %p117 = por %p115, %p116
    %p118 = scmp.ne.s32.totalorder %s110, %s112
    %p119 = scmp.eq.s32.totalorder %s18, 1
    %p120 = por %p118, %p119
    %p121 = scmp.ne.s32.totalorder %s112, %s113
    %p122 = scmp.eq.s32.totalorder %s18, 0
    %p123 = por %p121, %p122
    %p124 = scmp.ne.s32.totalorder %s112, %s113
    %p125 = scmp.eq.s32.totalorder %s19, 1
    %p126 = por %p124, %p125
    %p128 = scmp.ne.s32.totalorder %s113, %s127
    %p129 = scmp.eq.s32.totalorder %s19, 0
    %p130 = por %p128, %p129
    %s132 = sadd.s32 %s131, 1
    %p135 = scmp.eq.s32.totalorder %s13, 1
    %p136 = scmp.ne.s32.totalorder %s131, %s133
    %p137 = scmp.eq.s32.totalorder %s13, 0
    %p138 = por %p136, %p137
    %p139 = scmp.ne.s32.totalorder %s131, %s133
    %p140 = scmp.eq.s32.totalorder %s18, 1
    %p141 = por %p139, %p140
    %p142 = scmp.ne.s32.totalorder %s133, %s134
    %p143 = scmp.eq.s32.totalorder %s18, 0
    %p144 = por %p142, %p143
    %p145 = scmp.ne.s32.totalorder %s133, %s134
    %p146 = scmp.eq.s32.totalorder %s19, 1
    %p147 = por %p145, %p146
    %p149 = scmp.ne.s32.totalorder %s134, %s148
    %p150 = scmp.eq.s32.totalorder %s19, 0
    %p151 = por %p149, %p150
    %s153 = sadd.s32 %s152, 1
    %p156 = scmp.eq.s32.totalorder %s13, 1
    %p157 = scmp.ne.s32.totalorder %s152, %s154
    %p158 = scmp.eq.s32.totalorder %s13, 0
    %p159 = por %p157, %p158
    %p160 = scmp.ne.s32.totalorder %s152, %s154
    %p161 = scmp.eq.s32.totalorder %s18, 1
    %p162 = por %p160, %p161
    %p163 = scmp.ne.s32.totalorder %s154, %s155
    %p164 = scmp.eq.s32.totalorder %s18, 0
    %p165 = por %p163, %p164
    %p166 = scmp.ne.s32.totalorder %s154, %s155
    %p167 = scmp.eq.s32.totalorder %s19, 1
    %p168 = por %p166, %p167
    %p170 = scmp.ne.s32.totalorder %s155, %s169
    %p171 = scmp.eq.s32.totalorder %s19, 0
    %p172 = por %p170, %p171
    %s173 = ssub.s32 %s13, %s20
    %p174 = scmp.eq.s32.totalorder %s173, 0
    %s176 = sadd.s32 %s175, 1
    %s177 = scalar_select %p174, %s175, %s176
    %p180 = pneg %p174
    %p181 = scmp.eq.s32.totalorder %s13, 1
    %p182 = por %p180, %p181
    %p183 = scmp.ne.s32.totalorder %s175, %s178
    %p184 = scmp.eq.s32.totalorder %s13, 0
    %p185 = por %p183, %p184
    %p186 = scmp.ne.s32.totalorder %s175, %s178
    %p187 = scmp.eq.s32.totalorder %s18, 1
    %p188 = por %p186, %p187
    %p189 = scmp.ne.s32.totalorder %s178, %s179
    %p190 = scmp.eq.s32.totalorder %s18, 0
    %p191 = por %p189, %p190
    %p192 = scmp.ne.s32.totalorder %s178, %s179
    %p193 = scmp.eq.s32.totalorder %s19, 1
    %p194 = por %p192, %p193
    %p196 = scmp.ne.s32.totalorder %s179, %s195
    %p197 = scmp.eq.s32.totalorder %s19, 0
    %p198 = por %p196, %p197
    %p199 = scmp.le.s32.totalorder 1, %s13
    %p200 = scmp.lt.s32.totalorder %s13, 3
    %p201 = pnand %p199, %p200
    %p202 = pneg %p201
    // Predicated region
    $region9: #{basic_block_forward.1} parent=5 // pred_check
      _
    $region10: #{basic_block_forward.1} parent=5 // pred_check_branch
      %204 = sbr.rel (%p201) target = $region12
    $region11: #{basic_block_forward.1} parent=5 // pred_region
      %s205 = ssub.s32 %s13, 1
      // Predicated region
      $region13: #{basic_block_forward.1} parent=11 // pred_check
        %p206 = pneg %p60
      $region14: #{basic_block_forward.1} parent=11 // pred_check_branch
        %208 = sbr.rel (%p206) target = $region16
      $region15: #{basic_block_forward.1} parent=11 // pred_region
        _
      $region16: #{basic_block_forward.1} parent=11 // pred_fallthru
        _
      // Predicated region
      $region17: #{basic_block_forward.1} parent=11 // pred_check
        %p209 = pneg %p81
      $region18: #{basic_block_forward.1} parent=11 // pred_check_branch
        %211 = sbr.rel (%p209) target = $region20
      $region19: #{basic_block_forward.1} parent=11 // pred_region
        _
      $region20: #{basic_block_forward.1} parent=11 // pred_fallthru
        _
      // Predicated region
      $region21: #{basic_block_forward.1} parent=11 // pred_check
        %p212 = pneg %p102
      $region22: #{basic_block_forward.1} parent=11 // pred_check_branch
        %214 = sbr.rel (%p212) target = $region24
      $region23: #{basic_block_forward.1} parent=11 // pred_region
        _
      $region24: #{basic_block_forward.1} parent=11 // pred_fallthru
        _
      // Predicated region
      $region25: #{basic_block_forward.1} parent=11 // pred_check
        %p215 = pneg %p123
      $region26: #{basic_block_forward.1} parent=11 // pred_check_branch
        %217 = sbr.rel (%p215) target = $region28
      $region27: #{basic_block_forward.1} parent=11 // pred_region
        _
      $region28: #{basic_block_forward.1} parent=11 // pred_fallthru
        _
      // Predicated region
      $region29: #{basic_block_forward.1} parent=11 // pred_check
        %p218 = pneg %p144
      $region30: #{basic_block_forward.1} parent=11 // pred_check_branch
        %220 = sbr.rel (%p218) target = $region32
      $region31: #{basic_block_forward.1} parent=11 // pred_region
        _
      $region32: #{basic_block_forward.1} parent=11 // pred_fallthru
        _
      // Predicated region
      $region33: #{basic_block_forward.1} parent=11 // pred_check
        %p221 = pneg %p165
      $region34: #{basic_block_forward.1} parent=11 // pred_check_branch
        %223 = sbr.rel (%p221) target = $region36
      $region35: #{basic_block_forward.1} parent=11 // pred_region
        _
      $region36: #{basic_block_forward.1} parent=11 // pred_fallthru
        _
    $region12: #{basic_block_forward.1} parent=5 // pred_fallthru
      _
    %p224 = scmp.lt.s32.totalorder %s13, 2
    // Predicated region
    $region37: #{basic_block_forward.1} parent=5 // pred_check
      %p225 = pneg %p224
    $region38: #{basic_block_forward.1} parent=5 // pred_check_branch
      %227 = sbr.rel (%p225) target = $region40
    $region39: #{basic_block_forward.1} parent=5 // pred_region
      // Predicated region
      $region41: #{basic_block_forward.1} parent=39 // pred_check
        %p228 = pneg %p33
      $region42: #{basic_block_forward.1} parent=39 // pred_check_branch
        %230 = sbr.rel (%p228) target = $region44
      $region43: #{basic_block_forward.1} parent=39 // pred_region
        %p231 = scmp.lt.s32.totalorder %s13, 1
        %s232 = scalar_select %p231, %s13, 1
        %s233 = smul.addr %s232, 54
        %s234 = smul.addr %s233, 4
        %s235 = scalar_lea.vmem %s0, %s234
      $region44: #{basic_block_forward.1} parent=39 // pred_fallthru
        _
    $region40: #{basic_block_forward.1} parent=5 // pred_fallthru
      _
    %p236 = scmp.le.s32.totalorder 1, %s13
    %p237 = scmp.lt.s32.totalorder %s13, 3
    %p238 = pnand %p236, %p237
    %p239 = pneg %p238
    // Predicated region
    $region45: #{basic_block_forward.1} parent=5 // pred_check
      _
    $region46: #{basic_block_forward.1} parent=5 // pred_check_branch
      %241 = sbr.rel (%p238) target = $region48
    $region47: #{basic_block_forward.1} parent=5 // pred_region
      %s242 = ssub.s32 %s13, 1
      %p243 = scmp.lt.s32.totalorder %s18, 1
      %s244 = scalar_select %p243, %s18, 1
      %s245 = smul.addr %s244, 54
      %s246 = smul.addr %s245, 4
      %s247 = scalar_lea.vmem %s0, %s246
      %p248 = pneg %p39
      %p249 = pneg %p36
      %p250 = pneg %p60
      %p251 = pneg %p57
      %p252 = pneg %p81
      %p253 = pneg %p78
      %p254 = pneg %p102
      %p255 = pneg %p99
      %p256 = pneg %p123
      %p257 = pneg %p120
      %p258 = pneg %p144
      %p259 = pneg %p141
      %p260 = pneg %p165
      %p261 = pneg %p162
      %p262 = pneg %p191
      %p263 = pneg %p188
      %p264 = scmp.lt.s32.totalorder %s18, 1
      %s265 = scalar_select %p264, %s18, 1
      %s266 = smul.addr %s265, 32
      %s267 = smul.addr %s266, 8
      %s268 = scalar_lea.vmem %s7, %s267
      %p269 = scmp.lt.s32.totalorder %s18, 1
      %s270 = scalar_select %p269, %s18, 1
      %s271 = smul.addr %s270, 54
      %s272 = smul.addr %s271, 4
      %s273 = scalar_lea.vmem %s0, %s272
      %p274 = scmp.lt.s32.totalorder %s18, 1
      %s275 = scalar_select %p274, %s18, 1
      %s276 = smul.addr %s275, 32
      %s277 = smul.addr %s276, 8
      %s278 = scalar_lea.vmem %s7, %s277
      %v280 = vld [vmem:[%s273] sm:$0xf]
      %v281 = vld [vmem:[%s273 + $0x4] sm:$0xf]
      %v282 = vld [vmem:[%s273 + $0xc] sm:$0xf]
      %v283 = vld [vmem:[%s273 + $0x10] sm:$0xf]
      %v284 = vld [vmem:[%s273 + $0x18] sm:$0xf]
      %v285 = vld [vmem:[%s273 + $0x1c] sm:$0xf]
      %v286 = vld [vmem:[%s273 + $0x24] sm:$0xf]
      %v287 = vld [vmem:[%s273 + $0x28] sm:$0xf]
      %v288 = vld [vmem:[%s273 + $0x30] sm:$0xf]
      %v289 = vld [vmem:[%s273 + $0x34] sm:$0xf]
      %v290 = vld [vmem:[%s273 + $0x3c] sm:$0xf]
      %v291 = vld [vmem:[%s273 + $0x40] sm:$0xf]
      %v292 = vld [vmem:[%s273 + $0x48] sm:$0xf]
      %v293 = vld [vmem:[%s273 + $0x4c] sm:$0xf]
      %v294 = vld [vmem:[%s273 + $0x54] sm:$0xf]
      %v295 = vld [vmem:[%s273 + $0x58] sm:$0xf]
      %v296 = vld [vmem:[%s273 + $0x60] sm:$0xf]
      %v297 = vld [vmem:[%s273 + $0x64] sm:$0xf]
      %v298 = vld [vmem:[%s273 + $0x6c] sm:$0xf]
      %v299 = vld [vmem:[%s273 + $0x70] sm:$0xf]
      %v300 = vld [vmem:[%s273 + $0x78] sm:$0xf]
      %v301 = vld [vmem:[%s273 + $0x7c] sm:$0xf]
      %v302 = vld [vmem:[%s273 + $0x84] sm:$0xf]
      %v303 = vld [vmem:[%s273 + $0x88] sm:$0xf]
      %v304 = vld [vmem:[%s273 + $0x90] sm:$0xf]
      %v305 = vld [vmem:[%s273 + $0x94] sm:$0xf]
      %v306 = vld [vmem:[%s273 + $0x9c] sm:$0xf]
      %v307 = vld [vmem:[%s273 + $0xa0] sm:$0xf]
      %v308 = vld [vmem:[%s273 + $0xa8] sm:$0xf]
      %v309 = vld [vmem:[%s273 + $0xac] sm:$0xf]
      %v310 = vld [vmem:[%s273 + $0xb4] sm:$0xf]
      %v311 = vld [vmem:[%s273 + $0xb8] sm:$0xf]
      %v312 = vld [vmem:[%s1] sm:$0xf]
      %v313 = vld [vmem:[%s1 + $0x4] sm:$0xf]
      %v314 = vld [vmem:[%s1 + $0x8] sm:$0xf]
      %v315 = vld [vmem:[%s1 + $0xc] sm:$0xf]
      %v316 = vld [vmem:[%s1 + $0x10] sm:$0xf]
      %v317 = vld [vmem:[%s1 + $0x14] sm:$0xf]
      %v318 = vld [vmem:[%s1 + $0x18] sm:$0xf]
      %v319 = vld [vmem:[%s1 + $0x1c] sm:$0xf]
      %v320 = vld [vmem:[%s1 + $0x20] sm:$0xf]
      %v321 = vld [vmem:[%s1 + $0x24] sm:$0xf]
      %v322 = vld [vmem:[%s1 + $0x28] sm:$0xf]
      %v323 = vld [vmem:[%s1 + $0x2c] sm:$0xf]
      %v324 = vld [vmem:[%s1 + $0x30] sm:$0xf]
      %v325 = vld [vmem:[%s1 + $0x34] sm:$0xf]
      %v326 = vld [vmem:[%s1 + $0x38] sm:$0xf]
      %v327 = vld [vmem:[%s1 + $0x3c] sm:$0xf]
      %v328 = vld [vmem:[%s273 + $0x8] sm:$0x1]
      %v329 = vld [vmem:[%s273 + $0x14] sm:$0x1]
      %v330 = vld [vmem:[%s273 + $0x20] sm:$0x1]
      %v331 = vld [vmem:[%s273 + $0x2c] sm:$0x1]
      %v332 = vld [vmem:[%s273 + $0x38] sm:$0x1]
      %v333 = vld [vmem:[%s273 + $0x44] sm:$0x1]
      %v334 = vld [vmem:[%s273 + $0x50] sm:$0x1]
      %v335 = vld [vmem:[%s273 + $0x5c] sm:$0x1]
      %v336 = vld [vmem:[%s273 + $0x68] sm:$0x1]
      %v337 = vld [vmem:[%s273 + $0x74] sm:$0x1]
      %v338 = vld [vmem:[%s273 + $0x80] sm:$0x1]
      %v339 = vld [vmem:[%s273 + $0x8c] sm:$0x1]
      %v340 = vld [vmem:[%s273 + $0x98] sm:$0x1]
      %v341 = vld [vmem:[%s273 + $0xa4] sm:$0x1]
      %v342 = vld [vmem:[%s273 + $0xb0] sm:$0x1]
      %v343 = vld [vmem:[%s273 + $0xbc] sm:$0x1]
      %vm344 = vsmask.f32 3328
      %vm345 = vsmask.f32 7440
      %vm346 = vmor %vm344, %vm345
      %v348 = vshrl.u32 %v280, 16
      %v350 = vrot.slane %v348, 4
      %v351 = vshll.u32 %v280, 16
      %v353 = vrot.slane %v351, 5
      %v354 = vor.u32 %v350, %v353
      %v355 = vrot.slane %v354, 4
      %v357 = vshll.u32 %v281, 16
      %v359 = vrot.slane %v357, 5
      %v360 = vsel %vm346, %v355, %v359
      %v361 = vshrl.u32 %v281, 16
      %v363 = vrot.slane %v361, 4
      %v364 = vor.u32 %v363, %v359
      %v365 = vrot.slane %v364, 4
      %v367 = vshll.u32 %v328, 16
      %v369 = vrot.slane %v367, 5
      %v370 = vsel %vm346, %v365, %v369
      %v372 = vshrl.u32 %v282, 16
      %v374 = vrot.slane %v372, 4
      %v375 = vshll.u32 %v282, 16
      %v377 = vrot.slane %v375, 5
      %v378 = vor.u32 %v374, %v377
      %v379 = vrot.slane %v378, 4
      %v381 = vshll.u32 %v283, 16
      %v383 = vrot.slane %v381, 5
      %v384 = vsel %vm346, %v379, %v383
      %v385 = vshrl.u32 %v283, 16
      %v387 = vrot.slane %v385, 4
      %v388 = vor.u32 %v387, %v383
      %v389 = vrot.slane %v388, 4
      %v391 = vshll.u32 %v329, 16
      %v393 = vrot.slane %v391, 5
      %v394 = vsel %vm346, %v389, %v393
      %v396 = vshrl.u32 %v284, 16
      %v398 = vrot.slane %v396, 4
      %v399 = vshll.u32 %v284, 16
      %v401 = vrot.slane %v399, 5
      %v402 = vor.u32 %v398, %v401
      %v403 = vrot.slane %v402, 4
      %v405 = vshll.u32 %v285, 16
      %v407 = vrot.slane %v405, 5
      %v408 = vsel %vm346, %v403, %v407
      %v409 = vshrl.u32 %v285, 16
      %v411 = vrot.slane %v409, 4
      %v412 = vor.u32 %v411, %v407
      %v413 = vrot.slane %v412, 4
      %v415 = vshll.u32 %v330, 16
      %v417 = vrot.slane %v415, 5
      %v418 = vsel %vm346, %v413, %v417
      %v420 = vshrl.u32 %v286, 16
      %v422 = vrot.slane %v420, 4
      %v423 = vshll.u32 %v286, 16
      %v425 = vrot.slane %v423, 5
      %v426 = vor.u32 %v422, %v425
      %v427 = vrot.slane %v426, 4
      %v429 = vshll.u32 %v287, 16
      %v431 = vrot.slane %v429, 5
      %v432 = vsel %vm346, %v427, %v431
      %v433 = vshrl.u32 %v287, 16
      %v435 = vrot.slane %v433, 4
      %v436 = vor.u32 %v435, %v431
      %v437 = vrot.slane %v436, 4
      %v439 = vshll.u32 %v331, 16
      %v441 = vrot.slane %v439, 5
      %v442 = vsel %vm346, %v437, %v441
      %v444 = vshrl.u32 %v288, 16
      %v446 = vrot.slane %v444, 4
      %v447 = vshll.u32 %v288, 16
      %v449 = vrot.slane %v447, 5
      %v450 = vor.u32 %v446, %v449
      %v451 = vrot.slane %v450, 4
      %v453 = vshll.u32 %v289, 16
      %v455 = vrot.slane %v453, 5
      %v456 = vsel %vm346, %v451, %v455
      %v457 = vshrl.u32 %v289, 16
      %v459 = vrot.slane %v457, 4
      %v460 = vor.u32 %v459, %v455
      %v461 = vrot.slane %v460, 4
      %v463 = vshll.u32 %v332, 16
      %v465 = vrot.slane %v463, 5
      %v466 = vsel %vm346, %v461, %v465
      %v468 = vshrl.u32 %v290, 16
      %v470 = vrot.slane %v468, 4
      %v471 = vshll.u32 %v290, 16
      %v473 = vrot.slane %v471, 5
      %v474 = vor.u32 %v470, %v473
      %v475 = vrot.slane %v474, 4
      %v477 = vshll.u32 %v291, 16
      %v479 = vrot.slane %v477, 5
      %v480 = vsel %vm346, %v475, %v479
      %v481 = vshrl.u32 %v291, 16
      %v483 = vrot.slane %v481, 4
      %v484 = vor.u32 %v483, %v479
      %v485 = vrot.slane %v484, 4
      %v487 = vshll.u32 %v333, 16
      %v489 = vrot.slane %v487, 5
      %v490 = vsel %vm346, %v485, %v489
      %v492 = vshrl.u32 %v292, 16
      %v494 = vrot.slane %v492, 4
      %v495 = vshll.u32 %v292, 16
      %v497 = vrot.slane %v495, 5
      %v498 = vor.u32 %v494, %v497
      %v499 = vrot.slane %v498, 4
      %v501 = vshll.u32 %v293, 16
      %v503 = vrot.slane %v501, 5
      %v504 = vsel %vm346, %v499, %v503
      %v505 = vshrl.u32 %v293, 16
      %v507 = vrot.slane %v505, 4
      %v508 = vor.u32 %v507, %v503
      %v509 = vrot.slane %v508, 4
      %v511 = vshll.u32 %v334, 16
      %v513 = vrot.slane %v511, 5
      %v514 = vsel %vm346, %v509, %v513
      %v516 = vshrl.u32 %v294, 16
      %v518 = vrot.slane %v516, 4
      %v519 = vshll.u32 %v294, 16
      %v521 = vrot.slane %v519, 5
      %v522 = vor.u32 %v518, %v521
      %v523 = vrot.slane %v522, 4
      %v525 = vshll.u32 %v295, 16
      %v527 = vrot.slane %v525, 5
      %v528 = vsel %vm346, %v523, %v527
      %v529 = vshrl.u32 %v295, 16
      %v531 = vrot.slane %v529, 4
      %v532 = vor.u32 %v531, %v527
      %v533 = vrot.slane %v532, 4
      %v535 = vshll.u32 %v335, 16
      %v537 = vrot.slane %v535, 5
      %v538 = vsel %vm346, %v533, %v537
      %v540 = vshrl.u32 %v296, 16
      %v542 = vrot.slane %v540, 4
      %v543 = vshll.u32 %v296, 16
      %v545 = vrot.slane %v543, 5
      %v546 = vor.u32 %v542, %v545
      %v547 = vrot.slane %v546, 4
      %v549 = vshll.u32 %v297, 16
      %v551 = vrot.slane %v549, 5
      %v552 = vsel %vm346, %v547, %v551
      %v553 = vshrl.u32 %v297, 16
      %v555 = vrot.slane %v553, 4
      %v556 = vor.u32 %v555, %v551
      %v557 = vrot.slane %v556, 4
      %v559 = vshll.u32 %v336, 16
      %v561 = vrot.slane %v559, 5
      %v562 = vsel %vm346, %v557, %v561
      %v564 = vshrl.u32 %v298, 16
      %v566 = vrot.slane %v564, 4
      %v567 = vshll.u32 %v298, 16
      %v569 = vrot.slane %v567, 5
      %v570 = vor.u32 %v566, %v569
      %v571 = vrot.slane %v570, 4
      %v573 = vshll.u32 %v299, 16
      %v575 = vrot.slane %v573, 5
      %v576 = vsel %vm346, %v571, %v575
      %v577 = vshrl.u32 %v299, 16
      %v579 = vrot.slane %v577, 4
      %v580 = vor.u32 %v579, %v575
      %v581 = vrot.slane %v580, 4
      %v583 = vshll.u32 %v337, 16
      %v585 = vrot.slane %v583, 5
      %v586 = vsel %vm346, %v581, %v585
      %v588 = vshrl.u32 %v300, 16
      %v590 = vrot.slane %v588, 4
      %v591 = vshll.u32 %v300, 16
      %v593 = vrot.slane %v591, 5
      %v594 = vor.u32 %v590, %v593
      %v595 = vrot.slane %v594, 4
      %v597 = vshll.u32 %v301, 16
      %v599 = vrot.slane %v597, 5
      %v600 = vsel %vm346, %v595, %v599
      %v601 = vshrl.u32 %v301, 16
      %v603 = vrot.slane %v601, 4
      %v604 = vor.u32 %v603, %v599
      %v605 = vrot.slane %v604, 4
      %v607 = vshll.u32 %v338, 16
      %v609 = vrot.slane %v607, 5
      %v610 = vsel %vm346, %v605, %v609
      %v612 = vshrl.u32 %v302, 16
      %v614 = vrot.slane %v612, 4
      %v615 = vshll.u32 %v302, 16
      %v617 = vrot.slane %v615, 5
      %v618 = vor.u32 %v614, %v617
      %v619 = vrot.slane %v618, 4
      %v621 = vshll.u32 %v303, 16
      %v623 = vrot.slane %v621, 5
      %v624 = vsel %vm346, %v619, %v623
      %v625 = vshrl.u32 %v303, 16
      %v627 = vrot.slane %v625, 4
      %v628 = vor.u32 %v627, %v623
      %v629 = vrot.slane %v628, 4
      %v631 = vshll.u32 %v339, 16
      %v633 = vrot.slane %v631, 5
      %v634 = vsel %vm346, %v629, %v633
      %v636 = vshrl.u32 %v304, 16
      %v638 = vrot.slane %v636, 4
      %v639 = vshll.u32 %v304, 16
      %v641 = vrot.slane %v639, 5
      %v642 = vor.u32 %v638, %v641
      %v643 = vrot.slane %v642, 4
      %v645 = vshll.u32 %v305, 16
      %v647 = vrot.slane %v645, 5
      %v648 = vsel %vm346, %v643, %v647
      %v649 = vshrl.u32 %v305, 16
      %v651 = vrot.slane %v649, 4
      %v652 = vor.u32 %v651, %v647
      %v653 = vrot.slane %v652, 4
      %v655 = vshll.u32 %v340, 16
      %v657 = vrot.slane %v655, 5
      %v658 = vsel %vm346, %v653, %v657
      %v660 = vshrl.u32 %v306, 16
      %v662 = vrot.slane %v660, 4
      %v663 = vshll.u32 %v306, 16
      %v665 = vrot.slane %v663, 5
      %v666 = vor.u32 %v662, %v665
      %v667 = vrot.slane %v666, 4
      %v669 = vshll.u32 %v307, 16
      %v671 = vrot.slane %v669, 5
      %v672 = vsel %vm346, %v667, %v671
      %v673 = vshrl.u32 %v307, 16
      %v675 = vrot.slane %v673, 4
      %v676 = vor.u32 %v675, %v671
      %v677 = vrot.slane %v676, 4
      %v679 = vshll.u32 %v341, 16
      %v681 = vrot.slane %v679, 5
      %v682 = vsel %vm346, %v677, %v681
      %v684 = vshrl.u32 %v308, 16
      %v686 = vrot.slane %v684, 4
      %v687 = vshll.u32 %v308, 16
      %v689 = vrot.slane %v687, 5
      %v690 = vor.u32 %v686, %v689
      %v691 = vrot.slane %v690, 4
      %v693 = vshll.u32 %v309, 16
      %v695 = vrot.slane %v693, 5
      %v696 = vsel %vm346, %v691, %v695
      %v697 = vshrl.u32 %v309, 16
      %v699 = vrot.slane %v697, 4
      %v700 = vor.u32 %v699, %v695
      %v701 = vrot.slane %v700, 4
      %v703 = vshll.u32 %v342, 16
      %v705 = vrot.slane %v703, 5
      %v706 = vsel %vm346, %v701, %v705
      %v708 = vshrl.u32 %v310, 16
      %v710 = vrot.slane %v708, 4
      %v711 = vshll.u32 %v310, 16
      %v713 = vrot.slane %v711, 5
      %v714 = vor.u32 %v710, %v713
      %v715 = vrot.slane %v714, 4
      %v717 = vshll.u32 %v311, 16
      %v719 = vrot.slane %v717, 5
      %v720 = vsel %vm346, %v715, %v719
      %v721 = vshrl.u32 %v311, 16
      %v723 = vrot.slane %v721, 4
      %v724 = vor.u32 %v723, %v719
      %v725 = vrot.slane %v724, 4
      %v727 = vshll.u32 %v343, 16
      %v729 = vrot.slane %v727, 5
      %v730 = vsel %vm346, %v725, %v729
      %s731 = scalar_lea.vmem %s1, 64
      %v732 = vld [vmem:[%s731] sm:$0xf]
      %v733 = vld [vmem:[%s731 + $0x4] sm:$0xf]
      %v734 = vld [vmem:[%s731 + $0x8] sm:$0xf]
      %v735 = vld [vmem:[%s731 + $0xc] sm:$0xf]
      %v736 = vld [vmem:[%s731 + $0x10] sm:$0xf]
      %v737 = vld [vmem:[%s731 + $0x14] sm:$0xf]
      %v738 = vld [vmem:[%s731 + $0x18] sm:$0xf]
      %v739 = vld [vmem:[%s731 + $0x1c] sm:$0xf]
      %v740 = vld [vmem:[%s731 + $0x20] sm:$0xf]
      %v741 = vld [vmem:[%s731 + $0x24] sm:$0xf]
      %v742 = vld [vmem:[%s731 + $0x28] sm:$0xf]
      %v743 = vld [vmem:[%s731 + $0x2c] sm:$0xf]
      %v744 = vld [vmem:[%s731 + $0x30] sm:$0xf]
      %v745 = vld [vmem:[%s731 + $0x34] sm:$0xf]
      %v746 = vld [vmem:[%s731 + $0x38] sm:$0xf]
      %v747 = vld [vmem:[%s731 + $0x3c] sm:$0xf]
      %v748 = vunpack.c.l.b16 %v360
      %v749 = vunpack.c.l.b16 %v370
      %v750 = vunpack.c.l.b16 %v384
      %v751 = vunpack.c.l.b16 %v394
      %v752 = vunpack.c.l.b16 %v408
      %v753 = vunpack.c.l.b16 %v418
      %v754 = vunpack.c.l.b16 %v432
      %v755 = vunpack.c.l.b16 %v442
      %v756 = vunpack.c.l.b16 %v456
      %v757 = vunpack.c.l.b16 %v466
      %v758 = vunpack.c.l.b16 %v480
      %v759 = vunpack.c.l.b16 %v490
      %v760 = vunpack.c.l.b16 %v504
      %v761 = vunpack.c.l.b16 %v514
      %v762 = vunpack.c.l.b16 %v528
      %v763 = vunpack.c.l.b16 %v538
      %v764 = vunpack.c.l.b16 %v552
      %v765 = vunpack.c.l.b16 %v562
      %v766 = vunpack.c.l.b16 %v576
      %v767 = vunpack.c.l.b16 %v586
      %v768 = vunpack.c.l.b16 %v600
      %v769 = vunpack.c.l.b16 %v610
      %v770 = vunpack.c.l.b16 %v624
      %v771 = vunpack.c.l.b16 %v634
      %v772 = vunpack.c.l.b16 %v648
      %v773 = vunpack.c.l.b16 %v658
      %v774 = vunpack.c.l.b16 %v672
      %v775 = vunpack.c.l.b16 %v682
      %v776 = vunpack.c.l.b16 %v696
      %v777 = vunpack.c.l.b16 %v706
      %v778 = vunpack.c.l.b16 %v720
      %v779 = vunpack.c.l.b16 %v730
      %v780 = vpack.c.b16 %v749, %v748
      %v781 = vpack.c.b16 %v751, %v750
      %v782 = vpack.c.b16 %v753, %v752
      %v783 = vpack.c.b16 %v755, %v754
      %v784 = vpack.c.b16 %v757, %v756
      %v785 = vpack.c.b16 %v759, %v758
      %v786 = vpack.c.b16 %v761, %v760
      %v787 = vpack.c.b16 %v763, %v762
      %v788 = vpack.c.b16 %v765, %v764
      %v789 = vpack.c.b16 %v767, %v766
      %v790 = vpack.c.b16 %v769, %v768
      %v791 = vpack.c.b16 %v771, %v770
      %v792 = vpack.c.b16 %v773, %v772
      %v793 = vpack.c.b16 %v775, %v774
      %v794 = vpack.c.b16 %v777, %v776
      %v795 = vpack.c.b16 %v779, %v778
      %v828 = vunpack.c.l.b16 %v732
      %v829 = vunpack.c.l.b16 %v733
      %v830 = vunpack.c.l.b16 %v734
      %v831 = vunpack.c.l.b16 %v735
      %v832 = vunpack.c.l.b16 %v736
      %v833 = vunpack.c.l.b16 %v737
      %v834 = vunpack.c.l.b16 %v738
      %v835 = vunpack.c.l.b16 %v739
      %v836 = vunpack.c.l.b16 %v740
      %v837 = vunpack.c.l.b16 %v741
      %v838 = vunpack.c.l.b16 %v742
      %v839 = vunpack.c.l.b16 %v743
      %v840 = vunpack.c.l.b16 %v744
      %v841 = vunpack.c.l.b16 %v745
      %v842 = vunpack.c.l.b16 %v746
      %v843 = vunpack.c.l.b16 %v747
      %v844 = vpack.c.b16 %v829, %v828
      %v845 = vpack.c.b16 %v831, %v830
      %v846 = vpack.c.b16 %v833, %v832
      %v847 = vpack.c.b16 %v835, %v834
      %v848 = vpack.c.b16 %v837, %v836
      %v849 = vpack.c.b16 %v839, %v838
      %v850 = vpack.c.b16 %v841, %v840
      %v851 = vpack.c.b16 %v843, %v842
      %860 = vmatpush.bf16.msra.mxu0 %v851
      %861 = vmatpush.bf16.msra.mxu0 %v850
      %862 = vmatpush.bf16.msra.mxu0 %v849
      %863 = vmatpush.bf16.msra.mxu0 %v848
      %864 = vmatpush.bf16.msra.mxu0 %v847
      %865 = vmatpush.bf16.msra.mxu0 %v846
      %866 = vmatpush.bf16.msra.mxu0 %v845
      %867 = vmatpush.bf16.msra.mxu0 %v844
      %868 = vmatmul.bf16.gmra.mxu0 %v780
      %v869 = vpop.f32.mrf.mxu0
      %v870 = vadd.f32 0.0, %v869
      %v871 = vpop.f32.mrf.mxu0
      %v872 = vadd.f32 0.0, %v871
      %873 = vmatmul.bf16.gmra.mxu0 %v781
      %v874 = vpop.f32.mrf.mxu0
      %v875 = vadd.f32 0.0, %v874
      %v876 = vpop.f32.mrf.mxu0
      %v877 = vadd.f32 0.0, %v876
      %878 = vmatmul.bf16.gmra.mxu0 %v782
      %v879 = vpop.f32.mrf.mxu0
      %v880 = vadd.f32 0.0, %v879
      %v881 = vpop.f32.mrf.mxu0
      %v882 = vadd.f32 0.0, %v881
      %883 = vmatmul.bf16.gmra.mxu0 %v783
      %v884 = vpop.f32.mrf.mxu0
      %v885 = vadd.f32 0.0, %v884
      %v886 = vpop.f32.mrf.mxu0
      %v887 = vadd.f32 0.0, %v886
      %888 = vmatmul.bf16.gmra.mxu0 %v784
      %v889 = vpop.f32.mrf.mxu0
      %v890 = vadd.f32 0.0, %v889
      %v891 = vpop.f32.mrf.mxu0
      %v892 = vadd.f32 0.0, %v891
      %893 = vmatmul.bf16.gmra.mxu0 %v785
      %v894 = vpop.f32.mrf.mxu0
      %v895 = vadd.f32 0.0, %v894
      %v896 = vpop.f32.mrf.mxu0
      %v897 = vadd.f32 0.0, %v896
      %898 = vmatmul.bf16.gmra.mxu0 %v786
      %v899 = vpop.f32.mrf.mxu0
      %v900 = vadd.f32 0.0, %v899
      %v901 = vpop.f32.mrf.mxu0
      %v902 = vadd.f32 0.0, %v901
      %903 = vmatmul.bf16.gmra.mxu0 %v787
      %v904 = vpop.f32.mrf.mxu0
      %v905 = vadd.f32 0.0, %v904
      %v906 = vpop.f32.mrf.mxu0
      %v907 = vadd.f32 0.0, %v906
      %908 = vmatmul.bf16.gmra.mxu0 %v788
      %v909 = vpop.f32.mrf.mxu0
      %v910 = vadd.f32 0.0, %v909
      %v911 = vpop.f32.mrf.mxu0
      %v912 = vadd.f32 0.0, %v911
      %913 = vmatmul.bf16.gmra.mxu0 %v789
      %v914 = vpop.f32.mrf.mxu0
      %v915 = vadd.f32 0.0, %v914
      %v916 = vpop.f32.mrf.mxu0
      %v917 = vadd.f32 0.0, %v916
      %918 = vmatmul.bf16.gmra.mxu0 %v790
      %v919 = vpop.f32.mrf.mxu0
      %v920 = vadd.f32 0.0, %v919
      %v921 = vpop.f32.mrf.mxu0
      %v922 = vadd.f32 0.0, %v921
      %923 = vmatmul.bf16.gmra.mxu0 %v791
      %v924 = vpop.f32.mrf.mxu0
      %v925 = vadd.f32 0.0, %v924
      %v926 = vpop.f32.mrf.mxu0
      %v927 = vadd.f32 0.0, %v926
      %928 = vmatmul.bf16.gmra.mxu0 %v792
      %v929 = vpop.f32.mrf.mxu0
      %v930 = vadd.f32 0.0, %v929
      %v931 = vpop.f32.mrf.mxu0
      %v932 = vadd.f32 0.0, %v931
      %933 = vmatmul.bf16.gmra.mxu0 %v793
      %v934 = vpop.f32.mrf.mxu0
      %v935 = vadd.f32 0.0, %v934
      %v936 = vpop.f32.mrf.mxu0
      %v937 = vadd.f32 0.0, %v936
      %938 = vmatmul.bf16.gmra.mxu0 %v794
      %v939 = vpop.f32.mrf.mxu0
      %v940 = vadd.f32 0.0, %v939
      %v941 = vpop.f32.mrf.mxu0
      %v942 = vadd.f32 0.0, %v941
      %943 = vmatmul.bf16.gmra.mxu0 %v795
      %v944 = vpop.f32.mrf.mxu0
      %v945 = vadd.f32 0.0, %v944
      %v946 = vpop.f32.mrf.mxu0
      %v947 = vadd.f32 0.0, %v946
      %948 = vdwg.mxu0
      %v981 = vunpack.c.l.b16 %v280
      %v982 = vunpack.c.l.b16 %v281
      %v983 = vunpack.c.l.b16 %v282
      %v984 = vunpack.c.l.b16 %v283
      %v985 = vunpack.c.l.b16 %v284
      %v986 = vunpack.c.l.b16 %v285
      %v987 = vunpack.c.l.b16 %v286
      %v988 = vunpack.c.l.b16 %v287
      %v989 = vunpack.c.l.b16 %v288
      %v990 = vunpack.c.l.b16 %v289
      %v991 = vunpack.c.l.b16 %v290
      %v992 = vunpack.c.l.b16 %v291
      %v993 = vunpack.c.l.b16 %v292
      %v994 = vunpack.c.l.b16 %v293
      %v995 = vunpack.c.l.b16 %v294
      %v996 = vunpack.c.l.b16 %v295
      %v997 = vunpack.c.l.b16 %v296
      %v998 = vunpack.c.l.b16 %v297
      %v999 = vunpack.c.l.b16 %v298
      %v1000 = vunpack.c.l.b16 %v299
      %v1001 = vunpack.c.l.b16 %v300
      %v1002 = vunpack.c.l.b16 %v301
      %v1003 = vunpack.c.l.b16 %v302
      %v1004 = vunpack.c.l.b16 %v303
      %v1005 = vunpack.c.l.b16 %v304
      %v1006 = vunpack.c.l.b16 %v305
      %v1007 = vunpack.c.l.b16 %v306
      %v1008 = vunpack.c.l.b16 %v307
      %v1009 = vunpack.c.l.b16 %v308
      %v1010 = vunpack.c.l.b16 %v309
      %v1011 = vunpack.c.l.b16 %v310
      %v1012 = vunpack.c.l.b16 %v311
      %v1013 = vpack.c.b16 %v982, %v981
      %v1014 = vpack.c.b16 %v984, %v983
      %v1015 = vpack.c.b16 %v986, %v985
      %v1016 = vpack.c.b16 %v988, %v987
      %v1017 = vpack.c.b16 %v990, %v989
      %v1018 = vpack.c.b16 %v992, %v991
      %v1019 = vpack.c.b16 %v994, %v993
      %v1020 = vpack.c.b16 %v996, %v995
      %v1021 = vpack.c.b16 %v998, %v997
      %v1022 = vpack.c.b16 %v1000, %v999
      %v1023 = vpack.c.b16 %v1002, %v1001
      %v1024 = vpack.c.b16 %v1004, %v1003
      %v1025 = vpack.c.b16 %v1006, %v1005
      %v1026 = vpack.c.b16 %v1008, %v1007
      %v1027 = vpack.c.b16 %v1010, %v1009
      %v1028 = vpack.c.b16 %v1012, %v1011
      %v1061 = vunpack.c.l.b16 %v312
      %v1062 = vunpack.c.l.b16 %v313
      %v1063 = vunpack.c.l.b16 %v314
      %v1064 = vunpack.c.l.b16 %v315
      %v1065 = vunpack.c.l.b16 %v316
      %v1066 = vunpack.c.l.b16 %v317
      %v1067 = vunpack.c.l.b16 %v318
      %v1068 = vunpack.c.l.b16 %v319
      %v1069 = vunpack.c.l.b16 %v320
      %v1070 = vunpack.c.l.b16 %v321
      %v1071 = vunpack.c.l.b16 %v322
      %v1072 = vunpack.c.l.b16 %v323
      %v1073 = vunpack.c.l.b16 %v324
      %v1074 = vunpack.c.l.b16 %v325
      %v1075 = vunpack.c.l.b16 %v326
      %v1076 = vunpack.c.l.b16 %v327
      %v1077 = vpack.c.b16 %v1062, %v1061
      %v1078 = vpack.c.b16 %v1064, %v1063
      %v1079 = vpack.c.b16 %v1066, %v1065
      %v1080 = vpack.c.b16 %v1068, %v1067
      %v1081 = vpack.c.b16 %v1070, %v1069
      %v1082 = vpack.c.b16 %v1072, %v1071
      %v1083 = vpack.c.b16 %v1074, %v1073
      %v1084 = vpack.c.b16 %v1076, %v1075
      %1093 = vmatpush.bf16.msra.mxu0 %v1084
      %1094 = vmatpush.bf16.msra.mxu0 %v1083
      %1095 = vmatpush.bf16.msra.mxu0 %v1082
      %1096 = vmatpush.bf16.msra.mxu0 %v1081
      %1097 = vmatpush.bf16.msra.mxu0 %v1080
      %1098 = vmatpush.bf16.msra.mxu0 %v1079
      %1099 = vmatpush.bf16.msra.mxu0 %v1078
      %1100 = vmatpush.bf16.msra.mxu0 %v1077
      %1101 = vmatmul.bf16.gmra.mxu0 %v1013
      %v1102 = vpop.f32.mrf.mxu0
      %v1103 = vadd.f32 %v870, %v1102
      %v1104 = vpop.f32.mrf.mxu0
      %v1105 = vadd.f32 %v872, %v1104
      %1106 = vmatmul.bf16.gmra.mxu0 %v1014
      %v1107 = vpop.f32.mrf.mxu0
      %v1108 = vadd.f32 %v875, %v1107
      %v1109 = vpop.f32.mrf.mxu0
      %v1110 = vadd.f32 %v877, %v1109
      %1111 = vmatmul.bf16.gmra.mxu0 %v1015
      %v1112 = vpop.f32.mrf.mxu0
      %v1113 = vadd.f32 %v880, %v1112
      %v1114 = vpop.f32.mrf.mxu0
      %v1115 = vadd.f32 %v882, %v1114
      %1116 = vmatmul.bf16.gmra.mxu0 %v1016
      %v1117 = vpop.f32.mrf.mxu0
      %v1118 = vadd.f32 %v885, %v1117
      %v1119 = vpop.f32.mrf.mxu0
      %v1120 = vadd.f32 %v887, %v1119
      %1121 = vmatmul.bf16.gmra.mxu0 %v1017
      %v1122 = vpop.f32.mrf.mxu0
      %v1123 = vadd.f32 %v890, %v1122
      %v1124 = vpop.f32.mrf.mxu0
      %v1125 = vadd.f32 %v892, %v1124
      %1126 = vmatmul.bf16.gmra.mxu0 %v1018
      %v1127 = vpop.f32.mrf.mxu0
      %v1128 = vadd.f32 %v895, %v1127
      %v1129 = vpop.f32.mrf.mxu0
      %v1130 = vadd.f32 %v897, %v1129
      %1131 = vmatmul.bf16.gmra.mxu0 %v1019
      %v1132 = vpop.f32.mrf.mxu0
      %v1133 = vadd.f32 %v900, %v1132
      %v1134 = vpop.f32.mrf.mxu0
      %v1135 = vadd.f32 %v902, %v1134
      %1136 = vmatmul.bf16.gmra.mxu0 %v1020
      %v1137 = vpop.f32.mrf.mxu0
      %v1138 = vadd.f32 %v905, %v1137
      %v1139 = vpop.f32.mrf.mxu0
      %v1140 = vadd.f32 %v907, %v1139
      %1141 = vmatmul.bf16.gmra.mxu0 %v1021
      %v1142 = vpop.f32.mrf.mxu0
      %v1143 = vadd.f32 %v910, %v1142
      %v1144 = vpop.f32.mrf.mxu0
      %v1145 = vadd.f32 %v912, %v1144
      %1146 = vmatmul.bf16.gmra.mxu0 %v1022
      %v1147 = vpop.f32.mrf.mxu0
      %v1148 = vadd.f32 %v915, %v1147
      %v1149 = vpop.f32.mrf.mxu0
      %v1150 = vadd.f32 %v917, %v1149
      %1151 = vmatmul.bf16.gmra.mxu0 %v1023
      %v1152 = vpop.f32.mrf.mxu0
      %v1153 = vadd.f32 %v920, %v1152
      %v1154 = vpop.f32.mrf.mxu0
      %v1155 = vadd.f32 %v922, %v1154
      %1156 = vmatmul.bf16.gmra.mxu0 %v1024
      %v1157 = vpop.f32.mrf.mxu0
      %v1158 = vadd.f32 %v925, %v1157
      %v1159 = vpop.f32.mrf.mxu0
      %v1160 = vadd.f32 %v927, %v1159
      %1161 = vmatmul.bf16.gmra.mxu0 %v1025
      %v1162 = vpop.f32.mrf.mxu0
      %v1163 = vadd.f32 %v930, %v1162
      %v1164 = vpop.f32.mrf.mxu0
      %v1165 = vadd.f32 %v932, %v1164
      %1166 = vmatmul.bf16.gmra.mxu0 %v1026
      %v1167 = vpop.f32.mrf.mxu0
      %v1168 = vadd.f32 %v935, %v1167
      %v1169 = vpop.f32.mrf.mxu0
      %v1170 = vadd.f32 %v937, %v1169
      %1171 = vmatmul.bf16.gmra.mxu0 %v1027
      %v1172 = vpop.f32.mrf.mxu0
      %v1173 = vadd.f32 %v940, %v1172
      %v1174 = vpop.f32.mrf.mxu0
      %v1175 = vadd.f32 %v942, %v1174
      %1176 = vmatmul.bf16.gmra.mxu0 %v1028
      %v1177 = vpop.f32.mrf.mxu0
      %v1178 = vadd.f32 %v945, %v1177
      %v1179 = vpop.f32.mrf.mxu0
      %v1180 = vadd.f32 %v947, %v1179
      %1181 = vdwg.mxu0
      %v1182 = vld [vmem:[%s273] sm:$0xe]
      %v1183 = vld [vmem:[%s273 + $0xc] sm:$0xe]
      %v1184 = vld [vmem:[%s273 + $0x18] sm:$0xe]
      %v1185 = vld [vmem:[%s273 + $0x24] sm:$0xe]
      %v1186 = vld [vmem:[%s273 + $0x30] sm:$0xe]
      %v1187 = vld [vmem:[%s273 + $0x3c] sm:$0xe]
      %v1188 = vld [vmem:[%s273 + $0x48] sm:$0xe]
      %v1189 = vld [vmem:[%s273 + $0x54] sm:$0xe]
      %v1190 = vld [vmem:[%s273 + $0x60] sm:$0xe]
      %v1191 = vld [vmem:[%s273 + $0x6c] sm:$0xe]
      %v1192 = vld [vmem:[%s273 + $0x78] sm:$0xe]
      %v1193 = vld [vmem:[%s273 + $0x84] sm:$0xe]
      %v1194 = vld [vmem:[%s273 + $0x90] sm:$0xe]
      %v1195 = vld [vmem:[%s273 + $0x9c] sm:$0xe]
      %v1196 = vld [vmem:[%s273 + $0xa8] sm:$0xe]
      %v1197 = vld [vmem:[%s273 + $0xb4] sm:$0xe]
      %vm1230 = vcmask 1042432
      %vm1231 = vcmask 1046532
      %vm1232 = vmor %vm1230, %vm1231
      %v1233 = vrot.slane %v1182, 5
      %v1234 = vrot.slane %v1233, 4
      %v1235 = vrot.slane %v281, 5
      %v1236 = vsel %vm1232, %v1234, %v1235
      %v1237 = vrot.slane %v1235, 4
      %v1238 = vrot.slane %v328, 5
      %v1239 = vsel %vm1232, %v1237, %v1238
      %v1240 = vrot.slane %v1183, 5
      %v1241 = vrot.slane %v1240, 4
      %v1242 = vrot.slane %v283, 5
      %v1243 = vsel %vm1232, %v1241, %v1242
      %v1244 = vrot.slane %v1242, 4
      %v1245 = vrot.slane %v329, 5
      %v1246 = vsel %vm1232, %v1244, %v1245
      %v1247 = vrot.slane %v1184, 5
      %v1248 = vrot.slane %v1247, 4
      %v1249 = vrot.slane %v285, 5
      %v1250 = vsel %vm1232, %v1248, %v1249
      %v1251 = vrot.slane %v1249, 4
      %v1252 = vrot.slane %v330, 5
      %v1253 = vsel %vm1232, %v1251, %v1252
      %v1254 = vrot.slane %v1185, 5
      %v1255 = vrot.slane %v1254, 4
      %v1256 = vrot.slane %v287, 5
      %v1257 = vsel %vm1232, %v1255, %v1256
      %v1258 = vrot.slane %v1256, 4
      %v1259 = vrot.slane %v331, 5
      %v1260 = vsel %vm1232, %v1258, %v1259
      %v1261 = vrot.slane %v1186, 5
      %v1262 = vrot.slane %v1261, 4
      %v1263 = vrot.slane %v289, 5
      %v1264 = vsel %vm1232, %v1262, %v1263
      %v1265 = vrot.slane %v1263, 4
      %v1266 = vrot.slane %v332, 5
      %v1267 = vsel %vm1232, %v1265, %v1266
      %v1268 = vrot.slane %v1187, 5
      %v1269 = vrot.slane %v1268, 4
      %v1270 = vrot.slane %v291, 5
      %v1271 = vsel %vm1232, %v1269, %v1270
      %v1272 = vrot.slane %v1270, 4
      %v1273 = vrot.slane %v333, 5
      %v1274 = vsel %vm1232, %v1272, %v1273
      %v1275 = vrot.slane %v1188, 5
      %v1276 = vrot.slane %v1275, 4
      %v1277 = vrot.slane %v293, 5
      %v1278 = vsel %vm1232, %v1276, %v1277
      %v1279 = vrot.slane %v1277, 4
      %v1280 = vrot.slane %v334, 5
      %v1281 = vsel %vm1232, %v1279, %v1280
      %v1282 = vrot.slane %v1189, 5
      %v1283 = vrot.slane %v1282, 4
      %v1284 = vrot.slane %v295, 5
      %v1285 = vsel %vm1232, %v1283, %v1284
      %v1286 = vrot.slane %v1284, 4
      %v1287 = vrot.slane %v335, 5
      %v1288 = vsel %vm1232, %v1286, %v1287
      %v1289 = vrot.slane %v1190, 5
      %v1290 = vrot.slane %v1289, 4
      %v1291 = vrot.slane %v297, 5
      %v1292 = vsel %vm1232, %v1290, %v1291
      %v1293 = vrot.slane %v1291, 4
      %v1294 = vrot.slane %v336, 5
      %v1295 = vsel %vm1232, %v1293, %v1294
      %v1296 = vrot.slane %v1191, 5
      %v1297 = vrot.slane %v1296, 4
      %v1298 = vrot.slane %v299, 5
      %v1299 = vsel %vm1232, %v1297, %v1298
      %v1300 = vrot.slane %v1298, 4
      %v1301 = vrot.slane %v337, 5
      %v1302 = vsel %vm1232, %v1300, %v1301
      %v1303 = vrot.slane %v1192, 5
      %v1304 = vrot.slane %v1303, 4
      %v1305 = vrot.slane %v301, 5
      %v1306 = vsel %vm1232, %v1304, %v1305
      %v1307 = vrot.slane %v1305, 4
      %v1308 = vrot.slane %v338, 5
      %v1309 = vsel %vm1232, %v1307, %v1308
      %v1310 = vrot.slane %v1193, 5
      %v1311 = vrot.slane %v1310, 4
      %v1312 = vrot.slane %v303, 5
      %v1313 = vsel %vm1232, %v1311, %v1312
      %v1314 = vrot.slane %v1312, 4
      %v1315 = vrot.slane %v339, 5
      %v1316 = vsel %vm1232, %v1314, %v1315
      %v1317 = vrot.slane %v1194, 5
      %v1318 = vrot.slane %v1317, 4
      %v1319 = vrot.slane %v305, 5
      %v1320 = vsel %vm1232, %v1318, %v1319
      %v1321 = vrot.slane %v1319, 4
      %v1322 = vrot.slane %v340, 5
      %v1323 = vsel %vm1232, %v1321, %v1322
      %v1324 = vrot.slane %v1195, 5
      %v1325 = vrot.slane %v1324, 4
      %v1326 = vrot.slane %v307, 5
      %v1327 = vsel %vm1232, %v1325, %v1326
      %v1328 = vrot.slane %v1326, 4
      %v1329 = vrot.slane %v341, 5
      %v1330 = vsel %vm1232, %v1328, %v1329
      %v1331 = vrot.slane %v1196, 5
      %v1332 = vrot.slane %v1331, 4
      %v1333 = vrot.slane %v309, 5
      %v1334 = vsel %vm1232, %v1332, %v1333
      %v1335 = vrot.slane %v1333, 4
      %v1336 = vrot.slane %v342, 5
      %v1337 = vsel %vm1232, %v1335, %v1336
      %v1338 = vrot.slane %v1197, 5
      %v1339 = vrot.slane %v1338, 4
      %v1340 = vrot.slane %v311, 5
      %v1341 = vsel %vm1232, %v1339, %v1340
      %v1342 = vrot.slane %v1340, 4
      %v1343 = vrot.slane %v343, 5
      %v1344 = vsel %vm1232, %v1342, %v1343
      %s1345 = scalar_lea.vmem %s1, 128
      %v1346 = vld [vmem:[%s1345] sm:$0xf]
      %v1347 = vld [vmem:[%s1345 + $0x4] sm:$0xf]
      %v1348 = vld [vmem:[%s1345 + $0x8] sm:$0xf]
      %v1349 = vld [vmem:[%s1345 + $0xc] sm:$0xf]
      %v1350 = vld [vmem:[%s1345 + $0x10] sm:$0xf]
      %v1351 = vld [vmem:[%s1345 + $0x14] sm:$0xf]
      %v1352 = vld [vmem:[%s1345 + $0x18] sm:$0xf]
      %v1353 = vld [vmem:[%s1345 + $0x1c] sm:$0xf]
      %v1354 = vld [vmem:[%s1345 + $0x20] sm:$0xf]
      %v1355 = vld [vmem:[%s1345 + $0x24] sm:$0xf]
      %v1356 = vld [vmem:[%s1345 + $0x28] sm:$0xf]
      %v1357 = vld [vmem:[%s1345 + $0x2c] sm:$0xf]
      %v1358 = vld [vmem:[%s1345 + $0x30] sm:$0xf]
      %v1359 = vld [vmem:[%s1345 + $0x34] sm:$0xf]
      %v1360 = vld [vmem:[%s1345 + $0x38] sm:$0xf]
      %v1361 = vld [vmem:[%s1345 + $0x3c] sm:$0xf]
      %v1362 = vunpack.c.l.b16 %v1236
      %v1363 = vunpack.c.l.b16 %v1239
      %v1364 = vunpack.c.l.b16 %v1243
      %v1365 = vunpack.c.l.b16 %v1246
      %v1366 = vunpack.c.l.b16 %v1250
      %v1367 = vunpack.c.l.b16 %v1253
      %v1368 = vunpack.c.l.b16 %v1257
      %v1369 = vunpack.c.l.b16 %v1260
      %v1370 = vunpack.c.l.b16 %v1264
      %v1371 = vunpack.c.l.b16 %v1267
      %v1372 = vunpack.c.l.b16 %v1271
      %v1373 = vunpack.c.l.b16 %v1274
      %v1374 = vunpack.c.l.b16 %v1278
      %v1375 = vunpack.c.l.b16 %v1281
      %v1376 = vunpack.c.l.b16 %v1285
      %v1377 = vunpack.c.l.b16 %v1288
      %v1378 = vunpack.c.l.b16 %v1292
      %v1379 = vunpack.c.l.b16 %v1295
      %v1380 = vunpack.c.l.b16 %v1299
      %v1381 = vunpack.c.l.b16 %v1302
      %v1382 = vunpack.c.l.b16 %v1306
      %v1383 = vunpack.c.l.b16 %v1309
      %v1384 = vunpack.c.l.b16 %v1313
      %v1385 = vunpack.c.l.b16 %v1316
      %v1386 = vunpack.c.l.b16 %v1320
      %v1387 = vunpack.c.l.b16 %v1323
      %v1388 = vunpack.c.l.b16 %v1327
      %v1389 = vunpack.c.l.b16 %v1330
      %v1390 = vunpack.c.l.b16 %v1334
      %v1391 = vunpack.c.l.b16 %v1337
      %v1392 = vunpack.c.l.b16 %v1341
      %v1393 = vunpack.c.l.b16 %v1344
      %v1394 = vpack.c.b16 %v1363, %v1362
      %v1395 = vpack.c.b16 %v1365, %v1364
      %v1396 = vpack.c.b16 %v1367, %v1366
      %v1397 = vpack.c.b16 %v1369, %v1368
      %v1398 = vpack.c.b16 %v1371, %v1370
      %v1399 = vpack.c.b16 %v1373, %v1372
      %v1400 = vpack.c.b16 %v1375, %v1374
      %v1401 = vpack.c.b16 %v1377, %v1376
      %v1402 = vpack.c.b16 %v1379, %v1378
      %v1403 = vpack.c.b16 %v1381, %v1380
      %v1404 = vpack.c.b16 %v1383, %v1382
      %v1405 = vpack.c.b16 %v1385, %v1384
      %v1406 = vpack.c.b16 %v1387, %v1386
      %v1407 = vpack.c.b16 %v1389, %v1388
      %v1408 = vpack.c.b16 %v1391, %v1390
      %v1409 = vpack.c.b16 %v1393, %v1392
      %v1442 = vunpack.c.l.b16 %v1346
      %v1443 = vunpack.c.l.b16 %v1347
      %v1444 = vunpack.c.l.b16 %v1348
      %v1445 = vunpack.c.l.b16 %v1349
      %v1446 = vunpack.c.l.b16 %v1350
      %v1447 = vunpack.c.l.b16 %v1351
      %v1448 = vunpack.c.l.b16 %v1352
      %v1449 = vunpack.c.l.b16 %v1353
      %v1450 = vunpack.c.l.b16 %v1354
      %v1451 = vunpack.c.l.b16 %v1355
      %v1452 = vunpack.c.l.b16 %v1356
      %v1453 = vunpack.c.l.b16 %v1357
      %v1454 = vunpack.c.l.b16 %v1358
      %v1455 = vunpack.c.l.b16 %v1359
      %v1456 = vunpack.c.l.b16 %v1360
      %v1457 = vunpack.c.l.b16 %v1361
      %v1458 = vpack.c.b16 %v1443, %v1442
      %v1459 = vpack.c.b16 %v1445, %v1444
      %v1460 = vpack.c.b16 %v1447, %v1446
      %v1461 = vpack.c.b16 %v1449, %v1448
      %v1462 = vpack.c.b16 %v1451, %v1450
      %v1463 = vpack.c.b16 %v1453, %v1452
      %v1464 = vpack.c.b16 %v1455, %v1454
      %v1465 = vpack.c.b16 %v1457, %v1456
      %1474 = vmatpush.bf16.msra.mxu0 %v1465
      %1475 = vmatpush.bf16.msra.mxu0 %v1464
      %1476 = vmatpush.bf16.msra.mxu0 %v1463
      %1477 = vmatpush.bf16.msra.mxu0 %v1462
      %1478 = vmatpush.bf16.msra.mxu0 %v1461
      %1479 = vmatpush.bf16.msra.mxu0 %v1460
      %1480 = vmatpush.bf16.msra.mxu0 %v1459
      %1481 = vmatpush.bf16.msra.mxu0 %v1458
      %1482 = vmatmul.bf16.gmra.mxu0 %v1394
      %v1483 = vpop.f32.mrf.mxu0
      %v1484 = vadd.f32 0.0, %v1483
      %v1485 = vpop.f32.mrf.mxu0
      %v1486 = vadd.f32 0.0, %v1485
      %1487 = vmatmul.bf16.gmra.mxu0 %v1395
      %v1488 = vpop.f32.mrf.mxu0
      %v1489 = vadd.f32 0.0, %v1488
      %v1490 = vpop.f32.mrf.mxu0
      %v1491 = vadd.f32 0.0, %v1490
      %1492 = vmatmul.bf16.gmra.mxu0 %v1396
      %v1493 = vpop.f32.mrf.mxu0
      %v1494 = vadd.f32 0.0, %v1493
      %v1495 = vpop.f32.mrf.mxu0
      %v1496 = vadd.f32 0.0, %v1495
      %1497 = vmatmul.bf16.gmra.mxu0 %v1397
      %v1498 = vpop.f32.mrf.mxu0
      %v1499 = vadd.f32 0.0, %v1498
      %v1500 = vpop.f32.mrf.mxu0
      %v1501 = vadd.f32 0.0, %v1500
      %1502 = vmatmul.bf16.gmra.mxu0 %v1398
      %v1503 = vpop.f32.mrf.mxu0
      %v1504 = vadd.f32 0.0, %v1503
      %v1505 = vpop.f32.mrf.mxu0
      %v1506 = vadd.f32 0.0, %v1505
      %1507 = vmatmul.bf16.gmra.mxu0 %v1399
      %v1508 = vpop.f32.mrf.mxu0
      %v1509 = vadd.f32 0.0, %v1508
      %v1510 = vpop.f32.mrf.mxu0
      %v1511 = vadd.f32 0.0, %v1510
      %1512 = vmatmul.bf16.gmra.mxu0 %v1400
      %v1513 = vpop.f32.mrf.mxu0
      %v1514 = vadd.f32 0.0, %v1513
      %v1515 = vpop.f32.mrf.mxu0
      %v1516 = vadd.f32 0.0, %v1515
      %1517 = vmatmul.bf16.gmra.mxu0 %v1401
      %v1518 = vpop.f32.mrf.mxu0
      %v1519 = vadd.f32 0.0, %v1518
      %v1520 = vpop.f32.mrf.mxu0
      %v1521 = vadd.f32 0.0, %v1520
      %1522 = vmatmul.bf16.gmra.mxu0 %v1402
      %v1523 = vpop.f32.mrf.mxu0
      %v1524 = vadd.f32 0.0, %v1523
      %v1525 = vpop.f32.mrf.mxu0
      %v1526 = vadd.f32 0.0, %v1525
      %1527 = vmatmul.bf16.gmra.mxu0 %v1403
      %v1528 = vpop.f32.mrf.mxu0
      %v1529 = vadd.f32 0.0, %v1528
      %v1530 = vpop.f32.mrf.mxu0
      %v1531 = vadd.f32 0.0, %v1530
      %1532 = vmatmul.bf16.gmra.mxu0 %v1404
      %v1533 = vpop.f32.mrf.mxu0
      %v1534 = vadd.f32 0.0, %v1533
      %v1535 = vpop.f32.mrf.mxu0
      %v1536 = vadd.f32 0.0, %v1535
      %1537 = vmatmul.bf16.gmra.mxu0 %v1405
      %v1538 = vpop.f32.mrf.mxu0
      %v1539 = vadd.f32 0.0, %v1538
      %v1540 = vpop.f32.mrf.mxu0
      %v1541 = vadd.f32 0.0, %v1540
      %1542 = vmatmul.bf16.gmra.mxu0 %v1406
      %v1543 = vpop.f32.mrf.mxu0
      %v1544 = vadd.f32 0.0, %v1543
      %v1545 = vpop.f32.mrf.mxu0
      %v1546 = vadd.f32 0.0, %v1545
      %1547 = vmatmul.bf16.gmra.mxu0 %v1407
      %v1548 = vpop.f32.mrf.mxu0
      %v1549 = vadd.f32 0.0, %v1548
      %v1550 = vpop.f32.mrf.mxu0
      %v1551 = vadd.f32 0.0, %v1550
      %1552 = vmatmul.bf16.gmra.mxu0 %v1408
      %v1553 = vpop.f32.mrf.mxu0
      %v1554 = vadd.f32 0.0, %v1553
      %v1555 = vpop.f32.mrf.mxu0
      %v1556 = vadd.f32 0.0, %v1555
      %1557 = vmatmul.bf16.gmra.mxu0 %v1409
      %v1558 = vpop.f32.mrf.mxu0
      %v1559 = vadd.f32 0.0, %v1558
      %v1560 = vpop.f32.mrf.mxu0
      %v1561 = vadd.f32 0.0, %v1560
      %1562 = vdwg.mxu0
      %v1563 = vadd.f32 %v1103, %v1484
      %v1564 = vadd.f32 %v1105, %v1486
      %v1565 = vadd.f32 %v1108, %v1489
      %v1566 = vadd.f32 %v1110, %v1491
      %v1567 = vadd.f32 %v1113, %v1494
      %v1568 = vadd.f32 %v1115, %v1496
      %v1569 = vadd.f32 %v1118, %v1499
      %v1570 = vadd.f32 %v1120, %v1501
      %v1571 = vadd.f32 %v1123, %v1504
      %v1572 = vadd.f32 %v1125, %v1506
      %v1573 = vadd.f32 %v1128, %v1509
      %v1574 = vadd.f32 %v1130, %v1511
      %v1575 = vadd.f32 %v1133, %v1514
      %v1576 = vadd.f32 %v1135, %v1516
      %v1577 = vadd.f32 %v1138, %v1519
      %v1578 = vadd.f32 %v1140, %v1521
      %v1579 = vadd.f32 %v1143, %v1524
      %v1580 = vadd.f32 %v1145, %v1526
      %v1581 = vadd.f32 %v1148, %v1529
      %v1582 = vadd.f32 %v1150, %v1531
      %v1583 = vadd.f32 %v1153, %v1534
      %v1584 = vadd.f32 %v1155, %v1536
      %v1585 = vadd.f32 %v1158, %v1539
      %v1586 = vadd.f32 %v1160, %v1541
      %v1587 = vadd.f32 %v1163, %v1544
      %v1588 = vadd.f32 %v1165, %v1546
      %v1589 = vadd.f32 %v1168, %v1549
      %v1590 = vadd.f32 %v1170, %v1551
      %v1591 = vadd.f32 %v1173, %v1554
      %v1592 = vadd.f32 %v1175, %v1556
      %v1593 = vadd.f32 %v1178, %v1559
      %v1594 = vadd.f32 %v1180, %v1561
      %s1595 = scalar_lea.vmem %s273, 12
      %v1596 = vld [vmem:[%s1595] sm:$0xf]
      %v1597 = vld [vmem:[%s1595 + $0x4] sm:$0xf]
      %v1598 = vld [vmem:[%s1595 + $0xc] sm:$0xf]
      %v1599 = vld [vmem:[%s1595 + $0x10] sm:$0xf]
      %v1600 = vld [vmem:[%s1595 + $0x18] sm:$0xf]
      %v1601 = vld [vmem:[%s1595 + $0x1c] sm:$0xf]
      %v1602 = vld [vmem:[%s1595 + $0x24] sm:$0xf]
      %v1603 = vld [vmem:[%s1595 + $0x28] sm:$0xf]
      %v1604 = vld [vmem:[%s1595 + $0x30] sm:$0xf]
      %v1605 = vld [vmem:[%s1595 + $0x34] sm:$0xf]
      %v1606 = vld [vmem:[%s1595 + $0x3c] sm:$0xf]
      %v1607 = vld [vmem:[%s1595 + $0x40] sm:$0xf]
      %v1608 = vld [vmem:[%s1595 + $0x48] sm:$0xf]
      %v1609 = vld [vmem:[%s1595 + $0x4c] sm:$0xf]
      %v1610 = vld [vmem:[%s1595 + $0x54] sm:$0xf]
      %v1611 = vld [vmem:[%s1595 + $0x58] sm:$0xf]
      %v1612 = vld [vmem:[%s1595 + $0x60] sm:$0xf]
      %v1613 = vld [vmem:[%s1595 + $0x64] sm:$0xf]
      %v1614 = vld [vmem:[%s1595 + $0x6c] sm:$0xf]
      %v1615 = vld [vmem:[%s1595 + $0x70] sm:$0xf]
      %v1616 = vld [vmem:[%s1595 + $0x78] sm:$0xf]
      %v1617 = vld [vmem:[%s1595 + $0x7c] sm:$0xf]
      %v1618 = vld [vmem:[%s1595 + $0x84] sm:$0xf]
      %v1619 = vld [vmem:[%s1595 + $0x88] sm:$0xf]
      %v1620 = vld [vmem:[%s1595 + $0x90] sm:$0xf]
      %v1621 = vld [vmem:[%s1595 + $0x94] sm:$0xf]
      %v1622 = vld [vmem:[%s1595 + $0x9c] sm:$0xf]
      %v1623 = vld [vmem:[%s1595 + $0xa0] sm:$0xf]
      %v1624 = vld [vmem:[%s1595 + $0xa8] sm:$0xf]
      %v1625 = vld [vmem:[%s1595 + $0xac] sm:$0xf]
      %v1626 = vld [vmem:[%s1595 + $0xb4] sm:$0xf]
      %v1627 = vld [vmem:[%s1595 + $0xb8] sm:$0xf]
      %s1628 = scalar_lea.vmem %s1, 192
      %v1629 = vld [vmem:[%s1628] sm:$0xf]
      %v1630 = vld [vmem:[%s1628 + $0x4] sm:$0xf]
      %v1631 = vld [vmem:[%s1628 + $0x8] sm:$0xf]
      %v1632 = vld [vmem:[%s1628 + $0xc] sm:$0xf]
      %v1633 = vld [vmem:[%s1628 + $0x10] sm:$0xf]
      %v1634 = vld [vmem:[%s1628 + $0x14] sm:$0xf]
      %v1635 = vld [vmem:[%s1628 + $0x18] sm:$0xf]
      %v1636 = vld [vmem:[%s1628 + $0x1c] sm:$0xf]
      %v1637 = vld [vmem:[%s1628 + $0x20] sm:$0xf]
      %v1638 = vld [vmem:[%s1628 + $0x24] sm:$0xf]
      %v1639 = vld [vmem:[%s1628 + $0x28] sm:$0xf]
      %v1640 = vld [vmem:[%s1628 + $0x2c] sm:$0xf]
      %v1641 = vld [vmem:[%s1628 + $0x30] sm:$0xf]
      %v1642 = vld [vmem:[%s1628 + $0x34] sm:$0xf]
      %v1643 = vld [vmem:[%s1628 + $0x38] sm:$0xf]
      %v1644 = vld [vmem:[%s1628 + $0x3c] sm:$0xf]
      %v1677 = vunpack.c.l.b16 %v1596
      %v1678 = vunpack.c.l.b16 %v1597
      %v1679 = vunpack.c.l.b16 %v1598
      %v1680 = vunpack.c.l.b16 %v1599
      %v1681 = vunpack.c.l.b16 %v1600
      %v1682 = vunpack.c.l.b16 %v1601
      %v1683 = vunpack.c.l.b16 %v1602
      %v1684 = vunpack.c.l.b16 %v1603
      %v1685 = vunpack.c.l.b16 %v1604
      %v1686 = vunpack.c.l.b16 %v1605
      %v1687 = vunpack.c.l.b16 %v1606
      %v1688 = vunpack.c.l.b16 %v1607
      %v1689 = vunpack.c.l.b16 %v1608
      %v1690 = vunpack.c.l.b16 %v1609
      %v1691 = vunpack.c.l.b16 %v1610
      %v1692 = vunpack.c.l.b16 %v1611
      %v1693 = vunpack.c.l.b16 %v1612
      %v1694 = vunpack.c.l.b16 %v1613
      %v1695 = vunpack.c.l.b16 %v1614
      %v1696 = vunpack.c.l.b16 %v1615
      %v1697 = vunpack.c.l.b16 %v1616
      %v1698 = vunpack.c.l.b16 %v1617
      %v1699 = vunpack.c.l.b16 %v1618
      %v1700 = vunpack.c.l.b16 %v1619
      %v1701 = vunpack.c.l.b16 %v1620
      %v1702 = vunpack.c.l.b16 %v1621
      %v1703 = vunpack.c.l.b16 %v1622
      %v1704 = vunpack.c.l.b16 %v1623
      %v1705 = vunpack.c.l.b16 %v1624
      %v1706 = vunpack.c.l.b16 %v1625
      %v1707 = vunpack.c.l.b16 %v1626
      %v1708 = vunpack.c.l.b16 %v1627
      %v1709 = vpack.c.b16 %v1678, %v1677
      %v1710 = vpack.c.b16 %v1680, %v1679
      %v1711 = vpack.c.b16 %v1682, %v1681
      %v1712 = vpack.c.b16 %v1684, %v1683
      %v1713 = vpack.c.b16 %v1686, %v1685
      %v1714 = vpack.c.b16 %v1688, %v1687
      %v1715 = vpack.c.b16 %v1690, %v1689
      %v1716 = vpack.c.b16 %v1692, %v1691
      %v1717 = vpack.c.b16 %v1694, %v1693
      %v1718 = vpack.c.b16 %v1696, %v1695
      %v1719 = vpack.c.b16 %v1698, %v1697
      %v1720 = vpack.c.b16 %v1700, %v1699
      %v1721 = vpack.c.b16 %v1702, %v1701
      %v1722 = vpack.c.b16 %v1704, %v1703
      %v1723 = vpack.c.b16 %v1706, %v1705
      %v1724 = vpack.c.b16 %v1708, %v1707
      %v1757 = vunpack.c.l.b16 %v1629
      %v1758 = vunpack.c.l.b16 %v1630
      %v1759 = vunpack.c.l.b16 %v1631
      %v1760 = vunpack.c.l.b16 %v1632
      %v1761 = vunpack.c.l.b16 %v1633
      %v1762 = vunpack.c.l.b16 %v1634
      %v1763 = vunpack.c.l.b16 %v1635
      %v1764 = vunpack.c.l.b16 %v1636
      %v1765 = vunpack.c.l.b16 %v1637
      %v1766 = vunpack.c.l.b16 %v1638
      %v1767 = vunpack.c.l.b16 %v1639
      %v1768 = vunpack.c.l.b16 %v1640
      %v1769 = vunpack.c.l.b16 %v1641
      %v1770 = vunpack.c.l.b16 %v1642
      %v1771 = vunpack.c.l.b16 %v1643
      %v1772 = vunpack.c.l.b16 %v1644
      %v1773 = vpack.c.b16 %v1758, %v1757
      %v1774 = vpack.c.b16 %v1760, %v1759
      %v1775 = vpack.c.b16 %v1762, %v1761
      %v1776 = vpack.c.b16 %v1764, %v1763
      %v1777 = vpack.c.b16 %v1766, %v1765
      %v1778 = vpack.c.b16 %v1768, %v1767
      %v1779 = vpack.c.b16 %v1770, %v1769
      %v1780 = vpack.c.b16 %v1772, %v1771
      %1789 = vmatpush.bf16.msra.mxu0 %v1780
      %1790 = vmatpush.bf16.msra.mxu0 %v1779
      %1791 = vmatpush.bf16.msra.mxu0 %v1778
      %1792 = vmatpush.bf16.msra.mxu0 %v1777
      %1793 = vmatpush.bf16.msra.mxu0 %v1776
      %1794 = vmatpush.bf16.msra.mxu0 %v1775
      %1795 = vmatpush.bf16.msra.mxu0 %v1774
      %1796 = vmatpush.bf16.msra.mxu0 %v1773
      %1797 = vmatmul.bf16.gmra.mxu0 %v1709
      %v1798 = vpop.f32.mrf.mxu0
      %v1799 = vadd.f32 0.0, %v1798
      %v1800 = vpop.f32.mrf.mxu0
      %v1801 = vadd.f32 0.0, %v1800
      %1802 = vmatmul.bf16.gmra.mxu0 %v1710
      %v1803 = vpop.f32.mrf.mxu0
      %v1804 = vadd.f32 0.0, %v1803
      %v1805 = vpop.f32.mrf.mxu0
      %v1806 = vadd.f32 0.0, %v1805
      %1807 = vmatmul.bf16.gmra.mxu0 %v1711
      %v1808 = vpop.f32.mrf.mxu0
      %v1809 = vadd.f32 0.0, %v1808
      %v1810 = vpop.f32.mrf.mxu0
      %v1811 = vadd.f32 0.0, %v1810
      %1812 = vmatmul.bf16.gmra.mxu0 %v1712
      %v1813 = vpop.f32.mrf.mxu0
      %v1814 = vadd.f32 0.0, %v1813
      %v1815 = vpop.f32.mrf.mxu0
      %v1816 = vadd.f32 0.0, %v1815
      %1817 = vmatmul.bf16.gmra.mxu0 %v1713
      %v1818 = vpop.f32.mrf.mxu0
      %v1819 = vadd.f32 0.0, %v1818
      %v1820 = vpop.f32.mrf.mxu0
      %v1821 = vadd.f32 0.0, %v1820
      %1822 = vmatmul.bf16.gmra.mxu0 %v1714
      %v1823 = vpop.f32.mrf.mxu0
      %v1824 = vadd.f32 0.0, %v1823
      %v1825 = vpop.f32.mrf.mxu0
      %v1826 = vadd.f32 0.0, %v1825
      %1827 = vmatmul.bf16.gmra.mxu0 %v1715
      %v1828 = vpop.f32.mrf.mxu0
      %v1829 = vadd.f32 0.0, %v1828
      %v1830 = vpop.f32.mrf.mxu0
      %v1831 = vadd.f32 0.0, %v1830
      %1832 = vmatmul.bf16.gmra.mxu0 %v1716
      %v1833 = vpop.f32.mrf.mxu0
      %v1834 = vadd.f32 0.0, %v1833
      %v1835 = vpop.f32.mrf.mxu0
      %v1836 = vadd.f32 0.0, %v1835
      %1837 = vmatmul.bf16.gmra.mxu0 %v1717
      %v1838 = vpop.f32.mrf.mxu0
      %v1839 = vadd.f32 0.0, %v1838
      %v1840 = vpop.f32.mrf.mxu0
      %v1841 = vadd.f32 0.0, %v1840
      %1842 = vmatmul.bf16.gmra.mxu0 %v1718
      %v1843 = vpop.f32.mrf.mxu0
      %v1844 = vadd.f32 0.0, %v1843
      %v1845 = vpop.f32.mrf.mxu0
      %v1846 = vadd.f32 0.0, %v1845
      %1847 = vmatmul.bf16.gmra.mxu0 %v1719
      %v1848 = vpop.f32.mrf.mxu0
      %v1849 = vadd.f32 0.0, %v1848
      %v1850 = vpop.f32.mrf.mxu0
      %v1851 = vadd.f32 0.0, %v1850
      %1852 = vmatmul.bf16.gmra.mxu0 %v1720
      %v1853 = vpop.f32.mrf.mxu0
      %v1854 = vadd.f32 0.0, %v1853
      %v1855 = vpop.f32.mrf.mxu0
      %v1856 = vadd.f32 0.0, %v1855
      %1857 = vmatmul.bf16.gmra.mxu0 %v1721
      %v1858 = vpop.f32.mrf.mxu0
      %v1859 = vadd.f32 0.0, %v1858
      %v1860 = vpop.f32.mrf.mxu0
      %v1861 = vadd.f32 0.0, %v1860
      %1862 = vmatmul.bf16.gmra.mxu0 %v1722
      %v1863 = vpop.f32.mrf.mxu0
      %v1864 = vadd.f32 0.0, %v1863
      %v1865 = vpop.f32.mrf.mxu0
      %v1866 = vadd.f32 0.0, %v1865
      %1867 = vmatmul.bf16.gmra.mxu0 %v1723
      %v1868 = vpop.f32.mrf.mxu0
      %v1869 = vadd.f32 0.0, %v1868
      %v1870 = vpop.f32.mrf.mxu0
      %v1871 = vadd.f32 0.0, %v1870
      %1872 = vmatmul.bf16.gmra.mxu0 %v1724
      %v1873 = vpop.f32.mrf.mxu0
      %v1874 = vadd.f32 0.0, %v1873
      %v1875 = vpop.f32.mrf.mxu0
      %v1876 = vadd.f32 0.0, %v1875
      %1877 = vdwg.mxu0
      %v1878 = vadd.f32 %v1563, %v1799
      %v1879 = vadd.f32 %v1564, %v1801
      %v1880 = vadd.f32 %v1565, %v1804
      %v1881 = vadd.f32 %v1566, %v1806
      %v1882 = vadd.f32 %v1567, %v1809
      %v1883 = vadd.f32 %v1568, %v1811
      %v1884 = vadd.f32 %v1569, %v1814
      %v1885 = vadd.f32 %v1570, %v1816
      %v1886 = vadd.f32 %v1571, %v1819
      %v1887 = vadd.f32 %v1572, %v1821
      %v1888 = vadd.f32 %v1573, %v1824
      %v1889 = vadd.f32 %v1574, %v1826
      %v1890 = vadd.f32 %v1575, %v1829
      %v1891 = vadd.f32 %v1576, %v1831
      %v1892 = vadd.f32 %v1577, %v1834
      %v1893 = vadd.f32 %v1578, %v1836
      %v1894 = vadd.f32 %v1579, %v1839
      %v1895 = vadd.f32 %v1580, %v1841
      %v1896 = vadd.f32 %v1581, %v1844
      %v1897 = vadd.f32 %v1582, %v1846
      %v1898 = vadd.f32 %v1583, %v1849
      %v1899 = vadd.f32 %v1584, %v1851
      %v1900 = vadd.f32 %v1585, %v1854
      %v1901 = vadd.f32 %v1586, %v1856
      %v1902 = vadd.f32 %v1587, %v1859
      %v1903 = vadd.f32 %v1588, %v1861
      %v1904 = vadd.f32 %v1589, %v1864
      %v1905 = vadd.f32 %v1590, %v1866
      %v1906 = vadd.f32 %v1591, %v1869
      %v1907 = vadd.f32 %v1592, %v1871
      %v1908 = vadd.f32 %v1593, %v1874
      %v1909 = vadd.f32 %v1594, %v1876
      %v1910 = vld [vmem:[%s1595] sm:$0xf]
      %v1911 = vld [vmem:[%s1595 + $0x4] sm:$0xf]
      %v1912 = vld [vmem:[%s1595 + $0x8] sm:$0x1]
      %v1913 = vld [vmem:[%s1595 + $0xc] sm:$0xf]
      %v1914 = vld [vmem:[%s1595 + $0x10] sm:$0xf]
      %v1915 = vld [vmem:[%s1595 + $0x14] sm:$0x1]
      %v1916 = vld [vmem:[%s1595 + $0x18] sm:$0xf]
      %v1917 = vld [vmem:[%s1595 + $0x1c] sm:$0xf]
      %v1918 = vld [vmem:[%s1595 + $0x20] sm:$0x1]
      %v1919 = vld [vmem:[%s1595 + $0x24] sm:$0xf]
      %v1920 = vld [vmem:[%s1595 + $0x28] sm:$0xf]
      %v1921 = vld [vmem:[%s1595 + $0x2c] sm:$0x1]
      %v1922 = vld [vmem:[%s1595 + $0x30] sm:$0xf]
      %v1923 = vld [vmem:[%s1595 + $0x34] sm:$0xf]
      %v1924 = vld [vmem:[%s1595 + $0x38] sm:$0x1]
      %v1925 = vld [vmem:[%s1595 + $0x3c] sm:$0xf]
      %v1926 = vld [vmem:[%s1595 + $0x40] sm:$0xf]
      %v1927 = vld [vmem:[%s1595 + $0x44] sm:$0x1]
      %v1928 = vld [vmem:[%s1595 + $0x48] sm:$0xf]
      %v1929 = vld [vmem:[%s1595 + $0x4c] sm:$0xf]
      %v1930 = vld [vmem:[%s1595 + $0x50] sm:$0x1]
      %v1931 = vld [vmem:[%s1595 + $0x54] sm:$0xf]
      %v1932 = vld [vmem:[%s1595 + $0x58] sm:$0xf]
      %v1933 = vld [vmem:[%s1595 + $0x5c] sm:$0x1]
      %v1934 = vld [vmem:[%s1595 + $0x60] sm:$0xf]
      %v1935 = vld [vmem:[%s1595 + $0x64] sm:$0xf]
      %v1936 = vld [vmem:[%s1595 + $0x68] sm:$0x1]
      %v1937 = vld [vmem:[%s1595 + $0x6c] sm:$0xf]
      %v1938 = vld [vmem:[%s1595 + $0x70] sm:$0xf]
      %v1939 = vld [vmem:[%s1595 + $0x74] sm:$0x1]
      %v1940 = vld [vmem:[%s1595 + $0x78] sm:$0xf]
      %v1941 = vld [vmem:[%s1595 + $0x7c] sm:$0xf]
      %v1942 = vld [vmem:[%s1595 + $0x80] sm:$0x1]
      %v1943 = vld [vmem:[%s1595 + $0x84] sm:$0xf]
      %v1944 = vld [vmem:[%s1595 + $0x88] sm:$0xf]
      %v1945 = vld [vmem:[%s1595 + $0x8c] sm:$0x1]
      %v1946 = vld [vmem:[%s1595 + $0x90] sm:$0xf]
      %v1947 = vld [vmem:[%s1595 + $0x94] sm:$0xf]
      %v1948 = vld [vmem:[%s1595 + $0x98] sm:$0x1]
      %v1949 = vld [vmem:[%s1595 + $0x9c] sm:$0xf]
      %v1950 = vld [vmem:[%s1595 + $0xa0] sm:$0xf]
      %v1951 = vld [vmem:[%s1595 + $0xa4] sm:$0x1]
      %v1952 = vld [vmem:[%s1595 + $0xa8] sm:$0xf]
      %v1953 = vld [vmem:[%s1595 + $0xac] sm:$0xf]
      %v1954 = vld [vmem:[%s1595 + $0xb0] sm:$0x1]
      %v1955 = vld [vmem:[%s1595 + $0xb4] sm:$0xf]
      %v1956 = vld [vmem:[%s1595 + $0xb8] sm:$0xf]
      %v1957 = vld [vmem:[%s1595 + $0xbc] sm:$0x1]
      %v1959 = vshrl.u32 %v1910, 16
      %v1961 = vrot.slane %v1959, 4
      %v1962 = vshll.u32 %v1910, 16
      %v1964 = vrot.slane %v1962, 5
      %v1965 = vor.u32 %v1961, %v1964
      %v1966 = vrot.slane %v1965, 4
      %v1968 = vshll.u32 %v1911, 16
      %v1970 = vrot.slane %v1968, 5
      %v1971 = vsel %vm346, %v1966, %v1970
      %v1972 = vshrl.u32 %v1911, 16
      %v1974 = vrot.slane %v1972, 4
      %v1975 = vor.u32 %v1974, %v1970
      %v1976 = vrot.slane %v1975, 4
      %v1978 = vshll.u32 %v1912, 16
      %v1980 = vrot.slane %v1978, 5
      %v1981 = vsel %vm346, %v1976, %v1980
      %v1983 = vshrl.u32 %v1913, 16
      %v1985 = vrot.slane %v1983, 4
      %v1986 = vshll.u32 %v1913, 16
      %v1988 = vrot.slane %v1986, 5
      %v1989 = vor.u32 %v1985, %v1988
      %v1990 = vrot.slane %v1989, 4
      %v1992 = vshll.u32 %v1914, 16
      %v1994 = vrot.slane %v1992, 5
      %v1995 = vsel %vm346, %v1990, %v1994
      %v1996 = vshrl.u32 %v1914, 16
      %v1998 = vrot.slane %v1996, 4
      %v1999 = vor.u32 %v1998, %v1994
      %v2000 = vrot.slane %v1999, 4
      %v2002 = vshll.u32 %v1915, 16
      %v2004 = vrot.slane %v2002, 5
      %v2005 = vsel %vm346, %v2000, %v2004
      %v2007 = vshrl.u32 %v1916, 16
      %v2009 = vrot.slane %v2007, 4
      %v2010 = vshll.u32 %v1916, 16
      %v2012 = vrot.slane %v2010, 5
      %v2013 = vor.u32 %v2009, %v2012
      %v2014 = vrot.slane %v2013, 4
      %v2016 = vshll.u32 %v1917, 16
      %v2018 = vrot.slane %v2016, 5
      %v2019 = vsel %vm346, %v2014, %v2018
      %v2020 = vshrl.u32 %v1917, 16
      %v2022 = vrot.slane %v2020, 4
      %v2023 = vor.u32 %v2022, %v2018
      %v2024 = vrot.slane %v2023, 4
      %v2026 = vshll.u32 %v1918, 16
      %v2028 = vrot.slane %v2026, 5
      %v2029 = vsel %vm346, %v2024, %v2028
      %v2031 = vshrl.u32 %v1919, 16
      %v2033 = vrot.slane %v2031, 4
      %v2034 = vshll.u32 %v1919, 16
      %v2036 = vrot.slane %v2034, 5
      %v2037 = vor.u32 %v2033, %v2036
      %v2038 = vrot.slane %v2037, 4
      %v2040 = vshll.u32 %v1920, 16
      %v2042 = vrot.slane %v2040, 5
      %v2043 = vsel %vm346, %v2038, %v2042
      %v2044 = vshrl.u32 %v1920, 16
      %v2046 = vrot.slane %v2044, 4
      %v2047 = vor.u32 %v2046, %v2042
      %v2048 = vrot.slane %v2047, 4
      %v2050 = vshll.u32 %v1921, 16
      %v2052 = vrot.slane %v2050, 5
      %v2053 = vsel %vm346, %v2048, %v2052
      %v2055 = vshrl.u32 %v1922, 16
      %v2057 = vrot.slane %v2055, 4
      %v2058 = vshll.u32 %v1922, 16
      %v2060 = vrot.slane %v2058, 5
      %v2061 = vor.u32 %v2057, %v2060
      %v2062 = vrot.slane %v2061, 4
      %v2064 = vshll.u32 %v1923, 16
      %v2066 = vrot.slane %v2064, 5
      %v2067 = vsel %vm346, %v2062, %v2066
      %v2068 = vshrl.u32 %v1923, 16
      %v2070 = vrot.slane %v2068, 4
      %v2071 = vor.u32 %v2070, %v2066
      %v2072 = vrot.slane %v2071, 4
      %v2074 = vshll.u32 %v1924, 16
      %v2076 = vrot.slane %v2074, 5
      %v2077 = vsel %vm346, %v2072, %v2076
      %v2079 = vshrl.u32 %v1925, 16
      %v2081 = vrot.slane %v2079, 4
      %v2082 = vshll.u32 %v1925, 16
      %v2084 = vrot.slane %v2082, 5
      %v2085 = vor.u32 %v2081, %v2084
      %v2086 = vrot.slane %v2085, 4
      %v2088 = vshll.u32 %v1926, 16
      %v2090 = vrot.slane %v2088, 5
      %v2091 = vsel %vm346, %v2086, %v2090
      %v2092 = vshrl.u32 %v1926, 16
      %v2094 = vrot.slane %v2092, 4
      %v2095 = vor.u32 %v2094, %v2090
      %v2096 = vrot.slane %v2095, 4
      %v2098 = vshll.u32 %v1927, 16
      %v2100 = vrot.slane %v2098, 5
      %v2101 = vsel %vm346, %v2096, %v2100
      %v2103 = vshrl.u32 %v1928, 16
      %v2105 = vrot.slane %v2103, 4
      %v2106 = vshll.u32 %v1928, 16
      %v2108 = vrot.slane %v2106, 5
      %v2109 = vor.u32 %v2105, %v2108
      %v2110 = vrot.slane %v2109, 4
      %v2112 = vshll.u32 %v1929, 16
      %v2114 = vrot.slane %v2112, 5
      %v2115 = vsel %vm346, %v2110, %v2114
      %v2116 = vshrl.u32 %v1929, 16
      %v2118 = vrot.slane %v2116, 4
      %v2119 = vor.u32 %v2118, %v2114
      %v2120 = vrot.slane %v2119, 4
      %v2122 = vshll.u32 %v1930, 16
      %v2124 = vrot.slane %v2122, 5
      %v2125 = vsel %vm346, %v2120, %v2124
      %v2127 = vshrl.u32 %v1931, 16
      %v2129 = vrot.slane %v2127, 4
      %v2130 = vshll.u32 %v1931, 16
      %v2132 = vrot.slane %v2130, 5
      %v2133 = vor.u32 %v2129, %v2132
      %v2134 = vrot.slane %v2133, 4
      %v2136 = vshll.u32 %v1932, 16
      %v2138 = vrot.slane %v2136, 5
      %v2139 = vsel %vm346, %v2134, %v2138
      %v2140 = vshrl.u32 %v1932, 16
      %v2142 = vrot.slane %v2140, 4
      %v2143 = vor.u32 %v2142, %v2138
      %v2144 = vrot.slane %v2143, 4
      %v2146 = vshll.u32 %v1933, 16
      %v2148 = vrot.slane %v2146, 5
      %v2149 = vsel %vm346, %v2144, %v2148
      %v2151 = vshrl.u32 %v1934, 16
      %v2153 = vrot.slane %v2151, 4
      %v2154 = vshll.u32 %v1934, 16
      %v2156 = vrot.slane %v2154, 5
      %v2157 = vor.u32 %v2153, %v2156
      %v2158 = vrot.slane %v2157, 4
      %v2160 = vshll.u32 %v1935, 16
      %v2162 = vrot.slane %v2160, 5
      %v2163 = vsel %vm346, %v2158, %v2162
      %v2164 = vshrl.u32 %v1935, 16
      %v2166 = vrot.slane %v2164, 4
      %v2167 = vor.u32 %v2166, %v2162
      %v2168 = vrot.slane %v2167, 4
      %v2170 = vshll.u32 %v1936, 16
      %v2172 = vrot.slane %v2170, 5
      %v2173 = vsel %vm346, %v2168, %v2172
      %v2175 = vshrl.u32 %v1937, 16
      %v2177 = vrot.slane %v2175, 4
      %v2178 = vshll.u32 %v1937, 16
      %v2180 = vrot.slane %v2178, 5
      %v2181 = vor.u32 %v2177, %v2180
      %v2182 = vrot.slane %v2181, 4
      %v2184 = vshll.u32 %v1938, 16
      %v2186 = vrot.slane %v2184, 5
      %v2187 = vsel %vm346, %v2182, %v2186
      %v2188 = vshrl.u32 %v1938, 16
      %v2190 = vrot.slane %v2188, 4
      %v2191 = vor.u32 %v2190, %v2186
      %v2192 = vrot.slane %v2191, 4
      %v2194 = vshll.u32 %v1939, 16
      %v2196 = vrot.slane %v2194, 5
      %v2197 = vsel %vm346, %v2192, %v2196
      %v2199 = vshrl.u32 %v1940, 16
      %v2201 = vrot.slane %v2199, 4
      %v2202 = vshll.u32 %v1940, 16
      %v2204 = vrot.slane %v2202, 5
      %v2205 = vor.u32 %v2201, %v2204
      %v2206 = vrot.slane %v2205, 4
      %v2208 = vshll.u32 %v1941, 16
      %v2210 = vrot.slane %v2208, 5
      %v2211 = vsel %vm346, %v2206, %v2210
      %v2212 = vshrl.u32 %v1941, 16
      %v2214 = vrot.slane %v2212, 4
      %v2215 = vor.u32 %v2214, %v2210
      %v2216 = vrot.slane %v2215, 4
      %v2218 = vshll.u32 %v1942, 16
      %v2220 = vrot.slane %v2218, 5
      %v2221 = vsel %vm346, %v2216, %v2220
      %v2223 = vshrl.u32 %v1943, 16
      %v2225 = vrot.slane %v2223, 4
      %v2226 = vshll.u32 %v1943, 16
      %v2228 = vrot.slane %v2226, 5
      %v2229 = vor.u32 %v2225, %v2228
      %v2230 = vrot.slane %v2229, 4
      %v2232 = vshll.u32 %v1944, 16
      %v2234 = vrot.slane %v2232, 5
      %v2235 = vsel %vm346, %v2230, %v2234
      %v2236 = vshrl.u32 %v1944, 16
      %v2238 = vrot.slane %v2236, 4
      %v2239 = vor.u32 %v2238, %v2234
      %v2240 = vrot.slane %v2239, 4
      %v2242 = vshll.u32 %v1945, 16
      %v2244 = vrot.slane %v2242, 5
      %v2245 = vsel %vm346, %v2240, %v2244
      %v2247 = vshrl.u32 %v1946, 16
      %v2249 = vrot.slane %v2247, 4
      %v2250 = vshll.u32 %v1946, 16
      %v2252 = vrot.slane %v2250, 5
      %v2253 = vor.u32 %v2249, %v2252
      %v2254 = vrot.slane %v2253, 4
      %v2256 = vshll.u32 %v1947, 16
      %v2258 = vrot.slane %v2256, 5
      %v2259 = vsel %vm346, %v2254, %v2258
      %v2260 = vshrl.u32 %v1947, 16
      %v2262 = vrot.slane %v2260, 4
      %v2263 = vor.u32 %v2262, %v2258
      %v2264 = vrot.slane %v2263, 4
      %v2266 = vshll.u32 %v1948, 16
      %v2268 = vrot.slane %v2266, 5
      %v2269 = vsel %vm346, %v2264, %v2268
      %v2271 = vshrl.u32 %v1949, 16
      %v2273 = vrot.slane %v2271, 4
      %v2274 = vshll.u32 %v1949, 16
      %v2276 = vrot.slane %v2274, 5
      %v2277 = vor.u32 %v2273, %v2276
      %v2278 = vrot.slane %v2277, 4
      %v2280 = vshll.u32 %v1950, 16
      %v2282 = vrot.slane %v2280, 5
      %v2283 = vsel %vm346, %v2278, %v2282
      %v2284 = vshrl.u32 %v1950, 16
      %v2286 = vrot.slane %v2284, 4
      %v2287 = vor.u32 %v2286, %v2282
      %v2288 = vrot.slane %v2287, 4
      %v2290 = vshll.u32 %v1951, 16
      %v2292 = vrot.slane %v2290, 5
      %v2293 = vsel %vm346, %v2288, %v2292
      %v2295 = vshrl.u32 %v1952, 16
      %v2297 = vrot.slane %v2295, 4
      %v2298 = vshll.u32 %v1952, 16
      %v2300 = vrot.slane %v2298, 5
      %v2301 = vor.u32 %v2297, %v2300
      %v2302 = vrot.slane %v2301, 4
      %v2304 = vshll.u32 %v1953, 16
      %v2306 = vrot.slane %v2304, 5
      %v2307 = vsel %vm346, %v2302, %v2306
      %v2308 = vshrl.u32 %v1953, 16
      %v2310 = vrot.slane %v2308, 4
      %v2311 = vor.u32 %v2310, %v2306
      %v2312 = vrot.slane %v2311, 4
      %v2314 = vshll.u32 %v1954, 16
      %v2316 = vrot.slane %v2314, 5
      %v2317 = vsel %vm346, %v2312, %v2316
      %v2319 = vshrl.u32 %v1955, 16
      %v2321 = vrot.slane %v2319, 4
      %v2322 = vshll.u32 %v1955, 16
      %v2324 = vrot.slane %v2322, 5
      %v2325 = vor.u32 %v2321, %v2324
      %v2326 = vrot.slane %v2325, 4
      %v2328 = vshll.u32 %v1956, 16
      %v2330 = vrot.slane %v2328, 5
      %v2331 = vsel %vm346, %v2326, %v2330
      %v2332 = vshrl.u32 %v1956, 16
      %v2334 = vrot.slane %v2332, 4
      %v2335 = vor.u32 %v2334, %v2330
      %v2336 = vrot.slane %v2335, 4
      %v2338 = vshll.u32 %v1957, 16
      %v2340 = vrot.slane %v2338, 5
      %v2341 = vsel %vm346, %v2336, %v2340
      %s2342 = scalar_lea.vmem %s1, 256
      %v2343 = vld [vmem:[%s2342] sm:$0xf]
      %v2344 = vld [vmem:[%s2342 + $0x4] sm:$0xf]
      %v2345 = vld [vmem:[%s2342 + $0x8] sm:$0xf]
      %v2346 = vld [vmem:[%s2342 + $0xc] sm:$0xf]
      %v2347 = vld [vmem:[%s2342 + $0x10] sm:$0xf]
      %v2348 = vld [vmem:[%s2342 + $0x14] sm:$0xf]
      %v2349 = vld [vmem:[%s2342 + $0x18] sm:$0xf]
      %v2350 = vld [vmem:[%s2342 + $0x1c] sm:$0xf]
      %v2351 = vld [vmem:[%s2342 + $0x20] sm:$0xf]
      %v2352 = vld [vmem:[%s2342 + $0x24] sm:$0xf]
      %v2353 = vld [vmem:[%s2342 + $0x28] sm:$0xf]
      %v2354 = vld [vmem:[%s2342 + $0x2c] sm:$0xf]
      %v2355 = vld [vmem:[%s2342 + $0x30] sm:$0xf]
      %v2356 = vld [vmem:[%s2342 + $0x34] sm:$0xf]
      %v2357 = vld [vmem:[%s2342 + $0x38] sm:$0xf]
      %v2358 = vld [vmem:[%s2342 + $0x3c] sm:$0xf]
      %v2359 = vunpack.c.l.b16 %v1971
      %v2360 = vunpack.c.l.b16 %v1981
      %v2361 = vunpack.c.l.b16 %v1995
      %v2362 = vunpack.c.l.b16 %v2005
      %v2363 = vunpack.c.l.b16 %v2019
      %v2364 = vunpack.c.l.b16 %v2029
      %v2365 = vunpack.c.l.b16 %v2043
      %v2366 = vunpack.c.l.b16 %v2053
      %v2367 = vunpack.c.l.b16 %v2067
      %v2368 = vunpack.c.l.b16 %v2077
      %v2369 = vunpack.c.l.b16 %v2091
      %v2370 = vunpack.c.l.b16 %v2101
      %v2371 = vunpack.c.l.b16 %v2115
      %v2372 = vunpack.c.l.b16 %v2125
      %v2373 = vunpack.c.l.b16 %v2139
      %v2374 = vunpack.c.l.b16 %v2149
      %v2375 = vunpack.c.l.b16 %v2163
      %v2376 = vunpack.c.l.b16 %v2173
      %v2377 = vunpack.c.l.b16 %v2187
      %v2378 = vunpack.c.l.b16 %v2197
      %v2379 = vunpack.c.l.b16 %v2211
      %v2380 = vunpack.c.l.b16 %v2221
      %v2381 = vunpack.c.l.b16 %v2235
      %v2382 = vunpack.c.l.b16 %v2245
      %v2383 = vunpack.c.l.b16 %v2259
      %v2384 = vunpack.c.l.b16 %v2269
      %v2385 = vunpack.c.l.b16 %v2283
      %v2386 = vunpack.c.l.b16 %v2293
      %v2387 = vunpack.c.l.b16 %v2307
      %v2388 = vunpack.c.l.b16 %v2317
      %v2389 = vunpack.c.l.b16 %v2331
      %v2390 = vunpack.c.l.b16 %v2341
      %v2391 = vpack.c.b16 %v2360, %v2359
      %v2392 = vpack.c.b16 %v2362, %v2361
      %v2393 = vpack.c.b16 %v2364, %v2363
      %v2394 = vpack.c.b16 %v2366, %v2365
      %v2395 = vpack.c.b16 %v2368, %v2367
      %v2396 = vpack.c.b16 %v2370, %v2369
      %v2397 = vpack.c.b16 %v2372, %v2371
      %v2398 = vpack.c.b16 %v2374, %v2373
      %v2399 = vpack.c.b16 %v2376, %v2375
      %v2400 = vpack.c.b16 %v2378, %v2377
      %v2401 = vpack.c.b16 %v2380, %v2379
      %v2402 = vpack.c.b16 %v2382, %v2381
      %v2403 = vpack.c.b16 %v2384, %v2383
      %v2404 = vpack.c.b16 %v2386, %v2385
      %v2405 = vpack.c.b16 %v2388, %v2387
      %v2406 = vpack.c.b16 %v2390, %v2389
      %v2439 = vunpack.c.l.b16 %v2343
      %v2440 = vunpack.c.l.b16 %v2344
      %v2441 = vunpack.c.l.b16 %v2345
      %v2442 = vunpack.c.l.b16 %v2346
      %v2443 = vunpack.c.l.b16 %v2347
      %v2444 = vunpack.c.l.b16 %v2348
      %v2445 = vunpack.c.l.b16 %v2349
      %v2446 = vunpack.c.l.b16 %v2350
      %v2447 = vunpack.c.l.b16 %v2351
      %v2448 = vunpack.c.l.b16 %v2352
      %v2449 = vunpack.c.l.b16 %v2353
      %v2450 = vunpack.c.l.b16 %v2354
      %v2451 = vunpack.c.l.b16 %v2355
      %v2452 = vunpack.c.l.b16 %v2356
      %v2453 = vunpack.c.l.b16 %v2357
      %v2454 = vunpack.c.l.b16 %v2358
      %v2455 = vpack.c.b16 %v2440, %v2439
      %v2456 = vpack.c.b16 %v2442, %v2441
      %v2457 = vpack.c.b16 %v2444, %v2443
      %v2458 = vpack.c.b16 %v2446, %v2445
      %v2459 = vpack.c.b16 %v2448, %v2447
      %v2460 = vpack.c.b16 %v2450, %v2449
      %v2461 = vpack.c.b16 %v2452, %v2451
      %v2462 = vpack.c.b16 %v2454, %v2453
      %2471 = vmatpush.bf16.msra.mxu0 %v2462
      %2472 = vmatpush.bf16.msra.mxu0 %v2461
      %2473 = vmatpush.bf16.msra.mxu0 %v2460
      %2474 = vmatpush.bf16.msra.mxu0 %v2459
      %2475 = vmatpush.bf16.msra.mxu0 %v2458
      %2476 = vmatpush.bf16.msra.mxu0 %v2457
      %2477 = vmatpush.bf16.msra.mxu0 %v2456
      %2478 = vmatpush.bf16.msra.mxu0 %v2455
      %2479 = vmatmul.bf16.gmra.mxu0 %v2391
      %v2480 = vpop.f32.mrf.mxu0
      %v2481 = vadd.f32 0.0, %v2480
      %v2482 = vpop.f32.mrf.mxu0
      %v2483 = vadd.f32 0.0, %v2482
      %2484 = vmatmul.bf16.gmra.mxu0 %v2392
      %v2485 = vpop.f32.mrf.mxu0
      %v2486 = vadd.f32 0.0, %v2485
      %v2487 = vpop.f32.mrf.mxu0
      %v2488 = vadd.f32 0.0, %v2487
      %2489 = vmatmul.bf16.gmra.mxu0 %v2393
      %v2490 = vpop.f32.mrf.mxu0
      %v2491 = vadd.f32 0.0, %v2490
      %v2492 = vpop.f32.mrf.mxu0
      %v2493 = vadd.f32 0.0, %v2492
      %2494 = vmatmul.bf16.gmra.mxu0 %v2394
      %v2495 = vpop.f32.mrf.mxu0
      %v2496 = vadd.f32 0.0, %v2495
      %v2497 = vpop.f32.mrf.mxu0
      %v2498 = vadd.f32 0.0, %v2497
      %2499 = vmatmul.bf16.gmra.mxu0 %v2395
      %v2500 = vpop.f32.mrf.mxu0
      %v2501 = vadd.f32 0.0, %v2500
      %v2502 = vpop.f32.mrf.mxu0
      %v2503 = vadd.f32 0.0, %v2502
      %2504 = vmatmul.bf16.gmra.mxu0 %v2396
      %v2505 = vpop.f32.mrf.mxu0
      %v2506 = vadd.f32 0.0, %v2505
      %v2507 = vpop.f32.mrf.mxu0
      %v2508 = vadd.f32 0.0, %v2507
      %2509 = vmatmul.bf16.gmra.mxu0 %v2397
      %v2510 = vpop.f32.mrf.mxu0
      %v2511 = vadd.f32 0.0, %v2510
      %v2512 = vpop.f32.mrf.mxu0
      %v2513 = vadd.f32 0.0, %v2512
      %2514 = vmatmul.bf16.gmra.mxu0 %v2398
      %v2515 = vpop.f32.mrf.mxu0
      %v2516 = vadd.f32 0.0, %v2515
      %v2517 = vpop.f32.mrf.mxu0
      %v2518 = vadd.f32 0.0, %v2517
      %2519 = vmatmul.bf16.gmra.mxu0 %v2399
      %v2520 = vpop.f32.mrf.mxu0
      %v2521 = vadd.f32 0.0, %v2520
      %v2522 = vpop.f32.mrf.mxu0
      %v2523 = vadd.f32 0.0, %v2522
      %2524 = vmatmul.bf16.gmra.mxu0 %v2400
      %v2525 = vpop.f32.mrf.mxu0
      %v2526 = vadd.f32 0.0, %v2525
      %v2527 = vpop.f32.mrf.mxu0
      %v2528 = vadd.f32 0.0, %v2527
      %2529 = vmatmul.bf16.gmra.mxu0 %v2401
      %v2530 = vpop.f32.mrf.mxu0
      %v2531 = vadd.f32 0.0, %v2530
      %v2532 = vpop.f32.mrf.mxu0
      %v2533 = vadd.f32 0.0, %v2532
      %2534 = vmatmul.bf16.gmra.mxu0 %v2402
      %v2535 = vpop.f32.mrf.mxu0
      %v2536 = vadd.f32 0.0, %v2535
      %v2537 = vpop.f32.mrf.mxu0
      %v2538 = vadd.f32 0.0, %v2537
      %2539 = vmatmul.bf16.gmra.mxu0 %v2403
      %v2540 = vpop.f32.mrf.mxu0
      %v2541 = vadd.f32 0.0, %v2540
      %v2542 = vpop.f32.mrf.mxu0
      %v2543 = vadd.f32 0.0, %v2542
      %2544 = vmatmul.bf16.gmra.mxu0 %v2404
      %v2545 = vpop.f32.mrf.mxu0
      %v2546 = vadd.f32 0.0, %v2545
      %v2547 = vpop.f32.mrf.mxu0
      %v2548 = vadd.f32 0.0, %v2547
      %2549 = vmatmul.bf16.gmra.mxu0 %v2405
      %v2550 = vpop.f32.mrf.mxu0
      %v2551 = vadd.f32 0.0, %v2550
      %v2552 = vpop.f32.mrf.mxu0
      %v2553 = vadd.f32 0.0, %v2552
      %2554 = vmatmul.bf16.gmra.mxu0 %v2406
      %v2555 = vpop.f32.mrf.mxu0
      %v2556 = vadd.f32 0.0, %v2555
      %v2557 = vpop.f32.mrf.mxu0
      %v2558 = vadd.f32 0.0, %v2557
      %2559 = vdwg.mxu0
      %v2560 = vadd.f32 %v1878, %v2481
      %v2561 = vadd.f32 %v1879, %v2483
      %v2562 = vadd.f32 %v1880, %v2486
      %v2563 = vadd.f32 %v1881, %v2488
      %v2564 = vadd.f32 %v1882, %v2491
      %v2565 = vadd.f32 %v1883, %v2493
      %v2566 = vadd.f32 %v1884, %v2496
      %v2567 = vadd.f32 %v1885, %v2498
      %v2568 = vadd.f32 %v1886, %v2501
      %v2569 = vadd.f32 %v1887, %v2503
      %v2570 = vadd.f32 %v1888, %v2506
      %v2571 = vadd.f32 %v1889, %v2508
      %v2572 = vadd.f32 %v1890, %v2511
      %v2573 = vadd.f32 %v1891, %v2513
      %v2574 = vadd.f32 %v1892, %v2516
      %v2575 = vadd.f32 %v1893, %v2518
      %v2576 = vadd.f32 %v1894, %v2521
      %v2577 = vadd.f32 %v1895, %v2523
      %v2578 = vadd.f32 %v1896, %v2526
      %v2579 = vadd.f32 %v1897, %v2528
      %v2580 = vadd.f32 %v1898, %v2531
      %v2581 = vadd.f32 %v1899, %v2533
      %v2582 = vadd.f32 %v1900, %v2536
      %v2583 = vadd.f32 %v1901, %v2538
      %v2584 = vadd.f32 %v1902, %v2541
      %v2585 = vadd.f32 %v1903, %v2543
      %v2586 = vadd.f32 %v1904, %v2546
      %v2587 = vadd.f32 %v1905, %v2548
      %v2588 = vadd.f32 %v1906, %v2551
      %v2589 = vadd.f32 %v1907, %v2553
      %v2590 = vadd.f32 %v1908, %v2556
      %v2591 = vadd.f32 %v1909, %v2558
      %v2592 = vld [vmem:[%s1595] sm:$0xe]
      %v2593 = vld [vmem:[%s1595 + $0xc] sm:$0xe]
      %v2594 = vld [vmem:[%s1595 + $0x18] sm:$0xe]
      %v2595 = vld [vmem:[%s1595 + $0x24] sm:$0xe]
      %v2596 = vld [vmem:[%s1595 + $0x30] sm:$0xe]
      %v2597 = vld [vmem:[%s1595 + $0x3c] sm:$0xe]
      %v2598 = vld [vmem:[%s1595 + $0x48] sm:$0xe]
      %v2599 = vld [vmem:[%s1595 + $0x54] sm:$0xe]
      %v2600 = vld [vmem:[%s1595 + $0x60] sm:$0xe]
      %v2601 = vld [vmem:[%s1595 + $0x6c] sm:$0xe]
      %v2602 = vld [vmem:[%s1595 + $0x78] sm:$0xe]
      %v2603 = vld [vmem:[%s1595 + $0x84] sm:$0xe]
      %v2604 = vld [vmem:[%s1595 + $0x90] sm:$0xe]
      %v2605 = vld [vmem:[%s1595 + $0x9c] sm:$0xe]
      %v2606 = vld [vmem:[%s1595 + $0xa8] sm:$0xe]
      %v2607 = vld [vmem:[%s1595 + $0xb4] sm:$0xe]
      %v2656 = vrot.slane %v2592, 5
      %v2657 = vrot.slane %v2656, 4
      %v2658 = vrot.slane %v1911, 5
      %v2659 = vsel %vm1232, %v2657, %v2658
      %v2660 = vrot.slane %v2658, 4
      %v2661 = vrot.slane %v1912, 5
      %v2662 = vsel %vm1232, %v2660, %v2661
      %v2663 = vrot.slane %v2593, 5
      %v2664 = vrot.slane %v2663, 4
      %v2665 = vrot.slane %v1914, 5
      %v2666 = vsel %vm1232, %v2664, %v2665
      %v2667 = vrot.slane %v2665, 4
      %v2668 = vrot.slane %v1915, 5
      %v2669 = vsel %vm1232, %v2667, %v2668
      %v2670 = vrot.slane %v2594, 5
      %v2671 = vrot.slane %v2670, 4
      %v2672 = vrot.slane %v1917, 5
      %v2673 = vsel %vm1232, %v2671, %v2672
      %v2674 = vrot.slane %v2672, 4
      %v2675 = vrot.slane %v1918, 5
      %v2676 = vsel %vm1232, %v2674, %v2675
      %v2677 = vrot.slane %v2595, 5
      %v2678 = vrot.slane %v2677, 4
      %v2679 = vrot.slane %v1920, 5
      %v2680 = vsel %vm1232, %v2678, %v2679
      %v2681 = vrot.slane %v2679, 4
      %v2682 = vrot.slane %v1921, 5
      %v2683 = vsel %vm1232, %v2681, %v2682
      %v2684 = vrot.slane %v2596, 5
      %v2685 = vrot.slane %v2684, 4
      %v2686 = vrot.slane %v1923, 5
      %v2687 = vsel %vm1232, %v2685, %v2686
      %v2688 = vrot.slane %v2686, 4
      %v2689 = vrot.slane %v1924, 5
      %v2690 = vsel %vm1232, %v2688, %v2689
      %v2691 = vrot.slane %v2597, 5
      %v2692 = vrot.slane %v2691, 4
      %v2693 = vrot.slane %v1926, 5
      %v2694 = vsel %vm1232, %v2692, %v2693
      %v2695 = vrot.slane %v2693, 4
      %v2696 = vrot.slane %v1927, 5
      %v2697 = vsel %vm1232, %v2695, %v2696
      %v2698 = vrot.slane %v2598, 5
      %v2699 = vrot.slane %v2698, 4
      %v2700 = vrot.slane %v1929, 5
      %v2701 = vsel %vm1232, %v2699, %v2700
      %v2702 = vrot.slane %v2700, 4
      %v2703 = vrot.slane %v1930, 5
      %v2704 = vsel %vm1232, %v2702, %v2703
      %v2705 = vrot.slane %v2599, 5
      %v2706 = vrot.slane %v2705, 4
      %v2707 = vrot.slane %v1932, 5
      %v2708 = vsel %vm1232, %v2706, %v2707
      %v2709 = vrot.slane %v2707, 4
      %v2710 = vrot.slane %v1933, 5
      %v2711 = vsel %vm1232, %v2709, %v2710
      %v2712 = vrot.slane %v2600, 5
      %v2713 = vrot.slane %v2712, 4
      %v2714 = vrot.slane %v1935, 5
      %v2715 = vsel %vm1232, %v2713, %v2714
      %v2716 = vrot.slane %v2714, 4
      %v2717 = vrot.slane %v1936, 5
      %v2718 = vsel %vm1232, %v2716, %v2717
      %v2719 = vrot.slane %v2601, 5
      %v2720 = vrot.slane %v2719, 4
      %v2721 = vrot.slane %v1938, 5
      %v2722 = vsel %vm1232, %v2720, %v2721
      %v2723 = vrot.slane %v2721, 4
      %v2724 = vrot.slane %v1939, 5
      %v2725 = vsel %vm1232, %v2723, %v2724
      %v2726 = vrot.slane %v2602, 5
      %v2727 = vrot.slane %v2726, 4
      %v2728 = vrot.slane %v1941, 5
      %v2729 = vsel %vm1232, %v2727, %v2728
      %v2730 = vrot.slane %v2728, 4
      %v2731 = vrot.slane %v1942, 5
      %v2732 = vsel %vm1232, %v2730, %v2731
      %v2733 = vrot.slane %v2603, 5
      %v2734 = vrot.slane %v2733, 4
      %v2735 = vrot.slane %v1944, 5
      %v2736 = vsel %vm1232, %v2734, %v2735
      %v2737 = vrot.slane %v2735, 4
      %v2738 = vrot.slane %v1945, 5
      %v2739 = vsel %vm1232, %v2737, %v2738
      %v2740 = vrot.slane %v2604, 5
      %v2741 = vrot.slane %v2740, 4
      %v2742 = vrot.slane %v1947, 5
      %v2743 = vsel %vm1232, %v2741, %v2742
      %v2744 = vrot.slane %v2742, 4
      %v2745 = vrot.slane %v1948, 5
      %v2746 = vsel %vm1232, %v2744, %v2745
      %v2747 = vrot.slane %v2605, 5
      %v2748 = vrot.slane %v2747, 4
      %v2749 = vrot.slane %v1950, 5
      %v2750 = vsel %vm1232, %v2748, %v2749
      %v2751 = vrot.slane %v2749, 4
      %v2752 = vrot.slane %v1951, 5
      %v2753 = vsel %vm1232, %v2751, %v2752
      %v2754 = vrot.slane %v2606, 5
      %v2755 = vrot.slane %v2754, 4
      %v2756 = vrot.slane %v1953, 5
      %v2757 = vsel %vm1232, %v2755, %v2756
      %v2758 = vrot.slane %v2756, 4
      %v2759 = vrot.slane %v1954, 5
      %v2760 = vsel %vm1232, %v2758, %v2759
      %v2761 = vrot.slane %v2607, 5
      %v2762 = vrot.slane %v2761, 4
      %v2763 = vrot.slane %v1956, 5
      %v2764 = vsel %vm1232, %v2762, %v2763
      %v2765 = vrot.slane %v2763, 4
      %v2766 = vrot.slane %v1957, 5
      %v2767 = vsel %vm1232, %v2765, %v2766
      %s2768 = scalar_lea.vmem %s1, 320
      %v2769 = vld [vmem:[%s2768] sm:$0xf]
      %v2770 = vld [vmem:[%s2768 + $0x4] sm:$0xf]
      %v2771 = vld [vmem:[%s2768 + $0x8] sm:$0xf]
      %v2772 = vld [vmem:[%s2768 + $0xc] sm:$0xf]
      %v2773 = vld [vmem:[%s2768 + $0x10] sm:$0xf]
      %v2774 = vld [vmem:[%s2768 + $0x14] sm:$0xf]
      %v2775 = vld [vmem:[%s2768 + $0x18] sm:$0xf]
      %v2776 = vld [vmem:[%s2768 + $0x1c] sm:$0xf]
      %v2777 = vld [vmem:[%s2768 + $0x20] sm:$0xf]
      %v2778 = vld [vmem:[%s2768 + $0x24] sm:$0xf]
      %v2779 = vld [vmem:[%s2768 + $0x28] sm:$0xf]
      %v2780 = vld [vmem:[%s2768 + $0x2c] sm:$0xf]
      %v2781 = vld [vmem:[%s2768 + $0x30] sm:$0xf]
      %v2782 = vld [vmem:[%s2768 + $0x34] sm:$0xf]
      %v2783 = vld [vmem:[%s2768 + $0x38] sm:$0xf]
      %v2784 = vld [vmem:[%s2768 + $0x3c] sm:$0xf]
      %v2785 = vunpack.c.l.b16 %v2659
      %v2786 = vunpack.c.l.b16 %v2662
      %v2787 = vunpack.c.l.b16 %v2666
      %v2788 = vunpack.c.l.b16 %v2669
      %v2789 = vunpack.c.l.b16 %v2673
      %v2790 = vunpack.c.l.b16 %v2676
      %v2791 = vunpack.c.l.b16 %v2680
      %v2792 = vunpack.c.l.b16 %v2683
      %v2793 = vunpack.c.l.b16 %v2687
      %v2794 = vunpack.c.l.b16 %v2690
      %v2795 = vunpack.c.l.b16 %v2694
      %v2796 = vunpack.c.l.b16 %v2697
      %v2797 = vunpack.c.l.b16 %v2701
      %v2798 = vunpack.c.l.b16 %v2704
      %v2799 = vunpack.c.l.b16 %v2708
      %v2800 = vunpack.c.l.b16 %v2711
      %v2801 = vunpack.c.l.b16 %v2715
      %v2802 = vunpack.c.l.b16 %v2718
      %v2803 = vunpack.c.l.b16 %v2722
      %v2804 = vunpack.c.l.b16 %v2725
      %v2805 = vunpack.c.l.b16 %v2729
      %v2806 = vunpack.c.l.b16 %v2732
      %v2807 = vunpack.c.l.b16 %v2736
      %v2808 = vunpack.c.l.b16 %v2739
      %v2809 = vunpack.c.l.b16 %v2743
      %v2810 = vunpack.c.l.b16 %v2746
      %v2811 = vunpack.c.l.b16 %v2750
      %v2812 = vunpack.c.l.b16 %v2753
      %v2813 = vunpack.c.l.b16 %v2757
      %v2814 = vunpack.c.l.b16 %v2760
      %v2815 = vunpack.c.l.b16 %v2764
      %v2816 = vunpack.c.l.b16 %v2767
      %v2817 = vpack.c.b16 %v2786, %v2785
      %v2818 = vpack.c.b16 %v2788, %v2787
      %v2819 = vpack.c.b16 %v2790, %v2789
      %v2820 = vpack.c.b16 %v2792, %v2791
      %v2821 = vpack.c.b16 %v2794, %v2793
      %v2822 = vpack.c.b16 %v2796, %v2795
      %v2823 = vpack.c.b16 %v2798, %v2797
      %v2824 = vpack.c.b16 %v2800, %v2799
      %v2825 = vpack.c.b16 %v2802, %v2801
      %v2826 = vpack.c.b16 %v2804, %v2803
      %v2827 = vpack.c.b16 %v2806, %v2805
      %v2828 = vpack.c.b16 %v2808, %v2807
      %v2829 = vpack.c.b16 %v2810, %v2809
      %v2830 = vpack.c.b16 %v2812, %v2811
      %v2831 = vpack.c.b16 %v2814, %v2813
      %v2832 = vpack.c.b16 %v2816, %v2815
      %v2865 = vunpack.c.l.b16 %v2769
      %v2866 = vunpack.c.l.b16 %v2770
      %v2867 = vunpack.c.l.b16 %v2771
      %v2868 = vunpack.c.l.b16 %v2772
      %v2869 = vunpack.c.l.b16 %v2773
      %v2870 = vunpack.c.l.b16 %v2774
      %v2871 = vunpack.c.l.b16 %v2775
      %v2872 = vunpack.c.l.b16 %v2776
      %v2873 = vunpack.c.l.b16 %v2777
      %v2874 = vunpack.c.l.b16 %v2778
      %v2875 = vunpack.c.l.b16 %v2779
      %v2876 = vunpack.c.l.b16 %v2780
      %v2877 = vunpack.c.l.b16 %v2781
      %v2878 = vunpack.c.l.b16 %v2782
      %v2879 = vunpack.c.l.b16 %v2783
      %v2880 = vunpack.c.l.b16 %v2784
      %v2881 = vpack.c.b16 %v2866, %v2865
      %v2882 = vpack.c.b16 %v2868, %v2867
      %v2883 = vpack.c.b16 %v2870, %v2869
      %v2884 = vpack.c.b16 %v2872, %v2871
      %v2885 = vpack.c.b16 %v2874, %v2873
      %v2886 = vpack.c.b16 %v2876, %v2875
      %v2887 = vpack.c.b16 %v2878, %v2877
      %v2888 = vpack.c.b16 %v2880, %v2879
      %2897 = vmatpush.bf16.msra.mxu0 %v2888
      %2898 = vmatpush.bf16.msra.mxu0 %v2887
      %2899 = vmatpush.bf16.msra.mxu0 %v2886
      %2900 = vmatpush.bf16.msra.mxu0 %v2885
      %2901 = vmatpush.bf16.msra.mxu0 %v2884
      %2902 = vmatpush.bf16.msra.mxu0 %v2883
      %2903 = vmatpush.bf16.msra.mxu0 %v2882
      %2904 = vmatpush.bf16.msra.mxu0 %v2881
      %2905 = vmatmul.bf16.gmra.mxu0 %v2817
      %v2906 = vpop.f32.mrf.mxu0
      %v2907 = vadd.f32 0.0, %v2906
      %v2908 = vpop.f32.mrf.mxu0
      %v2909 = vadd.f32 0.0, %v2908
      %2910 = vmatmul.bf16.gmra.mxu0 %v2818
      %v2911 = vpop.f32.mrf.mxu0
      %v2912 = vadd.f32 0.0, %v2911
      %v2913 = vpop.f32.mrf.mxu0
      %v2914 = vadd.f32 0.0, %v2913
      %2915 = vmatmul.bf16.gmra.mxu0 %v2819
      %v2916 = vpop.f32.mrf.mxu0
      %v2917 = vadd.f32 0.0, %v2916
      %v2918 = vpop.f32.mrf.mxu0
      %v2919 = vadd.f32 0.0, %v2918
      %2920 = vmatmul.bf16.gmra.mxu0 %v2820
      %v2921 = vpop.f32.mrf.mxu0
      %v2922 = vadd.f32 0.0, %v2921
      %v2923 = vpop.f32.mrf.mxu0
      %v2924 = vadd.f32 0.0, %v2923
      %2925 = vmatmul.bf16.gmra.mxu0 %v2821
      %v2926 = vpop.f32.mrf.mxu0
      %v2927 = vadd.f32 0.0, %v2926
      %v2928 = vpop.f32.mrf.mxu0
      %v2929 = vadd.f32 0.0, %v2928
      %2930 = vmatmul.bf16.gmra.mxu0 %v2822
      %v2931 = vpop.f32.mrf.mxu0
      %v2932 = vadd.f32 0.0, %v2931
      %v2933 = vpop.f32.mrf.mxu0
      %v2934 = vadd.f32 0.0, %v2933
      %2935 = vmatmul.bf16.gmra.mxu0 %v2823
      %v2936 = vpop.f32.mrf.mxu0
      %v2937 = vadd.f32 0.0, %v2936
      %v2938 = vpop.f32.mrf.mxu0
      %v2939 = vadd.f32 0.0, %v2938
      %2940 = vmatmul.bf16.gmra.mxu0 %v2824
      %v2941 = vpop.f32.mrf.mxu0
      %v2942 = vadd.f32 0.0, %v2941
      %v2943 = vpop.f32.mrf.mxu0
      %v2944 = vadd.f32 0.0, %v2943
      %2945 = vmatmul.bf16.gmra.mxu0 %v2825
      %v2946 = vpop.f32.mrf.mxu0
      %v2947 = vadd.f32 0.0, %v2946
      %v2948 = vpop.f32.mrf.mxu0
      %v2949 = vadd.f32 0.0, %v2948
      %2950 = vmatmul.bf16.gmra.mxu0 %v2826
      %v2951 = vpop.f32.mrf.mxu0
      %v2952 = vadd.f32 0.0, %v2951
      %v2953 = vpop.f32.mrf.mxu0
      %v2954 = vadd.f32 0.0, %v2953
      %2955 = vmatmul.bf16.gmra.mxu0 %v2827
      %v2956 = vpop.f32.mrf.mxu0
      %v2957 = vadd.f32 0.0, %v2956
      %v2958 = vpop.f32.mrf.mxu0
      %v2959 = vadd.f32 0.0, %v2958
      %2960 = vmatmul.bf16.gmra.mxu0 %v2828
      %v2961 = vpop.f32.mrf.mxu0
      %v2962 = vadd.f32 0.0, %v2961
      %v2963 = vpop.f32.mrf.mxu0
      %v2964 = vadd.f32 0.0, %v2963
      %2965 = vmatmul.bf16.gmra.mxu0 %v2829
      %v2966 = vpop.f32.mrf.mxu0
      %v2967 = vadd.f32 0.0, %v2966
      %v2968 = vpop.f32.mrf.mxu0
      %v2969 = vadd.f32 0.0, %v2968
      %2970 = vmatmul.bf16.gmra.mxu0 %v2830
      %v2971 = vpop.f32.mrf.mxu0
      %v2972 = vadd.f32 0.0, %v2971
      %v2973 = vpop.f32.mrf.mxu0
      %v2974 = vadd.f32 0.0, %v2973
      %2975 = vmatmul.bf16.gmra.mxu0 %v2831
      %v2976 = vpop.f32.mrf.mxu0
      %v2977 = vadd.f32 0.0, %v2976
      %v2978 = vpop.f32.mrf.mxu0
      %v2979 = vadd.f32 0.0, %v2978
      %2980 = vmatmul.bf16.gmra.mxu0 %v2832
      %v2981 = vpop.f32.mrf.mxu0
      %v2982 = vadd.f32 0.0, %v2981
      %v2983 = vpop.f32.mrf.mxu0
      %v2984 = vadd.f32 0.0, %v2983
      %2985 = vdwg.mxu0
      %v2986 = vadd.f32 %v2560, %v2907
      %v2987 = vadd.f32 %v2561, %v2909
      %v2988 = vadd.f32 %v2562, %v2912
      %v2989 = vadd.f32 %v2563, %v2914
      %v2990 = vadd.f32 %v2564, %v2917
      %v2991 = vadd.f32 %v2565, %v2919
      %v2992 = vadd.f32 %v2566, %v2922
      %v2993 = vadd.f32 %v2567, %v2924
      %v2994 = vadd.f32 %v2568, %v2927
      %v2995 = vadd.f32 %v2569, %v2929
      %v2996 = vadd.f32 %v2570, %v2932
      %v2997 = vadd.f32 %v2571, %v2934
      %v2998 = vadd.f32 %v2572, %v2937
      %v2999 = vadd.f32 %v2573, %v2939
      %v3000 = vadd.f32 %v2574, %v2942
      %v3001 = vadd.f32 %v2575, %v2944
      %v3002 = vadd.f32 %v2576, %v2947
      %v3003 = vadd.f32 %v2577, %v2949
      %v3004 = vadd.f32 %v2578, %v2952
      %v3005 = vadd.f32 %v2579, %v2954
      %v3006 = vadd.f32 %v2580, %v2957
      %v3007 = vadd.f32 %v2581, %v2959
      %v3008 = vadd.f32 %v2582, %v2962
      %v3009 = vadd.f32 %v2583, %v2964
      %v3010 = vadd.f32 %v2584, %v2967
      %v3011 = vadd.f32 %v2585, %v2969
      %v3012 = vadd.f32 %v2586, %v2972
      %v3013 = vadd.f32 %v2587, %v2974
      %v3014 = vadd.f32 %v2588, %v2977
      %v3015 = vadd.f32 %v2589, %v2979
      %v3016 = vadd.f32 %v2590, %v2982
      %v3017 = vadd.f32 %v2591, %v2984
      %s3018 = scalar_lea.vmem %s273, 24
      %v3019 = vld [vmem:[%s3018] sm:$0xf]
      %v3020 = vld [vmem:[%s3018 + $0x4] sm:$0xf]
      %v3021 = vld [vmem:[%s3018 + $0xc] sm:$0xf]
      %v3022 = vld [vmem:[%s3018 + $0x10] sm:$0xf]
      %v3023 = vld [vmem:[%s3018 + $0x18] sm:$0xf]
      %v3024 = vld [vmem:[%s3018 + $0x1c] sm:$0xf]
      %v3025 = vld [vmem:[%s3018 + $0x24] sm:$0xf]
      %v3026 = vld [vmem:[%s3018 + $0x28] sm:$0xf]
      %v3027 = vld [vmem:[%s3018 + $0x30] sm:$0xf]
      %v3028 = vld [vmem:[%s3018 + $0x34] sm:$0xf]
      %v3029 = vld [vmem:[%s3018 + $0x3c] sm:$0xf]
      %v3030 = vld [vmem:[%s3018 + $0x40] sm:$0xf]
      %v3031 = vld [vmem:[%s3018 + $0x48] sm:$0xf]
      %v3032 = vld [vmem:[%s3018 + $0x4c] sm:$0xf]
      %v3033 = vld [vmem:[%s3018 + $0x54] sm:$0xf]
      %v3034 = vld [vmem:[%s3018 + $0x58] sm:$0xf]
      %v3035 = vld [vmem:[%s3018 + $0x60] sm:$0xf]
      %v3036 = vld [vmem:[%s3018 + $0x64] sm:$0xf]
      %v3037 = vld [vmem:[%s3018 + $0x6c] sm:$0xf]
      %v3038 = vld [vmem:[%s3018 + $0x70] sm:$0xf]
      %v3039 = vld [vmem:[%s3018 + $0x78] sm:$0xf]
      %v3040 = vld [vmem:[%s3018 + $0x7c] sm:$0xf]
      %v3041 = vld [vmem:[%s3018 + $0x84] sm:$0xf]
      %v3042 = vld [vmem:[%s3018 + $0x88] sm:$0xf]
      %v3043 = vld [vmem:[%s3018 + $0x90] sm:$0xf]
      %v3044 = vld [vmem:[%s3018 + $0x94] sm:$0xf]
      %v3045 = vld [vmem:[%s3018 + $0x9c] sm:$0xf]
      %v3046 = vld [vmem:[%s3018 + $0xa0] sm:$0xf]
      %v3047 = vld [vmem:[%s3018 + $0xa8] sm:$0xf]
      %v3048 = vld [vmem:[%s3018 + $0xac] sm:$0xf]
      %v3049 = vld [vmem:[%s3018 + $0xb4] sm:$0xf]
      %v3050 = vld [vmem:[%s3018 + $0xb8] sm:$0xf]
      %s3051 = scalar_lea.vmem %s1, 384
      %v3052 = vld [vmem:[%s3051] sm:$0xf]
      %v3053 = vld [vmem:[%s3051 + $0x4] sm:$0xf]
      %v3054 = vld [vmem:[%s3051 + $0x8] sm:$0xf]
      %v3055 = vld [vmem:[%s3051 + $0xc] sm:$0xf]
      %v3056 = vld [vmem:[%s3051 + $0x10] sm:$0xf]
      %v3057 = vld [vmem:[%s3051 + $0x14] sm:$0xf]
      %v3058 = vld [vmem:[%s3051 + $0x18] sm:$0xf]
      %v3059 = vld [vmem:[%s3051 + $0x1c] sm:$0xf]
      %v3060 = vld [vmem:[%s3051 + $0x20] sm:$0xf]
      %v3061 = vld [vmem:[%s3051 + $0x24] sm:$0xf]
      %v3062 = vld [vmem:[%s3051 + $0x28] sm:$0xf]
      %v3063 = vld [vmem:[%s3051 + $0x2c] sm:$0xf]
      %v3064 = vld [vmem:[%s3051 + $0x30] sm:$0xf]
      %v3065 = vld [vmem:[%s3051 + $0x34] sm:$0xf]
      %v3066 = vld [vmem:[%s3051 + $0x38] sm:$0xf]
      %v3067 = vld [vmem:[%s3051 + $0x3c] sm:$0xf]
      %v3100 = vunpack.c.l.b16 %v3019
      %v3101 = vunpack.c.l.b16 %v3020
      %v3102 = vunpack.c.l.b16 %v3021
      %v3103 = vunpack.c.l.b16 %v3022
      %v3104 = vunpack.c.l.b16 %v3023
      %v3105 = vunpack.c.l.b16 %v3024
      %v3106 = vunpack.c.l.b16 %v3025
      %v3107 = vunpack.c.l.b16 %v3026
      %v3108 = vunpack.c.l.b16 %v3027
      %v3109 = vunpack.c.l.b16 %v3028
      %v3110 = vunpack.c.l.b16 %v3029
      %v3111 = vunpack.c.l.b16 %v3030
      %v3112 = vunpack.c.l.b16 %v3031
      %v3113 = vunpack.c.l.b16 %v3032
      %v3114 = vunpack.c.l.b16 %v3033
      %v3115 = vunpack.c.l.b16 %v3034
      %v3116 = vunpack.c.l.b16 %v3035
      %v3117 = vunpack.c.l.b16 %v3036
      %v3118 = vunpack.c.l.b16 %v3037
      %v3119 = vunpack.c.l.b16 %v3038
      %v3120 = vunpack.c.l.b16 %v3039
      %v3121 = vunpack.c.l.b16 %v3040
      %v3122 = vunpack.c.l.b16 %v3041
      %v3123 = vunpack.c.l.b16 %v3042
      %v3124 = vunpack.c.l.b16 %v3043
      %v3125 = vunpack.c.l.b16 %v3044
      %v3126 = vunpack.c.l.b16 %v3045
      %v3127 = vunpack.c.l.b16 %v3046
      %v3128 = vunpack.c.l.b16 %v3047
      %v3129 = vunpack.c.l.b16 %v3048
      %v3130 = vunpack.c.l.b16 %v3049
      %v3131 = vunpack.c.l.b16 %v3050
      %v3132 = vpack.c.b16 %v3101, %v3100
      %v3133 = vpack.c.b16 %v3103, %v3102
      %v3134 = vpack.c.b16 %v3105, %v3104
      %v3135 = vpack.c.b16 %v3107, %v3106
      %v3136 = vpack.c.b16 %v3109, %v3108
      %v3137 = vpack.c.b16 %v3111, %v3110
      %v3138 = vpack.c.b16 %v3113, %v3112
      %v3139 = vpack.c.b16 %v3115, %v3114
      %v3140 = vpack.c.b16 %v3117, %v3116
      %v3141 = vpack.c.b16 %v3119, %v3118
      %v3142 = vpack.c.b16 %v3121, %v3120
      %v3143 = vpack.c.b16 %v3123, %v3122
      %v3144 = vpack.c.b16 %v3125, %v3124
      %v3145 = vpack.c.b16 %v3127, %v3126
      %v3146 = vpack.c.b16 %v3129, %v3128
      %v3147 = vpack.c.b16 %v3131, %v3130
      %v3180 = vunpack.c.l.b16 %v3052
      %v3181 = vunpack.c.l.b16 %v3053
      %v3182 = vunpack.c.l.b16 %v3054
      %v3183 = vunpack.c.l.b16 %v3055
      %v3184 = vunpack.c.l.b16 %v3056
      %v3185 = vunpack.c.l.b16 %v3057
      %v3186 = vunpack.c.l.b16 %v3058
      %v3187 = vunpack.c.l.b16 %v3059
      %v3188 = vunpack.c.l.b16 %v3060
      %v3189 = vunpack.c.l.b16 %v3061
      %v3190 = vunpack.c.l.b16 %v3062
      %v3191 = vunpack.c.l.b16 %v3063
      %v3192 = vunpack.c.l.b16 %v3064
      %v3193 = vunpack.c.l.b16 %v3065
      %v3194 = vunpack.c.l.b16 %v3066
      %v3195 = vunpack.c.l.b16 %v3067
      %v3196 = vpack.c.b16 %v3181, %v3180
      %v3197 = vpack.c.b16 %v3183, %v3182
      %v3198 = vpack.c.b16 %v3185, %v3184
      %v3199 = vpack.c.b16 %v3187, %v3186
      %v3200 = vpack.c.b16 %v3189, %v3188
      %v3201 = vpack.c.b16 %v3191, %v3190
      %v3202 = vpack.c.b16 %v3193, %v3192
      %v3203 = vpack.c.b16 %v3195, %v3194
      %3212 = vmatpush.bf16.msra.mxu0 %v3203
      %3213 = vmatpush.bf16.msra.mxu0 %v3202
      %3214 = vmatpush.bf16.msra.mxu0 %v3201
      %3215 = vmatpush.bf16.msra.mxu0 %v3200
      %3216 = vmatpush.bf16.msra.mxu0 %v3199
      %3217 = vmatpush.bf16.msra.mxu0 %v3198
      %3218 = vmatpush.bf16.msra.mxu0 %v3197
      %3219 = vmatpush.bf16.msra.mxu0 %v3196
      %3220 = vmatmul.bf16.gmra.mxu0 %v3132
      %v3221 = vpop.f32.mrf.mxu0
      %v3222 = vadd.f32 0.0, %v3221
      %v3223 = vpop.f32.mrf.mxu0
      %v3224 = vadd.f32 0.0, %v3223
      %3225 = vmatmul.bf16.gmra.mxu0 %v3133
      %v3226 = vpop.f32.mrf.mxu0
      %v3227 = vadd.f32 0.0, %v3226
      %v3228 = vpop.f32.mrf.mxu0
      %v3229 = vadd.f32 0.0, %v3228
      %3230 = vmatmul.bf16.gmra.mxu0 %v3134
      %v3231 = vpop.f32.mrf.mxu0
      %v3232 = vadd.f32 0.0, %v3231
      %v3233 = vpop.f32.mrf.mxu0
      %v3234 = vadd.f32 0.0, %v3233
      %3235 = vmatmul.bf16.gmra.mxu0 %v3135
      %v3236 = vpop.f32.mrf.mxu0
      %v3237 = vadd.f32 0.0, %v3236
      %v3238 = vpop.f32.mrf.mxu0
      %v3239 = vadd.f32 0.0, %v3238
      %3240 = vmatmul.bf16.gmra.mxu0 %v3136
      %v3241 = vpop.f32.mrf.mxu0
      %v3242 = vadd.f32 0.0, %v3241
      %v3243 = vpop.f32.mrf.mxu0
      %v3244 = vadd.f32 0.0, %v3243
      %3245 = vmatmul.bf16.gmra.mxu0 %v3137
      %v3246 = vpop.f32.mrf.mxu0
      %v3247 = vadd.f32 0.0, %v3246
      %v3248 = vpop.f32.mrf.mxu0
      %v3249 = vadd.f32 0.0, %v3248
      %3250 = vmatmul.bf16.gmra.mxu0 %v3138
      %v3251 = vpop.f32.mrf.mxu0
      %v3252 = vadd.f32 0.0, %v3251
      %v3253 = vpop.f32.mrf.mxu0
      %v3254 = vadd.f32 0.0, %v3253
      %3255 = vmatmul.bf16.gmra.mxu0 %v3139
      %v3256 = vpop.f32.mrf.mxu0
      %v3257 = vadd.f32 0.0, %v3256
      %v3258 = vpop.f32.mrf.mxu0
      %v3259 = vadd.f32 0.0, %v3258
      %3260 = vmatmul.bf16.gmra.mxu0 %v3140
      %v3261 = vpop.f32.mrf.mxu0
      %v3262 = vadd.f32 0.0, %v3261
      %v3263 = vpop.f32.mrf.mxu0
      %v3264 = vadd.f32 0.0, %v3263
      %3265 = vmatmul.bf16.gmra.mxu0 %v3141
      %v3266 = vpop.f32.mrf.mxu0
      %v3267 = vadd.f32 0.0, %v3266
      %v3268 = vpop.f32.mrf.mxu0
      %v3269 = vadd.f32 0.0, %v3268
      %3270 = vmatmul.bf16.gmra.mxu0 %v3142
      %v3271 = vpop.f32.mrf.mxu0
      %v3272 = vadd.f32 0.0, %v3271
      %v3273 = vpop.f32.mrf.mxu0
      %v3274 = vadd.f32 0.0, %v3273
      %3275 = vmatmul.bf16.gmra.mxu0 %v3143
      %v3276 = vpop.f32.mrf.mxu0
      %v3277 = vadd.f32 0.0, %v3276
      %v3278 = vpop.f32.mrf.mxu0
      %v3279 = vadd.f32 0.0, %v3278
      %3280 = vmatmul.bf16.gmra.mxu0 %v3144
      %v3281 = vpop.f32.mrf.mxu0
      %v3282 = vadd.f32 0.0, %v3281
      %v3283 = vpop.f32.mrf.mxu0
      %v3284 = vadd.f32 0.0, %v3283
      %3285 = vmatmul.bf16.gmra.mxu0 %v3145
      %v3286 = vpop.f32.mrf.mxu0
      %v3287 = vadd.f32 0.0, %v3286
      %v3288 = vpop.f32.mrf.mxu0
      %v3289 = vadd.f32 0.0, %v3288
      %3290 = vmatmul.bf16.gmra.mxu0 %v3146
      %v3291 = vpop.f32.mrf.mxu0
      %v3292 = vadd.f32 0.0, %v3291
      %v3293 = vpop.f32.mrf.mxu0
      %v3294 = vadd.f32 0.0, %v3293
      %3295 = vmatmul.bf16.gmra.mxu0 %v3147
      %v3296 = vpop.f32.mrf.mxu0
      %v3297 = vadd.f32 0.0, %v3296
      %v3298 = vpop.f32.mrf.mxu0
      %v3299 = vadd.f32 0.0, %v3298
      %3300 = vdwg.mxu0
      %v3301 = vadd.f32 %v2986, %v3222
      %v3302 = vadd.f32 %v2987, %v3224
      %v3303 = vadd.f32 %v2988, %v3227
      %v3304 = vadd.f32 %v2989, %v3229
      %v3305 = vadd.f32 %v2990, %v3232
      %v3306 = vadd.f32 %v2991, %v3234
      %v3307 = vadd.f32 %v2992, %v3237
      %v3308 = vadd.f32 %v2993, %v3239
      %v3309 = vadd.f32 %v2994, %v3242
      %v3310 = vadd.f32 %v2995, %v3244
      %v3311 = vadd.f32 %v2996, %v3247
      %v3312 = vadd.f32 %v2997, %v3249
      %v3313 = vadd.f32 %v2998, %v3252
      %v3314 = vadd.f32 %v2999, %v3254
      %v3315 = vadd.f32 %v3000, %v3257
      %v3316 = vadd.f32 %v3001, %v3259
      %v3317 = vadd.f32 %v3002, %v3262
      %v3318 = vadd.f32 %v3003, %v3264
      %v3319 = vadd.f32 %v3004, %v3267
      %v3320 = vadd.f32 %v3005, %v3269
      %v3321 = vadd.f32 %v3006, %v3272
      %v3322 = vadd.f32 %v3007, %v3274
      %v3323 = vadd.f32 %v3008, %v3277
      %v3324 = vadd.f32 %v3009, %v3279
      %v3325 = vadd.f32 %v3010, %v3282
      %v3326 = vadd.f32 %v3011, %v3284
      %v3327 = vadd.f32 %v3012, %v3287
      %v3328 = vadd.f32 %v3013, %v3289
      %v3329 = vadd.f32 %v3014, %v3292
      %v3330 = vadd.f32 %v3015, %v3294
      %v3331 = vadd.f32 %v3016, %v3297
      %v3332 = vadd.f32 %v3017, %v3299
      %v3333 = vld [vmem:[%s3018] sm:$0xf]
      %v3334 = vld [vmem:[%s3018 + $0x4] sm:$0xf]
      %v3335 = vld [vmem:[%s3018 + $0x8] sm:$0x1]
      %v3336 = vld [vmem:[%s3018 + $0xc] sm:$0xf]
      %v3337 = vld [vmem:[%s3018 + $0x10] sm:$0xf]
      %v3338 = vld [vmem:[%s3018 + $0x14] sm:$0x1]
      %v3339 = vld [vmem:[%s3018 + $0x18] sm:$0xf]
      %v3340 = vld [vmem:[%s3018 + $0x1c] sm:$0xf]
      %v3341 = vld [vmem:[%s3018 + $0x20] sm:$0x1]
      %v3342 = vld [vmem:[%s3018 + $0x24] sm:$0xf]
      %v3343 = vld [vmem:[%s3018 + $0x28] sm:$0xf]
      %v3344 = vld [vmem:[%s3018 + $0x2c] sm:$0x1]
      %v3345 = vld [vmem:[%s3018 + $0x30] sm:$0xf]
      %v3346 = vld [vmem:[%s3018 + $0x34] sm:$0xf]
      %v3347 = vld [vmem:[%s3018 + $0x38] sm:$0x1]
      %v3348 = vld [vmem:[%s3018 + $0x3c] sm:$0xf]
      %v3349 = vld [vmem:[%s3018 + $0x40] sm:$0xf]
      %v3350 = vld [vmem:[%s3018 + $0x44] sm:$0x1]
      %v3351 = vld [vmem:[%s3018 + $0x48] sm:$0xf]
      %v3352 = vld [vmem:[%s3018 + $0x4c] sm:$0xf]
      %v3353 = vld [vmem:[%s3018 + $0x50] sm:$0x1]
      %v3354 = vld [vmem:[%s3018 + $0x54] sm:$0xf]
      %v3355 = vld [vmem:[%s3018 + $0x58] sm:$0xf]
      %v3356 = vld [vmem:[%s3018 + $0x5c] sm:$0x1]
      %v3357 = vld [vmem:[%s3018 + $0x60] sm:$0xf]
      %v3358 = vld [vmem:[%s3018 + $0x64] sm:$0xf]
      %v3359 = vld [vmem:[%s3018 + $0x68] sm:$0x1]
      %v3360 = vld [vmem:[%s3018 + $0x6c] sm:$0xf]
      %v3361 = vld [vmem:[%s3018 + $0x70] sm:$0xf]
      %v3362 = vld [vmem:[%s3018 + $0x74] sm:$0x1]
      %v3363 = vld [vmem:[%s3018 + $0x78] sm:$0xf]
      %v3364 = vld [vmem:[%s3018 + $0x7c] sm:$0xf]
      %v3365 = vld [vmem:[%s3018 + $0x80] sm:$0x1]
      %v3366 = vld [vmem:[%s3018 + $0x84] sm:$0xf]
      %v3367 = vld [vmem:[%s3018 + $0x88] sm:$0xf]
      %v3368 = vld [vmem:[%s3018 + $0x8c] sm:$0x1]
      %v3369 = vld [vmem:[%s3018 + $0x90] sm:$0xf]
      %v3370 = vld [vmem:[%s3018 + $0x94] sm:$0xf]
      %v3371 = vld [vmem:[%s3018 + $0x98] sm:$0x1]
      %v3372 = vld [vmem:[%s3018 + $0x9c] sm:$0xf]
      %v3373 = vld [vmem:[%s3018 + $0xa0] sm:$0xf]
      %v3374 = vld [vmem:[%s3018 + $0xa4] sm:$0x1]
      %v3375 = vld [vmem:[%s3018 + $0xa8] sm:$0xf]
      %v3376 = vld [vmem:[%s3018 + $0xac] sm:$0xf]
      %v3377 = vld [vmem:[%s3018 + $0xb0] sm:$0x1]
      %v3378 = vld [vmem:[%s3018 + $0xb4] sm:$0xf]
      %v3379 = vld [vmem:[%s3018 + $0xb8] sm:$0xf]
      %v3380 = vld [vmem:[%s3018 + $0xbc] sm:$0x1]
      %v3382 = vshrl.u32 %v3333, 16
      %v3384 = vrot.slane %v3382, 4
      %v3385 = vshll.u32 %v3333, 16
      %v3387 = vrot.slane %v3385, 5
      %v3388 = vor.u32 %v3384, %v3387
      %v3389 = vrot.slane %v3388, 4
      %v3391 = vshll.u32 %v3334, 16
      %v3393 = vrot.slane %v3391, 5
      %v3394 = vsel %vm346, %v3389, %v3393
      %v3395 = vshrl.u32 %v3334, 16
      %v3397 = vrot.slane %v3395, 4
      %v3398 = vor.u32 %v3397, %v3393
      %v3399 = vrot.slane %v3398, 4
      %v3401 = vshll.u32 %v3335, 16
      %v3403 = vrot.slane %v3401, 5
      %v3404 = vsel %vm346, %v3399, %v3403
      %v3406 = vshrl.u32 %v3336, 16
      %v3408 = vrot.slane %v3406, 4
      %v3409 = vshll.u32 %v3336, 16
      %v3411 = vrot.slane %v3409, 5
      %v3412 = vor.u32 %v3408, %v3411
      %v3413 = vrot.slane %v3412, 4
      %v3415 = vshll.u32 %v3337, 16
      %v3417 = vrot.slane %v3415, 5
      %v3418 = vsel %vm346, %v3413, %v3417
      %v3419 = vshrl.u32 %v3337, 16
      %v3421 = vrot.slane %v3419, 4
      %v3422 = vor.u32 %v3421, %v3417
      %v3423 = vrot.slane %v3422, 4
      %v3425 = vshll.u32 %v3338, 16
      %v3427 = vrot.slane %v3425, 5
      %v3428 = vsel %vm346, %v3423, %v3427
      %v3430 = vshrl.u32 %v3339, 16
      %v3432 = vrot.slane %v3430, 4
      %v3433 = vshll.u32 %v3339, 16
      %v3435 = vrot.slane %v3433, 5
      %v3436 = vor.u32 %v3432, %v3435
      %v3437 = vrot.slane %v3436, 4
      %v3439 = vshll.u32 %v3340, 16
      %v3441 = vrot.slane %v3439, 5
      %v3442 = vsel %vm346, %v3437, %v3441
      %v3443 = vshrl.u32 %v3340, 16
      %v3445 = vrot.slane %v3443, 4
      %v3446 = vor.u32 %v3445, %v3441
      %v3447 = vrot.slane %v3446, 4
      %v3449 = vshll.u32 %v3341, 16
      %v3451 = vrot.slane %v3449, 5
      %v3452 = vsel %vm346, %v3447, %v3451
      %v3454 = vshrl.u32 %v3342, 16
      %v3456 = vrot.slane %v3454, 4
      %v3457 = vshll.u32 %v3342, 16
      %v3459 = vrot.slane %v3457, 5
      %v3460 = vor.u32 %v3456, %v3459
      %v3461 = vrot.slane %v3460, 4
      %v3463 = vshll.u32 %v3343, 16
      %v3465 = vrot.slane %v3463, 5
      %v3466 = vsel %vm346, %v3461, %v3465
      %v3467 = vshrl.u32 %v3343, 16
      %v3469 = vrot.slane %v3467, 4
      %v3470 = vor.u32 %v3469, %v3465
      %v3471 = vrot.slane %v3470, 4
      %v3473 = vshll.u32 %v3344, 16
      %v3475 = vrot.slane %v3473, 5
      %v3476 = vsel %vm346, %v3471, %v3475
      %v3478 = vshrl.u32 %v3345, 16
      %v3480 = vrot.slane %v3478, 4
      %v3481 = vshll.u32 %v3345, 16
      %v3483 = vrot.slane %v3481, 5
      %v3484 = vor.u32 %v3480, %v3483
      %v3485 = vrot.slane %v3484, 4
      %v3487 = vshll.u32 %v3346, 16
      %v3489 = vrot.slane %v3487, 5
      %v3490 = vsel %vm346, %v3485, %v3489
      %v3491 = vshrl.u32 %v3346, 16
      %v3493 = vrot.slane %v3491, 4
      %v3494 = vor.u32 %v3493, %v3489
      %v3495 = vrot.slane %v3494, 4
      %v3497 = vshll.u32 %v3347, 16
      %v3499 = vrot.slane %v3497, 5
      %v3500 = vsel %vm346, %v3495, %v3499
      %v3502 = vshrl.u32 %v3348, 16
      %v3504 = vrot.slane %v3502, 4
      %v3505 = vshll.u32 %v3348, 16
      %v3507 = vrot.slane %v3505, 5
      %v3508 = vor.u32 %v3504, %v3507
      %v3509 = vrot.slane %v3508, 4
      %v3511 = vshll.u32 %v3349, 16
      %v3513 = vrot.slane %v3511, 5
      %v3514 = vsel %vm346, %v3509, %v3513
      %v3515 = vshrl.u32 %v3349, 16
      %v3517 = vrot.slane %v3515, 4
      %v3518 = vor.u32 %v3517, %v3513
      %v3519 = vrot.slane %v3518, 4
      %v3521 = vshll.u32 %v3350, 16
      %v3523 = vrot.slane %v3521, 5
      %v3524 = vsel %vm346, %v3519, %v3523
      %v3526 = vshrl.u32 %v3351, 16
      %v3528 = vrot.slane %v3526, 4
      %v3529 = vshll.u32 %v3351, 16
      %v3531 = vrot.slane %v3529, 5
      %v3532 = vor.u32 %v3528, %v3531
      %v3533 = vrot.slane %v3532, 4
      %v3535 = vshll.u32 %v3352, 16
      %v3537 = vrot.slane %v3535, 5
      %v3538 = vsel %vm346, %v3533, %v3537
      %v3539 = vshrl.u32 %v3352, 16
      %v3541 = vrot.slane %v3539, 4
      %v3542 = vor.u32 %v3541, %v3537
      %v3543 = vrot.slane %v3542, 4
      %v3545 = vshll.u32 %v3353, 16
      %v3547 = vrot.slane %v3545, 5
      %v3548 = vsel %vm346, %v3543, %v3547
      %v3550 = vshrl.u32 %v3354, 16
      %v3552 = vrot.slane %v3550, 4
      %v3553 = vshll.u32 %v3354, 16
      %v3555 = vrot.slane %v3553, 5
      %v3556 = vor.u32 %v3552, %v3555
      %v3557 = vrot.slane %v3556, 4
      %v3559 = vshll.u32 %v3355, 16
      %v3561 = vrot.slane %v3559, 5
      %v3562 = vsel %vm346, %v3557, %v3561
      %v3563 = vshrl.u32 %v3355, 16
      %v3565 = vrot.slane %v3563, 4
      %v3566 = vor.u32 %v3565, %v3561
      %v3567 = vrot.slane %v3566, 4
      %v3569 = vshll.u32 %v3356, 16
      %v3571 = vrot.slane %v3569, 5
      %v3572 = vsel %vm346, %v3567, %v3571
      %v3574 = vshrl.u32 %v3357, 16
      %v3576 = vrot.slane %v3574, 4
      %v3577 = vshll.u32 %v3357, 16
      %v3579 = vrot.slane %v3577, 5
      %v3580 = vor.u32 %v3576, %v3579
      %v3581 = vrot.slane %v3580, 4
      %v3583 = vshll.u32 %v3358, 16
      %v3585 = vrot.slane %v3583, 5
      %v3586 = vsel %vm346, %v3581, %v3585
      %v3587 = vshrl.u32 %v3358, 16
      %v3589 = vrot.slane %v3587, 4
      %v3590 = vor.u32 %v3589, %v3585
      %v3591 = vrot.slane %v3590, 4
      %v3593 = vshll.u32 %v3359, 16
      %v3595 = vrot.slane %v3593, 5
      %v3596 = vsel %vm346, %v3591, %v3595
      %v3598 = vshrl.u32 %v3360, 16
      %v3600 = vrot.slane %v3598, 4
      %v3601 = vshll.u32 %v3360, 16
      %v3603 = vrot.slane %v3601, 5
      %v3604 = vor.u32 %v3600, %v3603
      %v3605 = vrot.slane %v3604, 4
      %v3607 = vshll.u32 %v3361, 16
      %v3609 = vrot.slane %v3607, 5
      %v3610 = vsel %vm346, %v3605, %v3609
      %v3611 = vshrl.u32 %v3361, 16
      %v3613 = vrot.slane %v3611, 4
      %v3614 = vor.u32 %v3613, %v3609
      %v3615 = vrot.slane %v3614, 4
      %v3617 = vshll.u32 %v3362, 16
      %v3619 = vrot.slane %v3617, 5
      %v3620 = vsel %vm346, %v3615, %v3619
      %v3622 = vshrl.u32 %v3363, 16
      %v3624 = vrot.slane %v3622, 4
      %v3625 = vshll.u32 %v3363, 16
      %v3627 = vrot.slane %v3625, 5
      %v3628 = vor.u32 %v3624, %v3627
      %v3629 = vrot.slane %v3628, 4
      %v3631 = vshll.u32 %v3364, 16
      %v3633 = vrot.slane %v3631, 5
      %v3634 = vsel %vm346, %v3629, %v3633
      %v3635 = vshrl.u32 %v3364, 16
      %v3637 = vrot.slane %v3635, 4
      %v3638 = vor.u32 %v3637, %v3633
      %v3639 = vrot.slane %v3638, 4
      %v3641 = vshll.u32 %v3365, 16
      %v3643 = vrot.slane %v3641, 5
      %v3644 = vsel %vm346, %v3639, %v3643
      %v3646 = vshrl.u32 %v3366, 16
      %v3648 = vrot.slane %v3646, 4
      %v3649 = vshll.u32 %v3366, 16
      %v3651 = vrot.slane %v3649, 5
      %v3652 = vor.u32 %v3648, %v3651
      %v3653 = vrot.slane %v3652, 4
      %v3655 = vshll.u32 %v3367, 16
      %v3657 = vrot.slane %v3655, 5
      %v3658 = vsel %vm346, %v3653, %v3657
      %v3659 = vshrl.u32 %v3367, 16
      %v3661 = vrot.slane %v3659, 4
      %v3662 = vor.u32 %v3661, %v3657
      %v3663 = vrot.slane %v3662, 4
      %v3665 = vshll.u32 %v3368, 16
      %v3667 = vrot.slane %v3665, 5
      %v3668 = vsel %vm346, %v3663, %v3667
      %v3670 = vshrl.u32 %v3369, 16
      %v3672 = vrot.slane %v3670, 4
      %v3673 = vshll.u32 %v3369, 16
      %v3675 = vrot.slane %v3673, 5
      %v3676 = vor.u32 %v3672, %v3675
      %v3677 = vrot.slane %v3676, 4
      %v3679 = vshll.u32 %v3370, 16
      %v3681 = vrot.slane %v3679, 5
      %v3682 = vsel %vm346, %v3677, %v3681
      %v3683 = vshrl.u32 %v3370, 16
      %v3685 = vrot.slane %v3683, 4
      %v3686 = vor.u32 %v3685, %v3681
      %v3687 = vrot.slane %v3686, 4
      %v3689 = vshll.u32 %v3371, 16
      %v3691 = vrot.slane %v3689, 5
      %v3692 = vsel %vm346, %v3687, %v3691
      %v3694 = vshrl.u32 %v3372, 16
      %v3696 = vrot.slane %v3694, 4
      %v3697 = vshll.u32 %v3372, 16
      %v3699 = vrot.slane %v3697, 5
      %v3700 = vor.u32 %v3696, %v3699
      %v3701 = vrot.slane %v3700, 4
      %v3703 = vshll.u32 %v3373, 16
      %v3705 = vrot.slane %v3703, 5
      %v3706 = vsel %vm346, %v3701, %v3705
      %v3707 = vshrl.u32 %v3373, 16
      %v3709 = vrot.slane %v3707, 4
      %v3710 = vor.u32 %v3709, %v3705
      %v3711 = vrot.slane %v3710, 4
      %v3713 = vshll.u32 %v3374, 16
      %v3715 = vrot.slane %v3713, 5
      %v3716 = vsel %vm346, %v3711, %v3715
      %v3718 = vshrl.u32 %v3375, 16
      %v3720 = vrot.slane %v3718, 4
      %v3721 = vshll.u32 %v3375, 16
      %v3723 = vrot.slane %v3721, 5
      %v3724 = vor.u32 %v3720, %v3723
      %v3725 = vrot.slane %v3724, 4
      %v3727 = vshll.u32 %v3376, 16
      %v3729 = vrot.slane %v3727, 5
      %v3730 = vsel %vm346, %v3725, %v3729
      %v3731 = vshrl.u32 %v3376, 16
      %v3733 = vrot.slane %v3731, 4
      %v3734 = vor.u32 %v3733, %v3729
      %v3735 = vrot.slane %v3734, 4
      %v3737 = vshll.u32 %v3377, 16
      %v3739 = vrot.slane %v3737, 5
      %v3740 = vsel %vm346, %v3735, %v3739
      %v3742 = vshrl.u32 %v3378, 16
      %v3744 = vrot.slane %v3742, 4
      %v3745 = vshll.u32 %v3378, 16
      %v3747 = vrot.slane %v3745, 5
      %v3748 = vor.u32 %v3744, %v3747
      %v3749 = vrot.slane %v3748, 4
      %v3751 = vshll.u32 %v3379, 16
      %v3753 = vrot.slane %v3751, 5
      %v3754 = vsel %vm346, %v3749, %v3753
      %v3755 = vshrl.u32 %v3379, 16
      %v3757 = vrot.slane %v3755, 4
      %v3758 = vor.u32 %v3757, %v3753
      %v3759 = vrot.slane %v3758, 4
      %v3761 = vshll.u32 %v3380, 16
      %v3763 = vrot.slane %v3761, 5
      %v3764 = vsel %vm346, %v3759, %v3763
      %s3765 = scalar_lea.vmem %s1, 448
      %v3766 = vld [vmem:[%s3765] sm:$0xf]
      %v3767 = vld [vmem:[%s3765 + $0x4] sm:$0xf]
      %v3768 = vld [vmem:[%s3765 + $0x8] sm:$0xf]
      %v3769 = vld [vmem:[%s3765 + $0xc] sm:$0xf]
      %v3770 = vld [vmem:[%s3765 + $0x10] sm:$0xf]
      %v3771 = vld [vmem:[%s3765 + $0x14] sm:$0xf]
      %v3772 = vld [vmem:[%s3765 + $0x18] sm:$0xf]
      %v3773 = vld [vmem:[%s3765 + $0x1c] sm:$0xf]
      %v3774 = vld [vmem:[%s3765 + $0x20] sm:$0xf]
      %v3775 = vld [vmem:[%s3765 + $0x24] sm:$0xf]
      %v3776 = vld [vmem:[%s3765 + $0x28] sm:$0xf]
      %v3777 = vld [vmem:[%s3765 + $0x2c] sm:$0xf]
      %v3778 = vld [vmem:[%s3765 + $0x30] sm:$0xf]
      %v3779 = vld [vmem:[%s3765 + $0x34] sm:$0xf]
      %v3780 = vld [vmem:[%s3765 + $0x38] sm:$0xf]
      %v3781 = vld [vmem:[%s3765 + $0x3c] sm:$0xf]
      %v3782 = vunpack.c.l.b16 %v3394
      %v3783 = vunpack.c.l.b16 %v3404
      %v3784 = vunpack.c.l.b16 %v3418
      %v3785 = vunpack.c.l.b16 %v3428
      %v3786 = vunpack.c.l.b16 %v3442
      %v3787 = vunpack.c.l.b16 %v3452
      %v3788 = vunpack.c.l.b16 %v3466
      %v3789 = vunpack.c.l.b16 %v3476
      %v3790 = vunpack.c.l.b16 %v3490
      %v3791 = vunpack.c.l.b16 %v3500
      %v3792 = vunpack.c.l.b16 %v3514
      %v3793 = vunpack.c.l.b16 %v3524
      %v3794 = vunpack.c.l.b16 %v3538
      %v3795 = vunpack.c.l.b16 %v3548
      %v3796 = vunpack.c.l.b16 %v3562
      %v3797 = vunpack.c.l.b16 %v3572
      %v3798 = vunpack.c.l.b16 %v3586
      %v3799 = vunpack.c.l.b16 %v3596
      %v3800 = vunpack.c.l.b16 %v3610
      %v3801 = vunpack.c.l.b16 %v3620
      %v3802 = vunpack.c.l.b16 %v3634
      %v3803 = vunpack.c.l.b16 %v3644
      %v3804 = vunpack.c.l.b16 %v3658
      %v3805 = vunpack.c.l.b16 %v3668
      %v3806 = vunpack.c.l.b16 %v3682
      %v3807 = vunpack.c.l.b16 %v3692
      %v3808 = vunpack.c.l.b16 %v3706
      %v3809 = vunpack.c.l.b16 %v3716
      %v3810 = vunpack.c.l.b16 %v3730
      %v3811 = vunpack.c.l.b16 %v3740
      %v3812 = vunpack.c.l.b16 %v3754
      %v3813 = vunpack.c.l.b16 %v3764
      %v3814 = vpack.c.b16 %v3783, %v3782
      %v3815 = vpack.c.b16 %v3785, %v3784
      %v3816 = vpack.c.b16 %v3787, %v3786
      %v3817 = vpack.c.b16 %v3789, %v3788
      %v3818 = vpack.c.b16 %v3791, %v3790
      %v3819 = vpack.c.b16 %v3793, %v3792
      %v3820 = vpack.c.b16 %v3795, %v3794
      %v3821 = vpack.c.b16 %v3797, %v3796
      %v3822 = vpack.c.b16 %v3799, %v3798
      %v3823 = vpack.c.b16 %v3801, %v3800
      %v3824 = vpack.c.b16 %v3803, %v3802
      %v3825 = vpack.c.b16 %v3805, %v3804
      %v3826 = vpack.c.b16 %v3807, %v3806
      %v3827 = vpack.c.b16 %v3809, %v3808
      %v3828 = vpack.c.b16 %v3811, %v3810
      %v3829 = vpack.c.b16 %v3813, %v3812
      %v3862 = vunpack.c.l.b16 %v3766
      %v3863 = vunpack.c.l.b16 %v3767
      %v3864 = vunpack.c.l.b16 %v3768
      %v3865 = vunpack.c.l.b16 %v3769
      %v3866 = vunpack.c.l.b16 %v3770
      %v3867 = vunpack.c.l.b16 %v3771
      %v3868 = vunpack.c.l.b16 %v3772
      %v3869 = vunpack.c.l.b16 %v3773
      %v3870 = vunpack.c.l.b16 %v3774
      %v3871 = vunpack.c.l.b16 %v3775
      %v3872 = vunpack.c.l.b16 %v3776
      %v3873 = vunpack.c.l.b16 %v3777
      %v3874 = vunpack.c.l.b16 %v3778
      %v3875 = vunpack.c.l.b16 %v3779
      %v3876 = vunpack.c.l.b16 %v3780
      %v3877 = vunpack.c.l.b16 %v3781
      %v3878 = vpack.c.b16 %v3863, %v3862
      %v3879 = vpack.c.b16 %v3865, %v3864
      %v3880 = vpack.c.b16 %v3867, %v3866
      %v3881 = vpack.c.b16 %v3869, %v3868
      %v3882 = vpack.c.b16 %v3871, %v3870
      %v3883 = vpack.c.b16 %v3873, %v3872
      %v3884 = vpack.c.b16 %v3875, %v3874
      %v3885 = vpack.c.b16 %v3877, %v3876
      %3894 = vmatpush.bf16.msra.mxu0 %v3885
      %3895 = vmatpush.bf16.msra.mxu0 %v3884
      %3896 = vmatpush.bf16.msra.mxu0 %v3883
      %3897 = vmatpush.bf16.msra.mxu0 %v3882
      %3898 = vmatpush.bf16.msra.mxu0 %v3881
      %3899 = vmatpush.bf16.msra.mxu0 %v3880
      %3900 = vmatpush.bf16.msra.mxu0 %v3879
      %3901 = vmatpush.bf16.msra.mxu0 %v3878
      %3902 = vmatmul.bf16.gmra.mxu0 %v3814
      %v3903 = vpop.f32.mrf.mxu0
      %v3904 = vadd.f32 0.0, %v3903
      %v3905 = vpop.f32.mrf.mxu0
      %v3906 = vadd.f32 0.0, %v3905
      %3907 = vmatmul.bf16.gmra.mxu0 %v3815
      %v3908 = vpop.f32.mrf.mxu0
      %v3909 = vadd.f32 0.0, %v3908
      %v3910 = vpop.f32.mrf.mxu0
      %v3911 = vadd.f32 0.0, %v3910
      %3912 = vmatmul.bf16.gmra.mxu0 %v3816
      %v3913 = vpop.f32.mrf.mxu0
      %v3914 = vadd.f32 0.0, %v3913
      %v3915 = vpop.f32.mrf.mxu0
      %v3916 = vadd.f32 0.0, %v3915
      %3917 = vmatmul.bf16.gmra.mxu0 %v3817
      %v3918 = vpop.f32.mrf.mxu0
      %v3919 = vadd.f32 0.0, %v3918
      %v3920 = vpop.f32.mrf.mxu0
      %v3921 = vadd.f32 0.0, %v3920
      %3922 = vmatmul.bf16.gmra.mxu0 %v3818
      %v3923 = vpop.f32.mrf.mxu0
      %v3924 = vadd.f32 0.0, %v3923
      %v3925 = vpop.f32.mrf.mxu0
      %v3926 = vadd.f32 0.0, %v3925
      %3927 = vmatmul.bf16.gmra.mxu0 %v3819
      %v3928 = vpop.f32.mrf.mxu0
      %v3929 = vadd.f32 0.0, %v3928
      %v3930 = vpop.f32.mrf.mxu0
      %v3931 = vadd.f32 0.0, %v3930
      %3932 = vmatmul.bf16.gmra.mxu0 %v3820
      %v3933 = vpop.f32.mrf.mxu0
      %v3934 = vadd.f32 0.0, %v3933
      %v3935 = vpop.f32.mrf.mxu0
      %v3936 = vadd.f32 0.0, %v3935
      %3937 = vmatmul.bf16.gmra.mxu0 %v3821
      %v3938 = vpop.f32.mrf.mxu0
      %v3939 = vadd.f32 0.0, %v3938
      %v3940 = vpop.f32.mrf.mxu0
      %v3941 = vadd.f32 0.0, %v3940
      %3942 = vmatmul.bf16.gmra.mxu0 %v3822
      %v3943 = vpop.f32.mrf.mxu0
      %v3944 = vadd.f32 0.0, %v3943
      %v3945 = vpop.f32.mrf.mxu0
      %v3946 = vadd.f32 0.0, %v3945
      %3947 = vmatmul.bf16.gmra.mxu0 %v3823
      %v3948 = vpop.f32.mrf.mxu0
      %v3949 = vadd.f32 0.0, %v3948
      %v3950 = vpop.f32.mrf.mxu0
      %v3951 = vadd.f32 0.0, %v3950
      %3952 = vmatmul.bf16.gmra.mxu0 %v3824
      %v3953 = vpop.f32.mrf.mxu0
      %v3954 = vadd.f32 0.0, %v3953
      %v3955 = vpop.f32.mrf.mxu0
      %v3956 = vadd.f32 0.0, %v3955
      %3957 = vmatmul.bf16.gmra.mxu0 %v3825
      %v3958 = vpop.f32.mrf.mxu0
      %v3959 = vadd.f32 0.0, %v3958
      %v3960 = vpop.f32.mrf.mxu0
      %v3961 = vadd.f32 0.0, %v3960
      %3962 = vmatmul.bf16.gmra.mxu0 %v3826
      %v3963 = vpop.f32.mrf.mxu0
      %v3964 = vadd.f32 0.0, %v3963
      %v3965 = vpop.f32.mrf.mxu0
      %v3966 = vadd.f32 0.0, %v3965
      %3967 = vmatmul.bf16.gmra.mxu0 %v3827
      %v3968 = vpop.f32.mrf.mxu0
      %v3969 = vadd.f32 0.0, %v3968
      %v3970 = vpop.f32.mrf.mxu0
      %v3971 = vadd.f32 0.0, %v3970
      %3972 = vmatmul.bf16.gmra.mxu0 %v3828
      %v3973 = vpop.f32.mrf.mxu0
      %v3974 = vadd.f32 0.0, %v3973
      %v3975 = vpop.f32.mrf.mxu0
      %v3976 = vadd.f32 0.0, %v3975
      %3977 = vmatmul.bf16.gmra.mxu0 %v3829
      %v3978 = vpop.f32.mrf.mxu0
      %v3979 = vadd.f32 0.0, %v3978
      %v3980 = vpop.f32.mrf.mxu0
      %v3981 = vadd.f32 0.0, %v3980
      %3982 = vdwg.mxu0
      %v3983 = vadd.f32 %v3301, %v3904
      %v3984 = vadd.f32 %v3302, %v3906
      %v3985 = vadd.f32 %v3303, %v3909
      %v3986 = vadd.f32 %v3304, %v3911
      %v3987 = vadd.f32 %v3305, %v3914
      %v3988 = vadd.f32 %v3306, %v3916
      %v3989 = vadd.f32 %v3307, %v3919
      %v3990 = vadd.f32 %v3308, %v3921
      %v3991 = vadd.f32 %v3309, %v3924
      %v3992 = vadd.f32 %v3310, %v3926
      %v3993 = vadd.f32 %v3311, %v3929
      %v3994 = vadd.f32 %v3312, %v3931
      %v3995 = vadd.f32 %v3313, %v3934
      %v3996 = vadd.f32 %v3314, %v3936
      %v3997 = vadd.f32 %v3315, %v3939
      %v3998 = vadd.f32 %v3316, %v3941
      %v3999 = vadd.f32 %v3317, %v3944
      %v4000 = vadd.f32 %v3318, %v3946
      %v4001 = vadd.f32 %v3319, %v3949
      %v4002 = vadd.f32 %v3320, %v3951
      %v4003 = vadd.f32 %v3321, %v3954
      %v4004 = vadd.f32 %v3322, %v3956
      %v4005 = vadd.f32 %v3323, %v3959
      %v4006 = vadd.f32 %v3324, %v3961
      %v4007 = vadd.f32 %v3325, %v3964
      %v4008 = vadd.f32 %v3326, %v3966
      %v4009 = vadd.f32 %v3327, %v3969
      %v4010 = vadd.f32 %v3328, %v3971
      %v4011 = vadd.f32 %v3329, %v3974
      %v4012 = vadd.f32 %v3330, %v3976
      %v4013 = vadd.f32 %v3331, %v3979
      %v4014 = vadd.f32 %v3332, %v3981
      %v4015 = vld [vmem:[%s3018] sm:$0xe]
      %v4016 = vld [vmem:[%s3018 + $0xc] sm:$0xe]
      %v4017 = vld [vmem:[%s3018 + $0x18] sm:$0xe]
      %v4018 = vld [vmem:[%s3018 + $0x24] sm:$0xe]
      %v4019 = vld [vmem:[%s3018 + $0x30] sm:$0xe]
      %v4020 = vld [vmem:[%s3018 + $0x3c] sm:$0xe]
      %v4021 = vld [vmem:[%s3018 + $0x48] sm:$0xe]
      %v4022 = vld [vmem:[%s3018 + $0x54] sm:$0xe]
      %v4023 = vld [vmem:[%s3018 + $0x60] sm:$0xe]
      %v4024 = vld [vmem:[%s3018 + $0x6c] sm:$0xe]
      %v4025 = vld [vmem:[%s3018 + $0x78] sm:$0xe]
      %v4026 = vld [vmem:[%s3018 + $0x84] sm:$0xe]
      %v4027 = vld [vmem:[%s3018 + $0x90] sm:$0xe]
      %v4028 = vld [vmem:[%s3018 + $0x9c] sm:$0xe]
      %v4029 = vld [vmem:[%s3018 + $0xa8] sm:$0xe]
      %v4030 = vld [vmem:[%s3018 + $0xb4] sm:$0xe]
      %v4079 = vrot.slane %v4015, 5
      %v4080 = vrot.slane %v4079, 4
      %v4081 = vrot.slane %v3334, 5
      %v4082 = vsel %vm1232, %v4080, %v4081
      %v4083 = vrot.slane %v4081, 4
      %v4084 = vrot.slane %v3335, 5
      %v4085 = vsel %vm1232, %v4083, %v4084
      %v4086 = vrot.slane %v4016, 5
      %v4087 = vrot.slane %v4086, 4
      %v4088 = vrot.slane %v3337, 5
      %v4089 = vsel %vm1232, %v4087, %v4088
      %v4090 = vrot.slane %v4088, 4
      %v4091 = vrot.slane %v3338, 5
      %v4092 = vsel %vm1232, %v4090, %v4091
      %v4093 = vrot.slane %v4017, 5
      %v4094 = vrot.slane %v4093, 4
      %v4095 = vrot.slane %v3340, 5
      %v4096 = vsel %vm1232, %v4094, %v4095
      %v4097 = vrot.slane %v4095, 4
      %v4098 = vrot.slane %v3341, 5
      %v4099 = vsel %vm1232, %v4097, %v4098
      %v4100 = vrot.slane %v4018, 5
      %v4101 = vrot.slane %v4100, 4
      %v4102 = vrot.slane %v3343, 5
      %v4103 = vsel %vm1232, %v4101, %v4102
      %v4104 = vrot.slane %v4102, 4
      %v4105 = vrot.slane %v3344, 5
      %v4106 = vsel %vm1232, %v4104, %v4105
      %v4107 = vrot.slane %v4019, 5
      %v4108 = vrot.slane %v4107, 4
      %v4109 = vrot.slane %v3346, 5
      %v4110 = vsel %vm1232, %v4108, %v4109
      %v4111 = vrot.slane %v4109, 4
      %v4112 = vrot.slane %v3347, 5
      %v4113 = vsel %vm1232, %v4111, %v4112
      %v4114 = vrot.slane %v4020, 5
      %v4115 = vrot.slane %v4114, 4
      %v4116 = vrot.slane %v3349, 5
      %v4117 = vsel %vm1232, %v4115, %v4116
      %v4118 = vrot.slane %v4116, 4
      %v4119 = vrot.slane %v3350, 5
      %v4120 = vsel %vm1232, %v4118, %v4119
      %v4121 = vrot.slane %v4021, 5
      %v4122 = vrot.slane %v4121, 4
      %v4123 = vrot.slane %v3352, 5
      %v4124 = vsel %vm1232, %v4122, %v4123
      %v4125 = vrot.slane %v4123, 4
      %v4126 = vrot.slane %v3353, 5
      %v4127 = vsel %vm1232, %v4125, %v4126
      %v4128 = vrot.slane %v4022, 5
      %v4129 = vrot.slane %v4128, 4
      %v4130 = vrot.slane %v3355, 5
      %v4131 = vsel %vm1232, %v4129, %v4130
      %v4132 = vrot.slane %v4130, 4
      %v4133 = vrot.slane %v3356, 5
      %v4134 = vsel %vm1232, %v4132, %v4133
      %v4135 = vrot.slane %v4023, 5
      %v4136 = vrot.slane %v4135, 4
      %v4137 = vrot.slane %v3358, 5
      %v4138 = vsel %vm1232, %v4136, %v4137
      %v4139 = vrot.slane %v4137, 4
      %v4140 = vrot.slane %v3359, 5
      %v4141 = vsel %vm1232, %v4139, %v4140
      %v4142 = vrot.slane %v4024, 5
      %v4143 = vrot.slane %v4142, 4
      %v4144 = vrot.slane %v3361, 5
      %v4145 = vsel %vm1232, %v4143, %v4144
      %v4146 = vrot.slane %v4144, 4
      %v4147 = vrot.slane %v3362, 5
      %v4148 = vsel %vm1232, %v4146, %v4147
      %v4149 = vrot.slane %v4025, 5
      %v4150 = vrot.slane %v4149, 4
      %v4151 = vrot.slane %v3364, 5
      %v4152 = vsel %vm1232, %v4150, %v4151
      %v4153 = vrot.slane %v4151, 4
      %v4154 = vrot.slane %v3365, 5
      %v4155 = vsel %vm1232, %v4153, %v4154
      %v4156 = vrot.slane %v4026, 5
      %v4157 = vrot.slane %v4156, 4
      %v4158 = vrot.slane %v3367, 5
      %v4159 = vsel %vm1232, %v4157, %v4158
      %v4160 = vrot.slane %v4158, 4
      %v4161 = vrot.slane %v3368, 5
      %v4162 = vsel %vm1232, %v4160, %v4161
      %v4163 = vrot.slane %v4027, 5
      %v4164 = vrot.slane %v4163, 4
      %v4165 = vrot.slane %v3370, 5
      %v4166 = vsel %vm1232, %v4164, %v4165
      %v4167 = vrot.slane %v4165, 4
      %v4168 = vrot.slane %v3371, 5
      %v4169 = vsel %vm1232, %v4167, %v4168
      %v4170 = vrot.slane %v4028, 5
      %v4171 = vrot.slane %v4170, 4
      %v4172 = vrot.slane %v3373, 5
      %v4173 = vsel %vm1232, %v4171, %v4172
      %v4174 = vrot.slane %v4172, 4
      %v4175 = vrot.slane %v3374, 5
      %v4176 = vsel %vm1232, %v4174, %v4175
      %v4177 = vrot.slane %v4029, 5
      %v4178 = vrot.slane %v4177, 4
      %v4179 = vrot.slane %v3376, 5
      %v4180 = vsel %vm1232, %v4178, %v4179
      %v4181 = vrot.slane %v4179, 4
      %v4182 = vrot.slane %v3377, 5
      %v4183 = vsel %vm1232, %v4181, %v4182
      %v4184 = vrot.slane %v4030, 5
      %v4185 = vrot.slane %v4184, 4
      %v4186 = vrot.slane %v3379, 5
      %v4187 = vsel %vm1232, %v4185, %v4186
      %v4188 = vrot.slane %v4186, 4
      %v4189 = vrot.slane %v3380, 5
      %v4190 = vsel %vm1232, %v4188, %v4189
      %s4191 = scalar_lea.vmem %s1, 512
      %v4192 = vld [vmem:[%s4191] sm:$0xf]
      %v4193 = vld [vmem:[%s4191 + $0x4] sm:$0xf]
      %v4194 = vld [vmem:[%s4191 + $0x8] sm:$0xf]
      %v4195 = vld [vmem:[%s4191 + $0xc] sm:$0xf]
      %v4196 = vld [vmem:[%s4191 + $0x10] sm:$0xf]
      %v4197 = vld [vmem:[%s4191 + $0x14] sm:$0xf]
      %v4198 = vld [vmem:[%s4191 + $0x18] sm:$0xf]
      %v4199 = vld [vmem:[%s4191 + $0x1c] sm:$0xf]
      %v4200 = vld [vmem:[%s4191 + $0x20] sm:$0xf]
      %v4201 = vld [vmem:[%s4191 + $0x24] sm:$0xf]
      %v4202 = vld [vmem:[%s4191 + $0x28] sm:$0xf]
      %v4203 = vld [vmem:[%s4191 + $0x2c] sm:$0xf]
      %v4204 = vld [vmem:[%s4191 + $0x30] sm:$0xf]
      %v4205 = vld [vmem:[%s4191 + $0x34] sm:$0xf]
      %v4206 = vld [vmem:[%s4191 + $0x38] sm:$0xf]
      %v4207 = vld [vmem:[%s4191 + $0x3c] sm:$0xf]
      %v4208 = vunpack.c.l.b16 %v4082
      %v4209 = vunpack.c.l.b16 %v4085
      %v4210 = vunpack.c.l.b16 %v4089
      %v4211 = vunpack.c.l.b16 %v4092
      %v4212 = vunpack.c.l.b16 %v4096
      %v4213 = vunpack.c.l.b16 %v4099
      %v4214 = vunpack.c.l.b16 %v4103
      %v4215 = vunpack.c.l.b16 %v4106
      %v4216 = vunpack.c.l.b16 %v4110
      %v4217 = vunpack.c.l.b16 %v4113
      %v4218 = vunpack.c.l.b16 %v4117
      %v4219 = vunpack.c.l.b16 %v4120
      %v4220 = vunpack.c.l.b16 %v4124
      %v4221 = vunpack.c.l.b16 %v4127
      %v4222 = vunpack.c.l.b16 %v4131
      %v4223 = vunpack.c.l.b16 %v4134
      %v4224 = vunpack.c.l.b16 %v4138
      %v4225 = vunpack.c.l.b16 %v4141
      %v4226 = vunpack.c.l.b16 %v4145
      %v4227 = vunpack.c.l.b16 %v4148
      %v4228 = vunpack.c.l.b16 %v4152
      %v4229 = vunpack.c.l.b16 %v4155
      %v4230 = vunpack.c.l.b16 %v4159
      %v4231 = vunpack.c.l.b16 %v4162
      %v4232 = vunpack.c.l.b16 %v4166
      %v4233 = vunpack.c.l.b16 %v4169
      %v4234 = vunpack.c.l.b16 %v4173
      %v4235 = vunpack.c.l.b16 %v4176
      %v4236 = vunpack.c.l.b16 %v4180
      %v4237 = vunpack.c.l.b16 %v4183
      %v4238 = vunpack.c.l.b16 %v4187
      %v4239 = vunpack.c.l.b16 %v4190
      %v4240 = vpack.c.b16 %v4209, %v4208
      %v4241 = vpack.c.b16 %v4211, %v4210
      %v4242 = vpack.c.b16 %v4213, %v4212
      %v4243 = vpack.c.b16 %v4215, %v4214
      %v4244 = vpack.c.b16 %v4217, %v4216
      %v4245 = vpack.c.b16 %v4219, %v4218
      %v4246 = vpack.c.b16 %v4221, %v4220
      %v4247 = vpack.c.b16 %v4223, %v4222
      %v4248 = vpack.c.b16 %v4225, %v4224
      %v4249 = vpack.c.b16 %v4227, %v4226
      %v4250 = vpack.c.b16 %v4229, %v4228
      %v4251 = vpack.c.b16 %v4231, %v4230
      %v4252 = vpack.c.b16 %v4233, %v4232
      %v4253 = vpack.c.b16 %v4235, %v4234
      %v4254 = vpack.c.b16 %v4237, %v4236
      %v4255 = vpack.c.b16 %v4239, %v4238
      %v4288 = vunpack.c.l.b16 %v4192
      %v4289 = vunpack.c.l.b16 %v4193
      %v4290 = vunpack.c.l.b16 %v4194
      %v4291 = vunpack.c.l.b16 %v4195
      %v4292 = vunpack.c.l.b16 %v4196
      %v4293 = vunpack.c.l.b16 %v4197
      %v4294 = vunpack.c.l.b16 %v4198
      %v4295 = vunpack.c.l.b16 %v4199
      %v4296 = vunpack.c.l.b16 %v4200
      %v4297 = vunpack.c.l.b16 %v4201
      %v4298 = vunpack.c.l.b16 %v4202
      %v4299 = vunpack.c.l.b16 %v4203
      %v4300 = vunpack.c.l.b16 %v4204
      %v4301 = vunpack.c.l.b16 %v4205
      %v4302 = vunpack.c.l.b16 %v4206
      %v4303 = vunpack.c.l.b16 %v4207
      %v4304 = vpack.c.b16 %v4289, %v4288
      %v4305 = vpack.c.b16 %v4291, %v4290
      %v4306 = vpack.c.b16 %v4293, %v4292
      %v4307 = vpack.c.b16 %v4295, %v4294
      %v4308 = vpack.c.b16 %v4297, %v4296
      %v4309 = vpack.c.b16 %v4299, %v4298
      %v4310 = vpack.c.b16 %v4301, %v4300
      %v4311 = vpack.c.b16 %v4303, %v4302
      %4320 = vmatpush.bf16.msra.mxu0 %v4311
      %4321 = vmatpush.bf16.msra.mxu0 %v4310
      %4322 = vmatpush.bf16.msra.mxu0 %v4309
      %4323 = vmatpush.bf16.msra.mxu0 %v4308
      %4324 = vmatpush.bf16.msra.mxu0 %v4307
      %4325 = vmatpush.bf16.msra.mxu0 %v4306
      %4326 = vmatpush.bf16.msra.mxu0 %v4305
      %4327 = vmatpush.bf16.msra.mxu0 %v4304
      %4328 = vmatmul.bf16.gmra.mxu0 %v4240
      %v4329 = vpop.f32.mrf.mxu0
      %v4330 = vadd.f32 0.0, %v4329
      %v4331 = vpop.f32.mrf.mxu0
      %v4332 = vadd.f32 0.0, %v4331
      %4333 = vmatmul.bf16.gmra.mxu0 %v4241
      %v4334 = vpop.f32.mrf.mxu0
      %v4335 = vadd.f32 0.0, %v4334
      %v4336 = vpop.f32.mrf.mxu0
      %v4337 = vadd.f32 0.0, %v4336
      %4338 = vmatmul.bf16.gmra.mxu0 %v4242
      %v4339 = vpop.f32.mrf.mxu0
      %v4340 = vadd.f32 0.0, %v4339
      %v4341 = vpop.f32.mrf.mxu0
      %v4342 = vadd.f32 0.0, %v4341
      %4343 = vmatmul.bf16.gmra.mxu0 %v4243
      %v4344 = vpop.f32.mrf.mxu0
      %v4345 = vadd.f32 0.0, %v4344
      %v4346 = vpop.f32.mrf.mxu0
      %v4347 = vadd.f32 0.0, %v4346
      %4348 = vmatmul.bf16.gmra.mxu0 %v4244
      %v4349 = vpop.f32.mrf.mxu0
      %v4350 = vadd.f32 0.0, %v4349
      %v4351 = vpop.f32.mrf.mxu0
      %v4352 = vadd.f32 0.0, %v4351
      %4353 = vmatmul.bf16.gmra.mxu0 %v4245
      %v4354 = vpop.f32.mrf.mxu0
      %v4355 = vadd.f32 0.0, %v4354
      %v4356 = vpop.f32.mrf.mxu0
      %v4357 = vadd.f32 0.0, %v4356
      %4358 = vmatmul.bf16.gmra.mxu0 %v4246
      %v4359 = vpop.f32.mrf.mxu0
      %v4360 = vadd.f32 0.0, %v4359
      %v4361 = vpop.f32.mrf.mxu0
      %v4362 = vadd.f32 0.0, %v4361
      %4363 = vmatmul.bf16.gmra.mxu0 %v4247
      %v4364 = vpop.f32.mrf.mxu0
      %v4365 = vadd.f32 0.0, %v4364
      %v4366 = vpop.f32.mrf.mxu0
      %v4367 = vadd.f32 0.0, %v4366
      %4368 = vmatmul.bf16.gmra.mxu0 %v4248
      %v4369 = vpop.f32.mrf.mxu0
      %v4370 = vadd.f32 0.0, %v4369
      %v4371 = vpop.f32.mrf.mxu0
      %v4372 = vadd.f32 0.0, %v4371
      %4373 = vmatmul.bf16.gmra.mxu0 %v4249
      %v4374 = vpop.f32.mrf.mxu0
      %v4375 = vadd.f32 0.0, %v4374
      %v4376 = vpop.f32.mrf.mxu0
      %v4377 = vadd.f32 0.0, %v4376
      %4378 = vmatmul.bf16.gmra.mxu0 %v4250
      %v4379 = vpop.f32.mrf.mxu0
      %v4380 = vadd.f32 0.0, %v4379
      %v4381 = vpop.f32.mrf.mxu0
      %v4382 = vadd.f32 0.0, %v4381
      %4383 = vmatmul.bf16.gmra.mxu0 %v4251
      %v4384 = vpop.f32.mrf.mxu0
      %v4385 = vadd.f32 0.0, %v4384
      %v4386 = vpop.f32.mrf.mxu0
      %v4387 = vadd.f32 0.0, %v4386
      %4388 = vmatmul.bf16.gmra.mxu0 %v4252
      %v4389 = vpop.f32.mrf.mxu0
      %v4390 = vadd.f32 0.0, %v4389
      %v4391 = vpop.f32.mrf.mxu0
      %v4392 = vadd.f32 0.0, %v4391
      %4393 = vmatmul.bf16.gmra.mxu0 %v4253
      %v4394 = vpop.f32.mrf.mxu0
      %v4395 = vadd.f32 0.0, %v4394
      %v4396 = vpop.f32.mrf.mxu0
      %v4397 = vadd.f32 0.0, %v4396
      %4398 = vmatmul.bf16.gmra.mxu0 %v4254
      %v4399 = vpop.f32.mrf.mxu0
      %v4400 = vadd.f32 0.0, %v4399
      %v4401 = vpop.f32.mrf.mxu0
      %v4402 = vadd.f32 0.0, %v4401
      %4403 = vmatmul.bf16.gmra.mxu0 %v4255
      %v4404 = vpop.f32.mrf.mxu0
      %v4405 = vadd.f32 0.0, %v4404
      %v4406 = vpop.f32.mrf.mxu0
      %v4407 = vadd.f32 0.0, %v4406
      %4408 = vdwg.mxu0
      %v4409 = vadd.f32 %v3983, %v4330
      %v4410 = vadd.f32 %v3984, %v4332
      %v4411 = vadd.f32 %v3985, %v4335
      %v4412 = vadd.f32 %v3986, %v4337
      %v4413 = vadd.f32 %v3987, %v4340
      %v4414 = vadd.f32 %v3988, %v4342
      %v4415 = vadd.f32 %v3989, %v4345
      %v4416 = vadd.f32 %v3990, %v4347
      %v4417 = vadd.f32 %v3991, %v4350
      %v4418 = vadd.f32 %v3992, %v4352
      %v4419 = vadd.f32 %v3993, %v4355
      %v4420 = vadd.f32 %v3994, %v4357
      %v4421 = vadd.f32 %v3995, %v4360
      %v4422 = vadd.f32 %v3996, %v4362
      %v4423 = vadd.f32 %v3997, %v4365
      %v4424 = vadd.f32 %v3998, %v4367
      %v4425 = vadd.f32 %v3999, %v4370
      %v4426 = vadd.f32 %v4000, %v4372
      %v4427 = vadd.f32 %v4001, %v4375
      %v4428 = vadd.f32 %v4002, %v4377
      %v4429 = vadd.f32 %v4003, %v4380
      %v4430 = vadd.f32 %v4004, %v4382
      %v4431 = vadd.f32 %v4005, %v4385
      %v4432 = vadd.f32 %v4006, %v4387
      %v4433 = vadd.f32 %v4007, %v4390
      %v4434 = vadd.f32 %v4008, %v4392
      %v4435 = vadd.f32 %v4009, %v4395
      %v4436 = vadd.f32 %v4010, %v4397
      %v4437 = vadd.f32 %v4011, %v4400
      %v4438 = vadd.f32 %v4012, %v4402
      %v4439 = vadd.f32 %v4013, %v4405
      %v4440 = vadd.f32 %v4014, %v4407
      %v4441 = vld [vmem:[%s2] sm:$0x1]
      %v4443 = vperm.slane %v4441, 0
      %v4445 = vadd.f32 %v4409, %v4443
      %v4446 = vadd.f32 %v4410, %v4443
      %v4447 = vadd.f32 %v4411, %v4443
      %v4448 = vadd.f32 %v4412, %v4443
      %v4449 = vadd.f32 %v4413, %v4443
      %v4450 = vadd.f32 %v4414, %v4443
      %v4451 = vadd.f32 %v4415, %v4443
      %v4452 = vadd.f32 %v4416, %v4443
      %v4453 = vadd.f32 %v4417, %v4443
      %v4454 = vadd.f32 %v4418, %v4443
      %v4455 = vadd.f32 %v4419, %v4443
      %v4456 = vadd.f32 %v4420, %v4443
      %v4457 = vadd.f32 %v4421, %v4443
      %v4458 = vadd.f32 %v4422, %v4443
      %v4459 = vadd.f32 %v4423, %v4443
      %v4460 = vadd.f32 %v4424, %v4443
      %v4461 = vadd.f32 %v4425, %v4443
      %v4462 = vadd.f32 %v4426, %v4443
      %v4463 = vadd.f32 %v4427, %v4443
      %v4464 = vadd.f32 %v4428, %v4443
      %v4465 = vadd.f32 %v4429, %v4443
      %v4466 = vadd.f32 %v4430, %v4443
      %v4467 = vadd.f32 %v4431, %v4443
      %v4468 = vadd.f32 %v4432, %v4443
      %v4469 = vadd.f32 %v4433, %v4443
      %v4470 = vadd.f32 %v4434, %v4443
      %v4471 = vadd.f32 %v4435, %v4443
      %v4472 = vadd.f32 %v4436, %v4443
      %v4473 = vadd.f32 %v4437, %v4443
      %v4474 = vadd.f32 %v4438, %v4443
      %v4475 = vadd.f32 %v4439, %v4443
      %v4476 = vadd.f32 %v4440, %v4443
      %v4477 = vmax.f32 %v4445, 0.0
      %v4478 = vmax.f32 %v4446, 0.0
      %v4479 = vmax.f32 %v4447, 0.0
      %v4480 = vmax.f32 %v4448, 0.0
      %v4481 = vmax.f32 %v4449, 0.0
      %v4482 = vmax.f32 %v4450, 0.0
      %v4483 = vmax.f32 %v4451, 0.0
      %v4484 = vmax.f32 %v4452, 0.0
      %v4485 = vmax.f32 %v4453, 0.0
      %v4486 = vmax.f32 %v4454, 0.0
      %v4487 = vmax.f32 %v4455, 0.0
      %v4488 = vmax.f32 %v4456, 0.0
      %v4489 = vmax.f32 %v4457, 0.0
      %v4490 = vmax.f32 %v4458, 0.0
      %v4491 = vmax.f32 %v4459, 0.0
      %v4492 = vmax.f32 %v4460, 0.0
      %v4493 = vmax.f32 %v4461, 0.0
      %v4494 = vmax.f32 %v4462, 0.0
      %v4495 = vmax.f32 %v4463, 0.0
      %v4496 = vmax.f32 %v4464, 0.0
      %v4497 = vmax.f32 %v4465, 0.0
      %v4498 = vmax.f32 %v4466, 0.0
      %v4499 = vmax.f32 %v4467, 0.0
      %v4500 = vmax.f32 %v4468, 0.0
      %v4501 = vmax.f32 %v4469, 0.0
      %v4502 = vmax.f32 %v4470, 0.0
      %v4503 = vmax.f32 %v4471, 0.0
      %v4504 = vmax.f32 %v4472, 0.0
      %v4505 = vmax.f32 %v4473, 0.0
      %v4506 = vmax.f32 %v4474, 0.0
      %v4507 = vmax.f32 %v4475, 0.0
      %v4508 = vmax.f32 %v4476, 0.0
      %4509 = vst [vmem:[#allocation2] sm:$0xf] 0
      %4510 = vst [vmem:[#allocation2 + $0x4] sm:$0xf] 0
      %4511 = vst [vmem:[#allocation2 + $0x8] sm:$0x1] 0
      %4512 = vst [vmem:[#allocation2 + $0xc] sm:$0xf] 0
      %4513 = vst [vmem:[#allocation2 + $0x10] sm:$0xf] 0
      %4514 = vst [vmem:[#allocation2 + $0x14] sm:$0x1] 0
      %4515 = vst [vmem:[#allocation2 + $0x18] sm:$0xf] 0
      %4516 = vst [vmem:[#allocation2 + $0x1c] sm:$0xf] 0
      %4517 = vst [vmem:[#allocation2 + $0x20] sm:$0x1] 0
      %4518 = vst [vmem:[#allocation2 + $0x24] sm:$0xf] 0
      %4519 = vst [vmem:[#allocation2 + $0x28] sm:$0xf] 0
      %4520 = vst [vmem:[#allocation2 + $0x2c] sm:$0x1] 0
      %4521 = vst [vmem:[#allocation2 + $0x30] sm:$0xf] 0
      %4522 = vst [vmem:[#allocation2 + $0x34] sm:$0xf] 0
      %4523 = vst [vmem:[#allocation2 + $0x38] sm:$0x1] 0
      %4524 = vst [vmem:[#allocation2 + $0x3c] sm:$0xf] 0
      %4525 = vst [vmem:[#allocation2 + $0x40] sm:$0xf] 0
      %4526 = vst [vmem:[#allocation2 + $0x44] sm:$0x1] 0
      %4527 = vst [vmem:[#allocation2 + $0x48] sm:$0xf] 0
      %4528 = vst [vmem:[#allocation2 + $0x4c] sm:$0xf] 0
      %4529 = vst [vmem:[#allocation2 + $0x50] sm:$0x1] 0
      %4530 = vst [vmem:[#allocation2 + $0x54] sm:$0xf] 0
      %4531 = vst [vmem:[#allocation2 + $0x58] sm:$0xf] 0
      %4532 = vst [vmem:[#allocation2 + $0x5c] sm:$0x1] 0
      %4533 = vst [vmem:[#allocation2 + $0x60] sm:$0xf] 0
      %4534 = vst [vmem:[#allocation2 + $0x64] sm:$0xf] 0
      %4535 = vst [vmem:[#allocation2 + $0x68] sm:$0x1] 0
      %4536 = vst [vmem:[#allocation2 + $0x6c] sm:$0xf] 0
      %4537 = vst [vmem:[#allocation2 + $0x70] sm:$0xf] 0
      %4538 = vst [vmem:[#allocation2 + $0x74] sm:$0x1] 0
      %4539 = vst [vmem:[#allocation2 + $0x78] sm:$0xf] 0
      %4540 = vst [vmem:[#allocation2 + $0x7c] sm:$0xf] 0
      %4541 = vst [vmem:[#allocation2 + $0x80] sm:$0x1] 0
      %4542 = vst [vmem:[#allocation2 + $0x84] sm:$0xf] 0
      %4543 = vst [vmem:[#allocation2 + $0x88] sm:$0xf] 0
      %4544 = vst [vmem:[#allocation2 + $0x8c] sm:$0x1] 0
      %4545 = vst [vmem:[#allocation2 + $0x90] sm:$0xf] 0
      %4546 = vst [vmem:[#allocation2 + $0x94] sm:$0xf] 0
      %4547 = vst [vmem:[#allocation2 + $0x98] sm:$0x1] 0
      %4548 = vst [vmem:[#allocation2 + $0x9c] sm:$0xf] 0
      %4549 = vst [vmem:[#allocation2 + $0xa0] sm:$0xf] 0
      %4550 = vst [vmem:[#allocation2 + $0xa4] sm:$0x1] 0
      %4551 = vst [vmem:[#allocation2 + $0xa8] sm:$0xf] 0
      %4552 = vst [vmem:[#allocation2 + $0xac] sm:$0xf] 0
      %4553 = vst [vmem:[#allocation2 + $0xb0] sm:$0x1] 0
      %4554 = vst [vmem:[#allocation2 + $0xb4] sm:$0xf] 0
      %4555 = vst [vmem:[#allocation2 + $0xb8] sm:$0xf] 0
      %4556 = vst [vmem:[#allocation2 + $0xbc] sm:$0x1] 0
      %4557 = vst [vmem:[#allocation2 + $0xc0] sm:$0xf] 0
      %4558 = vst [vmem:[#allocation2 + $0xc4] sm:$0xf] 0
      %4559 = vst [vmem:[#allocation2 + $0xc8] sm:$0x1] 0
      %4560 = vst [vmem:[#allocation2 + $0xcc] sm:$0xf] 0
      %4561 = vst [vmem:[#allocation2 + $0xd0] sm:$0xf] 0
      %4562 = vst [vmem:[#allocation2 + $0xd4] sm:$0x1] 0
      %v4563 = vpack.c.bf16 %v4477, %v4477
      %v4564 = vpack.c.bf16 %v4478, %v4478
      %v4565 = vpack.c.bf16 %v4479, %v4479
      %v4566 = vpack.c.bf16 %v4480, %v4480
      %v4567 = vpack.c.bf16 %v4481, %v4481
      %v4568 = vpack.c.bf16 %v4482, %v4482
      %v4569 = vpack.c.bf16 %v4483, %v4483
      %v4570 = vpack.c.bf16 %v4484, %v4484
      %v4571 = vpack.c.bf16 %v4485, %v4485
      %v4572 = vpack.c.bf16 %v4486, %v4486
      %v4573 = vpack.c.bf16 %v4487, %v4487
      %v4574 = vpack.c.bf16 %v4488, %v4488
      %v4575 = vpack.c.bf16 %v4489, %v4489
      %v4576 = vpack.c.bf16 %v4490, %v4490
      %v4577 = vpack.c.bf16 %v4491, %v4491
      %v4578 = vpack.c.bf16 %v4492, %v4492
      %v4579 = vpack.c.bf16 %v4493, %v4493
      %v4580 = vpack.c.bf16 %v4494, %v4494
      %v4581 = vpack.c.bf16 %v4495, %v4495
      %v4582 = vpack.c.bf16 %v4496, %v4496
      %v4583 = vpack.c.bf16 %v4497, %v4497
      %v4584 = vpack.c.bf16 %v4498, %v4498
      %v4585 = vpack.c.bf16 %v4499, %v4499
      %v4586 = vpack.c.bf16 %v4500, %v4500
      %v4587 = vpack.c.bf16 %v4501, %v4501
      %v4588 = vpack.c.bf16 %v4502, %v4502
      %v4589 = vpack.c.bf16 %v4503, %v4503
      %v4590 = vpack.c.bf16 %v4504, %v4504
      %v4591 = vpack.c.bf16 %v4505, %v4505
      %v4592 = vpack.c.bf16 %v4506, %v4506
      %v4593 = vpack.c.bf16 %v4507, %v4507
      %v4594 = vpack.c.bf16 %v4508, %v4508
      %vm4595 = vsmask.f32 256
      %vm4596 = vsmask.f32 4368
      %vm4597 = vmor %vm4595, %vm4596
      %v4599 = vshrl.u32 %v4563, 16
      %v4601 = vrot.slane %v4599, 7
      %v4602 = vshll.u32 %v4563, 16
      %v4604 = vor.u32 %v4601, %v4602
      %v4605 = vrot.slane %v4601, 4
      %v4607 = vshrl.u32 %v4564, 16
      %v4609 = vrot.slane %v4607, 7
      %v4610 = vshll.u32 %v4564, 16
      %v4612 = vor.u32 %v4609, %v4610
      %v4613 = vsel %vm4597, %v4605, %v4612
      %v4614 = vrot.slane %v4609, 4
      %v4616 = vshrl.u32 %v4565, 16
      %v4618 = vrot.slane %v4616, 7
      %v4619 = vshll.u32 %v4565, 16
      %v4621 = vor.u32 %v4618, %v4619
      %v4622 = vrot.slane %v4618, 4
      %v4624 = vshrl.u32 %v4566, 16
      %v4626 = vrot.slane %v4624, 7
      %v4627 = vshll.u32 %v4566, 16
      %v4629 = vor.u32 %v4626, %v4627
      %v4630 = vsel %vm4597, %v4622, %v4629
      %v4631 = vrot.slane %v4626, 4
      %v4633 = vshrl.u32 %v4567, 16
      %v4635 = vrot.slane %v4633, 7
      %v4636 = vshll.u32 %v4567, 16
      %v4638 = vor.u32 %v4635, %v4636
      %v4639 = vrot.slane %v4635, 4
      %v4641 = vshrl.u32 %v4568, 16
      %v4643 = vrot.slane %v4641, 7
      %v4644 = vshll.u32 %v4568, 16
      %v4646 = vor.u32 %v4643, %v4644
      %v4647 = vsel %vm4597, %v4639, %v4646
      %v4648 = vrot.slane %v4643, 4
      %v4650 = vshrl.u32 %v4569, 16
      %v4652 = vrot.slane %v4650, 7
      %v4653 = vshll.u32 %v4569, 16
      %v4655 = vor.u32 %v4652, %v4653
      %v4656 = vrot.slane %v4652, 4
      %v4658 = vshrl.u32 %v4570, 16
      %v4660 = vrot.slane %v4658, 7
      %v4661 = vshll.u32 %v4570, 16
      %v4663 = vor.u32 %v4660, %v4661
      %v4664 = vsel %vm4597, %v4656, %v4663
      %v4665 = vrot.slane %v4660, 4
      %v4667 = vshrl.u32 %v4571, 16
      %v4669 = vrot.slane %v4667, 7
      %v4670 = vshll.u32 %v4571, 16
      %v4672 = vor.u32 %v4669, %v4670
      %v4673 = vrot.slane %v4669, 4
      %v4675 = vshrl.u32 %v4572, 16
      %v4677 = vrot.slane %v4675, 7
      %v4678 = vshll.u32 %v4572, 16
      %v4680 = vor.u32 %v4677, %v4678
      %v4681 = vsel %vm4597, %v4673, %v4680
      %v4682 = vrot.slane %v4677, 4
      %v4684 = vshrl.u32 %v4573, 16
      %v4686 = vrot.slane %v4684, 7
      %v4687 = vshll.u32 %v4573, 16
      %v4689 = vor.u32 %v4686, %v4687
      %v4690 = vrot.slane %v4686, 4
      %v4692 = vshrl.u32 %v4574, 16
      %v4694 = vrot.slane %v4692, 7
      %v4695 = vshll.u32 %v4574, 16
      %v4697 = vor.u32 %v4694, %v4695
      %v4698 = vsel %vm4597, %v4690, %v4697
      %v4699 = vrot.slane %v4694, 4
      %v4701 = vshrl.u32 %v4575, 16
      %v4703 = vrot.slane %v4701, 7
      %v4704 = vshll.u32 %v4575, 16
      %v4706 = vor.u32 %v4703, %v4704
      %v4707 = vrot.slane %v4703, 4
      %v4709 = vshrl.u32 %v4576, 16
      %v4711 = vrot.slane %v4709, 7
      %v4712 = vshll.u32 %v4576, 16
      %v4714 = vor.u32 %v4711, %v4712
      %v4715 = vsel %vm4597, %v4707, %v4714
      %v4716 = vrot.slane %v4711, 4
      %v4718 = vshrl.u32 %v4577, 16
      %v4720 = vrot.slane %v4718, 7
      %v4721 = vshll.u32 %v4577, 16
      %v4723 = vor.u32 %v4720, %v4721
      %v4724 = vrot.slane %v4720, 4
      %v4726 = vshrl.u32 %v4578, 16
      %v4728 = vrot.slane %v4726, 7
      %v4729 = vshll.u32 %v4578, 16
      %v4731 = vor.u32 %v4728, %v4729
      %v4732 = vsel %vm4597, %v4724, %v4731
      %v4733 = vrot.slane %v4728, 4
      %v4735 = vshrl.u32 %v4579, 16
      %v4737 = vrot.slane %v4735, 7
      %v4738 = vshll.u32 %v4579, 16
      %v4740 = vor.u32 %v4737, %v4738
      %v4741 = vrot.slane %v4737, 4
      %v4743 = vshrl.u32 %v4580, 16
      %v4745 = vrot.slane %v4743, 7
      %v4746 = vshll.u32 %v4580, 16
      %v4748 = vor.u32 %v4745, %v4746
      %v4749 = vsel %vm4597, %v4741, %v4748
      %v4750 = vrot.slane %v4745, 4
      %v4752 = vshrl.u32 %v4581, 16
      %v4754 = vrot.slane %v4752, 7
      %v4755 = vshll.u32 %v4581, 16
      %v4757 = vor.u32 %v4754, %v4755
      %v4758 = vrot.slane %v4754, 4
      %v4760 = vshrl.u32 %v4582, 16
      %v4762 = vrot.slane %v4760, 7
      %v4763 = vshll.u32 %v4582, 16
      %v4765 = vor.u32 %v4762, %v4763
      %v4766 = vsel %vm4597, %v4758, %v4765
      %v4767 = vrot.slane %v4762, 4
      %v4769 = vshrl.u32 %v4583, 16
      %v4771 = vrot.slane %v4769, 7
      %v4772 = vshll.u32 %v4583, 16
      %v4774 = vor.u32 %v4771, %v4772
      %v4775 = vrot.slane %v4771, 4
      %v4777 = vshrl.u32 %v4584, 16
      %v4779 = vrot.slane %v4777, 7
      %v4780 = vshll.u32 %v4584, 16
      %v4782 = vor.u32 %v4779, %v4780
      %v4783 = vsel %vm4597, %v4775, %v4782
      %v4784 = vrot.slane %v4779, 4
      %v4786 = vshrl.u32 %v4585, 16
      %v4788 = vrot.slane %v4786, 7
      %v4789 = vshll.u32 %v4585, 16
      %v4791 = vor.u32 %v4788, %v4789
      %v4792 = vrot.slane %v4788, 4
      %v4794 = vshrl.u32 %v4586, 16
      %v4796 = vrot.slane %v4794, 7
      %v4797 = vshll.u32 %v4586, 16
      %v4799 = vor.u32 %v4796, %v4797
      %v4800 = vsel %vm4597, %v4792, %v4799
      %v4801 = vrot.slane %v4796, 4
      %v4803 = vshrl.u32 %v4587, 16
      %v4805 = vrot.slane %v4803, 7
      %v4806 = vshll.u32 %v4587, 16
      %v4808 = vor.u32 %v4805, %v4806
      %v4809 = vrot.slane %v4805, 4
      %v4811 = vshrl.u32 %v4588, 16
      %v4813 = vrot.slane %v4811, 7
      %v4814 = vshll.u32 %v4588, 16
      %v4816 = vor.u32 %v4813, %v4814
      %v4817 = vsel %vm4597, %v4809, %v4816
      %v4818 = vrot.slane %v4813, 4
      %v4820 = vshrl.u32 %v4589, 16
      %v4822 = vrot.slane %v4820, 7
      %v4823 = vshll.u32 %v4589, 16
      %v4825 = vor.u32 %v4822, %v4823
      %v4826 = vrot.slane %v4822, 4
      %v4828 = vshrl.u32 %v4590, 16
      %v4830 = vrot.slane %v4828, 7
      %v4831 = vshll.u32 %v4590, 16
      %v4833 = vor.u32 %v4830, %v4831
      %v4834 = vsel %vm4597, %v4826, %v4833
      %v4835 = vrot.slane %v4830, 4
      %v4837 = vshrl.u32 %v4591, 16
      %v4839 = vrot.slane %v4837, 7
      %v4840 = vshll.u32 %v4591, 16
      %v4842 = vor.u32 %v4839, %v4840
      %v4843 = vrot.slane %v4839, 4
      %v4845 = vshrl.u32 %v4592, 16
      %v4847 = vrot.slane %v4845, 7
      %v4848 = vshll.u32 %v4592, 16
      %v4850 = vor.u32 %v4847, %v4848
      %v4851 = vsel %vm4597, %v4843, %v4850
      %v4852 = vrot.slane %v4847, 4
      %v4854 = vshrl.u32 %v4593, 16
      %v4856 = vrot.slane %v4854, 7
      %v4857 = vshll.u32 %v4593, 16
      %v4859 = vor.u32 %v4856, %v4857
      %v4860 = vrot.slane %v4856, 4
      %v4862 = vshrl.u32 %v4594, 16
      %v4864 = vrot.slane %v4862, 7
      %v4865 = vshll.u32 %v4594, 16
      %v4867 = vor.u32 %v4864, %v4865
      %v4868 = vsel %vm4597, %v4860, %v4867
      %v4869 = vrot.slane %v4864, 4
      %s4918 = scalar_lea.vmem [#allocation2], 12
      %vm4919 = vcmask 1043456
      %vm4920 = vsmask.f32 7938
      %vm4921 = vmand %vm4919, %vm4920
      %v4922 = vld [vmem:[%s4918] sm:$0xf]
      %v4923 = vsel %vm4921, %v4604, %v4922
      %4924 = vst [vmem:[%s4918] sm:$0xf] %v4923
      %4925 = vst [vmem:[%s4918 + $0x4] sm:$0xf] %v4613
      %vm4926 = vcmask 1040384
      %vm4927 = vmand %vm4926, %vm4595
      %v4928 = vld [vmem:[%s4918 + $0x8] sm:$0x1]
      %v4929 = vsel %vm4927, %v4614, %v4928
      %4930 = vst [vmem:[%s4918 + $0x8] sm:$0x1] %v4929
      %v4931 = vld [vmem:[%s4918 + $0xc] sm:$0xf]
      %v4932 = vsel %vm4921, %v4621, %v4931
      %4933 = vst [vmem:[%s4918 + $0xc] sm:$0xf] %v4932
      %4934 = vst [vmem:[%s4918 + $0x10] sm:$0xf] %v4630
      %v4935 = vld [vmem:[%s4918 + $0x14] sm:$0x1]
      %v4936 = vsel %vm4927, %v4631, %v4935
      %4937 = vst [vmem:[%s4918 + $0x14] sm:$0x1] %v4936
      %v4938 = vld [vmem:[%s4918 + $0x18] sm:$0xf]
      %v4939 = vsel %vm4921, %v4638, %v4938
      %4940 = vst [vmem:[%s4918 + $0x18] sm:$0xf] %v4939
      %4941 = vst [vmem:[%s4918 + $0x1c] sm:$0xf] %v4647
      %v4942 = vld [vmem:[%s4918 + $0x20] sm:$0x1]
      %v4943 = vsel %vm4927, %v4648, %v4942
      %4944 = vst [vmem:[%s4918 + $0x20] sm:$0x1] %v4943
      %v4945 = vld [vmem:[%s4918 + $0x24] sm:$0xf]
      %v4946 = vsel %vm4921, %v4655, %v4945
      %4947 = vst [vmem:[%s4918 + $0x24] sm:$0xf] %v4946
      %4948 = vst [vmem:[%s4918 + $0x28] sm:$0xf] %v4664
      %v4949 = vld [vmem:[%s4918 + $0x2c] sm:$0x1]
      %v4950 = vsel %vm4927, %v4665, %v4949
      %4951 = vst [vmem:[%s4918 + $0x2c] sm:$0x1] %v4950
      %v4952 = vld [vmem:[%s4918 + $0x30] sm:$0xf]
      %v4953 = vsel %vm4921, %v4672, %v4952
      %4954 = vst [vmem:[%s4918 + $0x30] sm:$0xf] %v4953
      %4955 = vst [vmem:[%s4918 + $0x34] sm:$0xf] %v4681
      %v4956 = vld [vmem:[%s4918 + $0x38] sm:$0x1]
      %v4957 = vsel %vm4927, %v4682, %v4956
      %4958 = vst [vmem:[%s4918 + $0x38] sm:$0x1] %v4957
      %v4959 = vld [vmem:[%s4918 + $0x3c] sm:$0xf]
      %v4960 = vsel %vm4921, %v4689, %v4959
      %4961 = vst [vmem:[%s4918 + $0x3c] sm:$0xf] %v4960
      %4962 = vst [vmem:[%s4918 + $0x40] sm:$0xf] %v4698
      %v4963 = vld [vmem:[%s4918 + $0x44] sm:$0x1]
      %v4964 = vsel %vm4927, %v4699, %v4963
      %4965 = vst [vmem:[%s4918 + $0x44] sm:$0x1] %v4964
      %v4966 = vld [vmem:[%s4918 + $0x48] sm:$0xf]
      %v4967 = vsel %vm4921, %v4706, %v4966
      %4968 = vst [vmem:[%s4918 + $0x48] sm:$0xf] %v4967
      %4969 = vst [vmem:[%s4918 + $0x4c] sm:$0xf] %v4715
      %v4970 = vld [vmem:[%s4918 + $0x50] sm:$0x1]
      %v4971 = vsel %vm4927, %v4716, %v4970
      %4972 = vst [vmem:[%s4918 + $0x50] sm:$0x1] %v4971
      %v4973 = vld [vmem:[%s4918 + $0x54] sm:$0xf]
      %v4974 = vsel %vm4921, %v4723, %v4973
      %4975 = vst [vmem:[%s4918 + $0x54] sm:$0xf] %v4974
      %4976 = vst [vmem:[%s4918 + $0x58] sm:$0xf] %v4732
      %v4977 = vld [vmem:[%s4918 + $0x5c] sm:$0x1]
      %v4978 = vsel %vm4927, %v4733, %v4977
      %4979 = vst [vmem:[%s4918 + $0x5c] sm:$0x1] %v4978
      %v4980 = vld [vmem:[%s4918 + $0x60] sm:$0xf]
      %v4981 = vsel %vm4921, %v4740, %v4980
      %4982 = vst [vmem:[%s4918 + $0x60] sm:$0xf] %v4981
      %4983 = vst [vmem:[%s4918 + $0x64] sm:$0xf] %v4749
      %v4984 = vld [vmem:[%s4918 + $0x68] sm:$0x1]
      %v4985 = vsel %vm4927, %v4750, %v4984
      %4986 = vst [vmem:[%s4918 + $0x68] sm:$0x1] %v4985
      %v4987 = vld [vmem:[%s4918 + $0x6c] sm:$0xf]
      %v4988 = vsel %vm4921, %v4757, %v4987
      %4989 = vst [vmem:[%s4918 + $0x6c] sm:$0xf] %v4988
      %4990 = vst [vmem:[%s4918 + $0x70] sm:$0xf] %v4766
      %v4991 = vld [vmem:[%s4918 + $0x74] sm:$0x1]
      %v4992 = vsel %vm4927, %v4767, %v4991
      %4993 = vst [vmem:[%s4918 + $0x74] sm:$0x1] %v4992
      %v4994 = vld [vmem:[%s4918 + $0x78] sm:$0xf]
      %v4995 = vsel %vm4921, %v4774, %v4994
      %4996 = vst [vmem:[%s4918 + $0x78] sm:$0xf] %v4995
      %4997 = vst [vmem:[%s4918 + $0x7c] sm:$0xf] %v4783
      %v4998 = vld [vmem:[%s4918 + $0x80] sm:$0x1]
      %v4999 = vsel %vm4927, %v4784, %v4998
      %5000 = vst [vmem:[%s4918 + $0x80] sm:$0x1] %v4999
      %v5001 = vld [vmem:[%s4918 + $0x84] sm:$0xf]
      %v5002 = vsel %vm4921, %v4791, %v5001
      %5003 = vst [vmem:[%s4918 + $0x84] sm:$0xf] %v5002
      %5004 = vst [vmem:[%s4918 + $0x88] sm:$0xf] %v4800
      %v5005 = vld [vmem:[%s4918 + $0x8c] sm:$0x1]
      %v5006 = vsel %vm4927, %v4801, %v5005
      %5007 = vst [vmem:[%s4918 + $0x8c] sm:$0x1] %v5006
      %v5008 = vld [vmem:[%s4918 + $0x90] sm:$0xf]
      %v5009 = vsel %vm4921, %v4808, %v5008
      %5010 = vst [vmem:[%s4918 + $0x90] sm:$0xf] %v5009
      %5011 = vst [vmem:[%s4918 + $0x94] sm:$0xf] %v4817
      %v5012 = vld [vmem:[%s4918 + $0x98] sm:$0x1]
      %v5013 = vsel %vm4927, %v4818, %v5012
      %5014 = vst [vmem:[%s4918 + $0x98] sm:$0x1] %v5013
      %v5015 = vld [vmem:[%s4918 + $0x9c] sm:$0xf]
      %v5016 = vsel %vm4921, %v4825, %v5015
      %5017 = vst [vmem:[%s4918 + $0x9c] sm:$0xf] %v5016
      %5018 = vst [vmem:[%s4918 + $0xa0] sm:$0xf] %v4834
      %v5019 = vld [vmem:[%s4918 + $0xa4] sm:$0x1]
      %v5020 = vsel %vm4927, %v4835, %v5019
      %5021 = vst [vmem:[%s4918 + $0xa4] sm:$0x1] %v5020
      %v5022 = vld [vmem:[%s4918 + $0xa8] sm:$0xf]
      %v5023 = vsel %vm4921, %v4842, %v5022
      %5024 = vst [vmem:[%s4918 + $0xa8] sm:$0xf] %v5023
      %5025 = vst [vmem:[%s4918 + $0xac] sm:$0xf] %v4851
      %v5026 = vld [vmem:[%s4918 + $0xb0] sm:$0x1]
      %v5027 = vsel %vm4927, %v4852, %v5026
      %5028 = vst [vmem:[%s4918 + $0xb0] sm:$0x1] %v5027
      %v5029 = vld [vmem:[%s4918 + $0xb4] sm:$0xf]
      %v5030 = vsel %vm4921, %v4859, %v5029
      %5031 = vst [vmem:[%s4918 + $0xb4] sm:$0xf] %v5030
      %5032 = vst [vmem:[%s4918 + $0xb8] sm:$0xf] %v4868
      %v5033 = vld [vmem:[%s4918 + $0xbc] sm:$0x1]
      %v5034 = vsel %vm4927, %v4869, %v5033
      %5035 = vst [vmem:[%s4918 + $0xbc] sm:$0x1] %v5034
      %v5036 = vld [vmem:[#allocation2] sm:$0xf]
      %v5037 = vld [vmem:[#allocation2 + $0x4] sm:$0xf]
      %v5038 = vld [vmem:[#allocation2 + $0xc] sm:$0xf]
      %v5039 = vld [vmem:[#allocation2 + $0x10] sm:$0xf]
      %v5040 = vld [vmem:[#allocation2 + $0x18] sm:$0xf]
      %v5041 = vld [vmem:[#allocation2 + $0x1c] sm:$0xf]
      %v5042 = vld [vmem:[#allocation2 + $0x24] sm:$0xf]
      %v5043 = vld [vmem:[#allocation2 + $0x28] sm:$0xf]
      %v5044 = vld [vmem:[#allocation2 + $0x30] sm:$0xf]
      %v5045 = vld [vmem:[#allocation2 + $0x34] sm:$0xf]
      %v5046 = vld [vmem:[#allocation2 + $0x3c] sm:$0xf]
      %v5047 = vld [vmem:[#allocation2 + $0x40] sm:$0xf]
      %v5048 = vld [vmem:[#allocation2 + $0x48] sm:$0xf]
      %v5049 = vld [vmem:[#allocation2 + $0x4c] sm:$0xf]
      %v5050 = vld [vmem:[#allocation2 + $0x54] sm:$0xf]
      %v5051 = vld [vmem:[#allocation2 + $0x58] sm:$0xf]
      %v5052 = vld [vmem:[#allocation2 + $0x60] sm:$0xf]
      %v5053 = vld [vmem:[#allocation2 + $0x64] sm:$0xf]
      %v5054 = vld [vmem:[#allocation2 + $0x6c] sm:$0xf]
      %v5055 = vld [vmem:[#allocation2 + $0x70] sm:$0xf]
      %v5056 = vld [vmem:[#allocation2 + $0x78] sm:$0xf]
      %v5057 = vld [vmem:[#allocation2 + $0x7c] sm:$0xf]
      %v5058 = vld [vmem:[#allocation2 + $0x84] sm:$0xf]
      %v5059 = vld [vmem:[#allocation2 + $0x88] sm:$0xf]
      %v5060 = vld [vmem:[#allocation2 + $0x90] sm:$0xf]
      %v5061 = vld [vmem:[#allocation2 + $0x94] sm:$0xf]
      %v5062 = vld [vmem:[#allocation2 + $0x9c] sm:$0xf]
      %v5063 = vld [vmem:[#allocation2 + $0xa0] sm:$0xf]
      %v5064 = vld [vmem:[#allocation2 + $0xa8] sm:$0xf]
      %v5065 = vld [vmem:[#allocation2 + $0xac] sm:$0xf]
      %v5066 = vld [vmem:[#allocation2 + $0xb4] sm:$0xf]
      %v5067 = vld [vmem:[#allocation2 + $0xb8] sm:$0xf]
      %v5068 = vld [vmem:[%s3] sm:$0xf]
      %v5069 = vld [vmem:[%s3 + $0x4] sm:$0xf]
      %v5070 = vld [vmem:[%s3 + $0x8] sm:$0xf]
      %v5071 = vld [vmem:[%s3 + $0xc] sm:$0xf]
      %v5072 = vld [vmem:[%s3 + $0x10] sm:$0xf]
      %v5073 = vld [vmem:[%s3 + $0x14] sm:$0xf]
      %v5074 = vld [vmem:[%s3 + $0x18] sm:$0xf]
      %v5075 = vld [vmem:[%s3 + $0x1c] sm:$0xf]
      %v5076 = vld [vmem:[%s3 + $0x20] sm:$0xf]
      %v5077 = vld [vmem:[%s3 + $0x24] sm:$0xf]
      %v5078 = vld [vmem:[%s3 + $0x28] sm:$0xf]
      %v5079 = vld [vmem:[%s3 + $0x2c] sm:$0xf]
      %v5080 = vld [vmem:[%s3 + $0x30] sm:$0xf]
      %v5081 = vld [vmem:[%s3 + $0x34] sm:$0xf]
      %v5082 = vld [vmem:[%s3 + $0x38] sm:$0xf]
      %v5083 = vld [vmem:[%s3 + $0x3c] sm:$0xf]
      %v5084 = vld [vmem:[#allocation2 + $0x8] sm:$0x1]
      %v5085 = vld [vmem:[#allocation2 + $0x14] sm:$0x1]
      %v5086 = vld [vmem:[#allocation2 + $0x20] sm:$0x1]
      %v5087 = vld [vmem:[#allocation2 + $0x2c] sm:$0x1]
      %v5088 = vld [vmem:[#allocation2 + $0x38] sm:$0x1]
      %v5089 = vld [vmem:[#allocation2 + $0x44] sm:$0x1]
      %v5090 = vld [vmem:[#allocation2 + $0x50] sm:$0x1]
      %v5091 = vld [vmem:[#allocation2 + $0x5c] sm:$0x1]
      %v5092 = vld [vmem:[#allocation2 + $0x68] sm:$0x1]
      %v5093 = vld [vmem:[#allocation2 + $0x74] sm:$0x1]
      %v5094 = vld [vmem:[#allocation2 + $0x80] sm:$0x1]
      %v5095 = vld [vmem:[#allocation2 + $0x8c] sm:$0x1]
      %v5096 = vld [vmem:[#allocation2 + $0x98] sm:$0x1]
      %v5097 = vld [vmem:[#allocation2 + $0xa4] sm:$0x1]
      %v5098 = vld [vmem:[#allocation2 + $0xb0] sm:$0x1]
      %v5099 = vld [vmem:[#allocation2 + $0xbc] sm:$0x1]
      %v5101 = vshrl.u32 %v5036, 16
      %v5103 = vrot.slane %v5101, 4
      %v5104 = vshll.u32 %v5036, 16
      %v5106 = vrot.slane %v5104, 5
      %v5107 = vor.u32 %v5103, %v5106
      %v5108 = vrot.slane %v5107, 4
      %v5110 = vshll.u32 %v5037, 16
      %v5112 = vrot.slane %v5110, 5
      %v5113 = vsel %vm346, %v5108, %v5112
      %v5114 = vshrl.u32 %v5037, 16
      %v5116 = vrot.slane %v5114, 4
      %v5117 = vor.u32 %v5116, %v5112
      %v5118 = vrot.slane %v5117, 4
      %v5120 = vshll.u32 %v5084, 16
      %v5122 = vrot.slane %v5120, 5
      %v5123 = vsel %vm346, %v5118, %v5122
      %v5125 = vshrl.u32 %v5038, 16
      %v5127 = vrot.slane %v5125, 4
      %v5128 = vshll.u32 %v5038, 16
      %v5130 = vrot.slane %v5128, 5
      %v5131 = vor.u32 %v5127, %v5130
      %v5132 = vrot.slane %v5131, 4
      %v5134 = vshll.u32 %v5039, 16
      %v5136 = vrot.slane %v5134, 5
      %v5137 = vsel %vm346, %v5132, %v5136
      %v5138 = vshrl.u32 %v5039, 16
      %v5140 = vrot.slane %v5138, 4
      %v5141 = vor.u32 %v5140, %v5136
      %v5142 = vrot.slane %v5141, 4
      %v5144 = vshll.u32 %v5085, 16
      %v5146 = vrot.slane %v5144, 5
      %v5147 = vsel %vm346, %v5142, %v5146
      %v5149 = vshrl.u32 %v5040, 16
      %v5151 = vrot.slane %v5149, 4
      %v5152 = vshll.u32 %v5040, 16
      %v5154 = vrot.slane %v5152, 5
      %v5155 = vor.u32 %v5151, %v5154
      %v5156 = vrot.slane %v5155, 4
      %v5158 = vshll.u32 %v5041, 16
      %v5160 = vrot.slane %v5158, 5
      %v5161 = vsel %vm346, %v5156, %v5160
      %v5162 = vshrl.u32 %v5041, 16
      %v5164 = vrot.slane %v5162, 4
      %v5165 = vor.u32 %v5164, %v5160
      %v5166 = vrot.slane %v5165, 4
      %v5168 = vshll.u32 %v5086, 16
      %v5170 = vrot.slane %v5168, 5
      %v5171 = vsel %vm346, %v5166, %v5170
      %v5173 = vshrl.u32 %v5042, 16
      %v5175 = vrot.slane %v5173, 4
      %v5176 = vshll.u32 %v5042, 16
      %v5178 = vrot.slane %v5176, 5
      %v5179 = vor.u32 %v5175, %v5178
      %v5180 = vrot.slane %v5179, 4
      %v5182 = vshll.u32 %v5043, 16
      %v5184 = vrot.slane %v5182, 5
      %v5185 = vsel %vm346, %v5180, %v5184
      %v5186 = vshrl.u32 %v5043, 16
      %v5188 = vrot.slane %v5186, 4
      %v5189 = vor.u32 %v5188, %v5184
      %v5190 = vrot.slane %v5189, 4
      %v5192 = vshll.u32 %v5087, 16
      %v5194 = vrot.slane %v5192, 5
      %v5195 = vsel %vm346, %v5190, %v5194
      %v5197 = vshrl.u32 %v5044, 16
      %v5199 = vrot.slane %v5197, 4
      %v5200 = vshll.u32 %v5044, 16
      %v5202 = vrot.slane %v5200, 5
      %v5203 = vor.u32 %v5199, %v5202
      %v5204 = vrot.slane %v5203, 4
      %v5206 = vshll.u32 %v5045, 16
      %v5208 = vrot.slane %v5206, 5
      %v5209 = vsel %vm346, %v5204, %v5208
      %v5210 = vshrl.u32 %v5045, 16
      %v5212 = vrot.slane %v5210, 4
      %v5213 = vor.u32 %v5212, %v5208
      %v5214 = vrot.slane %v5213, 4
      %v5216 = vshll.u32 %v5088, 16
      %v5218 = vrot.slane %v5216, 5
      %v5219 = vsel %vm346, %v5214, %v5218
      %v5221 = vshrl.u32 %v5046, 16
      %v5223 = vrot.slane %v5221, 4
      %v5224 = vshll.u32 %v5046, 16
      %v5226 = vrot.slane %v5224, 5
      %v5227 = vor.u32 %v5223, %v5226
      %v5228 = vrot.slane %v5227, 4
      %v5230 = vshll.u32 %v5047, 16
      %v5232 = vrot.slane %v5230, 5
      %v5233 = vsel %vm346, %v5228, %v5232
      %v5234 = vshrl.u32 %v5047, 16
      %v5236 = vrot.slane %v5234, 4
      %v5237 = vor.u32 %v5236, %v5232
      %v5238 = vrot.slane %v5237, 4
      %v5240 = vshll.u32 %v5089, 16
      %v5242 = vrot.slane %v5240, 5
      %v5243 = vsel %vm346, %v5238, %v5242
      %v5245 = vshrl.u32 %v5048, 16
      %v5247 = vrot.slane %v5245, 4
      %v5248 = vshll.u32 %v5048, 16
      %v5250 = vrot.slane %v5248, 5
      %v5251 = vor.u32 %v5247, %v5250
      %v5252 = vrot.slane %v5251, 4
      %v5254 = vshll.u32 %v5049, 16
      %v5256 = vrot.slane %v5254, 5
      %v5257 = vsel %vm346, %v5252, %v5256
      %v5258 = vshrl.u32 %v5049, 16
      %v5260 = vrot.slane %v5258, 4
      %v5261 = vor.u32 %v5260, %v5256
      %v5262 = vrot.slane %v5261, 4
      %v5264 = vshll.u32 %v5090, 16
      %v5266 = vrot.slane %v5264, 5
      %v5267 = vsel %vm346, %v5262, %v5266
      %v5269 = vshrl.u32 %v5050, 16
      %v5271 = vrot.slane %v5269, 4
      %v5272 = vshll.u32 %v5050, 16
      %v5274 = vrot.slane %v5272, 5
      %v5275 = vor.u32 %v5271, %v5274
      %v5276 = vrot.slane %v5275, 4
      %v5278 = vshll.u32 %v5051, 16
      %v5280 = vrot.slane %v5278, 5
      %v5281 = vsel %vm346, %v5276, %v5280
      %v5282 = vshrl.u32 %v5051, 16
      %v5284 = vrot.slane %v5282, 4
      %v5285 = vor.u32 %v5284, %v5280
      %v5286 = vrot.slane %v5285, 4
      %v5288 = vshll.u32 %v5091, 16
      %v5290 = vrot.slane %v5288, 5
      %v5291 = vsel %vm346, %v5286, %v5290
      %v5293 = vshrl.u32 %v5052, 16
      %v5295 = vrot.slane %v5293, 4
      %v5296 = vshll.u32 %v5052, 16
      %v5298 = vrot.slane %v5296, 5
      %v5299 = vor.u32 %v5295, %v5298
      %v5300 = vrot.slane %v5299, 4
      %v5302 = vshll.u32 %v5053, 16
      %v5304 = vrot.slane %v5302, 5
      %v5305 = vsel %vm346, %v5300, %v5304
      %v5306 = vshrl.u32 %v5053, 16
      %v5308 = vrot.slane %v5306, 4
      %v5309 = vor.u32 %v5308, %v5304
      %v5310 = vrot.slane %v5309, 4
      %v5312 = vshll.u32 %v5092, 16
      %v5314 = vrot.slane %v5312, 5
      %v5315 = vsel %vm346, %v5310, %v5314
      %v5317 = vshrl.u32 %v5054, 16
      %v5319 = vrot.slane %v5317, 4
      %v5320 = vshll.u32 %v5054, 16
      %v5322 = vrot.slane %v5320, 5
      %v5323 = vor.u32 %v5319, %v5322
      %v5324 = vrot.slane %v5323, 4
      %v5326 = vshll.u32 %v5055, 16
      %v5328 = vrot.slane %v5326, 5
      %v5329 = vsel %vm346, %v5324, %v5328
      %v5330 = vshrl.u32 %v5055, 16
      %v5332 = vrot.slane %v5330, 4
      %v5333 = vor.u32 %v5332, %v5328
      %v5334 = vrot.slane %v5333, 4
      %v5336 = vshll.u32 %v5093, 16
      %v5338 = vrot.slane %v5336, 5
      %v5339 = vsel %vm346, %v5334, %v5338
      %v5341 = vshrl.u32 %v5056, 16
      %v5343 = vrot.slane %v5341, 4
      %v5344 = vshll.u32 %v5056, 16
      %v5346 = vrot.slane %v5344, 5
      %v5347 = vor.u32 %v5343, %v5346
      %v5348 = vrot.slane %v5347, 4
      %v5350 = vshll.u32 %v5057, 16
      %v5352 = vrot.slane %v5350, 5
      %v5353 = vsel %vm346, %v5348, %v5352
      %v5354 = vshrl.u32 %v5057, 16
      %v5356 = vrot.slane %v5354, 4
      %v5357 = vor.u32 %v5356, %v5352
      %v5358 = vrot.slane %v5357, 4
      %v5360 = vshll.u32 %v5094, 16
      %v5362 = vrot.slane %v5360, 5
      %v5363 = vsel %vm346, %v5358, %v5362
      %v5365 = vshrl.u32 %v5058, 16
      %v5367 = vrot.slane %v5365, 4
      %v5368 = vshll.u32 %v5058, 16
      %v5370 = vrot.slane %v5368, 5
      %v5371 = vor.u32 %v5367, %v5370
      %v5372 = vrot.slane %v5371, 4
      %v5374 = vshll.u32 %v5059, 16
      %v5376 = vrot.slane %v5374, 5
      %v5377 = vsel %vm346, %v5372, %v5376
      %v5378 = vshrl.u32 %v5059, 16
      %v5380 = vrot.slane %v5378, 4
      %v5381 = vor.u32 %v5380, %v5376
      %v5382 = vrot.slane %v5381, 4
      %v5384 = vshll.u32 %v5095, 16
      %v5386 = vrot.slane %v5384, 5
      %v5387 = vsel %vm346, %v5382, %v5386
      %v5389 = vshrl.u32 %v5060, 16
      %v5391 = vrot.slane %v5389, 4
      %v5392 = vshll.u32 %v5060, 16
      %v5394 = vrot.slane %v5392, 5
      %v5395 = vor.u32 %v5391, %v5394
      %v5396 = vrot.slane %v5395, 4
      %v5398 = vshll.u32 %v5061, 16
      %v5400 = vrot.slane %v5398, 5
      %v5401 = vsel %vm346, %v5396, %v5400
      %v5402 = vshrl.u32 %v5061, 16
      %v5404 = vrot.slane %v5402, 4
      %v5405 = vor.u32 %v5404, %v5400
      %v5406 = vrot.slane %v5405, 4
      %v5408 = vshll.u32 %v5096, 16
      %v5410 = vrot.slane %v5408, 5
      %v5411 = vsel %vm346, %v5406, %v5410
      %v5413 = vshrl.u32 %v5062, 16
      %v5415 = vrot.slane %v5413, 4
      %v5416 = vshll.u32 %v5062, 16
      %v5418 = vrot.slane %v5416, 5
      %v5419 = vor.u32 %v5415, %v5418
      %v5420 = vrot.slane %v5419, 4
      %v5422 = vshll.u32 %v5063, 16
      %v5424 = vrot.slane %v5422, 5
      %v5425 = vsel %vm346, %v5420, %v5424
      %v5426 = vshrl.u32 %v5063, 16
      %v5428 = vrot.slane %v5426, 4
      %v5429 = vor.u32 %v5428, %v5424
      %v5430 = vrot.slane %v5429, 4
      %v5432 = vshll.u32 %v5097, 16
      %v5434 = vrot.slane %v5432, 5
      %v5435 = vsel %vm346, %v5430, %v5434
      %v5437 = vshrl.u32 %v5064, 16
      %v5439 = vrot.slane %v5437, 4
      %v5440 = vshll.u32 %v5064, 16
      %v5442 = vrot.slane %v5440, 5
      %v5443 = vor.u32 %v5439, %v5442
      %v5444 = vrot.slane %v5443, 4
      %v5446 = vshll.u32 %v5065, 16
      %v5448 = vrot.slane %v5446, 5
      %v5449 = vsel %vm346, %v5444, %v5448
      %v5450 = vshrl.u32 %v5065, 16
      %v5452 = vrot.slane %v5450, 4
      %v5453 = vor.u32 %v5452, %v5448
      %v5454 = vrot.slane %v5453, 4
      %v5456 = vshll.u32 %v5098, 16
      %v5458 = vrot.slane %v5456, 5
      %v5459 = vsel %vm346, %v5454, %v5458
      %v5461 = vshrl.u32 %v5066, 16
      %v5463 = vrot.slane %v5461, 4
      %v5464 = vshll.u32 %v5066, 16
      %v5466 = vrot.slane %v5464, 5
      %v5467 = vor.u32 %v5463, %v5466
      %v5468 = vrot.slane %v5467, 4
      %v5470 = vshll.u32 %v5067, 16
      %v5472 = vrot.slane %v5470, 5
      %v5473 = vsel %vm346, %v5468, %v5472
      %v5474 = vshrl.u32 %v5067, 16
      %v5476 = vrot.slane %v5474, 4
      %v5477 = vor.u32 %v5476, %v5472
      %v5478 = vrot.slane %v5477, 4
      %v5480 = vshll.u32 %v5099, 16
      %v5482 = vrot.slane %v5480, 5
      %v5483 = vsel %vm346, %v5478, %v5482
      %s5484 = scalar_lea.vmem %s3, 64
      %v5485 = vld [vmem:[%s5484] sm:$0xf]
      %v5486 = vld [vmem:[%s5484 + $0x4] sm:$0xf]
      %v5487 = vld [vmem:[%s5484 + $0x8] sm:$0xf]
      %v5488 = vld [vmem:[%s5484 + $0xc] sm:$0xf]
      %v5489 = vld [vmem:[%s5484 + $0x10] sm:$0xf]
      %v5490 = vld [vmem:[%s5484 + $0x14] sm:$0xf]
      %v5491 = vld [vmem:[%s5484 + $0x18] sm:$0xf]
      %v5492 = vld [vmem:[%s5484 + $0x1c] sm:$0xf]
      %v5493 = vld [vmem:[%s5484 + $0x20] sm:$0xf]
      %v5494 = vld [vmem:[%s5484 + $0x24] sm:$0xf]
      %v5495 = vld [vmem:[%s5484 + $0x28] sm:$0xf]
      %v5496 = vld [vmem:[%s5484 + $0x2c] sm:$0xf]
      %v5497 = vld [vmem:[%s5484 + $0x30] sm:$0xf]
      %v5498 = vld [vmem:[%s5484 + $0x34] sm:$0xf]
      %v5499 = vld [vmem:[%s5484 + $0x38] sm:$0xf]
      %v5500 = vld [vmem:[%s5484 + $0x3c] sm:$0xf]
      %v5501 = vunpack.c.l.b16 %v5113
      %v5502 = vunpack.c.l.b16 %v5123
      %v5503 = vunpack.c.l.b16 %v5137
      %v5504 = vunpack.c.l.b16 %v5147
      %v5505 = vunpack.c.l.b16 %v5161
      %v5506 = vunpack.c.l.b16 %v5171
      %v5507 = vunpack.c.l.b16 %v5185
      %v5508 = vunpack.c.l.b16 %v5195
      %v5509 = vunpack.c.l.b16 %v5209
      %v5510 = vunpack.c.l.b16 %v5219
      %v5511 = vunpack.c.l.b16 %v5233
      %v5512 = vunpack.c.l.b16 %v5243
      %v5513 = vunpack.c.l.b16 %v5257
      %v5514 = vunpack.c.l.b16 %v5267
      %v5515 = vunpack.c.l.b16 %v5281
      %v5516 = vunpack.c.l.b16 %v5291
      %v5517 = vunpack.c.l.b16 %v5305
      %v5518 = vunpack.c.l.b16 %v5315
      %v5519 = vunpack.c.l.b16 %v5329
      %v5520 = vunpack.c.l.b16 %v5339
      %v5521 = vunpack.c.l.b16 %v5353
      %v5522 = vunpack.c.l.b16 %v5363
      %v5523 = vunpack.c.l.b16 %v5377
      %v5524 = vunpack.c.l.b16 %v5387
      %v5525 = vunpack.c.l.b16 %v5401
      %v5526 = vunpack.c.l.b16 %v5411
      %v5527 = vunpack.c.l.b16 %v5425
      %v5528 = vunpack.c.l.b16 %v5435
      %v5529 = vunpack.c.l.b16 %v5449
      %v5530 = vunpack.c.l.b16 %v5459
      %v5531 = vunpack.c.l.b16 %v5473
      %v5532 = vunpack.c.l.b16 %v5483
      %v5533 = vpack.c.b16 %v5502, %v5501
      %v5534 = vpack.c.b16 %v5504, %v5503
      %v5535 = vpack.c.b16 %v5506, %v5505
      %v5536 = vpack.c.b16 %v5508, %v5507
      %v5537 = vpack.c.b16 %v5510, %v5509
      %v5538 = vpack.c.b16 %v5512, %v5511
      %v5539 = vpack.c.b16 %v5514, %v5513
      %v5540 = vpack.c.b16 %v5516, %v5515
      %v5541 = vpack.c.b16 %v5518, %v5517
      %v5542 = vpack.c.b16 %v5520, %v5519
      %v5543 = vpack.c.b16 %v5522, %v5521
      %v5544 = vpack.c.b16 %v5524, %v5523
      %v5545 = vpack.c.b16 %v5526, %v5525
      %v5546 = vpack.c.b16 %v5528, %v5527
      %v5547 = vpack.c.b16 %v5530, %v5529
      %v5548 = vpack.c.b16 %v5532, %v5531
      %v5581 = vunpack.c.l.b16 %v5485
      %v5582 = vunpack.c.l.b16 %v5486
      %v5583 = vunpack.c.l.b16 %v5487
      %v5584 = vunpack.c.l.b16 %v5488
      %v5585 = vunpack.c.l.b16 %v5489
      %v5586 = vunpack.c.l.b16 %v5490
      %v5587 = vunpack.c.l.b16 %v5491
      %v5588 = vunpack.c.l.b16 %v5492
      %v5589 = vunpack.c.l.b16 %v5493
      %v5590 = vunpack.c.l.b16 %v5494
      %v5591 = vunpack.c.l.b16 %v5495
      %v5592 = vunpack.c.l.b16 %v5496
      %v5593 = vunpack.c.l.b16 %v5497
      %v5594 = vunpack.c.l.b16 %v5498
      %v5595 = vunpack.c.l.b16 %v5499
      %v5596 = vunpack.c.l.b16 %v5500
      %v5597 = vpack.c.b16 %v5582, %v5581
      %v5598 = vpack.c.b16 %v5584, %v5583
      %v5599 = vpack.c.b16 %v5586, %v5585
      %v5600 = vpack.c.b16 %v5588, %v5587
      %v5601 = vpack.c.b16 %v5590, %v5589
      %v5602 = vpack.c.b16 %v5592, %v5591
      %v5603 = vpack.c.b16 %v5594, %v5593
      %v5604 = vpack.c.b16 %v5596, %v5595
      %5613 = vmatpush.bf16.msra.mxu0 %v5604
      %5614 = vmatpush.bf16.msra.mxu0 %v5603
      %5615 = vmatpush.bf16.msra.mxu0 %v5602
      %5616 = vmatpush.bf16.msra.mxu0 %v5601
      %5617 = vmatpush.bf16.msra.mxu0 %v5600
      %5618 = vmatpush.bf16.msra.mxu0 %v5599
      %5619 = vmatpush.bf16.msra.mxu0 %v5598
      %5620 = vmatpush.bf16.msra.mxu0 %v5597
      %5621 = vmatmul.bf16.gmra.mxu0 %v5533
      %v5622 = vpop.f32.mrf.mxu0
      %v5623 = vadd.f32 0.0, %v5622
      %v5624 = vpop.f32.mrf.mxu0
      %v5625 = vadd.f32 0.0, %v5624
      %5626 = vmatmul.bf16.gmra.mxu0 %v5534
      %v5627 = vpop.f32.mrf.mxu0
      %v5628 = vadd.f32 0.0, %v5627
      %v5629 = vpop.f32.mrf.mxu0
      %v5630 = vadd.f32 0.0, %v5629
      %5631 = vmatmul.bf16.gmra.mxu0 %v5535
      %v5632 = vpop.f32.mrf.mxu0
      %v5633 = vadd.f32 0.0, %v5632
      %v5634 = vpop.f32.mrf.mxu0
      %v5635 = vadd.f32 0.0, %v5634
      %5636 = vmatmul.bf16.gmra.mxu0 %v5536
      %v5637 = vpop.f32.mrf.mxu0
      %v5638 = vadd.f32 0.0, %v5637
      %v5639 = vpop.f32.mrf.mxu0
      %v5640 = vadd.f32 0.0, %v5639
      %5641 = vmatmul.bf16.gmra.mxu0 %v5537
      %v5642 = vpop.f32.mrf.mxu0
      %v5643 = vadd.f32 0.0, %v5642
      %v5644 = vpop.f32.mrf.mxu0
      %v5645 = vadd.f32 0.0, %v5644
      %5646 = vmatmul.bf16.gmra.mxu0 %v5538
      %v5647 = vpop.f32.mrf.mxu0
      %v5648 = vadd.f32 0.0, %v5647
      %v5649 = vpop.f32.mrf.mxu0
      %v5650 = vadd.f32 0.0, %v5649
      %5651 = vmatmul.bf16.gmra.mxu0 %v5539
      %v5652 = vpop.f32.mrf.mxu0
      %v5653 = vadd.f32 0.0, %v5652
      %v5654 = vpop.f32.mrf.mxu0
      %v5655 = vadd.f32 0.0, %v5654
      %5656 = vmatmul.bf16.gmra.mxu0 %v5540
      %v5657 = vpop.f32.mrf.mxu0
      %v5658 = vadd.f32 0.0, %v5657
      %v5659 = vpop.f32.mrf.mxu0
      %v5660 = vadd.f32 0.0, %v5659
      %5661 = vmatmul.bf16.gmra.mxu0 %v5541
      %v5662 = vpop.f32.mrf.mxu0
      %v5663 = vadd.f32 0.0, %v5662
      %v5664 = vpop.f32.mrf.mxu0
      %v5665 = vadd.f32 0.0, %v5664
      %5666 = vmatmul.bf16.gmra.mxu0 %v5542
      %v5667 = vpop.f32.mrf.mxu0
      %v5668 = vadd.f32 0.0, %v5667
      %v5669 = vpop.f32.mrf.mxu0
      %v5670 = vadd.f32 0.0, %v5669
      %5671 = vmatmul.bf16.gmra.mxu0 %v5543
      %v5672 = vpop.f32.mrf.mxu0
      %v5673 = vadd.f32 0.0, %v5672
      %v5674 = vpop.f32.mrf.mxu0
      %v5675 = vadd.f32 0.0, %v5674
      %5676 = vmatmul.bf16.gmra.mxu0 %v5544
      %v5677 = vpop.f32.mrf.mxu0
      %v5678 = vadd.f32 0.0, %v5677
      %v5679 = vpop.f32.mrf.mxu0
      %v5680 = vadd.f32 0.0, %v5679
      %5681 = vmatmul.bf16.gmra.mxu0 %v5545
      %v5682 = vpop.f32.mrf.mxu0
      %v5683 = vadd.f32 0.0, %v5682
      %v5684 = vpop.f32.mrf.mxu0
      %v5685 = vadd.f32 0.0, %v5684
      %5686 = vmatmul.bf16.gmra.mxu0 %v5546
      %v5687 = vpop.f32.mrf.mxu0
      %v5688 = vadd.f32 0.0, %v5687
      %v5689 = vpop.f32.mrf.mxu0
      %v5690 = vadd.f32 0.0, %v5689
      %5691 = vmatmul.bf16.gmra.mxu0 %v5547
      %v5692 = vpop.f32.mrf.mxu0
      %v5693 = vadd.f32 0.0, %v5692
      %v5694 = vpop.f32.mrf.mxu0
      %v5695 = vadd.f32 0.0, %v5694
      %5696 = vmatmul.bf16.gmra.mxu0 %v5548
      %v5697 = vpop.f32.mrf.mxu0
      %v5698 = vadd.f32 0.0, %v5697
      %v5699 = vpop.f32.mrf.mxu0
      %v5700 = vadd.f32 0.0, %v5699
      %5701 = vdwg.mxu0
      %v5734 = vunpack.c.l.b16 %v5036
      %v5735 = vunpack.c.l.b16 %v5037
      %v5736 = vunpack.c.l.b16 %v5038
      %v5737 = vunpack.c.l.b16 %v5039
      %v5738 = vunpack.c.l.b16 %v5040
      %v5739 = vunpack.c.l.b16 %v5041
      %v5740 = vunpack.c.l.b16 %v5042
      %v5741 = vunpack.c.l.b16 %v5043
      %v5742 = vunpack.c.l.b16 %v5044
      %v5743 = vunpack.c.l.b16 %v5045
      %v5744 = vunpack.c.l.b16 %v5046
      %v5745 = vunpack.c.l.b16 %v5047
      %v5746 = vunpack.c.l.b16 %v5048
      %v5747 = vunpack.c.l.b16 %v5049
      %v5748 = vunpack.c.l.b16 %v5050
      %v5749 = vunpack.c.l.b16 %v5051
      %v5750 = vunpack.c.l.b16 %v5052
      %v5751 = vunpack.c.l.b16 %v5053
      %v5752 = vunpack.c.l.b16 %v5054
      %v5753 = vunpack.c.l.b16 %v5055
      %v5754 = vunpack.c.l.b16 %v5056
      %v5755 = vunpack.c.l.b16 %v5057
      %v5756 = vunpack.c.l.b16 %v5058
      %v5757 = vunpack.c.l.b16 %v5059
      %v5758 = vunpack.c.l.b16 %v5060
      %v5759 = vunpack.c.l.b16 %v5061
      %v5760 = vunpack.c.l.b16 %v5062
      %v5761 = vunpack.c.l.b16 %v5063
      %v5762 = vunpack.c.l.b16 %v5064
      %v5763 = vunpack.c.l.b16 %v5065
      %v5764 = vunpack.c.l.b16 %v5066
      %v5765 = vunpack.c.l.b16 %v5067
      %v5766 = vpack.c.b16 %v5735, %v5734
      %v5767 = vpack.c.b16 %v5737, %v5736
      %v5768 = vpack.c.b16 %v5739, %v5738
      %v5769 = vpack.c.b16 %v5741, %v5740
      %v5770 = vpack.c.b16 %v5743, %v5742
      %v5771 = vpack.c.b16 %v5745, %v5744
      %v5772 = vpack.c.b16 %v5747, %v5746
      %v5773 = vpack.c.b16 %v5749, %v5748
      %v5774 = vpack.c.b16 %v5751, %v5750
      %v5775 = vpack.c.b16 %v5753, %v5752
      %v5776 = vpack.c.b16 %v5755, %v5754
      %v5777 = vpack.c.b16 %v5757, %v5756
      %v5778 = vpack.c.b16 %v5759, %v5758
      %v5779 = vpack.c.b16 %v5761, %v5760
      %v5780 = vpack.c.b16 %v5763, %v5762
      %v5781 = vpack.c.b16 %v5765, %v5764
      %v5814 = vunpack.c.l.b16 %v5068
      %v5815 = vunpack.c.l.b16 %v5069
      %v5816 = vunpack.c.l.b16 %v5070
      %v5817 = vunpack.c.l.b16 %v5071
      %v5818 = vunpack.c.l.b16 %v5072
      %v5819 = vunpack.c.l.b16 %v5073
      %v5820 = vunpack.c.l.b16 %v5074
      %v5821 = vunpack.c.l.b16 %v5075
      %v5822 = vunpack.c.l.b16 %v5076
      %v5823 = vunpack.c.l.b16 %v5077
      %v5824 = vunpack.c.l.b16 %v5078
      %v5825 = vunpack.c.l.b16 %v5079
      %v5826 = vunpack.c.l.b16 %v5080
      %v5827 = vunpack.c.l.b16 %v5081
      %v5828 = vunpack.c.l.b16 %v5082
      %v5829 = vunpack.c.l.b16 %v5083
      %v5830 = vpack.c.b16 %v5815, %v5814
      %v5831 = vpack.c.b16 %v5817, %v5816
      %v5832 = vpack.c.b16 %v5819, %v5818
      %v5833 = vpack.c.b16 %v5821, %v5820
      %v5834 = vpack.c.b16 %v5823, %v5822
      %v5835 = vpack.c.b16 %v5825, %v5824
      %v5836 = vpack.c.b16 %v5827, %v5826
      %v5837 = vpack.c.b16 %v5829, %v5828
      %5846 = vmatpush.bf16.msra.mxu0 %v5837
      %5847 = vmatpush.bf16.msra.mxu0 %v5836
      %5848 = vmatpush.bf16.msra.mxu0 %v5835
      %5849 = vmatpush.bf16.msra.mxu0 %v5834
      %5850 = vmatpush.bf16.msra.mxu0 %v5833
      %5851 = vmatpush.bf16.msra.mxu0 %v5832
      %5852 = vmatpush.bf16.msra.mxu0 %v5831
      %5853 = vmatpush.bf16.msra.mxu0 %v5830
      %5854 = vmatmul.bf16.gmra.mxu0 %v5766
      %v5855 = vpop.f32.mrf.mxu0
      %v5856 = vadd.f32 %v5623, %v5855
      %v5857 = vpop.f32.mrf.mxu0
      %v5858 = vadd.f32 %v5625, %v5857
      %5859 = vmatmul.bf16.gmra.mxu0 %v5767
      %v5860 = vpop.f32.mrf.mxu0
      %v5861 = vadd.f32 %v5628, %v5860
      %v5862 = vpop.f32.mrf.mxu0
      %v5863 = vadd.f32 %v5630, %v5862
      %5864 = vmatmul.bf16.gmra.mxu0 %v5768
      %v5865 = vpop.f32.mrf.mxu0
      %v5866 = vadd.f32 %v5633, %v5865
      %v5867 = vpop.f32.mrf.mxu0
      %v5868 = vadd.f32 %v5635, %v5867
      %5869 = vmatmul.bf16.gmra.mxu0 %v5769
      %v5870 = vpop.f32.mrf.mxu0
      %v5871 = vadd.f32 %v5638, %v5870
      %v5872 = vpop.f32.mrf.mxu0
      %v5873 = vadd.f32 %v5640, %v5872
      %5874 = vmatmul.bf16.gmra.mxu0 %v5770
      %v5875 = vpop.f32.mrf.mxu0
      %v5876 = vadd.f32 %v5643, %v5875
      %v5877 = vpop.f32.mrf.mxu0
      %v5878 = vadd.f32 %v5645, %v5877
      %5879 = vmatmul.bf16.gmra.mxu0 %v5771
      %v5880 = vpop.f32.mrf.mxu0
      %v5881 = vadd.f32 %v5648, %v5880
      %v5882 = vpop.f32.mrf.mxu0
      %v5883 = vadd.f32 %v5650, %v5882
      %5884 = vmatmul.bf16.gmra.mxu0 %v5772
      %v5885 = vpop.f32.mrf.mxu0
      %v5886 = vadd.f32 %v5653, %v5885
      %v5887 = vpop.f32.mrf.mxu0
      %v5888 = vadd.f32 %v5655, %v5887
      %5889 = vmatmul.bf16.gmra.mxu0 %v5773
      %v5890 = vpop.f32.mrf.mxu0
      %v5891 = vadd.f32 %v5658, %v5890
      %v5892 = vpop.f32.mrf.mxu0
      %v5893 = vadd.f32 %v5660, %v5892
      %5894 = vmatmul.bf16.gmra.mxu0 %v5774
      %v5895 = vpop.f32.mrf.mxu0
      %v5896 = vadd.f32 %v5663, %v5895
      %v5897 = vpop.f32.mrf.mxu0
      %v5898 = vadd.f32 %v5665, %v5897
      %5899 = vmatmul.bf16.gmra.mxu0 %v5775
      %v5900 = vpop.f32.mrf.mxu0
      %v5901 = vadd.f32 %v5668, %v5900
      %v5902 = vpop.f32.mrf.mxu0
      %v5903 = vadd.f32 %v5670, %v5902
      %5904 = vmatmul.bf16.gmra.mxu0 %v5776
      %v5905 = vpop.f32.mrf.mxu0
      %v5906 = vadd.f32 %v5673, %v5905
      %v5907 = vpop.f32.mrf.mxu0
      %v5908 = vadd.f32 %v5675, %v5907
      %5909 = vmatmul.bf16.gmra.mxu0 %v5777
      %v5910 = vpop.f32.mrf.mxu0
      %v5911 = vadd.f32 %v5678, %v5910
      %v5912 = vpop.f32.mrf.mxu0
      %v5913 = vadd.f32 %v5680, %v5912
      %5914 = vmatmul.bf16.gmra.mxu0 %v5778
      %v5915 = vpop.f32.mrf.mxu0
      %v5916 = vadd.f32 %v5683, %v5915
      %v5917 = vpop.f32.mrf.mxu0
      %v5918 = vadd.f32 %v5685, %v5917
      %5919 = vmatmul.bf16.gmra.mxu0 %v5779
      %v5920 = vpop.f32.mrf.mxu0
      %v5921 = vadd.f32 %v5688, %v5920
      %v5922 = vpop.f32.mrf.mxu0
      %v5923 = vadd.f32 %v5690, %v5922
      %5924 = vmatmul.bf16.gmra.mxu0 %v5780
      %v5925 = vpop.f32.mrf.mxu0
      %v5926 = vadd.f32 %v5693, %v5925
      %v5927 = vpop.f32.mrf.mxu0
      %v5928 = vadd.f32 %v5695, %v5927
      %5929 = vmatmul.bf16.gmra.mxu0 %v5781
      %v5930 = vpop.f32.mrf.mxu0
      %v5931 = vadd.f32 %v5698, %v5930
      %v5932 = vpop.f32.mrf.mxu0
      %v5933 = vadd.f32 %v5700, %v5932
      %5934 = vdwg.mxu0
      %v5935 = vld [vmem:[#allocation2] sm:$0xe]
      %v5936 = vld [vmem:[#allocation2 + $0xc] sm:$0xe]
      %v5937 = vld [vmem:[#allocation2 + $0x18] sm:$0xe]
      %v5938 = vld [vmem:[#allocation2 + $0x24] sm:$0xe]
      %v5939 = vld [vmem:[#allocation2 + $0x30] sm:$0xe]
      %v5940 = vld [vmem:[#allocation2 + $0x3c] sm:$0xe]
      %v5941 = vld [vmem:[#allocation2 + $0x48] sm:$0xe]
      %v5942 = vld [vmem:[#allocation2 + $0x54] sm:$0xe]
      %v5943 = vld [vmem:[#allocation2 + $0x60] sm:$0xe]
      %v5944 = vld [vmem:[#allocation2 + $0x6c] sm:$0xe]
      %v5945 = vld [vmem:[#allocation2 + $0x78] sm:$0xe]
      %v5946 = vld [vmem:[#allocation2 + $0x84] sm:$0xe]
      %v5947 = vld [vmem:[#allocation2 + $0x90] sm:$0xe]
      %v5948 = vld [vmem:[#allocation2 + $0x9c] sm:$0xe]
      %v5949 = vld [vmem:[#allocation2 + $0xa8] sm:$0xe]
      %v5950 = vld [vmem:[#allocation2 + $0xb4] sm:$0xe]
      %v5983 = vrot.slane %v5935, 5
      %v5984 = vrot.slane %v5983, 4
      %v5985 = vrot.slane %v5037, 5
      %v5986 = vsel %vm1232, %v5984, %v5985
      %v5987 = vrot.slane %v5985, 4
      %v5988 = vrot.slane %v5084, 5
      %v5989 = vsel %vm1232, %v5987, %v5988
      %v5990 = vrot.slane %v5936, 5
      %v5991 = vrot.slane %v5990, 4
      %v5992 = vrot.slane %v5039, 5
      %v5993 = vsel %vm1232, %v5991, %v5992
      %v5994 = vrot.slane %v5992, 4
      %v5995 = vrot.slane %v5085, 5
      %v5996 = vsel %vm1232, %v5994, %v5995
      %v5997 = vrot.slane %v5937, 5
      %v5998 = vrot.slane %v5997, 4
      %v5999 = vrot.slane %v5041, 5
      %v6000 = vsel %vm1232, %v5998, %v5999
      %v6001 = vrot.slane %v5999, 4
      %v6002 = vrot.slane %v5086, 5
      %v6003 = vsel %vm1232, %v6001, %v6002
      %v6004 = vrot.slane %v5938, 5
      %v6005 = vrot.slane %v6004, 4
      %v6006 = vrot.slane %v5043, 5
      %v6007 = vsel %vm1232, %v6005, %v6006
      %v6008 = vrot.slane %v6006, 4
      %v6009 = vrot.slane %v5087, 5
      %v6010 = vsel %vm1232, %v6008, %v6009
      %v6011 = vrot.slane %v5939, 5
      %v6012 = vrot.slane %v6011, 4
      %v6013 = vrot.slane %v5045, 5
      %v6014 = vsel %vm1232, %v6012, %v6013
      %v6015 = vrot.slane %v6013, 4
      %v6016 = vrot.slane %v5088, 5
      %v6017 = vsel %vm1232, %v6015, %v6016
      %v6018 = vrot.slane %v5940, 5
      %v6019 = vrot.slane %v6018, 4
      %v6020 = vrot.slane %v5047, 5
      %v6021 = vsel %vm1232, %v6019, %v6020
      %v6022 = vrot.slane %v6020, 4
      %v6023 = vrot.slane %v5089, 5
      %v6024 = vsel %vm1232, %v6022, %v6023
      %v6025 = vrot.slane %v5941, 5
      %v6026 = vrot.slane %v6025, 4
      %v6027 = vrot.slane %v5049, 5
      %v6028 = vsel %vm1232, %v6026, %v6027
      %v6029 = vrot.slane %v6027, 4
      %v6030 = vrot.slane %v5090, 5
      %v6031 = vsel %vm1232, %v6029, %v6030
      %v6032 = vrot.slane %v5942, 5
      %v6033 = vrot.slane %v6032, 4
      %v6034 = vrot.slane %v5051, 5
      %v6035 = vsel %vm1232, %v6033, %v6034
      %v6036 = vrot.slane %v6034, 4
      %v6037 = vrot.slane %v5091, 5
      %v6038 = vsel %vm1232, %v6036, %v6037
      %v6039 = vrot.slane %v5943, 5
      %v6040 = vrot.slane %v6039, 4
      %v6041 = vrot.slane %v5053, 5
      %v6042 = vsel %vm1232, %v6040, %v6041
      %v6043 = vrot.slane %v6041, 4
      %v6044 = vrot.slane %v5092, 5
      %v6045 = vsel %vm1232, %v6043, %v6044
      %v6046 = vrot.slane %v5944, 5
      %v6047 = vrot.slane %v6046, 4
      %v6048 = vrot.slane %v5055, 5
      %v6049 = vsel %vm1232, %v6047, %v6048
      %v6050 = vrot.slane %v6048, 4
      %v6051 = vrot.slane %v5093, 5
      %v6052 = vsel %vm1232, %v6050, %v6051
      %v6053 = vrot.slane %v5945, 5
      %v6054 = vrot.slane %v6053, 4
      %v6055 = vrot.slane %v5057, 5
      %v6056 = vsel %vm1232, %v6054, %v6055
      %v6057 = vrot.slane %v6055, 4
      %v6058 = vrot.slane %v5094, 5
      %v6059 = vsel %vm1232, %v6057, %v6058
      %v6060 = vrot.slane %v5946, 5
      %v6061 = vrot.slane %v6060, 4
      %v6062 = vrot.slane %v5059, 5
      %v6063 = vsel %vm1232, %v6061, %v6062
      %v6064 = vrot.slane %v6062, 4
      %v6065 = vrot.slane %v5095, 5
      %v6066 = vsel %vm1232, %v6064, %v6065
      %v6067 = vrot.slane %v5947, 5
      %v6068 = vrot.slane %v6067, 4
      %v6069 = vrot.slane %v5061, 5
      %v6070 = vsel %vm1232, %v6068, %v6069
      %v6071 = vrot.slane %v6069, 4
      %v6072 = vrot.slane %v5096, 5
      %v6073 = vsel %vm1232, %v6071, %v6072
      %v6074 = vrot.slane %v5948, 5
      %v6075 = vrot.slane %v6074, 4
      %v6076 = vrot.slane %v5063, 5
      %v6077 = vsel %vm1232, %v6075, %v6076
      %v6078 = vrot.slane %v6076, 4
      %v6079 = vrot.slane %v5097, 5
      %v6080 = vsel %vm1232, %v6078, %v6079
      %v6081 = vrot.slane %v5949, 5
      %v6082 = vrot.slane %v6081, 4
      %v6083 = vrot.slane %v5065, 5
      %v6084 = vsel %vm1232, %v6082, %v6083
      %v6085 = vrot.slane %v6083, 4
      %v6086 = vrot.slane %v5098, 5
      %v6087 = vsel %vm1232, %v6085, %v6086
      %v6088 = vrot.slane %v5950, 5
      %v6089 = vrot.slane %v6088, 4
      %v6090 = vrot.slane %v5067, 5
      %v6091 = vsel %vm1232, %v6089, %v6090
      %v6092 = vrot.slane %v6090, 4
      %v6093 = vrot.slane %v5099, 5
      %v6094 = vsel %vm1232, %v6092, %v6093
      %s6095 = scalar_lea.vmem %s3, 128
      %v6096 = vld [vmem:[%s6095] sm:$0xf]
      %v6097 = vld [vmem:[%s6095 + $0x4] sm:$0xf]
      %v6098 = vld [vmem:[%s6095 + $0x8] sm:$0xf]
      %v6099 = vld [vmem:[%s6095 + $0xc] sm:$0xf]
      %v6100 = vld [vmem:[%s6095 + $0x10] sm:$0xf]
      %v6101 = vld [vmem:[%s6095 + $0x14] sm:$0xf]
      %v6102 = vld [vmem:[%s6095 + $0x18] sm:$0xf]
      %v6103 = vld [vmem:[%s6095 + $0x1c] sm:$0xf]
      %v6104 = vld [vmem:[%s6095 + $0x20] sm:$0xf]
      %v6105 = vld [vmem:[%s6095 + $0x24] sm:$0xf]
      %v6106 = vld [vmem:[%s6095 + $0x28] sm:$0xf]
      %v6107 = vld [vmem:[%s6095 + $0x2c] sm:$0xf]
      %v6108 = vld [vmem:[%s6095 + $0x30] sm:$0xf]
      %v6109 = vld [vmem:[%s6095 + $0x34] sm:$0xf]
      %v6110 = vld [vmem:[%s6095 + $0x38] sm:$0xf]
      %v6111 = vld [vmem:[%s6095 + $0x3c] sm:$0xf]
      %v6112 = vunpack.c.l.b16 %v5986
      %v6113 = vunpack.c.l.b16 %v5989
      %v6114 = vunpack.c.l.b16 %v5993
      %v6115 = vunpack.c.l.b16 %v5996
      %v6116 = vunpack.c.l.b16 %v6000
      %v6117 = vunpack.c.l.b16 %v6003
      %v6118 = vunpack.c.l.b16 %v6007
      %v6119 = vunpack.c.l.b16 %v6010
      %v6120 = vunpack.c.l.b16 %v6014
      %v6121 = vunpack.c.l.b16 %v6017
      %v6122 = vunpack.c.l.b16 %v6021
      %v6123 = vunpack.c.l.b16 %v6024
      %v6124 = vunpack.c.l.b16 %v6028
      %v6125 = vunpack.c.l.b16 %v6031
      %v6126 = vunpack.c.l.b16 %v6035
      %v6127 = vunpack.c.l.b16 %v6038
      %v6128 = vunpack.c.l.b16 %v6042
      %v6129 = vunpack.c.l.b16 %v6045
      %v6130 = vunpack.c.l.b16 %v6049
      %v6131 = vunpack.c.l.b16 %v6052
      %v6132 = vunpack.c.l.b16 %v6056
      %v6133 = vunpack.c.l.b16 %v6059
      %v6134 = vunpack.c.l.b16 %v6063
      %v6135 = vunpack.c.l.b16 %v6066
      %v6136 = vunpack.c.l.b16 %v6070
      %v6137 = vunpack.c.l.b16 %v6073
      %v6138 = vunpack.c.l.b16 %v6077
      %v6139 = vunpack.c.l.b16 %v6080
      %v6140 = vunpack.c.l.b16 %v6084
      %v6141 = vunpack.c.l.b16 %v6087
      %v6142 = vunpack.c.l.b16 %v6091
      %v6143 = vunpack.c.l.b16 %v6094
      %v6144 = vpack.c.b16 %v6113, %v6112
      %v6145 = vpack.c.b16 %v6115, %v6114
      %v6146 = vpack.c.b16 %v6117, %v6116
      %v6147 = vpack.c.b16 %v6119, %v6118
      %v6148 = vpack.c.b16 %v6121, %v6120
      %v6149 = vpack.c.b16 %v6123, %v6122
      %v6150 = vpack.c.b16 %v6125, %v6124
      %v6151 = vpack.c.b16 %v6127, %v6126
      %v6152 = vpack.c.b16 %v6129, %v6128
      %v6153 = vpack.c.b16 %v6131, %v6130
      %v6154 = vpack.c.b16 %v6133, %v6132
      %v6155 = vpack.c.b16 %v6135, %v6134
      %v6156 = vpack.c.b16 %v6137, %v6136
      %v6157 = vpack.c.b16 %v6139, %v6138
      %v6158 = vpack.c.b16 %v6141, %v6140
      %v6159 = vpack.c.b16 %v6143, %v6142
      %v6192 = vunpack.c.l.b16 %v6096
      %v6193 = vunpack.c.l.b16 %v6097
      %v6194 = vunpack.c.l.b16 %v6098
      %v6195 = vunpack.c.l.b16 %v6099
      %v6196 = vunpack.c.l.b16 %v6100
      %v6197 = vunpack.c.l.b16 %v6101
      %v6198 = vunpack.c.l.b16 %v6102
      %v6199 = vunpack.c.l.b16 %v6103
      %v6200 = vunpack.c.l.b16 %v6104
      %v6201 = vunpack.c.l.b16 %v6105
      %v6202 = vunpack.c.l.b16 %v6106
      %v6203 = vunpack.c.l.b16 %v6107
      %v6204 = vunpack.c.l.b16 %v6108
      %v6205 = vunpack.c.l.b16 %v6109
      %v6206 = vunpack.c.l.b16 %v6110
      %v6207 = vunpack.c.l.b16 %v6111
      %v6208 = vpack.c.b16 %v6193, %v6192
      %v6209 = vpack.c.b16 %v6195, %v6194
      %v6210 = vpack.c.b16 %v6197, %v6196
      %v6211 = vpack.c.b16 %v6199, %v6198
      %v6212 = vpack.c.b16 %v6201, %v6200
      %v6213 = vpack.c.b16 %v6203, %v6202
      %v6214 = vpack.c.b16 %v6205, %v6204
      %v6215 = vpack.c.b16 %v6207, %v6206
      %6224 = vmatpush.bf16.msra.mxu0 %v6215
      %6225 = vmatpush.bf16.msra.mxu0 %v6214
      %6226 = vmatpush.bf16.msra.mxu0 %v6213
      %6227 = vmatpush.bf16.msra.mxu0 %v6212
      %6228 = vmatpush.bf16.msra.mxu0 %v6211
      %6229 = vmatpush.bf16.msra.mxu0 %v6210
      %6230 = vmatpush.bf16.msra.mxu0 %v6209
      %6231 = vmatpush.bf16.msra.mxu0 %v6208
      %6232 = vmatmul.bf16.gmra.mxu0 %v6144
      %v6233 = vpop.f32.mrf.mxu0
      %v6234 = vadd.f32 0.0, %v6233
      %v6235 = vpop.f32.mrf.mxu0
      %v6236 = vadd.f32 0.0, %v6235
      %6237 = vmatmul.bf16.gmra.mxu0 %v6145
      %v6238 = vpop.f32.mrf.mxu0
      %v6239 = vadd.f32 0.0, %v6238
      %v6240 = vpop.f32.mrf.mxu0
      %v6241 = vadd.f32 0.0, %v6240
      %6242 = vmatmul.bf16.gmra.mxu0 %v6146
      %v6243 = vpop.f32.mrf.mxu0
      %v6244 = vadd.f32 0.0, %v6243
      %v6245 = vpop.f32.mrf.mxu0
      %v6246 = vadd.f32 0.0, %v6245
      %6247 = vmatmul.bf16.gmra.mxu0 %v6147
      %v6248 = vpop.f32.mrf.mxu0
      %v6249 = vadd.f32 0.0, %v6248
      %v6250 = vpop.f32.mrf.mxu0
      %v6251 = vadd.f32 0.0, %v6250
      %6252 = vmatmul.bf16.gmra.mxu0 %v6148
      %v6253 = vpop.f32.mrf.mxu0
      %v6254 = vadd.f32 0.0, %v6253
      %v6255 = vpop.f32.mrf.mxu0
      %v6256 = vadd.f32 0.0, %v6255
      %6257 = vmatmul.bf16.gmra.mxu0 %v6149
      %v6258 = vpop.f32.mrf.mxu0
      %v6259 = vadd.f32 0.0, %v6258
      %v6260 = vpop.f32.mrf.mxu0
      %v6261 = vadd.f32 0.0, %v6260
      %6262 = vmatmul.bf16.gmra.mxu0 %v6150
      %v6263 = vpop.f32.mrf.mxu0
      %v6264 = vadd.f32 0.0, %v6263
      %v6265 = vpop.f32.mrf.mxu0
      %v6266 = vadd.f32 0.0, %v6265
      %6267 = vmatmul.bf16.gmra.mxu0 %v6151
      %v6268 = vpop.f32.mrf.mxu0
      %v6269 = vadd.f32 0.0, %v6268
      %v6270 = vpop.f32.mrf.mxu0
      %v6271 = vadd.f32 0.0, %v6270
      %6272 = vmatmul.bf16.gmra.mxu0 %v6152
      %v6273 = vpop.f32.mrf.mxu0
      %v6274 = vadd.f32 0.0, %v6273
      %v6275 = vpop.f32.mrf.mxu0
      %v6276 = vadd.f32 0.0, %v6275
      %6277 = vmatmul.bf16.gmra.mxu0 %v6153
      %v6278 = vpop.f32.mrf.mxu0
      %v6279 = vadd.f32 0.0, %v6278
      %v6280 = vpop.f32.mrf.mxu0
      %v6281 = vadd.f32 0.0, %v6280
      %6282 = vmatmul.bf16.gmra.mxu0 %v6154
      %v6283 = vpop.f32.mrf.mxu0
      %v6284 = vadd.f32 0.0, %v6283
      %v6285 = vpop.f32.mrf.mxu0
      %v6286 = vadd.f32 0.0, %v6285
      %6287 = vmatmul.bf16.gmra.mxu0 %v6155
      %v6288 = vpop.f32.mrf.mxu0
      %v6289 = vadd.f32 0.0, %v6288
      %v6290 = vpop.f32.mrf.mxu0
      %v6291 = vadd.f32 0.0, %v6290
      %6292 = vmatmul.bf16.gmra.mxu0 %v6156
      %v6293 = vpop.f32.mrf.mxu0
      %v6294 = vadd.f32 0.0, %v6293
      %v6295 = vpop.f32.mrf.mxu0
      %v6296 = vadd.f32 0.0, %v6295
      %6297 = vmatmul.bf16.gmra.mxu0 %v6157
      %v6298 = vpop.f32.mrf.mxu0
      %v6299 = vadd.f32 0.0, %v6298
      %v6300 = vpop.f32.mrf.mxu0
      %v6301 = vadd.f32 0.0, %v6300
      %6302 = vmatmul.bf16.gmra.mxu0 %v6158
      %v6303 = vpop.f32.mrf.mxu0
      %v6304 = vadd.f32 0.0, %v6303
      %v6305 = vpop.f32.mrf.mxu0
      %v6306 = vadd.f32 0.0, %v6305
      %6307 = vmatmul.bf16.gmra.mxu0 %v6159
      %v6308 = vpop.f32.mrf.mxu0
      %v6309 = vadd.f32 0.0, %v6308
      %v6310 = vpop.f32.mrf.mxu0
      %v6311 = vadd.f32 0.0, %v6310
      %6312 = vdwg.mxu0
      %v6313 = vadd.f32 %v5856, %v6234
      %v6314 = vadd.f32 %v5858, %v6236
      %v6315 = vadd.f32 %v5861, %v6239
      %v6316 = vadd.f32 %v5863, %v6241
      %v6317 = vadd.f32 %v5866, %v6244
      %v6318 = vadd.f32 %v5868, %v6246
      %v6319 = vadd.f32 %v5871, %v6249
      %v6320 = vadd.f32 %v5873, %v6251
      %v6321 = vadd.f32 %v5876, %v6254
      %v6322 = vadd.f32 %v5878, %v6256
      %v6323 = vadd.f32 %v5881, %v6259
      %v6324 = vadd.f32 %v5883, %v6261
      %v6325 = vadd.f32 %v5886, %v6264
      %v6326 = vadd.f32 %v5888, %v6266
      %v6327 = vadd.f32 %v5891, %v6269
      %v6328 = vadd.f32 %v5893, %v6271
      %v6329 = vadd.f32 %v5896, %v6274
      %v6330 = vadd.f32 %v5898, %v6276
      %v6331 = vadd.f32 %v5901, %v6279
      %v6332 = vadd.f32 %v5903, %v6281
      %v6333 = vadd.f32 %v5906, %v6284
      %v6334 = vadd.f32 %v5908, %v6286
      %v6335 = vadd.f32 %v5911, %v6289
      %v6336 = vadd.f32 %v5913, %v6291
      %v6337 = vadd.f32 %v5916, %v6294
      %v6338 = vadd.f32 %v5918, %v6296
      %v6339 = vadd.f32 %v5921, %v6299
      %v6340 = vadd.f32 %v5923, %v6301
      %v6341 = vadd.f32 %v5926, %v6304
      %v6342 = vadd.f32 %v5928, %v6306
      %v6343 = vadd.f32 %v5931, %v6309
      %v6344 = vadd.f32 %v5933, %v6311
      %v6345 = vld [vmem:[%s4918] sm:$0xf]
      %v6346 = vld [vmem:[%s4918 + $0x4] sm:$0xf]
      %v6347 = vld [vmem:[%s4918 + $0xc] sm:$0xf]
      %v6348 = vld [vmem:[%s4918 + $0x10] sm:$0xf]
      %v6349 = vld [vmem:[%s4918 + $0x18] sm:$0xf]
      %v6350 = vld [vmem:[%s4918 + $0x1c] sm:$0xf]
      %v6351 = vld [vmem:[%s4918 + $0x24] sm:$0xf]
      %v6352 = vld [vmem:[%s4918 + $0x28] sm:$0xf]
      %v6353 = vld [vmem:[%s4918 + $0x30] sm:$0xf]
      %v6354 = vld [vmem:[%s4918 + $0x34] sm:$0xf]
      %v6355 = vld [vmem:[%s4918 + $0x3c] sm:$0xf]
      %v6356 = vld [vmem:[%s4918 + $0x40] sm:$0xf]
      %v6357 = vld [vmem:[%s4918 + $0x48] sm:$0xf]
      %v6358 = vld [vmem:[%s4918 + $0x4c] sm:$0xf]
      %v6359 = vld [vmem:[%s4918 + $0x54] sm:$0xf]
      %v6360 = vld [vmem:[%s4918 + $0x58] sm:$0xf]
      %v6361 = vld [vmem:[%s4918 + $0x60] sm:$0xf]
      %v6362 = vld [vmem:[%s4918 + $0x64] sm:$0xf]
      %v6363 = vld [vmem:[%s4918 + $0x6c] sm:$0xf]
      %v6364 = vld [vmem:[%s4918 + $0x70] sm:$0xf]
      %v6365 = vld [vmem:[%s4918 + $0x78] sm:$0xf]
      %v6366 = vld [vmem:[%s4918 + $0x7c] sm:$0xf]
      %v6367 = vld [vmem:[%s4918 + $0x84] sm:$0xf]
      %v6368 = vld [vmem:[%s4918 + $0x88] sm:$0xf]
      %v6369 = vld [vmem:[%s4918 + $0x90] sm:$0xf]
      %v6370 = vld [vmem:[%s4918 + $0x94] sm:$0xf]
      %v6371 = vld [vmem:[%s4918 + $0x9c] sm:$0xf]
      %v6372 = vld [vmem:[%s4918 + $0xa0] sm:$0xf]
      %v6373 = vld [vmem:[%s4918 + $0xa8] sm:$0xf]
      %v6374 = vld [vmem:[%s4918 + $0xac] sm:$0xf]
      %v6375 = vld [vmem:[%s4918 + $0xb4] sm:$0xf]
      %v6376 = vld [vmem:[%s4918 + $0xb8] sm:$0xf]
      %s6377 = scalar_lea.vmem %s3, 192
      %v6378 = vld [vmem:[%s6377] sm:$0xf]
      %v6379 = vld [vmem:[%s6377 + $0x4] sm:$0xf]
      %v6380 = vld [vmem:[%s6377 + $0x8] sm:$0xf]
      %v6381 = vld [vmem:[%s6377 + $0xc] sm:$0xf]
      %v6382 = vld [vmem:[%s6377 + $0x10] sm:$0xf]
      %v6383 = vld [vmem:[%s6377 + $0x14] sm:$0xf]
      %v6384 = vld [vmem:[%s6377 + $0x18] sm:$0xf]
      %v6385 = vld [vmem:[%s6377 + $0x1c] sm:$0xf]
      %v6386 = vld [vmem:[%s6377 + $0x20] sm:$0xf]
      %v6387 = vld [vmem:[%s6377 + $0x24] sm:$0xf]
      %v6388 = vld [vmem:[%s6377 + $0x28] sm:$0xf]
      %v6389 = vld [vmem:[%s6377 + $0x2c] sm:$0xf]
      %v6390 = vld [vmem:[%s6377 + $0x30] sm:$0xf]
      %v6391 = vld [vmem:[%s6377 + $0x34] sm:$0xf]
      %v6392 = vld [vmem:[%s6377 + $0x38] sm:$0xf]
      %v6393 = vld [vmem:[%s6377 + $0x3c] sm:$0xf]
      %v6426 = vunpack.c.l.b16 %v6345
      %v6427 = vunpack.c.l.b16 %v6346
      %v6428 = vunpack.c.l.b16 %v6347
      %v6429 = vunpack.c.l.b16 %v6348
      %v6430 = vunpack.c.l.b16 %v6349
      %v6431 = vunpack.c.l.b16 %v6350
      %v6432 = vunpack.c.l.b16 %v6351
      %v6433 = vunpack.c.l.b16 %v6352
      %v6434 = vunpack.c.l.b16 %v6353
      %v6435 = vunpack.c.l.b16 %v6354
      %v6436 = vunpack.c.l.b16 %v6355
      %v6437 = vunpack.c.l.b16 %v6356
      %v6438 = vunpack.c.l.b16 %v6357
      %v6439 = vunpack.c.l.b16 %v6358
      %v6440 = vunpack.c.l.b16 %v6359
      %v6441 = vunpack.c.l.b16 %v6360
      %v6442 = vunpack.c.l.b16 %v6361
      %v6443 = vunpack.c.l.b16 %v6362
      %v6444 = vunpack.c.l.b16 %v6363
      %v6445 = vunpack.c.l.b16 %v6364
      %v6446 = vunpack.c.l.b16 %v6365
      %v6447 = vunpack.c.l.b16 %v6366
      %v6448 = vunpack.c.l.b16 %v6367
      %v6449 = vunpack.c.l.b16 %v6368
      %v6450 = vunpack.c.l.b16 %v6369
      %v6451 = vunpack.c.l.b16 %v6370
      %v6452 = vunpack.c.l.b16 %v6371
      %v6453 = vunpack.c.l.b16 %v6372
      %v6454 = vunpack.c.l.b16 %v6373
      %v6455 = vunpack.c.l.b16 %v6374
      %v6456 = vunpack.c.l.b16 %v6375
      %v6457 = vunpack.c.l.b16 %v6376
      %v6458 = vpack.c.b16 %v6427, %v6426
      %v6459 = vpack.c.b16 %v6429, %v6428
      %v6460 = vpack.c.b16 %v6431, %v6430
      %v6461 = vpack.c.b16 %v6433, %v6432
      %v6462 = vpack.c.b16 %v6435, %v6434
      %v6463 = vpack.c.b16 %v6437, %v6436
      %v6464 = vpack.c.b16 %v6439, %v6438
      %v6465 = vpack.c.b16 %v6441, %v6440
      %v6466 = vpack.c.b16 %v6443, %v6442
      %v6467 = vpack.c.b16 %v6445, %v6444
      %v6468 = vpack.c.b16 %v6447, %v6446
      %v6469 = vpack.c.b16 %v6449, %v6448
      %v6470 = vpack.c.b16 %v6451, %v6450
      %v6471 = vpack.c.b16 %v6453, %v6452
      %v6472 = vpack.c.b16 %v6455, %v6454
      %v6473 = vpack.c.b16 %v6457, %v6456
      %v6506 = vunpack.c.l.b16 %v6378
      %v6507 = vunpack.c.l.b16 %v6379
      %v6508 = vunpack.c.l.b16 %v6380
      %v6509 = vunpack.c.l.b16 %v6381
      %v6510 = vunpack.c.l.b16 %v6382
      %v6511 = vunpack.c.l.b16 %v6383
      %v6512 = vunpack.c.l.b16 %v6384
      %v6513 = vunpack.c.l.b16 %v6385
      %v6514 = vunpack.c.l.b16 %v6386
      %v6515 = vunpack.c.l.b16 %v6387
      %v6516 = vunpack.c.l.b16 %v6388
      %v6517 = vunpack.c.l.b16 %v6389
      %v6518 = vunpack.c.l.b16 %v6390
      %v6519 = vunpack.c.l.b16 %v6391
      %v6520 = vunpack.c.l.b16 %v6392
      %v6521 = vunpack.c.l.b16 %v6393
      %v6522 = vpack.c.b16 %v6507, %v6506
      %v6523 = vpack.c.b16 %v6509, %v6508
      %v6524 = vpack.c.b16 %v6511, %v6510
      %v6525 = vpack.c.b16 %v6513, %v6512
      %v6526 = vpack.c.b16 %v6515, %v6514
      %v6527 = vpack.c.b16 %v6517, %v6516
      %v6528 = vpack.c.b16 %v6519, %v6518
      %v6529 = vpack.c.b16 %v6521, %v6520
      %6538 = vmatpush.bf16.msra.mxu0 %v6529
      %6539 = vmatpush.bf16.msra.mxu0 %v6528
      %6540 = vmatpush.bf16.msra.mxu0 %v6527
      %6541 = vmatpush.bf16.msra.mxu0 %v6526
      %6542 = vmatpush.bf16.msra.mxu0 %v6525
      %6543 = vmatpush.bf16.msra.mxu0 %v6524
      %6544 = vmatpush.bf16.msra.mxu0 %v6523
      %6545 = vmatpush.bf16.msra.mxu0 %v6522
      %6546 = vmatmul.bf16.gmra.mxu0 %v6458
      %v6547 = vpop.f32.mrf.mxu0
      %v6548 = vadd.f32 0.0, %v6547
      %v6549 = vpop.f32.mrf.mxu0
      %v6550 = vadd.f32 0.0, %v6549
      %6551 = vmatmul.bf16.gmra.mxu0 %v6459
      %v6552 = vpop.f32.mrf.mxu0
      %v6553 = vadd.f32 0.0, %v6552
      %v6554 = vpop.f32.mrf.mxu0
      %v6555 = vadd.f32 0.0, %v6554
      %6556 = vmatmul.bf16.gmra.mxu0 %v6460
      %v6557 = vpop.f32.mrf.mxu0
      %v6558 = vadd.f32 0.0, %v6557
      %v6559 = vpop.f32.mrf.mxu0
      %v6560 = vadd.f32 0.0, %v6559
      %6561 = vmatmul.bf16.gmra.mxu0 %v6461
      %v6562 = vpop.f32.mrf.mxu0
      %v6563 = vadd.f32 0.0, %v6562
      %v6564 = vpop.f32.mrf.mxu0
      %v6565 = vadd.f32 0.0, %v6564
      %6566 = vmatmul.bf16.gmra.mxu0 %v6462
      %v6567 = vpop.f32.mrf.mxu0
      %v6568 = vadd.f32 0.0, %v6567
      %v6569 = vpop.f32.mrf.mxu0
      %v6570 = vadd.f32 0.0, %v6569
      %6571 = vmatmul.bf16.gmra.mxu0 %v6463
      %v6572 = vpop.f32.mrf.mxu0
      %v6573 = vadd.f32 0.0, %v6572
      %v6574 = vpop.f32.mrf.mxu0
      %v6575 = vadd.f32 0.0, %v6574
      %6576 = vmatmul.bf16.gmra.mxu0 %v6464
      %v6577 = vpop.f32.mrf.mxu0
      %v6578 = vadd.f32 0.0, %v6577
      %v6579 = vpop.f32.mrf.mxu0
      %v6580 = vadd.f32 0.0, %v6579
      %6581 = vmatmul.bf16.gmra.mxu0 %v6465
      %v6582 = vpop.f32.mrf.mxu0
      %v6583 = vadd.f32 0.0, %v6582
      %v6584 = vpop.f32.mrf.mxu0
      %v6585 = vadd.f32 0.0, %v6584
      %6586 = vmatmul.bf16.gmra.mxu0 %v6466
      %v6587 = vpop.f32.mrf.mxu0
      %v6588 = vadd.f32 0.0, %v6587
      %v6589 = vpop.f32.mrf.mxu0
      %v6590 = vadd.f32 0.0, %v6589
      %6591 = vmatmul.bf16.gmra.mxu0 %v6467
      %v6592 = vpop.f32.mrf.mxu0
      %v6593 = vadd.f32 0.0, %v6592
      %v6594 = vpop.f32.mrf.mxu0
      %v6595 = vadd.f32 0.0, %v6594
      %6596 = vmatmul.bf16.gmra.mxu0 %v6468
      %v6597 = vpop.f32.mrf.mxu0
      %v6598 = vadd.f32 0.0, %v6597
      %v6599 = vpop.f32.mrf.mxu0
      %v6600 = vadd.f32 0.0, %v6599
      %6601 = vmatmul.bf16.gmra.mxu0 %v6469
      %v6602 = vpop.f32.mrf.mxu0
      %v6603 = vadd.f32 0.0, %v6602
      %v6604 = vpop.f32.mrf.mxu0
      %v6605 = vadd.f32 0.0, %v6604
      %6606 = vmatmul.bf16.gmra.mxu0 %v6470
      %v6607 = vpop.f32.mrf.mxu0
      %v6608 = vadd.f32 0.0, %v6607
      %v6609 = vpop.f32.mrf.mxu0
      %v6610 = vadd.f32 0.0, %v6609
      %6611 = vmatmul.bf16.gmra.mxu0 %v6471
      %v6612 = vpop.f32.mrf.mxu0
      %v6613 = vadd.f32 0.0, %v6612
      %v6614 = vpop.f32.mrf.mxu0
      %v6615 = vadd.f32 0.0, %v6614
      %6616 = vmatmul.bf16.gmra.mxu0 %v6472
      %v6617 = vpop.f32.mrf.mxu0
      %v6618 = vadd.f32 0.0, %v6617
      %v6619 = vpop.f32.mrf.mxu0
      %v6620 = vadd.f32 0.0, %v6619
      %6621 = vmatmul.bf16.gmra.mxu0 %v6473
      %v6622 = vpop.f32.mrf.mxu0
      %v6623 = vadd.f32 0.0, %v6622
      %v6624 = vpop.f32.mrf.mxu0
      %v6625 = vadd.f32 0.0, %v6624
      %6626 = vdwg.mxu0
      %v6627 = vadd.f32 %v6313, %v6548
      %v6628 = vadd.f32 %v6314, %v6550
      %v6629 = vadd.f32 %v6315, %v6553
      %v6630 = vadd.f32 %v6316, %v6555
      %v6631 = vadd.f32 %v6317, %v6558
      %v6632 = vadd.f32 %v6318, %v6560
      %v6633 = vadd.f32 %v6319, %v6563
      %v6634 = vadd.f32 %v6320, %v6565
      %v6635 = vadd.f32 %v6321, %v6568
      %v6636 = vadd.f32 %v6322, %v6570
      %v6637 = vadd.f32 %v6323, %v6573
      %v6638 = vadd.f32 %v6324, %v6575
      %v6639 = vadd.f32 %v6325, %v6578
      %v6640 = vadd.f32 %v6326, %v6580
      %v6641 = vadd.f32 %v6327, %v6583
      %v6642 = vadd.f32 %v6328, %v6585
      %v6643 = vadd.f32 %v6329, %v6588
      %v6644 = vadd.f32 %v6330, %v6590
      %v6645 = vadd.f32 %v6331, %v6593
      %v6646 = vadd.f32 %v6332, %v6595
      %v6647 = vadd.f32 %v6333, %v6598
      %v6648 = vadd.f32 %v6334, %v6600
      %v6649 = vadd.f32 %v6335, %v6603
      %v6650 = vadd.f32 %v6336, %v6605
      %v6651 = vadd.f32 %v6337, %v6608
      %v6652 = vadd.f32 %v6338, %v6610
      %v6653 = vadd.f32 %v6339, %v6613
      %v6654 = vadd.f32 %v6340, %v6615
      %v6655 = vadd.f32 %v6341, %v6618
      %v6656 = vadd.f32 %v6342, %v6620
      %v6657 = vadd.f32 %v6343, %v6623
      %v6658 = vadd.f32 %v6344, %v6625
      %v6659 = vld [vmem:[%s4918] sm:$0xf]
      %v6660 = vld [vmem:[%s4918 + $0x4] sm:$0xf]
      %v6661 = vld [vmem:[%s4918 + $0x8] sm:$0x1]
      %v6662 = vld [vmem:[%s4918 + $0xc] sm:$0xf]
      %v6663 = vld [vmem:[%s4918 + $0x10] sm:$0xf]
      %v6664 = vld [vmem:[%s4918 + $0x14] sm:$0x1]
      %v6665 = vld [vmem:[%s4918 + $0x18] sm:$0xf]
      %v6666 = vld [vmem:[%s4918 + $0x1c] sm:$0xf]
      %v6667 = vld [vmem:[%s4918 + $0x20] sm:$0x1]
      %v6668 = vld [vmem:[%s4918 + $0x24] sm:$0xf]
      %v6669 = vld [vmem:[%s4918 + $0x28] sm:$0xf]
      %v6670 = vld [vmem:[%s4918 + $0x2c] sm:$0x1]
      %v6671 = vld [vmem:[%s4918 + $0x30] sm:$0xf]
      %v6672 = vld [vmem:[%s4918 + $0x34] sm:$0xf]
      %v6673 = vld [vmem:[%s4918 + $0x38] sm:$0x1]
      %v6674 = vld [vmem:[%s4918 + $0x3c] sm:$0xf]
      %v6675 = vld [vmem:[%s4918 + $0x40] sm:$0xf]
      %v6676 = vld [vmem:[%s4918 + $0x44] sm:$0x1]
      %v6677 = vld [vmem:[%s4918 + $0x48] sm:$0xf]
      %v6678 = vld [vmem:[%s4918 + $0x4c] sm:$0xf]
      %v6679 = vld [vmem:[%s4918 + $0x50] sm:$0x1]
      %v6680 = vld [vmem:[%s4918 + $0x54] sm:$0xf]
      %v6681 = vld [vmem:[%s4918 + $0x58] sm:$0xf]
      %v6682 = vld [vmem:[%s4918 + $0x5c] sm:$0x1]
      %v6683 = vld [vmem:[%s4918 + $0x60] sm:$0xf]
      %v6684 = vld [vmem:[%s4918 + $0x64] sm:$0xf]
      %v6685 = vld [vmem:[%s4918 + $0x68] sm:$0x1]
      %v6686 = vld [vmem:[%s4918 + $0x6c] sm:$0xf]
      %v6687 = vld [vmem:[%s4918 + $0x70] sm:$0xf]
      %v6688 = vld [vmem:[%s4918 + $0x74] sm:$0x1]
      %v6689 = vld [vmem:[%s4918 + $0x78] sm:$0xf]
      %v6690 = vld [vmem:[%s4918 + $0x7c] sm:$0xf]
      %v6691 = vld [vmem:[%s4918 + $0x80] sm:$0x1]
      %v6692 = vld [vmem:[%s4918 + $0x84] sm:$0xf]
      %v6693 = vld [vmem:[%s4918 + $0x88] sm:$0xf]
      %v6694 = vld [vmem:[%s4918 + $0x8c] sm:$0x1]
      %v6695 = vld [vmem:[%s4918 + $0x90] sm:$0xf]
      %v6696 = vld [vmem:[%s4918 + $0x94] sm:$0xf]
      %v6697 = vld [vmem:[%s4918 + $0x98] sm:$0x1]
      %v6698 = vld [vmem:[%s4918 + $0x9c] sm:$0xf]
      %v6699 = vld [vmem:[%s4918 + $0xa0] sm:$0xf]
      %v6700 = vld [vmem:[%s4918 + $0xa4] sm:$0x1]
      %v6701 = vld [vmem:[%s4918 + $0xa8] sm:$0xf]
      %v6702 = vld [vmem:[%s4918 + $0xac] sm:$0xf]
      %v6703 = vld [vmem:[%s4918 + $0xb0] sm:$0x1]
      %v6704 = vld [vmem:[%s4918 + $0xb4] sm:$0xf]
      %v6705 = vld [vmem:[%s4918 + $0xb8] sm:$0xf]
      %v6706 = vld [vmem:[%s4918 + $0xbc] sm:$0x1]
      %v6708 = vshrl.u32 %v6659, 16
      %v6710 = vrot.slane %v6708, 4
      %v6711 = vshll.u32 %v6659, 16
      %v6713 = vrot.slane %v6711, 5
      %v6714 = vor.u32 %v6710, %v6713
      %v6715 = vrot.slane %v6714, 4
      %v6717 = vshll.u32 %v6660, 16
      %v6719 = vrot.slane %v6717, 5
      %v6720 = vsel %vm346, %v6715, %v6719
      %v6721 = vshrl.u32 %v6660, 16
      %v6723 = vrot.slane %v6721, 4
      %v6724 = vor.u32 %v6723, %v6719
      %v6725 = vrot.slane %v6724, 4
      %v6727 = vshll.u32 %v6661, 16
      %v6729 = vrot.slane %v6727, 5
      %v6730 = vsel %vm346, %v6725, %v6729
      %v6732 = vshrl.u32 %v6662, 16
      %v6734 = vrot.slane %v6732, 4
      %v6735 = vshll.u32 %v6662, 16
      %v6737 = vrot.slane %v6735, 5
      %v6738 = vor.u32 %v6734, %v6737
      %v6739 = vrot.slane %v6738, 4
      %v6741 = vshll.u32 %v6663, 16
      %v6743 = vrot.slane %v6741, 5
      %v6744 = vsel %vm346, %v6739, %v6743
      %v6745 = vshrl.u32 %v6663, 16
      %v6747 = vrot.slane %v6745, 4
      %v6748 = vor.u32 %v6747, %v6743
      %v6749 = vrot.slane %v6748, 4
      %v6751 = vshll.u32 %v6664, 16
      %v6753 = vrot.slane %v6751, 5
      %v6754 = vsel %vm346, %v6749, %v6753
      %v6756 = vshrl.u32 %v6665, 16
      %v6758 = vrot.slane %v6756, 4
      %v6759 = vshll.u32 %v6665, 16
      %v6761 = vrot.slane %v6759, 5
      %v6762 = vor.u32 %v6758, %v6761
      %v6763 = vrot.slane %v6762, 4
      %v6765 = vshll.u32 %v6666, 16
      %v6767 = vrot.slane %v6765, 5
      %v6768 = vsel %vm346, %v6763, %v6767
      %v6769 = vshrl.u32 %v6666, 16
      %v6771 = vrot.slane %v6769, 4
      %v6772 = vor.u32 %v6771, %v6767
      %v6773 = vrot.slane %v6772, 4
      %v6775 = vshll.u32 %v6667, 16
      %v6777 = vrot.slane %v6775, 5
      %v6778 = vsel %vm346, %v6773, %v6777
      %v6780 = vshrl.u32 %v6668, 16
      %v6782 = vrot.slane %v6780, 4
      %v6783 = vshll.u32 %v6668, 16
      %v6785 = vrot.slane %v6783, 5
      %v6786 = vor.u32 %v6782, %v6785
      %v6787 = vrot.slane %v6786, 4
      %v6789 = vshll.u32 %v6669, 16
      %v6791 = vrot.slane %v6789, 5
      %v6792 = vsel %vm346, %v6787, %v6791
      %v6793 = vshrl.u32 %v6669, 16
      %v6795 = vrot.slane %v6793, 4
      %v6796 = vor.u32 %v6795, %v6791
      %v6797 = vrot.slane %v6796, 4
      %v6799 = vshll.u32 %v6670, 16
      %v6801 = vrot.slane %v6799, 5
      %v6802 = vsel %vm346, %v6797, %v6801
      %v6804 = vshrl.u32 %v6671, 16
      %v6806 = vrot.slane %v6804, 4
      %v6807 = vshll.u32 %v6671, 16
      %v6809 = vrot.slane %v6807, 5
      %v6810 = vor.u32 %v6806, %v6809
      %v6811 = vrot.slane %v6810, 4
      %v6813 = vshll.u32 %v6672, 16
      %v6815 = vrot.slane %v6813, 5
      %v6816 = vsel %vm346, %v6811, %v6815
      %v6817 = vshrl.u32 %v6672, 16
      %v6819 = vrot.slane %v6817, 4
      %v6820 = vor.u32 %v6819, %v6815
      %v6821 = vrot.slane %v6820, 4
      %v6823 = vshll.u32 %v6673, 16
      %v6825 = vrot.slane %v6823, 5
      %v6826 = vsel %vm346, %v6821, %v6825
      %v6828 = vshrl.u32 %v6674, 16
      %v6830 = vrot.slane %v6828, 4
      %v6831 = vshll.u32 %v6674, 16
      %v6833 = vrot.slane %v6831, 5
      %v6834 = vor.u32 %v6830, %v6833
      %v6835 = vrot.slane %v6834, 4
      %v6837 = vshll.u32 %v6675, 16
      %v6839 = vrot.slane %v6837, 5
      %v6840 = vsel %vm346, %v6835, %v6839
      %v6841 = vshrl.u32 %v6675, 16
      %v6843 = vrot.slane %v6841, 4
      %v6844 = vor.u32 %v6843, %v6839
      %v6845 = vrot.slane %v6844, 4
      %v6847 = vshll.u32 %v6676, 16
      %v6849 = vrot.slane %v6847, 5
      %v6850 = vsel %vm346, %v6845, %v6849
      %v6852 = vshrl.u32 %v6677, 16
      %v6854 = vrot.slane %v6852, 4
      %v6855 = vshll.u32 %v6677, 16
      %v6857 = vrot.slane %v6855, 5
      %v6858 = vor.u32 %v6854, %v6857
      %v6859 = vrot.slane %v6858, 4
      %v6861 = vshll.u32 %v6678, 16
      %v6863 = vrot.slane %v6861, 5
      %v6864 = vsel %vm346, %v6859, %v6863
      %v6865 = vshrl.u32 %v6678, 16
      %v6867 = vrot.slane %v6865, 4
      %v6868 = vor.u32 %v6867, %v6863
      %v6869 = vrot.slane %v6868, 4
      %v6871 = vshll.u32 %v6679, 16
      %v6873 = vrot.slane %v6871, 5
      %v6874 = vsel %vm346, %v6869, %v6873
      %v6876 = vshrl.u32 %v6680, 16
      %v6878 = vrot.slane %v6876, 4
      %v6879 = vshll.u32 %v6680, 16
      %v6881 = vrot.slane %v6879, 5
      %v6882 = vor.u32 %v6878, %v6881
      %v6883 = vrot.slane %v6882, 4
      %v6885 = vshll.u32 %v6681, 16
      %v6887 = vrot.slane %v6885, 5
      %v6888 = vsel %vm346, %v6883, %v6887
      %v6889 = vshrl.u32 %v6681, 16
      %v6891 = vrot.slane %v6889, 4
      %v6892 = vor.u32 %v6891, %v6887
      %v6893 = vrot.slane %v6892, 4
      %v6895 = vshll.u32 %v6682, 16
      %v6897 = vrot.slane %v6895, 5
      %v6898 = vsel %vm346, %v6893, %v6897
      %v6900 = vshrl.u32 %v6683, 16
      %v6902 = vrot.slane %v6900, 4
      %v6903 = vshll.u32 %v6683, 16
      %v6905 = vrot.slane %v6903, 5
      %v6906 = vor.u32 %v6902, %v6905
      %v6907 = vrot.slane %v6906, 4
      %v6909 = vshll.u32 %v6684, 16
      %v6911 = vrot.slane %v6909, 5
      %v6912 = vsel %vm346, %v6907, %v6911
      %v6913 = vshrl.u32 %v6684, 16
      %v6915 = vrot.slane %v6913, 4
      %v6916 = vor.u32 %v6915, %v6911
      %v6917 = vrot.slane %v6916, 4
      %v6919 = vshll.u32 %v6685, 16
      %v6921 = vrot.slane %v6919, 5
      %v6922 = vsel %vm346, %v6917, %v6921
      %v6924 = vshrl.u32 %v6686, 16
      %v6926 = vrot.slane %v6924, 4
      %v6927 = vshll.u32 %v6686, 16
      %v6929 = vrot.slane %v6927, 5
      %v6930 = vor.u32 %v6926, %v6929
      %v6931 = vrot.slane %v6930, 4
      %v6933 = vshll.u32 %v6687, 16
      %v6935 = vrot.slane %v6933, 5
      %v6936 = vsel %vm346, %v6931, %v6935
      %v6937 = vshrl.u32 %v6687, 16
      %v6939 = vrot.slane %v6937, 4
      %v6940 = vor.u32 %v6939, %v6935
      %v6941 = vrot.slane %v6940, 4
      %v6943 = vshll.u32 %v6688, 16
      %v6945 = vrot.slane %v6943, 5
      %v6946 = vsel %vm346, %v6941, %v6945
      %v6948 = vshrl.u32 %v6689, 16
      %v6950 = vrot.slane %v6948, 4
      %v6951 = vshll.u32 %v6689, 16
      %v6953 = vrot.slane %v6951, 5
      %v6954 = vor.u32 %v6950, %v6953
      %v6955 = vrot.slane %v6954, 4
      %v6957 = vshll.u32 %v6690, 16
      %v6959 = vrot.slane %v6957, 5
      %v6960 = vsel %vm346, %v6955, %v6959
      %v6961 = vshrl.u32 %v6690, 16
      %v6963 = vrot.slane %v6961, 4
      %v6964 = vor.u32 %v6963, %v6959
      %v6965 = vrot.slane %v6964, 4
      %v6967 = vshll.u32 %v6691, 16
      %v6969 = vrot.slane %v6967, 5
      %v6970 = vsel %vm346, %v6965, %v6969
      %v6972 = vshrl.u32 %v6692, 16
      %v6974 = vrot.slane %v6972, 4
      %v6975 = vshll.u32 %v6692, 16
      %v6977 = vrot.slane %v6975, 5
      %v6978 = vor.u32 %v6974, %v6977
      %v6979 = vrot.slane %v6978, 4
      %v6981 = vshll.u32 %v6693, 16
      %v6983 = vrot.slane %v6981, 5
      %v6984 = vsel %vm346, %v6979, %v6983
      %v6985 = vshrl.u32 %v6693, 16
      %v6987 = vrot.slane %v6985, 4
      %v6988 = vor.u32 %v6987, %v6983
      %v6989 = vrot.slane %v6988, 4
      %v6991 = vshll.u32 %v6694, 16
      %v6993 = vrot.slane %v6991, 5
      %v6994 = vsel %vm346, %v6989, %v6993
      %v6996 = vshrl.u32 %v6695, 16
      %v6998 = vrot.slane %v6996, 4
      %v6999 = vshll.u32 %v6695, 16
      %v7001 = vrot.slane %v6999, 5
      %v7002 = vor.u32 %v6998, %v7001
      %v7003 = vrot.slane %v7002, 4
      %v7005 = vshll.u32 %v6696, 16
      %v7007 = vrot.slane %v7005, 5
      %v7008 = vsel %vm346, %v7003, %v7007
      %v7009 = vshrl.u32 %v6696, 16
      %v7011 = vrot.slane %v7009, 4
      %v7012 = vor.u32 %v7011, %v7007
      %v7013 = vrot.slane %v7012, 4
      %v7015 = vshll.u32 %v6697, 16
      %v7017 = vrot.slane %v7015, 5
      %v7018 = vsel %vm346, %v7013, %v7017
      %v7020 = vshrl.u32 %v6698, 16
      %v7022 = vrot.slane %v7020, 4
      %v7023 = vshll.u32 %v6698, 16
      %v7025 = vrot.slane %v7023, 5
      %v7026 = vor.u32 %v7022, %v7025
      %v7027 = vrot.slane %v7026, 4
      %v7029 = vshll.u32 %v6699, 16
      %v7031 = vrot.slane %v7029, 5
      %v7032 = vsel %vm346, %v7027, %v7031
      %v7033 = vshrl.u32 %v6699, 16
      %v7035 = vrot.slane %v7033, 4
      %v7036 = vor.u32 %v7035, %v7031
      %v7037 = vrot.slane %v7036, 4
      %v7039 = vshll.u32 %v6700, 16
      %v7041 = vrot.slane %v7039, 5
      %v7042 = vsel %vm346, %v7037, %v7041
      %v7044 = vshrl.u32 %v6701, 16
      %v7046 = vrot.slane %v7044, 4
      %v7047 = vshll.u32 %v6701, 16
      %v7049 = vrot.slane %v7047, 5
      %v7050 = vor.u32 %v7046, %v7049
      %v7051 = vrot.slane %v7050, 4
      %v7053 = vshll.u32 %v6702, 16
      %v7055 = vrot.slane %v7053, 5
      %v7056 = vsel %vm346, %v7051, %v7055
      %v7057 = vshrl.u32 %v6702, 16
      %v7059 = vrot.slane %v7057, 4
      %v7060 = vor.u32 %v7059, %v7055
      %v7061 = vrot.slane %v7060, 4
      %v7063 = vshll.u32 %v6703, 16
      %v7065 = vrot.slane %v7063, 5
      %v7066 = vsel %vm346, %v7061, %v7065
      %v7068 = vshrl.u32 %v6704, 16
      %v7070 = vrot.slane %v7068, 4
      %v7071 = vshll.u32 %v6704, 16
      %v7073 = vrot.slane %v7071, 5
      %v7074 = vor.u32 %v7070, %v7073
      %v7075 = vrot.slane %v7074, 4
      %v7077 = vshll.u32 %v6705, 16
      %v7079 = vrot.slane %v7077, 5
      %v7080 = vsel %vm346, %v7075, %v7079
      %v7081 = vshrl.u32 %v6705, 16
      %v7083 = vrot.slane %v7081, 4
      %v7084 = vor.u32 %v7083, %v7079
      %v7085 = vrot.slane %v7084, 4
      %v7087 = vshll.u32 %v6706, 16
      %v7089 = vrot.slane %v7087, 5
      %v7090 = vsel %vm346, %v7085, %v7089
      %s7091 = scalar_lea.vmem %s3, 256
      %v7092 = vld [vmem:[%s7091] sm:$0xf]
      %v7093 = vld [vmem:[%s7091 + $0x4] sm:$0xf]
      %v7094 = vld [vmem:[%s7091 + $0x8] sm:$0xf]
      %v7095 = vld [vmem:[%s7091 + $0xc] sm:$0xf]
      %v7096 = vld [vmem:[%s7091 + $0x10] sm:$0xf]
      %v7097 = vld [vmem:[%s7091 + $0x14] sm:$0xf]
      %v7098 = vld [vmem:[%s7091 + $0x18] sm:$0xf]
      %v7099 = vld [vmem:[%s7091 + $0x1c] sm:$0xf]
      %v7100 = vld [vmem:[%s7091 + $0x20] sm:$0xf]
      %v7101 = vld [vmem:[%s7091 + $0x24] sm:$0xf]
      %v7102 = vld [vmem:[%s7091 + $0x28] sm:$0xf]
      %v7103 = vld [vmem:[%s7091 + $0x2c] sm:$0xf]
      %v7104 = vld [vmem:[%s7091 + $0x30] sm:$0xf]
      %v7105 = vld [vmem:[%s7091 + $0x34] sm:$0xf]
      %v7106 = vld [vmem:[%s7091 + $0x38] sm:$0xf]
      %v7107 = vld [vmem:[%s7091 + $0x3c] sm:$0xf]
      %v7108 = vunpack.c.l.b16 %v6720
      %v7109 = vunpack.c.l.b16 %v6730
      %v7110 = vunpack.c.l.b16 %v6744
      %v7111 = vunpack.c.l.b16 %v6754
      %v7112 = vunpack.c.l.b16 %v6768
      %v7113 = vunpack.c.l.b16 %v6778
      %v7114 = vunpack.c.l.b16 %v6792
      %v7115 = vunpack.c.l.b16 %v6802
      %v7116 = vunpack.c.l.b16 %v6816
      %v7117 = vunpack.c.l.b16 %v6826
      %v7118 = vunpack.c.l.b16 %v6840
      %v7119 = vunpack.c.l.b16 %v6850
      %v7120 = vunpack.c.l.b16 %v6864
      %v7121 = vunpack.c.l.b16 %v6874
      %v7122 = vunpack.c.l.b16 %v6888
      %v7123 = vunpack.c.l.b16 %v6898
      %v7124 = vunpack.c.l.b16 %v6912
      %v7125 = vunpack.c.l.b16 %v6922
      %v7126 = vunpack.c.l.b16 %v6936
      %v7127 = vunpack.c.l.b16 %v6946
      %v7128 = vunpack.c.l.b16 %v6960
      %v7129 = vunpack.c.l.b16 %v6970
      %v7130 = vunpack.c.l.b16 %v6984
      %v7131 = vunpack.c.l.b16 %v6994
      %v7132 = vunpack.c.l.b16 %v7008
      %v7133 = vunpack.c.l.b16 %v7018
      %v7134 = vunpack.c.l.b16 %v7032
      %v7135 = vunpack.c.l.b16 %v7042
      %v7136 = vunpack.c.l.b16 %v7056
      %v7137 = vunpack.c.l.b16 %v7066
      %v7138 = vunpack.c.l.b16 %v7080
      %v7139 = vunpack.c.l.b16 %v7090
      %v7140 = vpack.c.b16 %v7109, %v7108
      %v7141 = vpack.c.b16 %v7111, %v7110
      %v7142 = vpack.c.b16 %v7113, %v7112
      %v7143 = vpack.c.b16 %v7115, %v7114
      %v7144 = vpack.c.b16 %v7117, %v7116
      %v7145 = vpack.c.b16 %v7119, %v7118
      %v7146 = vpack.c.b16 %v7121, %v7120
      %v7147 = vpack.c.b16 %v7123, %v7122
      %v7148 = vpack.c.b16 %v7125, %v7124
      %v7149 = vpack.c.b16 %v7127, %v7126
      %v7150 = vpack.c.b16 %v7129, %v7128
      %v7151 = vpack.c.b16 %v7131, %v7130
      %v7152 = vpack.c.b16 %v7133, %v7132
      %v7153 = vpack.c.b16 %v7135, %v7134
      %v7154 = vpack.c.b16 %v7137, %v7136
      %v7155 = vpack.c.b16 %v7139, %v7138
      %v7188 = vunpack.c.l.b16 %v7092
      %v7189 = vunpack.c.l.b16 %v7093
      %v7190 = vunpack.c.l.b16 %v7094
      %v7191 = vunpack.c.l.b16 %v7095
      %v7192 = vunpack.c.l.b16 %v7096
      %v7193 = vunpack.c.l.b16 %v7097
      %v7194 = vunpack.c.l.b16 %v7098
      %v7195 = vunpack.c.l.b16 %v7099
      %v7196 = vunpack.c.l.b16 %v7100
      %v7197 = vunpack.c.l.b16 %v7101
      %v7198 = vunpack.c.l.b16 %v7102
      %v7199 = vunpack.c.l.b16 %v7103
      %v7200 = vunpack.c.l.b16 %v7104
      %v7201 = vunpack.c.l.b16 %v7105
      %v7202 = vunpack.c.l.b16 %v7106
      %v7203 = vunpack.c.l.b16 %v7107
      %v7204 = vpack.c.b16 %v7189, %v7188
      %v7205 = vpack.c.b16 %v7191, %v7190
      %v7206 = vpack.c.b16 %v7193, %v7192
      %v7207 = vpack.c.b16 %v7195, %v7194
      %v7208 = vpack.c.b16 %v7197, %v7196
      %v7209 = vpack.c.b16 %v7199, %v7198
      %v7210 = vpack.c.b16 %v7201, %v7200
      %v7211 = vpack.c.b16 %v7203, %v7202
      %7220 = vmatpush.bf16.msra.mxu0 %v7211
      %7221 = vmatpush.bf16.msra.mxu0 %v7210
      %7222 = vmatpush.bf16.msra.mxu0 %v7209
      %7223 = vmatpush.bf16.msra.mxu0 %v7208
      %7224 = vmatpush.bf16.msra.mxu0 %v7207
      %7225 = vmatpush.bf16.msra.mxu0 %v7206
      %7226 = vmatpush.bf16.msra.mxu0 %v7205
      %7227 = vmatpush.bf16.msra.mxu0 %v7204
      %7228 = vmatmul.bf16.gmra.mxu0 %v7140
      %v7229 = vpop.f32.mrf.mxu0
      %v7230 = vadd.f32 0.0, %v7229
      %v7231 = vpop.f32.mrf.mxu0
      %v7232 = vadd.f32 0.0, %v7231
      %7233 = vmatmul.bf16.gmra.mxu0 %v7141
      %v7234 = vpop.f32.mrf.mxu0
      %v7235 = vadd.f32 0.0, %v7234
      %v7236 = vpop.f32.mrf.mxu0
      %v7237 = vadd.f32 0.0, %v7236
      %7238 = vmatmul.bf16.gmra.mxu0 %v7142
      %v7239 = vpop.f32.mrf.mxu0
      %v7240 = vadd.f32 0.0, %v7239
      %v7241 = vpop.f32.mrf.mxu0
      %v7242 = vadd.f32 0.0, %v7241
      %7243 = vmatmul.bf16.gmra.mxu0 %v7143
      %v7244 = vpop.f32.mrf.mxu0
      %v7245 = vadd.f32 0.0, %v7244
      %v7246 = vpop.f32.mrf.mxu0
      %v7247 = vadd.f32 0.0, %v7246
      %7248 = vmatmul.bf16.gmra.mxu0 %v7144
      %v7249 = vpop.f32.mrf.mxu0
      %v7250 = vadd.f32 0.0, %v7249
      %v7251 = vpop.f32.mrf.mxu0
      %v7252 = vadd.f32 0.0, %v7251
      %7253 = vmatmul.bf16.gmra.mxu0 %v7145
      %v7254 = vpop.f32.mrf.mxu0
      %v7255 = vadd.f32 0.0, %v7254
      %v7256 = vpop.f32.mrf.mxu0
      %v7257 = vadd.f32 0.0, %v7256
      %7258 = vmatmul.bf16.gmra.mxu0 %v7146
      %v7259 = vpop.f32.mrf.mxu0
      %v7260 = vadd.f32 0.0, %v7259
      %v7261 = vpop.f32.mrf.mxu0
      %v7262 = vadd.f32 0.0, %v7261
      %7263 = vmatmul.bf16.gmra.mxu0 %v7147
      %v7264 = vpop.f32.mrf.mxu0
      %v7265 = vadd.f32 0.0, %v7264
      %v7266 = vpop.f32.mrf.mxu0
      %v7267 = vadd.f32 0.0, %v7266
      %7268 = vmatmul.bf16.gmra.mxu0 %v7148
      %v7269 = vpop.f32.mrf.mxu0
      %v7270 = vadd.f32 0.0, %v7269
      %v7271 = vpop.f32.mrf.mxu0
      %v7272 = vadd.f32 0.0, %v7271
      %7273 = vmatmul.bf16.gmra.mxu0 %v7149
      %v7274 = vpop.f32.mrf.mxu0
      %v7275 = vadd.f32 0.0, %v7274
      %v7276 = vpop.f32.mrf.mxu0
      %v7277 = vadd.f32 0.0, %v7276
      %7278 = vmatmul.bf16.gmra.mxu0 %v7150
      %v7279 = vpop.f32.mrf.mxu0
      %v7280 = vadd.f32 0.0, %v7279
      %v7281 = vpop.f32.mrf.mxu0
      %v7282 = vadd.f32 0.0, %v7281
      %7283 = vmatmul.bf16.gmra.mxu0 %v7151
      %v7284 = vpop.f32.mrf.mxu0
      %v7285 = vadd.f32 0.0, %v7284
      %v7286 = vpop.f32.mrf.mxu0
      %v7287 = vadd.f32 0.0, %v7286
      %7288 = vmatmul.bf16.gmra.mxu0 %v7152
      %v7289 = vpop.f32.mrf.mxu0
      %v7290 = vadd.f32 0.0, %v7289
      %v7291 = vpop.f32.mrf.mxu0
      %v7292 = vadd.f32 0.0, %v7291
      %7293 = vmatmul.bf16.gmra.mxu0 %v7153
      %v7294 = vpop.f32.mrf.mxu0
      %v7295 = vadd.f32 0.0, %v7294
      %v7296 = vpop.f32.mrf.mxu0
      %v7297 = vadd.f32 0.0, %v7296
      %7298 = vmatmul.bf16.gmra.mxu0 %v7154
      %v7299 = vpop.f32.mrf.mxu0
      %v7300 = vadd.f32 0.0, %v7299
      %v7301 = vpop.f32.mrf.mxu0
      %v7302 = vadd.f32 0.0, %v7301
      %7303 = vmatmul.bf16.gmra.mxu0 %v7155
      %v7304 = vpop.f32.mrf.mxu0
      %v7305 = vadd.f32 0.0, %v7304
      %v7306 = vpop.f32.mrf.mxu0
      %v7307 = vadd.f32 0.0, %v7306
      %7308 = vdwg.mxu0
      %v7309 = vadd.f32 %v6627, %v7230
      %v7310 = vadd.f32 %v6628, %v7232
      %v7311 = vadd.f32 %v6629, %v7235
      %v7312 = vadd.f32 %v6630, %v7237
      %v7313 = vadd.f32 %v6631, %v7240
      %v7314 = vadd.f32 %v6632, %v7242
      %v7315 = vadd.f32 %v6633, %v7245
      %v7316 = vadd.f32 %v6634, %v7247
      %v7317 = vadd.f32 %v6635, %v7250
      %v7318 = vadd.f32 %v6636, %v7252
      %v7319 = vadd.f32 %v6637, %v7255
      %v7320 = vadd.f32 %v6638, %v7257
      %v7321 = vadd.f32 %v6639, %v7260
      %v7322 = vadd.f32 %v6640, %v7262
      %v7323 = vadd.f32 %v6641, %v7265
      %v7324 = vadd.f32 %v6642, %v7267
      %v7325 = vadd.f32 %v6643, %v7270
      %v7326 = vadd.f32 %v6644, %v7272
      %v7327 = vadd.f32 %v6645, %v7275
      %v7328 = vadd.f32 %v6646, %v7277
      %v7329 = vadd.f32 %v6647, %v7280
      %v7330 = vadd.f32 %v6648, %v7282
      %v7331 = vadd.f32 %v6649, %v7285
      %v7332 = vadd.f32 %v6650, %v7287
      %v7333 = vadd.f32 %v6651, %v7290
      %v7334 = vadd.f32 %v6652, %v7292
      %v7335 = vadd.f32 %v6653, %v7295
      %v7336 = vadd.f32 %v6654, %v7297
      %v7337 = vadd.f32 %v6655, %v7300
      %v7338 = vadd.f32 %v6656, %v7302
      %v7339 = vadd.f32 %v6657, %v7305
      %v7340 = vadd.f32 %v6658, %v7307
      %v7341 = vld [vmem:[%s4918] sm:$0xe]
      %v7342 = vld [vmem:[%s4918 + $0xc] sm:$0xe]
      %v7343 = vld [vmem:[%s4918 + $0x18] sm:$0xe]
      %v7344 = vld [vmem:[%s4918 + $0x24] sm:$0xe]
      %v7345 = vld [vmem:[%s4918 + $0x30] sm:$0xe]
      %v7346 = vld [vmem:[%s4918 + $0x3c] sm:$0xe]
      %v7347 = vld [vmem:[%s4918 + $0x48] sm:$0xe]
      %v7348 = vld [vmem:[%s4918 + $0x54] sm:$0xe]
      %v7349 = vld [vmem:[%s4918 + $0x60] sm:$0xe]
      %v7350 = vld [vmem:[%s4918 + $0x6c] sm:$0xe]
      %v7351 = vld [vmem:[%s4918 + $0x78] sm:$0xe]
      %v7352 = vld [vmem:[%s4918 + $0x84] sm:$0xe]
      %v7353 = vld [vmem:[%s4918 + $0x90] sm:$0xe]
      %v7354 = vld [vmem:[%s4918 + $0x9c] sm:$0xe]
      %v7355 = vld [vmem:[%s4918 + $0xa8] sm:$0xe]
      %v7356 = vld [vmem:[%s4918 + $0xb4] sm:$0xe]
      %v7405 = vrot.slane %v7341, 5
      %v7406 = vrot.slane %v7405, 4
      %v7407 = vrot.slane %v6660, 5
      %v7408 = vsel %vm1232, %v7406, %v7407
      %v7409 = vrot.slane %v7407, 4
      %v7410 = vrot.slane %v6661, 5
      %v7411 = vsel %vm1232, %v7409, %v7410
      %v7412 = vrot.slane %v7342, 5
      %v7413 = vrot.slane %v7412, 4
      %v7414 = vrot.slane %v6663, 5
      %v7415 = vsel %vm1232, %v7413, %v7414
      %v7416 = vrot.slane %v7414, 4
      %v7417 = vrot.slane %v6664, 5
      %v7418 = vsel %vm1232, %v7416, %v7417
      %v7419 = vrot.slane %v7343, 5
      %v7420 = vrot.slane %v7419, 4
      %v7421 = vrot.slane %v6666, 5
      %v7422 = vsel %vm1232, %v7420, %v7421
      %v7423 = vrot.slane %v7421, 4
      %v7424 = vrot.slane %v6667, 5
      %v7425 = vsel %vm1232, %v7423, %v7424
      %v7426 = vrot.slane %v7344, 5
      %v7427 = vrot.slane %v7426, 4
      %v7428 = vrot.slane %v6669, 5
      %v7429 = vsel %vm1232, %v7427, %v7428
      %v7430 = vrot.slane %v7428, 4
      %v7431 = vrot.slane %v6670, 5
      %v7432 = vsel %vm1232, %v7430, %v7431
      %v7433 = vrot.slane %v7345, 5
      %v7434 = vrot.slane %v7433, 4
      %v7435 = vrot.slane %v6672, 5
      %v7436 = vsel %vm1232, %v7434, %v7435
      %v7437 = vrot.slane %v7435, 4
      %v7438 = vrot.slane %v6673, 5
      %v7439 = vsel %vm1232, %v7437, %v7438
      %v7440 = vrot.slane %v7346, 5
      %v7441 = vrot.slane %v7440, 4
      %v7442 = vrot.slane %v6675, 5
      %v7443 = vsel %vm1232, %v7441, %v7442
      %v7444 = vrot.slane %v7442, 4
      %v7445 = vrot.slane %v6676, 5
      %v7446 = vsel %vm1232, %v7444, %v7445
      %v7447 = vrot.slane %v7347, 5
      %v7448 = vrot.slane %v7447, 4
      %v7449 = vrot.slane %v6678, 5
      %v7450 = vsel %vm1232, %v7448, %v7449
      %v7451 = vrot.slane %v7449, 4
      %v7452 = vrot.slane %v6679, 5
      %v7453 = vsel %vm1232, %v7451, %v7452
      %v7454 = vrot.slane %v7348, 5
      %v7455 = vrot.slane %v7454, 4
      %v7456 = vrot.slane %v6681, 5
      %v7457 = vsel %vm1232, %v7455, %v7456
      %v7458 = vrot.slane %v7456, 4
      %v7459 = vrot.slane %v6682, 5
      %v7460 = vsel %vm1232, %v7458, %v7459
      %v7461 = vrot.slane %v7349, 5
      %v7462 = vrot.slane %v7461, 4
      %v7463 = vrot.slane %v6684, 5
      %v7464 = vsel %vm1232, %v7462, %v7463
      %v7465 = vrot.slane %v7463, 4
      %v7466 = vrot.slane %v6685, 5
      %v7467 = vsel %vm1232, %v7465, %v7466
      %v7468 = vrot.slane %v7350, 5
      %v7469 = vrot.slane %v7468, 4
      %v7470 = vrot.slane %v6687, 5
      %v7471 = vsel %vm1232, %v7469, %v7470
      %v7472 = vrot.slane %v7470, 4
      %v7473 = vrot.slane %v6688, 5
      %v7474 = vsel %vm1232, %v7472, %v7473
      %v7475 = vrot.slane %v7351, 5
      %v7476 = vrot.slane %v7475, 4
      %v7477 = vrot.slane %v6690, 5
      %v7478 = vsel %vm1232, %v7476, %v7477
      %v7479 = vrot.slane %v7477, 4
      %v7480 = vrot.slane %v6691, 5
      %v7481 = vsel %vm1232, %v7479, %v7480
      %v7482 = vrot.slane %v7352, 5
      %v7483 = vrot.slane %v7482, 4
      %v7484 = vrot.slane %v6693, 5
      %v7485 = vsel %vm1232, %v7483, %v7484
      %v7486 = vrot.slane %v7484, 4
      %v7487 = vrot.slane %v6694, 5
      %v7488 = vsel %vm1232, %v7486, %v7487
      %v7489 = vrot.slane %v7353, 5
      %v7490 = vrot.slane %v7489, 4
      %v7491 = vrot.slane %v6696, 5
      %v7492 = vsel %vm1232, %v7490, %v7491
      %v7493 = vrot.slane %v7491, 4
      %v7494 = vrot.slane %v6697, 5
      %v7495 = vsel %vm1232, %v7493, %v7494
      %v7496 = vrot.slane %v7354, 5
      %v7497 = vrot.slane %v7496, 4
      %v7498 = vrot.slane %v6699, 5
      %v7499 = vsel %vm1232, %v7497, %v7498
      %v7500 = vrot.slane %v7498, 4
      %v7501 = vrot.slane %v6700, 5
      %v7502 = vsel %vm1232, %v7500, %v7501
      %v7503 = vrot.slane %v7355, 5
      %v7504 = vrot.slane %v7503, 4
      %v7505 = vrot.slane %v6702, 5
      %v7506 = vsel %vm1232, %v7504, %v7505
      %v7507 = vrot.slane %v7505, 4
      %v7508 = vrot.slane %v6703, 5
      %v7509 = vsel %vm1232, %v7507, %v7508
      %v7510 = vrot.slane %v7356, 5
      %v7511 = vrot.slane %v7510, 4
      %v7512 = vrot.slane %v6705, 5
      %v7513 = vsel %vm1232, %v7511, %v7512
      %v7514 = vrot.slane %v7512, 4
      %v7515 = vrot.slane %v6706, 5
      %v7516 = vsel %vm1232, %v7514, %v7515
      %s7517 = scalar_lea.vmem %s3, 320
      %v7518 = vld [vmem:[%s7517] sm:$0xf]
      %v7519 = vld [vmem:[%s7517 + $0x4] sm:$0xf]
      %v7520 = vld [vmem:[%s7517 + $0x8] sm:$0xf]
      %v7521 = vld [vmem:[%s7517 + $0xc] sm:$0xf]
      %v7522 = vld [vmem:[%s7517 + $0x10] sm:$0xf]
      %v7523 = vld [vmem:[%s7517 + $0x14] sm:$0xf]
      %v7524 = vld [vmem:[%s7517 + $0x18] sm:$0xf]
      %v7525 = vld [vmem:[%s7517 + $0x1c] sm:$0xf]
      %v7526 = vld [vmem:[%s7517 + $0x20] sm:$0xf]
      %v7527 = vld [vmem:[%s7517 + $0x24] sm:$0xf]
      %v7528 = vld [vmem:[%s7517 + $0x28] sm:$0xf]
      %v7529 = vld [vmem:[%s7517 + $0x2c] sm:$0xf]
      %v7530 = vld [vmem:[%s7517 + $0x30] sm:$0xf]
      %v7531 = vld [vmem:[%s7517 + $0x34] sm:$0xf]
      %v7532 = vld [vmem:[%s7517 + $0x38] sm:$0xf]
      %v7533 = vld [vmem:[%s7517 + $0x3c] sm:$0xf]
      %v7534 = vunpack.c.l.b16 %v7408
      %v7535 = vunpack.c.l.b16 %v7411
      %v7536 = vunpack.c.l.b16 %v7415
      %v7537 = vunpack.c.l.b16 %v7418
      %v7538 = vunpack.c.l.b16 %v7422
      %v7539 = vunpack.c.l.b16 %v7425
      %v7540 = vunpack.c.l.b16 %v7429
      %v7541 = vunpack.c.l.b16 %v7432
      %v7542 = vunpack.c.l.b16 %v7436
      %v7543 = vunpack.c.l.b16 %v7439
      %v7544 = vunpack.c.l.b16 %v7443
      %v7545 = vunpack.c.l.b16 %v7446
      %v7546 = vunpack.c.l.b16 %v7450
      %v7547 = vunpack.c.l.b16 %v7453
      %v7548 = vunpack.c.l.b16 %v7457
      %v7549 = vunpack.c.l.b16 %v7460
      %v7550 = vunpack.c.l.b16 %v7464
      %v7551 = vunpack.c.l.b16 %v7467
      %v7552 = vunpack.c.l.b16 %v7471
      %v7553 = vunpack.c.l.b16 %v7474
      %v7554 = vunpack.c.l.b16 %v7478
      %v7555 = vunpack.c.l.b16 %v7481
      %v7556 = vunpack.c.l.b16 %v7485
      %v7557 = vunpack.c.l.b16 %v7488
      %v7558 = vunpack.c.l.b16 %v7492
      %v7559 = vunpack.c.l.b16 %v7495
      %v7560 = vunpack.c.l.b16 %v7499
      %v7561 = vunpack.c.l.b16 %v7502
      %v7562 = vunpack.c.l.b16 %v7506
      %v7563 = vunpack.c.l.b16 %v7509
      %v7564 = vunpack.c.l.b16 %v7513
      %v7565 = vunpack.c.l.b16 %v7516
      %v7566 = vpack.c.b16 %v7535, %v7534
      %v7567 = vpack.c.b16 %v7537, %v7536
      %v7568 = vpack.c.b16 %v7539, %v7538
      %v7569 = vpack.c.b16 %v7541, %v7540
      %v7570 = vpack.c.b16 %v7543, %v7542
      %v7571 = vpack.c.b16 %v7545, %v7544
      %v7572 = vpack.c.b16 %v7547, %v7546
      %v7573 = vpack.c.b16 %v7549, %v7548
      %v7574 = vpack.c.b16 %v7551, %v7550
      %v7575 = vpack.c.b16 %v7553, %v7552
      %v7576 = vpack.c.b16 %v7555, %v7554
      %v7577 = vpack.c.b16 %v7557, %v7556
      %v7578 = vpack.c.b16 %v7559, %v7558
      %v7579 = vpack.c.b16 %v7561, %v7560
      %v7580 = vpack.c.b16 %v7563, %v7562
      %v7581 = vpack.c.b16 %v7565, %v7564
      %v7614 = vunpack.c.l.b16 %v7518
      %v7615 = vunpack.c.l.b16 %v7519
      %v7616 = vunpack.c.l.b16 %v7520
      %v7617 = vunpack.c.l.b16 %v7521
      %v7618 = vunpack.c.l.b16 %v7522
      %v7619 = vunpack.c.l.b16 %v7523
      %v7620 = vunpack.c.l.b16 %v7524
      %v7621 = vunpack.c.l.b16 %v7525
      %v7622 = vunpack.c.l.b16 %v7526
      %v7623 = vunpack.c.l.b16 %v7527
      %v7624 = vunpack.c.l.b16 %v7528
      %v7625 = vunpack.c.l.b16 %v7529
      %v7626 = vunpack.c.l.b16 %v7530
      %v7627 = vunpack.c.l.b16 %v7531
      %v7628 = vunpack.c.l.b16 %v7532
      %v7629 = vunpack.c.l.b16 %v7533
      %v7630 = vpack.c.b16 %v7615, %v7614
      %v7631 = vpack.c.b16 %v7617, %v7616
      %v7632 = vpack.c.b16 %v7619, %v7618
      %v7633 = vpack.c.b16 %v7621, %v7620
      %v7634 = vpack.c.b16 %v7623, %v7622
      %v7635 = vpack.c.b16 %v7625, %v7624
      %v7636 = vpack.c.b16 %v7627, %v7626
      %v7637 = vpack.c.b16 %v7629, %v7628
      %7646 = vmatpush.bf16.msra.mxu0 %v7637
      %7647 = vmatpush.bf16.msra.mxu0 %v7636
      %7648 = vmatpush.bf16.msra.mxu0 %v7635
      %7649 = vmatpush.bf16.msra.mxu0 %v7634
      %7650 = vmatpush.bf16.msra.mxu0 %v7633
      %7651 = vmatpush.bf16.msra.mxu0 %v7632
      %7652 = vmatpush.bf16.msra.mxu0 %v7631
      %7653 = vmatpush.bf16.msra.mxu0 %v7630
      %7654 = vmatmul.bf16.gmra.mxu0 %v7566
      %v7655 = vpop.f32.mrf.mxu0
      %v7656 = vadd.f32 0.0, %v7655
      %v7657 = vpop.f32.mrf.mxu0
      %v7658 = vadd.f32 0.0, %v7657
      %7659 = vmatmul.bf16.gmra.mxu0 %v7567
      %v7660 = vpop.f32.mrf.mxu0
      %v7661 = vadd.f32 0.0, %v7660
      %v7662 = vpop.f32.mrf.mxu0
      %v7663 = vadd.f32 0.0, %v7662
      %7664 = vmatmul.bf16.gmra.mxu0 %v7568
      %v7665 = vpop.f32.mrf.mxu0
      %v7666 = vadd.f32 0.0, %v7665
      %v7667 = vpop.f32.mrf.mxu0
      %v7668 = vadd.f32 0.0, %v7667
      %7669 = vmatmul.bf16.gmra.mxu0 %v7569
      %v7670 = vpop.f32.mrf.mxu0
      %v7671 = vadd.f32 0.0, %v7670
      %v7672 = vpop.f32.mrf.mxu0
      %v7673 = vadd.f32 0.0, %v7672
      %7674 = vmatmul.bf16.gmra.mxu0 %v7570
      %v7675 = vpop.f32.mrf.mxu0
      %v7676 = vadd.f32 0.0, %v7675
      %v7677 = vpop.f32.mrf.mxu0
      %v7678 = vadd.f32 0.0, %v7677
      %7679 = vmatmul.bf16.gmra.mxu0 %v7571
      %v7680 = vpop.f32.mrf.mxu0
      %v7681 = vadd.f32 0.0, %v7680
      %v7682 = vpop.f32.mrf.mxu0
      %v7683 = vadd.f32 0.0, %v7682
      %7684 = vmatmul.bf16.gmra.mxu0 %v7572
      %v7685 = vpop.f32.mrf.mxu0
      %v7686 = vadd.f32 0.0, %v7685
      %v7687 = vpop.f32.mrf.mxu0
      %v7688 = vadd.f32 0.0, %v7687
      %7689 = vmatmul.bf16.gmra.mxu0 %v7573
      %v7690 = vpop.f32.mrf.mxu0
      %v7691 = vadd.f32 0.0, %v7690
      %v7692 = vpop.f32.mrf.mxu0
      %v7693 = vadd.f32 0.0, %v7692
      %7694 = vmatmul.bf16.gmra.mxu0 %v7574
      %v7695 = vpop.f32.mrf.mxu0
      %v7696 = vadd.f32 0.0, %v7695
      %v7697 = vpop.f32.mrf.mxu0
      %v7698 = vadd.f32 0.0, %v7697
      %7699 = vmatmul.bf16.gmra.mxu0 %v7575
      %v7700 = vpop.f32.mrf.mxu0
      %v7701 = vadd.f32 0.0, %v7700
      %v7702 = vpop.f32.mrf.mxu0
      %v7703 = vadd.f32 0.0, %v7702
      %7704 = vmatmul.bf16.gmra.mxu0 %v7576
      %v7705 = vpop.f32.mrf.mxu0
      %v7706 = vadd.f32 0.0, %v7705
      %v7707 = vpop.f32.mrf.mxu0
      %v7708 = vadd.f32 0.0, %v7707
      %7709 = vmatmul.bf16.gmra.mxu0 %v7577
      %v7710 = vpop.f32.mrf.mxu0
      %v7711 = vadd.f32 0.0, %v7710
      %v7712 = vpop.f32.mrf.mxu0
      %v7713 = vadd.f32 0.0, %v7712
      %7714 = vmatmul.bf16.gmra.mxu0 %v7578
      %v7715 = vpop.f32.mrf.mxu0
      %v7716 = vadd.f32 0.0, %v7715
      %v7717 = vpop.f32.mrf.mxu0
      %v7718 = vadd.f32 0.0, %v7717
      %7719 = vmatmul.bf16.gmra.mxu0 %v7579
      %v7720 = vpop.f32.mrf.mxu0
      %v7721 = vadd.f32 0.0, %v7720
      %v7722 = vpop.f32.mrf.mxu0
      %v7723 = vadd.f32 0.0, %v7722
      %7724 = vmatmul.bf16.gmra.mxu0 %v7580
      %v7725 = vpop.f32.mrf.mxu0
      %v7726 = vadd.f32 0.0, %v7725
      %v7727 = vpop.f32.mrf.mxu0
      %v7728 = vadd.f32 0.0, %v7727
      %7729 = vmatmul.bf16.gmra.mxu0 %v7581
      %v7730 = vpop.f32.mrf.mxu0
      %v7731 = vadd.f32 0.0, %v7730
      %v7732 = vpop.f32.mrf.mxu0
      %v7733 = vadd.f32 0.0, %v7732
      %7734 = vdwg.mxu0
      %v7735 = vadd.f32 %v7309, %v7656
      %v7736 = vadd.f32 %v7310, %v7658
      %v7737 = vadd.f32 %v7311, %v7661
      %v7738 = vadd.f32 %v7312, %v7663
      %v7739 = vadd.f32 %v7313, %v7666
      %v7740 = vadd.f32 %v7314, %v7668
      %v7741 = vadd.f32 %v7315, %v7671
      %v7742 = vadd.f32 %v7316, %v7673
      %v7743 = vadd.f32 %v7317, %v7676
      %v7744 = vadd.f32 %v7318, %v7678
      %v7745 = vadd.f32 %v7319, %v7681
      %v7746 = vadd.f32 %v7320, %v7683
      %v7747 = vadd.f32 %v7321, %v7686
      %v7748 = vadd.f32 %v7322, %v7688
      %v7749 = vadd.f32 %v7323, %v7691
      %v7750 = vadd.f32 %v7324, %v7693
      %v7751 = vadd.f32 %v7325, %v7696
      %v7752 = vadd.f32 %v7326, %v7698
      %v7753 = vadd.f32 %v7327, %v7701
      %v7754 = vadd.f32 %v7328, %v7703
      %v7755 = vadd.f32 %v7329, %v7706
      %v7756 = vadd.f32 %v7330, %v7708
      %v7757 = vadd.f32 %v7331, %v7711
      %v7758 = vadd.f32 %v7332, %v7713
      %v7759 = vadd.f32 %v7333, %v7716
      %v7760 = vadd.f32 %v7334, %v7718
      %v7761 = vadd.f32 %v7335, %v7721
      %v7762 = vadd.f32 %v7336, %v7723
      %v7763 = vadd.f32 %v7337, %v7726
      %v7764 = vadd.f32 %v7338, %v7728
      %v7765 = vadd.f32 %v7339, %v7731
      %v7766 = vadd.f32 %v7340, %v7733
      %s7767 = scalar_lea.vmem [#allocation2], 24
      %v7768 = vld [vmem:[%s7767] sm:$0xf]
      %v7769 = vld [vmem:[%s7767 + $0x4] sm:$0xf]
      %v7770 = vld [vmem:[%s7767 + $0xc] sm:$0xf]
      %v7771 = vld [vmem:[%s7767 + $0x10] sm:$0xf]
      %v7772 = vld [vmem:[%s7767 + $0x18] sm:$0xf]
      %v7773 = vld [vmem:[%s7767 + $0x1c] sm:$0xf]
      %v7774 = vld [vmem:[%s7767 + $0x24] sm:$0xf]
      %v7775 = vld [vmem:[%s7767 + $0x28] sm:$0xf]
      %v7776 = vld [vmem:[%s7767 + $0x30] sm:$0xf]
      %v7777 = vld [vmem:[%s7767 + $0x34] sm:$0xf]
      %v7778 = vld [vmem:[%s7767 + $0x3c] sm:$0xf]
      %v7779 = vld [vmem:[%s7767 + $0x40] sm:$0xf]
      %v7780 = vld [vmem:[%s7767 + $0x48] sm:$0xf]
      %v7781 = vld [vmem:[%s7767 + $0x4c] sm:$0xf]
      %v7782 = vld [vmem:[%s7767 + $0x54] sm:$0xf]
      %v7783 = vld [vmem:[%s7767 + $0x58] sm:$0xf]
      %v7784 = vld [vmem:[%s7767 + $0x60] sm:$0xf]
      %v7785 = vld [vmem:[%s7767 + $0x64] sm:$0xf]
      %v7786 = vld [vmem:[%s7767 + $0x6c] sm:$0xf]
      %v7787 = vld [vmem:[%s7767 + $0x70] sm:$0xf]
      %v7788 = vld [vmem:[%s7767 + $0x78] sm:$0xf]
      %v7789 = vld [vmem:[%s7767 + $0x7c] sm:$0xf]
      %v7790 = vld [vmem:[%s7767 + $0x84] sm:$0xf]
      %v7791 = vld [vmem:[%s7767 + $0x88] sm:$0xf]
      %v7792 = vld [vmem:[%s7767 + $0x90] sm:$0xf]
      %v7793 = vld [vmem:[%s7767 + $0x94] sm:$0xf]
      %v7794 = vld [vmem:[%s7767 + $0x9c] sm:$0xf]
      %v7795 = vld [vmem:[%s7767 + $0xa0] sm:$0xf]
      %v7796 = vld [vmem:[%s7767 + $0xa8] sm:$0xf]
      %v7797 = vld [vmem:[%s7767 + $0xac] sm:$0xf]
      %v7798 = vld [vmem:[%s7767 + $0xb4] sm:$0xf]
      %v7799 = vld [vmem:[%s7767 + $0xb8] sm:$0xf]
      %s7800 = scalar_lea.vmem %s3, 384
      %v7801 = vld [vmem:[%s7800] sm:$0xf]
      %v7802 = vld [vmem:[%s7800 + $0x4] sm:$0xf]
      %v7803 = vld [vmem:[%s7800 + $0x8] sm:$0xf]
      %v7804 = vld [vmem:[%s7800 + $0xc] sm:$0xf]
      %v7805 = vld [vmem:[%s7800 + $0x10] sm:$0xf]
      %v7806 = vld [vmem:[%s7800 + $0x14] sm:$0xf]
      %v7807 = vld [vmem:[%s7800 + $0x18] sm:$0xf]
      %v7808 = vld [vmem:[%s7800 + $0x1c] sm:$0xf]
      %v7809 = vld [vmem:[%s7800 + $0x20] sm:$0xf]
      %v7810 = vld [vmem:[%s7800 + $0x24] sm:$0xf]
      %v7811 = vld [vmem:[%s7800 + $0x28] sm:$0xf]
      %v7812 = vld [vmem:[%s7800 + $0x2c] sm:$0xf]
      %v7813 = vld [vmem:[%s7800 + $0x30] sm:$0xf]
      %v7814 = vld [vmem:[%s7800 + $0x34] sm:$0xf]
      %v7815 = vld [vmem:[%s7800 + $0x38] sm:$0xf]
      %v7816 = vld [vmem:[%s7800 + $0x3c] sm:$0xf]
      %v7849 = vunpack.c.l.b16 %v7768
      %v7850 = vunpack.c.l.b16 %v7769
      %v7851 = vunpack.c.l.b16 %v7770
      %v7852 = vunpack.c.l.b16 %v7771
      %v7853 = vunpack.c.l.b16 %v7772
      %v7854 = vunpack.c.l.b16 %v7773
      %v7855 = vunpack.c.l.b16 %v7774
      %v7856 = vunpack.c.l.b16 %v7775
      %v7857 = vunpack.c.l.b16 %v7776
      %v7858 = vunpack.c.l.b16 %v7777
      %v7859 = vunpack.c.l.b16 %v7778
      %v7860 = vunpack.c.l.b16 %v7779
      %v7861 = vunpack.c.l.b16 %v7780
      %v7862 = vunpack.c.l.b16 %v7781
      %v7863 = vunpack.c.l.b16 %v7782
      %v7864 = vunpack.c.l.b16 %v7783
      %v7865 = vunpack.c.l.b16 %v7784
      %v7866 = vunpack.c.l.b16 %v7785
      %v7867 = vunpack.c.l.b16 %v7786
      %v7868 = vunpack.c.l.b16 %v7787
      %v7869 = vunpack.c.l.b16 %v7788
      %v7870 = vunpack.c.l.b16 %v7789
      %v7871 = vunpack.c.l.b16 %v7790
      %v7872 = vunpack.c.l.b16 %v7791
      %v7873 = vunpack.c.l.b16 %v7792
      %v7874 = vunpack.c.l.b16 %v7793
      %v7875 = vunpack.c.l.b16 %v7794
      %v7876 = vunpack.c.l.b16 %v7795
      %v7877 = vunpack.c.l.b16 %v7796
      %v7878 = vunpack.c.l.b16 %v7797
      %v7879 = vunpack.c.l.b16 %v7798
      %v7880 = vunpack.c.l.b16 %v7799
      %v7881 = vpack.c.b16 %v7850, %v7849
      %v7882 = vpack.c.b16 %v7852, %v7851
      %v7883 = vpack.c.b16 %v7854, %v7853
      %v7884 = vpack.c.b16 %v7856, %v7855
      %v7885 = vpack.c.b16 %v7858, %v7857
      %v7886 = vpack.c.b16 %v7860, %v7859
      %v7887 = vpack.c.b16 %v7862, %v7861
      %v7888 = vpack.c.b16 %v7864, %v7863
      %v7889 = vpack.c.b16 %v7866, %v7865
      %v7890 = vpack.c.b16 %v7868, %v7867
      %v7891 = vpack.c.b16 %v7870, %v7869
      %v7892 = vpack.c.b16 %v7872, %v7871
      %v7893 = vpack.c.b16 %v7874, %v7873
      %v7894 = vpack.c.b16 %v7876, %v7875
      %v7895 = vpack.c.b16 %v7878, %v7877
      %v7896 = vpack.c.b16 %v7880, %v7879
      %v7929 = vunpack.c.l.b16 %v7801
      %v7930 = vunpack.c.l.b16 %v7802
      %v7931 = vunpack.c.l.b16 %v7803
      %v7932 = vunpack.c.l.b16 %v7804
      %v7933 = vunpack.c.l.b16 %v7805
      %v7934 = vunpack.c.l.b16 %v7806
      %v7935 = vunpack.c.l.b16 %v7807
      %v7936 = vunpack.c.l.b16 %v7808
      %v7937 = vunpack.c.l.b16 %v7809
      %v7938 = vunpack.c.l.b16 %v7810
      %v7939 = vunpack.c.l.b16 %v7811
      %v7940 = vunpack.c.l.b16 %v7812
      %v7941 = vunpack.c.l.b16 %v7813
      %v7942 = vunpack.c.l.b16 %v7814
      %v7943 = vunpack.c.l.b16 %v7815
      %v7944 = vunpack.c.l.b16 %v7816
      %v7945 = vpack.c.b16 %v7930, %v7929
      %v7946 = vpack.c.b16 %v7932, %v7931
      %v7947 = vpack.c.b16 %v7934, %v7933
      %v7948 = vpack.c.b16 %v7936, %v7935
      %v7949 = vpack.c.b16 %v7938, %v7937
      %v7950 = vpack.c.b16 %v7940, %v7939
      %v7951 = vpack.c.b16 %v7942, %v7941
      %v7952 = vpack.c.b16 %v7944, %v7943
      %7961 = vmatpush.bf16.msra.mxu0 %v7952
      %7962 = vmatpush.bf16.msra.mxu0 %v7951
      %7963 = vmatpush.bf16.msra.mxu0 %v7950
      %7964 = vmatpush.bf16.msra.mxu0 %v7949
      %7965 = vmatpush.bf16.msra.mxu0 %v7948
      %7966 = vmatpush.bf16.msra.mxu0 %v7947
      %7967 = vmatpush.bf16.msra.mxu0 %v7946
      %7968 = vmatpush.bf16.msra.mxu0 %v7945
      %7969 = vmatmul.bf16.gmra.mxu0 %v7881
      %v7970 = vpop.f32.mrf.mxu0
      %v7971 = vadd.f32 0.0, %v7970
      %v7972 = vpop.f32.mrf.mxu0
      %v7973 = vadd.f32 0.0, %v7972
      %7974 = vmatmul.bf16.gmra.mxu0 %v7882
      %v7975 = vpop.f32.mrf.mxu0
      %v7976 = vadd.f32 0.0, %v7975
      %v7977 = vpop.f32.mrf.mxu0
      %v7978 = vadd.f32 0.0, %v7977
      %7979 = vmatmul.bf16.gmra.mxu0 %v7883
      %v7980 = vpop.f32.mrf.mxu0
      %v7981 = vadd.f32 0.0, %v7980
      %v7982 = vpop.f32.mrf.mxu0
      %v7983 = vadd.f32 0.0, %v7982
      %7984 = vmatmul.bf16.gmra.mxu0 %v7884
      %v7985 = vpop.f32.mrf.mxu0
      %v7986 = vadd.f32 0.0, %v7985
      %v7987 = vpop.f32.mrf.mxu0
      %v7988 = vadd.f32 0.0, %v7987
      %7989 = vmatmul.bf16.gmra.mxu0 %v7885
      %v7990 = vpop.f32.mrf.mxu0
      %v7991 = vadd.f32 0.0, %v7990
      %v7992 = vpop.f32.mrf.mxu0
      %v7993 = vadd.f32 0.0, %v7992
      %7994 = vmatmul.bf16.gmra.mxu0 %v7886
      %v7995 = vpop.f32.mrf.mxu0
      %v7996 = vadd.f32 0.0, %v7995
      %v7997 = vpop.f32.mrf.mxu0
      %v7998 = vadd.f32 0.0, %v7997
      %7999 = vmatmul.bf16.gmra.mxu0 %v7887
      %v8000 = vpop.f32.mrf.mxu0
      %v8001 = vadd.f32 0.0, %v8000
      %v8002 = vpop.f32.mrf.mxu0
      %v8003 = vadd.f32 0.0, %v8002
      %8004 = vmatmul.bf16.gmra.mxu0 %v7888
      %v8005 = vpop.f32.mrf.mxu0
      %v8006 = vadd.f32 0.0, %v8005
      %v8007 = vpop.f32.mrf.mxu0
      %v8008 = vadd.f32 0.0, %v8007
      %8009 = vmatmul.bf16.gmra.mxu0 %v7889
      %v8010 = vpop.f32.mrf.mxu0
      %v8011 = vadd.f32 0.0, %v8010
      %v8012 = vpop.f32.mrf.mxu0
      %v8013 = vadd.f32 0.0, %v8012
      %8014 = vmatmul.bf16.gmra.mxu0 %v7890
      %v8015 = vpop.f32.mrf.mxu0
      %v8016 = vadd.f32 0.0, %v8015
      %v8017 = vpop.f32.mrf.mxu0
      %v8018 = vadd.f32 0.0, %v8017
      %8019 = vmatmul.bf16.gmra.mxu0 %v7891
      %v8020 = vpop.f32.mrf.mxu0
      %v8021 = vadd.f32 0.0, %v8020
      %v8022 = vpop.f32.mrf.mxu0
      %v8023 = vadd.f32 0.0, %v8022
      %8024 = vmatmul.bf16.gmra.mxu0 %v7892
      %v8025 = vpop.f32.mrf.mxu0
      %v8026 = vadd.f32 0.0, %v8025
      %v8027 = vpop.f32.mrf.mxu0
      %v8028 = vadd.f32 0.0, %v8027
      %8029 = vmatmul.bf16.gmra.mxu0 %v7893
      %v8030 = vpop.f32.mrf.mxu0
      %v8031 = vadd.f32 0.0, %v8030
      %v8032 = vpop.f32.mrf.mxu0
      %v8033 = vadd.f32 0.0, %v8032
      %8034 = vmatmul.bf16.gmra.mxu0 %v7894
      %v8035 = vpop.f32.mrf.mxu0
      %v8036 = vadd.f32 0.0, %v8035
      %v8037 = vpop.f32.mrf.mxu0
      %v8038 = vadd.f32 0.0, %v8037
      %8039 = vmatmul.bf16.gmra.mxu0 %v7895
      %v8040 = vpop.f32.mrf.mxu0
      %v8041 = vadd.f32 0.0, %v8040
      %v8042 = vpop.f32.mrf.mxu0
      %v8043 = vadd.f32 0.0, %v8042
      %8044 = vmatmul.bf16.gmra.mxu0 %v7896
      %v8045 = vpop.f32.mrf.mxu0
      %v8046 = vadd.f32 0.0, %v8045
      %v8047 = vpop.f32.mrf.mxu0
      %v8048 = vadd.f32 0.0, %v8047
      %8049 = vdwg.mxu0
      %v8050 = vadd.f32 %v7735, %v7971
      %v8051 = vadd.f32 %v7736, %v7973
      %v8052 = vadd.f32 %v7737, %v7976
      %v8053 = vadd.f32 %v7738, %v7978
      %v8054 = vadd.f32 %v7739, %v7981
      %v8055 = vadd.f32 %v7740, %v7983
      %v8056 = vadd.f32 %v7741, %v7986
      %v8057 = vadd.f32 %v7742, %v7988
      %v8058 = vadd.f32 %v7743, %v7991
      %v8059 = vadd.f32 %v7744, %v7993
      %v8060 = vadd.f32 %v7745, %v7996
      %v8061 = vadd.f32 %v7746, %v7998
      %v8062 = vadd.f32 %v7747, %v8001
      %v8063 = vadd.f32 %v7748, %v8003
      %v8064 = vadd.f32 %v7749, %v8006
      %v8065 = vadd.f32 %v7750, %v8008
      %v8066 = vadd.f32 %v7751, %v8011
      %v8067 = vadd.f32 %v7752, %v8013
      %v8068 = vadd.f32 %v7753, %v8016
      %v8069 = vadd.f32 %v7754, %v8018
      %v8070 = vadd.f32 %v7755, %v8021
      %v8071 = vadd.f32 %v7756, %v8023
      %v8072 = vadd.f32 %v7757, %v8026
      %v8073 = vadd.f32 %v7758, %v8028
      %v8074 = vadd.f32 %v7759, %v8031
      %v8075 = vadd.f32 %v7760, %v8033
      %v8076 = vadd.f32 %v7761, %v8036
      %v8077 = vadd.f32 %v7762, %v8038
      %v8078 = vadd.f32 %v7763, %v8041
      %v8079 = vadd.f32 %v7764, %v8043
      %v8080 = vadd.f32 %v7765, %v8046
      %v8081 = vadd.f32 %v7766, %v8048
      %v8082 = vld [vmem:[%s7767] sm:$0xf]
      %v8083 = vld [vmem:[%s7767 + $0x4] sm:$0xf]
      %v8084 = vld [vmem:[%s7767 + $0x8] sm:$0x1]
      %v8085 = vld [vmem:[%s7767 + $0xc] sm:$0xf]
      %v8086 = vld [vmem:[%s7767 + $0x10] sm:$0xf]
      %v8087 = vld [vmem:[%s7767 + $0x14] sm:$0x1]
      %v8088 = vld [vmem:[%s7767 + $0x18] sm:$0xf]
      %v8089 = vld [vmem:[%s7767 + $0x1c] sm:$0xf]
      %v8090 = vld [vmem:[%s7767 + $0x20] sm:$0x1]
      %v8091 = vld [vmem:[%s7767 + $0x24] sm:$0xf]
      %v8092 = vld [vmem:[%s7767 + $0x28] sm:$0xf]
      %v8093 = vld [vmem:[%s7767 + $0x2c] sm:$0x1]
      %v8094 = vld [vmem:[%s7767 + $0x30] sm:$0xf]
      %v8095 = vld [vmem:[%s7767 + $0x34] sm:$0xf]
      %v8096 = vld [vmem:[%s7767 + $0x38] sm:$0x1]
      %v8097 = vld [vmem:[%s7767 + $0x3c] sm:$0xf]
      %v8098 = vld [vmem:[%s7767 + $0x40] sm:$0xf]
      %v8099 = vld [vmem:[%s7767 + $0x44] sm:$0x1]
      %v8100 = vld [vmem:[%s7767 + $0x48] sm:$0xf]
      %v8101 = vld [vmem:[%s7767 + $0x4c] sm:$0xf]
      %v8102 = vld [vmem:[%s7767 + $0x50] sm:$0x1]
      %v8103 = vld [vmem:[%s7767 + $0x54] sm:$0xf]
      %v8104 = vld [vmem:[%s7767 + $0x58] sm:$0xf]
      %v8105 = vld [vmem:[%s7767 + $0x5c] sm:$0x1]
      %v8106 = vld [vmem:[%s7767 + $0x60] sm:$0xf]
      %v8107 = vld [vmem:[%s7767 + $0x64] sm:$0xf]
      %v8108 = vld [vmem:[%s7767 + $0x68] sm:$0x1]
      %v8109 = vld [vmem:[%s7767 + $0x6c] sm:$0xf]
      %v8110 = vld [vmem:[%s7767 + $0x70] sm:$0xf]
      %v8111 = vld [vmem:[%s7767 + $0x74] sm:$0x1]
      %v8112 = vld [vmem:[%s7767 + $0x78] sm:$0xf]
      %v8113 = vld [vmem:[%s7767 + $0x7c] sm:$0xf]
      %v8114 = vld [vmem:[%s7767 + $0x80] sm:$0x1]
      %v8115 = vld [vmem:[%s7767 + $0x84] sm:$0xf]
      %v8116 = vld [vmem:[%s7767 + $0x88] sm:$0xf]
      %v8117 = vld [vmem:[%s7767 + $0x8c] sm:$0x1]
      %v8118 = vld [vmem:[%s7767 + $0x90] sm:$0xf]
      %v8119 = vld [vmem:[%s7767 + $0x94] sm:$0xf]
      %v8120 = vld [vmem:[%s7767 + $0x98] sm:$0x1]
      %v8121 = vld [vmem:[%s7767 + $0x9c] sm:$0xf]
      %v8122 = vld [vmem:[%s7767 + $0xa0] sm:$0xf]
      %v8123 = vld [vmem:[%s7767 + $0xa4] sm:$0x1]
      %v8124 = vld [vmem:[%s7767 + $0xa8] sm:$0xf]
      %v8125 = vld [vmem:[%s7767 + $0xac] sm:$0xf]
      %v8126 = vld [vmem:[%s7767 + $0xb0] sm:$0x1]
      %v8127 = vld [vmem:[%s7767 + $0xb4] sm:$0xf]
      %v8128 = vld [vmem:[%s7767 + $0xb8] sm:$0xf]
      %v8129 = vld [vmem:[%s7767 + $0xbc] sm:$0x1]
      %v8131 = vshrl.u32 %v8082, 16
      %v8133 = vrot.slane %v8131, 4
      %v8134 = vshll.u32 %v8082, 16
      %v8136 = vrot.slane %v8134, 5
      %v8137 = vor.u32 %v8133, %v8136
      %v8138 = vrot.slane %v8137, 4
      %v8140 = vshll.u32 %v8083, 16
      %v8142 = vrot.slane %v8140, 5
      %v8143 = vsel %vm346, %v8138, %v8142
      %v8144 = vshrl.u32 %v8083, 16
      %v8146 = vrot.slane %v8144, 4
      %v8147 = vor.u32 %v8146, %v8142
      %v8148 = vrot.slane %v8147, 4
      %v8150 = vshll.u32 %v8084, 16
      %v8152 = vrot.slane %v8150, 5
      %v8153 = vsel %vm346, %v8148, %v8152
      %v8155 = vshrl.u32 %v8085, 16
      %v8157 = vrot.slane %v8155, 4
      %v8158 = vshll.u32 %v8085, 16
      %v8160 = vrot.slane %v8158, 5
      %v8161 = vor.u32 %v8157, %v8160
      %v8162 = vrot.slane %v8161, 4
      %v8164 = vshll.u32 %v8086, 16
      %v8166 = vrot.slane %v8164, 5
      %v8167 = vsel %vm346, %v8162, %v8166
      %v8168 = vshrl.u32 %v8086, 16
      %v8170 = vrot.slane %v8168, 4
      %v8171 = vor.u32 %v8170, %v8166
      %v8172 = vrot.slane %v8171, 4
      %v8174 = vshll.u32 %v8087, 16
      %v8176 = vrot.slane %v8174, 5
      %v8177 = vsel %vm346, %v8172, %v8176
      %v8179 = vshrl.u32 %v8088, 16
      %v8181 = vrot.slane %v8179, 4
      %v8182 = vshll.u32 %v8088, 16
      %v8184 = vrot.slane %v8182, 5
      %v8185 = vor.u32 %v8181, %v8184
      %v8186 = vrot.slane %v8185, 4
      %v8188 = vshll.u32 %v8089, 16
      %v8190 = vrot.slane %v8188, 5
      %v8191 = vsel %vm346, %v8186, %v8190
      %v8192 = vshrl.u32 %v8089, 16
      %v8194 = vrot.slane %v8192, 4
      %v8195 = vor.u32 %v8194, %v8190
      %v8196 = vrot.slane %v8195, 4
      %v8198 = vshll.u32 %v8090, 16
      %v8200 = vrot.slane %v8198, 5
      %v8201 = vsel %vm346, %v8196, %v8200
      %v8203 = vshrl.u32 %v8091, 16
      %v8205 = vrot.slane %v8203, 4
      %v8206 = vshll.u32 %v8091, 16
      %v8208 = vrot.slane %v8206, 5
      %v8209 = vor.u32 %v8205, %v8208
      %v8210 = vrot.slane %v8209, 4
      %v8212 = vshll.u32 %v8092, 16
      %v8214 = vrot.slane %v8212, 5
      %v8215 = vsel %vm346, %v8210, %v8214
      %v8216 = vshrl.u32 %v8092, 16
      %v8218 = vrot.slane %v8216, 4
      %v8219 = vor.u32 %v8218, %v8214
      %v8220 = vrot.slane %v8219, 4
      %v8222 = vshll.u32 %v8093, 16
      %v8224 = vrot.slane %v8222, 5
      %v8225 = vsel %vm346, %v8220, %v8224
      %v8227 = vshrl.u32 %v8094, 16
      %v8229 = vrot.slane %v8227, 4
      %v8230 = vshll.u32 %v8094, 16
      %v8232 = vrot.slane %v8230, 5
      %v8233 = vor.u32 %v8229, %v8232
      %v8234 = vrot.slane %v8233, 4
      %v8236 = vshll.u32 %v8095, 16
      %v8238 = vrot.slane %v8236, 5
      %v8239 = vsel %vm346, %v8234, %v8238
      %v8240 = vshrl.u32 %v8095, 16
      %v8242 = vrot.slane %v8240, 4
      %v8243 = vor.u32 %v8242, %v8238
      %v8244 = vrot.slane %v8243, 4
      %v8246 = vshll.u32 %v8096, 16
      %v8248 = vrot.slane %v8246, 5
      %v8249 = vsel %vm346, %v8244, %v8248
      %v8251 = vshrl.u32 %v8097, 16
      %v8253 = vrot.slane %v8251, 4
      %v8254 = vshll.u32 %v8097, 16
      %v8256 = vrot.slane %v8254, 5
      %v8257 = vor.u32 %v8253, %v8256
      %v8258 = vrot.slane %v8257, 4
      %v8260 = vshll.u32 %v8098, 16
      %v8262 = vrot.slane %v8260, 5
      %v8263 = vsel %vm346, %v8258, %v8262
      %v8264 = vshrl.u32 %v8098, 16
      %v8266 = vrot.slane %v8264, 4
      %v8267 = vor.u32 %v8266, %v8262
      %v8268 = vrot.slane %v8267, 4
      %v8270 = vshll.u32 %v8099, 16
      %v8272 = vrot.slane %v8270, 5
      %v8273 = vsel %vm346, %v8268, %v8272
      %v8275 = vshrl.u32 %v8100, 16
      %v8277 = vrot.slane %v8275, 4
      %v8278 = vshll.u32 %v8100, 16
      %v8280 = vrot.slane %v8278, 5
      %v8281 = vor.u32 %v8277, %v8280
      %v8282 = vrot.slane %v8281, 4
      %v8284 = vshll.u32 %v8101, 16
      %v8286 = vrot.slane %v8284, 5
      %v8287 = vsel %vm346, %v8282, %v8286
      %v8288 = vshrl.u32 %v8101, 16
      %v8290 = vrot.slane %v8288, 4
      %v8291 = vor.u32 %v8290, %v8286
      %v8292 = vrot.slane %v8291, 4
      %v8294 = vshll.u32 %v8102, 16
      %v8296 = vrot.slane %v8294, 5
      %v8297 = vsel %vm346, %v8292, %v8296
      %v8299 = vshrl.u32 %v8103, 16
      %v8301 = vrot.slane %v8299, 4
      %v8302 = vshll.u32 %v8103, 16
      %v8304 = vrot.slane %v8302, 5
      %v8305 = vor.u32 %v8301, %v8304
      %v8306 = vrot.slane %v8305, 4
      %v8308 = vshll.u32 %v8104, 16
      %v8310 = vrot.slane %v8308, 5
      %v8311 = vsel %vm346, %v8306, %v8310
      %v8312 = vshrl.u32 %v8104, 16
      %v8314 = vrot.slane %v8312, 4
      %v8315 = vor.u32 %v8314, %v8310
      %v8316 = vrot.slane %v8315, 4
      %v8318 = vshll.u32 %v8105, 16
      %v8320 = vrot.slane %v8318, 5
      %v8321 = vsel %vm346, %v8316, %v8320
      %v8323 = vshrl.u32 %v8106, 16
      %v8325 = vrot.slane %v8323, 4
      %v8326 = vshll.u32 %v8106, 16
      %v8328 = vrot.slane %v8326, 5
      %v8329 = vor.u32 %v8325, %v8328
      %v8330 = vrot.slane %v8329, 4
      %v8332 = vshll.u32 %v8107, 16
      %v8334 = vrot.slane %v8332, 5
      %v8335 = vsel %vm346, %v8330, %v8334
      %v8336 = vshrl.u32 %v8107, 16
      %v8338 = vrot.slane %v8336, 4
      %v8339 = vor.u32 %v8338, %v8334
      %v8340 = vrot.slane %v8339, 4
      %v8342 = vshll.u32 %v8108, 16
      %v8344 = vrot.slane %v8342, 5
      %v8345 = vsel %vm346, %v8340, %v8344
      %v8347 = vshrl.u32 %v8109, 16
      %v8349 = vrot.slane %v8347, 4
      %v8350 = vshll.u32 %v8109, 16
      %v8352 = vrot.slane %v8350, 5
      %v8353 = vor.u32 %v8349, %v8352
      %v8354 = vrot.slane %v8353, 4
      %v8356 = vshll.u32 %v8110, 16
      %v8358 = vrot.slane %v8356, 5
      %v8359 = vsel %vm346, %v8354, %v8358
      %v8360 = vshrl.u32 %v8110, 16
      %v8362 = vrot.slane %v8360, 4
      %v8363 = vor.u32 %v8362, %v8358
      %v8364 = vrot.slane %v8363, 4
      %v8366 = vshll.u32 %v8111, 16
      %v8368 = vrot.slane %v8366, 5
      %v8369 = vsel %vm346, %v8364, %v8368
      %v8371 = vshrl.u32 %v8112, 16
      %v8373 = vrot.slane %v8371, 4
      %v8374 = vshll.u32 %v8112, 16
      %v8376 = vrot.slane %v8374, 5
      %v8377 = vor.u32 %v8373, %v8376
      %v8378 = vrot.slane %v8377, 4
      %v8380 = vshll.u32 %v8113, 16
      %v8382 = vrot.slane %v8380, 5
      %v8383 = vsel %vm346, %v8378, %v8382
      %v8384 = vshrl.u32 %v8113, 16
      %v8386 = vrot.slane %v8384, 4
      %v8387 = vor.u32 %v8386, %v8382
      %v8388 = vrot.slane %v8387, 4
      %v8390 = vshll.u32 %v8114, 16
      %v8392 = vrot.slane %v8390, 5
      %v8393 = vsel %vm346, %v8388, %v8392
      %v8395 = vshrl.u32 %v8115, 16
      %v8397 = vrot.slane %v8395, 4
      %v8398 = vshll.u32 %v8115, 16
      %v8400 = vrot.slane %v8398, 5
      %v8401 = vor.u32 %v8397, %v8400
      %v8402 = vrot.slane %v8401, 4
      %v8404 = vshll.u32 %v8116, 16
      %v8406 = vrot.slane %v8404, 5
      %v8407 = vsel %vm346, %v8402, %v8406
      %v8408 = vshrl.u32 %v8116, 16
      %v8410 = vrot.slane %v8408, 4
      %v8411 = vor.u32 %v8410, %v8406
      %v8412 = vrot.slane %v8411, 4
      %v8414 = vshll.u32 %v8117, 16
      %v8416 = vrot.slane %v8414, 5
      %v8417 = vsel %vm346, %v8412, %v8416
      %v8419 = vshrl.u32 %v8118, 16
      %v8421 = vrot.slane %v8419, 4
      %v8422 = vshll.u32 %v8118, 16
      %v8424 = vrot.slane %v8422, 5
      %v8425 = vor.u32 %v8421, %v8424
      %v8426 = vrot.slane %v8425, 4
      %v8428 = vshll.u32 %v8119, 16
      %v8430 = vrot.slane %v8428, 5
      %v8431 = vsel %vm346, %v8426, %v8430
      %v8432 = vshrl.u32 %v8119, 16
      %v8434 = vrot.slane %v8432, 4
      %v8435 = vor.u32 %v8434, %v8430
      %v8436 = vrot.slane %v8435, 4
      %v8438 = vshll.u32 %v8120, 16
      %v8440 = vrot.slane %v8438, 5
      %v8441 = vsel %vm346, %v8436, %v8440
      %v8443 = vshrl.u32 %v8121, 16
      %v8445 = vrot.slane %v8443, 4
      %v8446 = vshll.u32 %v8121, 16
      %v8448 = vrot.slane %v8446, 5
      %v8449 = vor.u32 %v8445, %v8448
      %v8450 = vrot.slane %v8449, 4
      %v8452 = vshll.u32 %v8122, 16
      %v8454 = vrot.slane %v8452, 5
      %v8455 = vsel %vm346, %v8450, %v8454
      %v8456 = vshrl.u32 %v8122, 16
      %v8458 = vrot.slane %v8456, 4
      %v8459 = vor.u32 %v8458, %v8454
      %v8460 = vrot.slane %v8459, 4
      %v8462 = vshll.u32 %v8123, 16
      %v8464 = vrot.slane %v8462, 5
      %v8465 = vsel %vm346, %v8460, %v8464
      %v8467 = vshrl.u32 %v8124, 16
      %v8469 = vrot.slane %v8467, 4
      %v8470 = vshll.u32 %v8124, 16
      %v8472 = vrot.slane %v8470, 5
      %v8473 = vor.u32 %v8469, %v8472
      %v8474 = vrot.slane %v8473, 4
      %v8476 = vshll.u32 %v8125, 16
      %v8478 = vrot.slane %v8476, 5
      %v8479 = vsel %vm346, %v8474, %v8478
      %v8480 = vshrl.u32 %v8125, 16
      %v8482 = vrot.slane %v8480, 4
      %v8483 = vor.u32 %v8482, %v8478
      %v8484 = vrot.slane %v8483, 4
      %v8486 = vshll.u32 %v8126, 16
      %v8488 = vrot.slane %v8486, 5
      %v8489 = vsel %vm346, %v8484, %v8488
      %v8491 = vshrl.u32 %v8127, 16
      %v8493 = vrot.slane %v8491, 4
      %v8494 = vshll.u32 %v8127, 16
      %v8496 = vrot.slane %v8494, 5
      %v8497 = vor.u32 %v8493, %v8496
      %v8498 = vrot.slane %v8497, 4
      %v8500 = vshll.u32 %v8128, 16
      %v8502 = vrot.slane %v8500, 5
      %v8503 = vsel %vm346, %v8498, %v8502
      %v8504 = vshrl.u32 %v8128, 16
      %v8506 = vrot.slane %v8504, 4
      %v8507 = vor.u32 %v8506, %v8502
      %v8508 = vrot.slane %v8507, 4
      %v8510 = vshll.u32 %v8129, 16
      %v8512 = vrot.slane %v8510, 5
      %v8513 = vsel %vm346, %v8508, %v8512
      %s8514 = scalar_lea.vmem %s3, 448
      %v8515 = vld [vmem:[%s8514] sm:$0xf]
      %v8516 = vld [vmem:[%s8514 + $0x4] sm:$0xf]
      %v8517 = vld [vmem:[%s8514 + $0x8] sm:$0xf]
      %v8518 = vld [vmem:[%s8514 + $0xc] sm:$0xf]
      %v8519 = vld [vmem:[%s8514 + $0x10] sm:$0xf]
      %v8520 = vld [vmem:[%s8514 + $0x14] sm:$0xf]
      %v8521 = vld [vmem:[%s8514 + $0x18] sm:$0xf]
      %v8522 = vld [vmem:[%s8514 + $0x1c] sm:$0xf]
      %v8523 = vld [vmem:[%s8514 + $0x20] sm:$0xf]
      %v8524 = vld [vmem:[%s8514 + $0x24] sm:$0xf]
      %v8525 = vld [vmem:[%s8514 + $0x28] sm:$0xf]
      %v8526 = vld [vmem:[%s8514 + $0x2c] sm:$0xf]
      %v8527 = vld [vmem:[%s8514 + $0x30] sm:$0xf]
      %v8528 = vld [vmem:[%s8514 + $0x34] sm:$0xf]
      %v8529 = vld [vmem:[%s8514 + $0x38] sm:$0xf]
      %v8530 = vld [vmem:[%s8514 + $0x3c] sm:$0xf]
      %v8531 = vunpack.c.l.b16 %v8143
      %v8532 = vunpack.c.l.b16 %v8153
      %v8533 = vunpack.c.l.b16 %v8167
      %v8534 = vunpack.c.l.b16 %v8177
      %v8535 = vunpack.c.l.b16 %v8191
      %v8536 = vunpack.c.l.b16 %v8201
      %v8537 = vunpack.c.l.b16 %v8215
      %v8538 = vunpack.c.l.b16 %v8225
      %v8539 = vunpack.c.l.b16 %v8239
      %v8540 = vunpack.c.l.b16 %v8249
      %v8541 = vunpack.c.l.b16 %v8263
      %v8542 = vunpack.c.l.b16 %v8273
      %v8543 = vunpack.c.l.b16 %v8287
      %v8544 = vunpack.c.l.b16 %v8297
      %v8545 = vunpack.c.l.b16 %v8311
      %v8546 = vunpack.c.l.b16 %v8321
      %v8547 = vunpack.c.l.b16 %v8335
      %v8548 = vunpack.c.l.b16 %v8345
      %v8549 = vunpack.c.l.b16 %v8359
      %v8550 = vunpack.c.l.b16 %v8369
      %v8551 = vunpack.c.l.b16 %v8383
      %v8552 = vunpack.c.l.b16 %v8393
      %v8553 = vunpack.c.l.b16 %v8407
      %v8554 = vunpack.c.l.b16 %v8417
      %v8555 = vunpack.c.l.b16 %v8431
      %v8556 = vunpack.c.l.b16 %v8441
      %v8557 = vunpack.c.l.b16 %v8455
      %v8558 = vunpack.c.l.b16 %v8465
      %v8559 = vunpack.c.l.b16 %v8479
      %v8560 = vunpack.c.l.b16 %v8489
      %v8561 = vunpack.c.l.b16 %v8503
      %v8562 = vunpack.c.l.b16 %v8513
      %v8563 = vpack.c.b16 %v8532, %v8531
      %v8564 = vpack.c.b16 %v8534, %v8533
      %v8565 = vpack.c.b16 %v8536, %v8535
      %v8566 = vpack.c.b16 %v8538, %v8537
      %v8567 = vpack.c.b16 %v8540, %v8539
      %v8568 = vpack.c.b16 %v8542, %v8541
      %v8569 = vpack.c.b16 %v8544, %v8543
      %v8570 = vpack.c.b16 %v8546, %v8545
      %v8571 = vpack.c.b16 %v8548, %v8547
      %v8572 = vpack.c.b16 %v8550, %v8549
      %v8573 = vpack.c.b16 %v8552, %v8551
      %v8574 = vpack.c.b16 %v8554, %v8553
      %v8575 = vpack.c.b16 %v8556, %v8555
      %v8576 = vpack.c.b16 %v8558, %v8557
      %v8577 = vpack.c.b16 %v8560, %v8559
      %v8578 = vpack.c.b16 %v8562, %v8561
      %v8611 = vunpack.c.l.b16 %v8515
      %v8612 = vunpack.c.l.b16 %v8516
      %v8613 = vunpack.c.l.b16 %v8517
      %v8614 = vunpack.c.l.b16 %v8518
      %v8615 = vunpack.c.l.b16 %v8519
      %v8616 = vunpack.c.l.b16 %v8520
      %v8617 = vunpack.c.l.b16 %v8521
      %v8618 = vunpack.c.l.b16 %v8522
      %v8619 = vunpack.c.l.b16 %v8523
      %v8620 = vunpack.c.l.b16 %v8524
      %v8621 = vunpack.c.l.b16 %v8525
      %v8622 = vunpack.c.l.b16 %v8526
      %v8623 = vunpack.c.l.b16 %v8527
      %v8624 = vunpack.c.l.b16 %v8528
      %v8625 = vunpack.c.l.b16 %v8529
      %v8626 = vunpack.c.l.b16 %v8530
      %v8627 = vpack.c.b16 %v8612, %v8611
      %v8628 = vpack.c.b16 %v8614, %v8613
      %v8629 = vpack.c.b16 %v8616, %v8615
      %v8630 = vpack.c.b16 %v8618, %v8617
      %v8631 = vpack.c.b16 %v8620, %v8619
      %v8632 = vpack.c.b16 %v8622, %v8621
      %v8633 = vpack.c.b16 %v8624, %v8623
      %v8634 = vpack.c.b16 %v8626, %v8625
      %8643 = vmatpush.bf16.msra.mxu0 %v8634
      %8644 = vmatpush.bf16.msra.mxu0 %v8633
      %8645 = vmatpush.bf16.msra.mxu0 %v8632
      %8646 = vmatpush.bf16.msra.mxu0 %v8631
      %8647 = vmatpush.bf16.msra.mxu0 %v8630
      %8648 = vmatpush.bf16.msra.mxu0 %v8629
      %8649 = vmatpush.bf16.msra.mxu0 %v8628
      %8650 = vmatpush.bf16.msra.mxu0 %v8627
      %8651 = vmatmul.bf16.gmra.mxu0 %v8563
      %v8652 = vpop.f32.mrf.mxu0
      %v8653 = vadd.f32 0.0, %v8652
      %v8654 = vpop.f32.mrf.mxu0
      %v8655 = vadd.f32 0.0, %v8654
      %8656 = vmatmul.bf16.gmra.mxu0 %v8564
      %v8657 = vpop.f32.mrf.mxu0
      %v8658 = vadd.f32 0.0, %v8657
      %v8659 = vpop.f32.mrf.mxu0
      %v8660 = vadd.f32 0.0, %v8659
      %8661 = vmatmul.bf16.gmra.mxu0 %v8565
      %v8662 = vpop.f32.mrf.mxu0
      %v8663 = vadd.f32 0.0, %v8662
      %v8664 = vpop.f32.mrf.mxu0
      %v8665 = vadd.f32 0.0, %v8664
      %8666 = vmatmul.bf16.gmra.mxu0 %v8566
      %v8667 = vpop.f32.mrf.mxu0
      %v8668 = vadd.f32 0.0, %v8667
      %v8669 = vpop.f32.mrf.mxu0
      %v8670 = vadd.f32 0.0, %v8669
      %8671 = vmatmul.bf16.gmra.mxu0 %v8567
      %v8672 = vpop.f32.mrf.mxu0
      %v8673 = vadd.f32 0.0, %v8672
      %v8674 = vpop.f32.mrf.mxu0
      %v8675 = vadd.f32 0.0, %v8674
      %8676 = vmatmul.bf16.gmra.mxu0 %v8568
      %v8677 = vpop.f32.mrf.mxu0
      %v8678 = vadd.f32 0.0, %v8677
      %v8679 = vpop.f32.mrf.mxu0
      %v8680 = vadd.f32 0.0, %v8679
      %8681 = vmatmul.bf16.gmra.mxu0 %v8569
      %v8682 = vpop.f32.mrf.mxu0
      %v8683 = vadd.f32 0.0, %v8682
      %v8684 = vpop.f32.mrf.mxu0
      %v8685 = vadd.f32 0.0, %v8684
      %8686 = vmatmul.bf16.gmra.mxu0 %v8570
      %v8687 = vpop.f32.mrf.mxu0
      %v8688 = vadd.f32 0.0, %v8687
      %v8689 = vpop.f32.mrf.mxu0
      %v8690 = vadd.f32 0.0, %v8689
      %8691 = vmatmul.bf16.gmra.mxu0 %v8571
      %v8692 = vpop.f32.mrf.mxu0
      %v8693 = vadd.f32 0.0, %v8692
      %v8694 = vpop.f32.mrf.mxu0
      %v8695 = vadd.f32 0.0, %v8694
      %8696 = vmatmul.bf16.gmra.mxu0 %v8572
      %v8697 = vpop.f32.mrf.mxu0
      %v8698 = vadd.f32 0.0, %v8697
      %v8699 = vpop.f32.mrf.mxu0
      %v8700 = vadd.f32 0.0, %v8699
      %8701 = vmatmul.bf16.gmra.mxu0 %v8573
      %v8702 = vpop.f32.mrf.mxu0
      %v8703 = vadd.f32 0.0, %v8702
      %v8704 = vpop.f32.mrf.mxu0
      %v8705 = vadd.f32 0.0, %v8704
      %8706 = vmatmul.bf16.gmra.mxu0 %v8574
      %v8707 = vpop.f32.mrf.mxu0
      %v8708 = vadd.f32 0.0, %v8707
      %v8709 = vpop.f32.mrf.mxu0
      %v8710 = vadd.f32 0.0, %v8709
      %8711 = vmatmul.bf16.gmra.mxu0 %v8575
      %v8712 = vpop.f32.mrf.mxu0
      %v8713 = vadd.f32 0.0, %v8712
      %v8714 = vpop.f32.mrf.mxu0
      %v8715 = vadd.f32 0.0, %v8714
      %8716 = vmatmul.bf16.gmra.mxu0 %v8576
      %v8717 = vpop.f32.mrf.mxu0
      %v8718 = vadd.f32 0.0, %v8717
      %v8719 = vpop.f32.mrf.mxu0
      %v8720 = vadd.f32 0.0, %v8719
      %8721 = vmatmul.bf16.gmra.mxu0 %v8577
      %v8722 = vpop.f32.mrf.mxu0
      %v8723 = vadd.f32 0.0, %v8722
      %v8724 = vpop.f32.mrf.mxu0
      %v8725 = vadd.f32 0.0, %v8724
      %8726 = vmatmul.bf16.gmra.mxu0 %v8578
      %v8727 = vpop.f32.mrf.mxu0
      %v8728 = vadd.f32 0.0, %v8727
      %v8729 = vpop.f32.mrf.mxu0
      %v8730 = vadd.f32 0.0, %v8729
      %8731 = vdwg.mxu0
      %v8732 = vadd.f32 %v8050, %v8653
      %v8733 = vadd.f32 %v8051, %v8655
      %v8734 = vadd.f32 %v8052, %v8658
      %v8735 = vadd.f32 %v8053, %v8660
      %v8736 = vadd.f32 %v8054, %v8663
      %v8737 = vadd.f32 %v8055, %v8665
      %v8738 = vadd.f32 %v8056, %v8668
      %v8739 = vadd.f32 %v8057, %v8670
      %v8740 = vadd.f32 %v8058, %v8673
      %v8741 = vadd.f32 %v8059, %v8675
      %v8742 = vadd.f32 %v8060, %v8678
      %v8743 = vadd.f32 %v8061, %v8680
      %v8744 = vadd.f32 %v8062, %v8683
      %v8745 = vadd.f32 %v8063, %v8685
      %v8746 = vadd.f32 %v8064, %v8688
      %v8747 = vadd.f32 %v8065, %v8690
      %v8748 = vadd.f32 %v8066, %v8693
      %v8749 = vadd.f32 %v8067, %v8695
      %v8750 = vadd.f32 %v8068, %v8698
      %v8751 = vadd.f32 %v8069, %v8700
      %v8752 = vadd.f32 %v8070, %v8703
      %v8753 = vadd.f32 %v8071, %v8705
      %v8754 = vadd.f32 %v8072, %v8708
      %v8755 = vadd.f32 %v8073, %v8710
      %v8756 = vadd.f32 %v8074, %v8713
      %v8757 = vadd.f32 %v8075, %v8715
      %v8758 = vadd.f32 %v8076, %v8718
      %v8759 = vadd.f32 %v8077, %v8720
      %v8760 = vadd.f32 %v8078, %v8723
      %v8761 = vadd.f32 %v8079, %v8725
      %v8762 = vadd.f32 %v8080, %v8728
      %v8763 = vadd.f32 %v8081, %v8730
      %v8764 = vld [vmem:[%s7767] sm:$0xe]
      %v8765 = vld [vmem:[%s7767 + $0xc] sm:$0xe]
      %v8766 = vld [vmem:[%s7767 + $0x18] sm:$0xe]
      %v8767 = vld [vmem:[%s7767 + $0x24] sm:$0xe]
      %v8768 = vld [vmem:[%s7767 + $0x30] sm:$0xe]
      %v8769 = vld [vmem:[%s7767 + $0x3c] sm:$0xe]
      %v8770 = vld [vmem:[%s7767 + $0x48] sm:$0xe]
      %v8771 = vld [vmem:[%s7767 + $0x54] sm:$0xe]
      %v8772 = vld [vmem:[%s7767 + $0x60] sm:$0xe]
      %v8773 = vld [vmem:[%s7767 + $0x6c] sm:$0xe]
      %v8774 = vld [vmem:[%s7767 + $0x78] sm:$0xe]
      %v8775 = vld [vmem:[%s7767 + $0x84] sm:$0xe]
      %v8776 = vld [vmem:[%s7767 + $0x90] sm:$0xe]
      %v8777 = vld [vmem:[%s7767 + $0x9c] sm:$0xe]
      %v8778 = vld [vmem:[%s7767 + $0xa8] sm:$0xe]
      %v8779 = vld [vmem:[%s7767 + $0xb4] sm:$0xe]
      %v8828 = vrot.slane %v8764, 5
      %v8829 = vrot.slane %v8828, 4
      %v8830 = vrot.slane %v8083, 5
      %v8831 = vsel %vm1232, %v8829, %v8830
      %v8832 = vrot.slane %v8830, 4
      %v8833 = vrot.slane %v8084, 5
      %v8834 = vsel %vm1232, %v8832, %v8833
      %v8835 = vrot.slane %v8765, 5
      %v8836 = vrot.slane %v8835, 4
      %v8837 = vrot.slane %v8086, 5
      %v8838 = vsel %vm1232, %v8836, %v8837
      %v8839 = vrot.slane %v8837, 4
      %v8840 = vrot.slane %v8087, 5
      %v8841 = vsel %vm1232, %v8839, %v8840
      %v8842 = vrot.slane %v8766, 5
      %v8843 = vrot.slane %v8842, 4
      %v8844 = vrot.slane %v8089, 5
      %v8845 = vsel %vm1232, %v8843, %v8844
      %v8846 = vrot.slane %v8844, 4
      %v8847 = vrot.slane %v8090, 5
      %v8848 = vsel %vm1232, %v8846, %v8847
      %v8849 = vrot.slane %v8767, 5
      %v8850 = vrot.slane %v8849, 4
      %v8851 = vrot.slane %v8092, 5
      %v8852 = vsel %vm1232, %v8850, %v8851
      %v8853 = vrot.slane %v8851, 4
      %v8854 = vrot.slane %v8093, 5
      %v8855 = vsel %vm1232, %v8853, %v8854
      %v8856 = vrot.slane %v8768, 5
      %v8857 = vrot.slane %v8856, 4
      %v8858 = vrot.slane %v8095, 5
      %v8859 = vsel %vm1232, %v8857, %v8858
      %v8860 = vrot.slane %v8858, 4
      %v8861 = vrot.slane %v8096, 5
      %v8862 = vsel %vm1232, %v8860, %v8861
      %v8863 = vrot.slane %v8769, 5
      %v8864 = vrot.slane %v8863, 4
      %v8865 = vrot.slane %v8098, 5
      %v8866 = vsel %vm1232, %v8864, %v8865
      %v8867 = vrot.slane %v8865, 4
      %v8868 = vrot.slane %v8099, 5
      %v8869 = vsel %vm1232, %v8867, %v8868
      %v8870 = vrot.slane %v8770, 5
      %v8871 = vrot.slane %v8870, 4
      %v8872 = vrot.slane %v8101, 5
      %v8873 = vsel %vm1232, %v8871, %v8872
      %v8874 = vrot.slane %v8872, 4
      %v8875 = vrot.slane %v8102, 5
      %v8876 = vsel %vm1232, %v8874, %v8875
      %v8877 = vrot.slane %v8771, 5
      %v8878 = vrot.slane %v8877, 4
      %v8879 = vrot.slane %v8104, 5
      %v8880 = vsel %vm1232, %v8878, %v8879
      %v8881 = vrot.slane %v8879, 4
      %v8882 = vrot.slane %v8105, 5
      %v8883 = vsel %vm1232, %v8881, %v8882
      %v8884 = vrot.slane %v8772, 5
      %v8885 = vrot.slane %v8884, 4
      %v8886 = vrot.slane %v8107, 5
      %v8887 = vsel %vm1232, %v8885, %v8886
      %v8888 = vrot.slane %v8886, 4
      %v8889 = vrot.slane %v8108, 5
      %v8890 = vsel %vm1232, %v8888, %v8889
      %v8891 = vrot.slane %v8773, 5
      %v8892 = vrot.slane %v8891, 4
      %v8893 = vrot.slane %v8110, 5
      %v8894 = vsel %vm1232, %v8892, %v8893
      %v8895 = vrot.slane %v8893, 4
      %v8896 = vrot.slane %v8111, 5
      %v8897 = vsel %vm1232, %v8895, %v8896
      %v8898 = vrot.slane %v8774, 5
      %v8899 = vrot.slane %v8898, 4
      %v8900 = vrot.slane %v8113, 5
      %v8901 = vsel %vm1232, %v8899, %v8900
      %v8902 = vrot.slane %v8900, 4
      %v8903 = vrot.slane %v8114, 5
      %v8904 = vsel %vm1232, %v8902, %v8903
      %v8905 = vrot.slane %v8775, 5
      %v8906 = vrot.slane %v8905, 4
      %v8907 = vrot.slane %v8116, 5
      %v8908 = vsel %vm1232, %v8906, %v8907
      %v8909 = vrot.slane %v8907, 4
      %v8910 = vrot.slane %v8117, 5
      %v8911 = vsel %vm1232, %v8909, %v8910
      %v8912 = vrot.slane %v8776, 5
      %v8913 = vrot.slane %v8912, 4
      %v8914 = vrot.slane %v8119, 5
      %v8915 = vsel %vm1232, %v8913, %v8914
      %v8916 = vrot.slane %v8914, 4
      %v8917 = vrot.slane %v8120, 5
      %v8918 = vsel %vm1232, %v8916, %v8917
      %v8919 = vrot.slane %v8777, 5
      %v8920 = vrot.slane %v8919, 4
      %v8921 = vrot.slane %v8122, 5
      %v8922 = vsel %vm1232, %v8920, %v8921
      %v8923 = vrot.slane %v8921, 4
      %v8924 = vrot.slane %v8123, 5
      %v8925 = vsel %vm1232, %v8923, %v8924
      %v8926 = vrot.slane %v8778, 5
      %v8927 = vrot.slane %v8926, 4
      %v8928 = vrot.slane %v8125, 5
      %v8929 = vsel %vm1232, %v8927, %v8928
      %v8930 = vrot.slane %v8928, 4
      %v8931 = vrot.slane %v8126, 5
      %v8932 = vsel %vm1232, %v8930, %v8931
      %v8933 = vrot.slane %v8779, 5
      %v8934 = vrot.slane %v8933, 4
      %v8935 = vrot.slane %v8128, 5
      %v8936 = vsel %vm1232, %v8934, %v8935
      %v8937 = vrot.slane %v8935, 4
      %v8938 = vrot.slane %v8129, 5
      %v8939 = vsel %vm1232, %v8937, %v8938
      %s8940 = scalar_lea.vmem %s3, 512
      %v8941 = vld [vmem:[%s8940] sm:$0xf]
      %v8942 = vld [vmem:[%s8940 + $0x4] sm:$0xf]
      %v8943 = vld [vmem:[%s8940 + $0x8] sm:$0xf]
      %v8944 = vld [vmem:[%s8940 + $0xc] sm:$0xf]
      %v8945 = vld [vmem:[%s8940 + $0x10] sm:$0xf]
      %v8946 = vld [vmem:[%s8940 + $0x14] sm:$0xf]
      %v8947 = vld [vmem:[%s8940 + $0x18] sm:$0xf]
      %v8948 = vld [vmem:[%s8940 + $0x1c] sm:$0xf]
      %v8949 = vld [vmem:[%s8940 + $0x20] sm:$0xf]
      %v8950 = vld [vmem:[%s8940 + $0x24] sm:$0xf]
      %v8951 = vld [vmem:[%s8940 + $0x28] sm:$0xf]
      %v8952 = vld [vmem:[%s8940 + $0x2c] sm:$0xf]
      %v8953 = vld [vmem:[%s8940 + $0x30] sm:$0xf]
      %v8954 = vld [vmem:[%s8940 + $0x34] sm:$0xf]
      %v8955 = vld [vmem:[%s8940 + $0x38] sm:$0xf]
      %v8956 = vld [vmem:[%s8940 + $0x3c] sm:$0xf]
      %v8957 = vunpack.c.l.b16 %v8831
      %v8958 = vunpack.c.l.b16 %v8834
      %v8959 = vunpack.c.l.b16 %v8838
      %v8960 = vunpack.c.l.b16 %v8841
      %v8961 = vunpack.c.l.b16 %v8845
      %v8962 = vunpack.c.l.b16 %v8848
      %v8963 = vunpack.c.l.b16 %v8852
      %v8964 = vunpack.c.l.b16 %v8855
      %v8965 = vunpack.c.l.b16 %v8859
      %v8966 = vunpack.c.l.b16 %v8862
      %v8967 = vunpack.c.l.b16 %v8866
      %v8968 = vunpack.c.l.b16 %v8869
      %v8969 = vunpack.c.l.b16 %v8873
      %v8970 = vunpack.c.l.b16 %v8876
      %v8971 = vunpack.c.l.b16 %v8880
      %v8972 = vunpack.c.l.b16 %v8883
      %v8973 = vunpack.c.l.b16 %v8887
      %v8974 = vunpack.c.l.b16 %v8890
      %v8975 = vunpack.c.l.b16 %v8894
      %v8976 = vunpack.c.l.b16 %v8897
      %v8977 = vunpack.c.l.b16 %v8901
      %v8978 = vunpack.c.l.b16 %v8904
      %v8979 = vunpack.c.l.b16 %v8908
      %v8980 = vunpack.c.l.b16 %v8911
      %v8981 = vunpack.c.l.b16 %v8915
      %v8982 = vunpack.c.l.b16 %v8918
      %v8983 = vunpack.c.l.b16 %v8922
      %v8984 = vunpack.c.l.b16 %v8925
      %v8985 = vunpack.c.l.b16 %v8929
      %v8986 = vunpack.c.l.b16 %v8932
      %v8987 = vunpack.c.l.b16 %v8936
      %v8988 = vunpack.c.l.b16 %v8939
      %v8989 = vpack.c.b16 %v8958, %v8957
      %v8990 = vpack.c.b16 %v8960, %v8959
      %v8991 = vpack.c.b16 %v8962, %v8961
      %v8992 = vpack.c.b16 %v8964, %v8963
      %v8993 = vpack.c.b16 %v8966, %v8965
      %v8994 = vpack.c.b16 %v8968, %v8967
      %v8995 = vpack.c.b16 %v8970, %v8969
      %v8996 = vpack.c.b16 %v8972, %v8971
      %v8997 = vpack.c.b16 %v8974, %v8973
      %v8998 = vpack.c.b16 %v8976, %v8975
      %v8999 = vpack.c.b16 %v8978, %v8977
      %v9000 = vpack.c.b16 %v8980, %v8979
      %v9001 = vpack.c.b16 %v8982, %v8981
      %v9002 = vpack.c.b16 %v8984, %v8983
      %v9003 = vpack.c.b16 %v8986, %v8985
      %v9004 = vpack.c.b16 %v8988, %v8987
      %v9037 = vunpack.c.l.b16 %v8941
      %v9038 = vunpack.c.l.b16 %v8942
      %v9039 = vunpack.c.l.b16 %v8943
      %v9040 = vunpack.c.l.b16 %v8944
      %v9041 = vunpack.c.l.b16 %v8945
      %v9042 = vunpack.c.l.b16 %v8946
      %v9043 = vunpack.c.l.b16 %v8947
      %v9044 = vunpack.c.l.b16 %v8948
      %v9045 = vunpack.c.l.b16 %v8949
      %v9046 = vunpack.c.l.b16 %v8950
      %v9047 = vunpack.c.l.b16 %v8951
      %v9048 = vunpack.c.l.b16 %v8952
      %v9049 = vunpack.c.l.b16 %v8953
      %v9050 = vunpack.c.l.b16 %v8954
      %v9051 = vunpack.c.l.b16 %v8955
      %v9052 = vunpack.c.l.b16 %v8956
      %v9053 = vpack.c.b16 %v9038, %v9037
      %v9054 = vpack.c.b16 %v9040, %v9039
      %v9055 = vpack.c.b16 %v9042, %v9041
      %v9056 = vpack.c.b16 %v9044, %v9043
      %v9057 = vpack.c.b16 %v9046, %v9045
      %v9058 = vpack.c.b16 %v9048, %v9047
      %v9059 = vpack.c.b16 %v9050, %v9049
      %v9060 = vpack.c.b16 %v9052, %v9051
      %9069 = vmatpush.bf16.msra.mxu0 %v9060
      %9070 = vmatpush.bf16.msra.mxu0 %v9059
      %9071 = vmatpush.bf16.msra.mxu0 %v9058
      %9072 = vmatpush.bf16.msra.mxu0 %v9057
      %9073 = vmatpush.bf16.msra.mxu0 %v9056
      %9074 = vmatpush.bf16.msra.mxu0 %v9055
      %9075 = vmatpush.bf16.msra.mxu0 %v9054
      %9076 = vmatpush.bf16.msra.mxu0 %v9053
      %9077 = vmatmul.bf16.gmra.mxu0 %v8989
      %v9078 = vpop.f32.mrf.mxu0
      %v9079 = vadd.f32 0.0, %v9078
      %v9080 = vpop.f32.mrf.mxu0
      %v9081 = vadd.f32 0.0, %v9080
      %9082 = vmatmul.bf16.gmra.mxu0 %v8990
      %v9083 = vpop.f32.mrf.mxu0
      %v9084 = vadd.f32 0.0, %v9083
      %v9085 = vpop.f32.mrf.mxu0
      %v9086 = vadd.f32 0.0, %v9085
      %9087 = vmatmul.bf16.gmra.mxu0 %v8991
      %v9088 = vpop.f32.mrf.mxu0
      %v9089 = vadd.f32 0.0, %v9088
      %v9090 = vpop.f32.mrf.mxu0
      %v9091 = vadd.f32 0.0, %v9090
      %9092 = vmatmul.bf16.gmra.mxu0 %v8992
      %v9093 = vpop.f32.mrf.mxu0
      %v9094 = vadd.f32 0.0, %v9093
      %v9095 = vpop.f32.mrf.mxu0
      %v9096 = vadd.f32 0.0, %v9095
      %9097 = vmatmul.bf16.gmra.mxu0 %v8993
      %v9098 = vpop.f32.mrf.mxu0
      %v9099 = vadd.f32 0.0, %v9098
      %v9100 = vpop.f32.mrf.mxu0
      %v9101 = vadd.f32 0.0, %v9100
      %9102 = vmatmul.bf16.gmra.mxu0 %v8994
      %v9103 = vpop.f32.mrf.mxu0
      %v9104 = vadd.f32 0.0, %v9103
      %v9105 = vpop.f32.mrf.mxu0
      %v9106 = vadd.f32 0.0, %v9105
      %9107 = vmatmul.bf16.gmra.mxu0 %v8995
      %v9108 = vpop.f32.mrf.mxu0
      %v9109 = vadd.f32 0.0, %v9108
      %v9110 = vpop.f32.mrf.mxu0
      %v9111 = vadd.f32 0.0, %v9110
      %9112 = vmatmul.bf16.gmra.mxu0 %v8996
      %v9113 = vpop.f32.mrf.mxu0
      %v9114 = vadd.f32 0.0, %v9113
      %v9115 = vpop.f32.mrf.mxu0
      %v9116 = vadd.f32 0.0, %v9115
      %9117 = vmatmul.bf16.gmra.mxu0 %v8997
      %v9118 = vpop.f32.mrf.mxu0
      %v9119 = vadd.f32 0.0, %v9118
      %v9120 = vpop.f32.mrf.mxu0
      %v9121 = vadd.f32 0.0, %v9120
      %9122 = vmatmul.bf16.gmra.mxu0 %v8998
      %v9123 = vpop.f32.mrf.mxu0
      %v9124 = vadd.f32 0.0, %v9123
      %v9125 = vpop.f32.mrf.mxu0
      %v9126 = vadd.f32 0.0, %v9125
      %9127 = vmatmul.bf16.gmra.mxu0 %v8999
      %v9128 = vpop.f32.mrf.mxu0
      %v9129 = vadd.f32 0.0, %v9128
      %v9130 = vpop.f32.mrf.mxu0
      %v9131 = vadd.f32 0.0, %v9130
      %9132 = vmatmul.bf16.gmra.mxu0 %v9000
      %v9133 = vpop.f32.mrf.mxu0
      %v9134 = vadd.f32 0.0, %v9133
      %v9135 = vpop.f32.mrf.mxu0
      %v9136 = vadd.f32 0.0, %v9135
      %9137 = vmatmul.bf16.gmra.mxu0 %v9001
      %v9138 = vpop.f32.mrf.mxu0
      %v9139 = vadd.f32 0.0, %v9138
      %v9140 = vpop.f32.mrf.mxu0
      %v9141 = vadd.f32 0.0, %v9140
      %9142 = vmatmul.bf16.gmra.mxu0 %v9002
      %v9143 = vpop.f32.mrf.mxu0
      %v9144 = vadd.f32 0.0, %v9143
      %v9145 = vpop.f32.mrf.mxu0
      %v9146 = vadd.f32 0.0, %v9145
      %9147 = vmatmul.bf16.gmra.mxu0 %v9003
      %v9148 = vpop.f32.mrf.mxu0
      %v9149 = vadd.f32 0.0, %v9148
      %v9150 = vpop.f32.mrf.mxu0
      %v9151 = vadd.f32 0.0, %v9150
      %9152 = vmatmul.bf16.gmra.mxu0 %v9004
      %v9153 = vpop.f32.mrf.mxu0
      %v9154 = vadd.f32 0.0, %v9153
      %v9155 = vpop.f32.mrf.mxu0
      %v9156 = vadd.f32 0.0, %v9155
      %9157 = vdwg.mxu0
      %v9158 = vadd.f32 %v8732, %v9079
      %v9159 = vadd.f32 %v8733, %v9081
      %v9160 = vadd.f32 %v8734, %v9084
      %v9161 = vadd.f32 %v8735, %v9086
      %v9162 = vadd.f32 %v8736, %v9089
      %v9163 = vadd.f32 %v8737, %v9091
      %v9164 = vadd.f32 %v8738, %v9094
      %v9165 = vadd.f32 %v8739, %v9096
      %v9166 = vadd.f32 %v8740, %v9099
      %v9167 = vadd.f32 %v8741, %v9101
      %v9168 = vadd.f32 %v8742, %v9104
      %v9169 = vadd.f32 %v8743, %v9106
      %v9170 = vadd.f32 %v8744, %v9109
      %v9171 = vadd.f32 %v8745, %v9111
      %v9172 = vadd.f32 %v8746, %v9114
      %v9173 = vadd.f32 %v8747, %v9116
      %v9174 = vadd.f32 %v8748, %v9119
      %v9175 = vadd.f32 %v8749, %v9121
      %v9176 = vadd.f32 %v8750, %v9124
      %v9177 = vadd.f32 %v8751, %v9126
      %v9178 = vadd.f32 %v8752, %v9129
      %v9179 = vadd.f32 %v8753, %v9131
      %v9180 = vadd.f32 %v8754, %v9134
      %v9181 = vadd.f32 %v8755, %v9136
      %v9182 = vadd.f32 %v8756, %v9139
      %v9183 = vadd.f32 %v8757, %v9141
      %v9184 = vadd.f32 %v8758, %v9144
      %v9185 = vadd.f32 %v8759, %v9146
      %v9186 = vadd.f32 %v8760, %v9149
      %v9187 = vadd.f32 %v8761, %v9151
      %v9188 = vadd.f32 %v8762, %v9154
      %v9189 = vadd.f32 %v8763, %v9156
      %v9190 = vld [vmem:[%s4] sm:$0x1]
      %v9192 = vperm.slane %v9190, 0
      %v9194 = vadd.f32 %v9158, %v9192
      %v9195 = vadd.f32 %v9159, %v9192
      %v9196 = vadd.f32 %v9160, %v9192
      %v9197 = vadd.f32 %v9161, %v9192
      %v9198 = vadd.f32 %v9162, %v9192
      %v9199 = vadd.f32 %v9163, %v9192
      %v9200 = vadd.f32 %v9164, %v9192
      %v9201 = vadd.f32 %v9165, %v9192
      %v9202 = vadd.f32 %v9166, %v9192
      %v9203 = vadd.f32 %v9167, %v9192
      %v9204 = vadd.f32 %v9168, %v9192
      %v9205 = vadd.f32 %v9169, %v9192
      %v9206 = vadd.f32 %v9170, %v9192
      %v9207 = vadd.f32 %v9171, %v9192
      %v9208 = vadd.f32 %v9172, %v9192
      %v9209 = vadd.f32 %v9173, %v9192
      %v9210 = vadd.f32 %v9174, %v9192
      %v9211 = vadd.f32 %v9175, %v9192
      %v9212 = vadd.f32 %v9176, %v9192
      %v9213 = vadd.f32 %v9177, %v9192
      %v9214 = vadd.f32 %v9178, %v9192
      %v9215 = vadd.f32 %v9179, %v9192
      %v9216 = vadd.f32 %v9180, %v9192
      %v9217 = vadd.f32 %v9181, %v9192
      %v9218 = vadd.f32 %v9182, %v9192
      %v9219 = vadd.f32 %v9183, %v9192
      %v9220 = vadd.f32 %v9184, %v9192
      %v9221 = vadd.f32 %v9185, %v9192
      %v9222 = vadd.f32 %v9186, %v9192
      %v9223 = vadd.f32 %v9187, %v9192
      %v9224 = vadd.f32 %v9188, %v9192
      %v9225 = vadd.f32 %v9189, %v9192
      %v9226 = vld [vmem:[%s1595] sm:$0xf]
      %v9227 = vld [vmem:[%s1595 + $0x4] sm:$0xf]
      %v9228 = vld [vmem:[%s1595 + $0x8] sm:$0x1]
      %v9229 = vld [vmem:[%s1595 + $0xc] sm:$0xf]
      %v9230 = vld [vmem:[%s1595 + $0x10] sm:$0xf]
      %v9231 = vld [vmem:[%s1595 + $0x14] sm:$0x1]
      %v9232 = vld [vmem:[%s1595 + $0x18] sm:$0xf]
      %v9233 = vld [vmem:[%s1595 + $0x1c] sm:$0xf]
      %v9234 = vld [vmem:[%s1595 + $0x20] sm:$0x1]
      %v9235 = vld [vmem:[%s1595 + $0x24] sm:$0xf]
      %v9236 = vld [vmem:[%s1595 + $0x28] sm:$0xf]
      %v9237 = vld [vmem:[%s1595 + $0x2c] sm:$0x1]
      %v9238 = vld [vmem:[%s1595 + $0x30] sm:$0xf]
      %v9239 = vld [vmem:[%s1595 + $0x34] sm:$0xf]
      %v9240 = vld [vmem:[%s1595 + $0x38] sm:$0x1]
      %v9241 = vld [vmem:[%s1595 + $0x3c] sm:$0xf]
      %v9242 = vld [vmem:[%s1595 + $0x40] sm:$0xf]
      %v9243 = vld [vmem:[%s1595 + $0x44] sm:$0x1]
      %v9244 = vld [vmem:[%s1595 + $0x48] sm:$0xf]
      %v9245 = vld [vmem:[%s1595 + $0x4c] sm:$0xf]
      %v9246 = vld [vmem:[%s1595 + $0x50] sm:$0x1]
      %v9247 = vld [vmem:[%s1595 + $0x54] sm:$0xf]
      %v9248 = vld [vmem:[%s1595 + $0x58] sm:$0xf]
      %v9249 = vld [vmem:[%s1595 + $0x5c] sm:$0x1]
      %v9250 = vld [vmem:[%s1595 + $0x60] sm:$0xf]
      %v9251 = vld [vmem:[%s1595 + $0x64] sm:$0xf]
      %v9252 = vld [vmem:[%s1595 + $0x68] sm:$0x1]
      %v9253 = vld [vmem:[%s1595 + $0x6c] sm:$0xf]
      %v9254 = vld [vmem:[%s1595 + $0x70] sm:$0xf]
      %v9255 = vld [vmem:[%s1595 + $0x74] sm:$0x1]
      %v9256 = vld [vmem:[%s1595 + $0x78] sm:$0xf]
      %v9257 = vld [vmem:[%s1595 + $0x7c] sm:$0xf]
      %v9258 = vld [vmem:[%s1595 + $0x80] sm:$0x1]
      %v9259 = vld [vmem:[%s1595 + $0x84] sm:$0xf]
      %v9260 = vld [vmem:[%s1595 + $0x88] sm:$0xf]
      %v9261 = vld [vmem:[%s1595 + $0x8c] sm:$0x1]
      %v9262 = vld [vmem:[%s1595 + $0x90] sm:$0xf]
      %v9263 = vld [vmem:[%s1595 + $0x94] sm:$0xf]
      %v9264 = vld [vmem:[%s1595 + $0x98] sm:$0x1]
      %v9265 = vld [vmem:[%s1595 + $0x9c] sm:$0xf]
      %v9266 = vld [vmem:[%s1595 + $0xa0] sm:$0xf]
      %v9267 = vld [vmem:[%s1595 + $0xa4] sm:$0x1]
      %v9268 = vld [vmem:[%s1595 + $0xa8] sm:$0xf]
      %v9269 = vld [vmem:[%s1595 + $0xac] sm:$0xf]
      %v9270 = vld [vmem:[%s1595 + $0xb0] sm:$0x1]
      %v9271 = vld [vmem:[%s1595 + $0xb4] sm:$0xf]
      %v9272 = vld [vmem:[%s1595 + $0xb8] sm:$0xf]
      %v9273 = vld [vmem:[%s1595 + $0xbc] sm:$0x1]
      %v9275 = vshrl.u32 %v9226, 16
      %v9277 = vrot.slane %v9275, 4
      %v9278 = vshll.u32 %v9226, 16
      %v9280 = vrot.slane %v9278, 5
      %v9281 = vor.u32 %v9277, %v9280
      %v9282 = vrot.slane %v9281, 4
      %v9284 = vshll.u32 %v9227, 16
      %v9286 = vrot.slane %v9284, 5
      %v9287 = vsel %vm346, %v9282, %v9286
      %v9288 = vshrl.u32 %v9227, 16
      %v9290 = vrot.slane %v9288, 4
      %v9291 = vor.u32 %v9290, %v9286
      %v9292 = vrot.slane %v9291, 4
      %v9294 = vshll.u32 %v9228, 16
      %v9296 = vrot.slane %v9294, 5
      %v9297 = vsel %vm346, %v9292, %v9296
      %v9299 = vshrl.u32 %v9229, 16
      %v9301 = vrot.slane %v9299, 4
      %v9302 = vshll.u32 %v9229, 16
      %v9304 = vrot.slane %v9302, 5
      %v9305 = vor.u32 %v9301, %v9304
      %v9306 = vrot.slane %v9305, 4
      %v9308 = vshll.u32 %v9230, 16
      %v9310 = vrot.slane %v9308, 5
      %v9311 = vsel %vm346, %v9306, %v9310
      %v9312 = vshrl.u32 %v9230, 16
      %v9314 = vrot.slane %v9312, 4
      %v9315 = vor.u32 %v9314, %v9310
      %v9316 = vrot.slane %v9315, 4
      %v9318 = vshll.u32 %v9231, 16
      %v9320 = vrot.slane %v9318, 5
      %v9321 = vsel %vm346, %v9316, %v9320
      %v9323 = vshrl.u32 %v9232, 16
      %v9325 = vrot.slane %v9323, 4
      %v9326 = vshll.u32 %v9232, 16
      %v9328 = vrot.slane %v9326, 5
      %v9329 = vor.u32 %v9325, %v9328
      %v9330 = vrot.slane %v9329, 4
      %v9332 = vshll.u32 %v9233, 16
      %v9334 = vrot.slane %v9332, 5
      %v9335 = vsel %vm346, %v9330, %v9334
      %v9336 = vshrl.u32 %v9233, 16
      %v9338 = vrot.slane %v9336, 4
      %v9339 = vor.u32 %v9338, %v9334
      %v9340 = vrot.slane %v9339, 4
      %v9342 = vshll.u32 %v9234, 16
      %v9344 = vrot.slane %v9342, 5
      %v9345 = vsel %vm346, %v9340, %v9344
      %v9347 = vshrl.u32 %v9235, 16
      %v9349 = vrot.slane %v9347, 4
      %v9350 = vshll.u32 %v9235, 16
      %v9352 = vrot.slane %v9350, 5
      %v9353 = vor.u32 %v9349, %v9352
      %v9354 = vrot.slane %v9353, 4
      %v9356 = vshll.u32 %v9236, 16
      %v9358 = vrot.slane %v9356, 5
      %v9359 = vsel %vm346, %v9354, %v9358
      %v9360 = vshrl.u32 %v9236, 16
      %v9362 = vrot.slane %v9360, 4
      %v9363 = vor.u32 %v9362, %v9358
      %v9364 = vrot.slane %v9363, 4
      %v9366 = vshll.u32 %v9237, 16
      %v9368 = vrot.slane %v9366, 5
      %v9369 = vsel %vm346, %v9364, %v9368
      %v9371 = vshrl.u32 %v9238, 16
      %v9373 = vrot.slane %v9371, 4
      %v9374 = vshll.u32 %v9238, 16
      %v9376 = vrot.slane %v9374, 5
      %v9377 = vor.u32 %v9373, %v9376
      %v9378 = vrot.slane %v9377, 4
      %v9380 = vshll.u32 %v9239, 16
      %v9382 = vrot.slane %v9380, 5
      %v9383 = vsel %vm346, %v9378, %v9382
      %v9384 = vshrl.u32 %v9239, 16
      %v9386 = vrot.slane %v9384, 4
      %v9387 = vor.u32 %v9386, %v9382
      %v9388 = vrot.slane %v9387, 4
      %v9390 = vshll.u32 %v9240, 16
      %v9392 = vrot.slane %v9390, 5
      %v9393 = vsel %vm346, %v9388, %v9392
      %v9395 = vshrl.u32 %v9241, 16
      %v9397 = vrot.slane %v9395, 4
      %v9398 = vshll.u32 %v9241, 16
      %v9400 = vrot.slane %v9398, 5
      %v9401 = vor.u32 %v9397, %v9400
      %v9402 = vrot.slane %v9401, 4
      %v9404 = vshll.u32 %v9242, 16
      %v9406 = vrot.slane %v9404, 5
      %v9407 = vsel %vm346, %v9402, %v9406
      %v9408 = vshrl.u32 %v9242, 16
      %v9410 = vrot.slane %v9408, 4
      %v9411 = vor.u32 %v9410, %v9406
      %v9412 = vrot.slane %v9411, 4
      %v9414 = vshll.u32 %v9243, 16
      %v9416 = vrot.slane %v9414, 5
      %v9417 = vsel %vm346, %v9412, %v9416
      %v9419 = vshrl.u32 %v9244, 16
      %v9421 = vrot.slane %v9419, 4
      %v9422 = vshll.u32 %v9244, 16
      %v9424 = vrot.slane %v9422, 5
      %v9425 = vor.u32 %v9421, %v9424
      %v9426 = vrot.slane %v9425, 4
      %v9428 = vshll.u32 %v9245, 16
      %v9430 = vrot.slane %v9428, 5
      %v9431 = vsel %vm346, %v9426, %v9430
      %v9432 = vshrl.u32 %v9245, 16
      %v9434 = vrot.slane %v9432, 4
      %v9435 = vor.u32 %v9434, %v9430
      %v9436 = vrot.slane %v9435, 4
      %v9438 = vshll.u32 %v9246, 16
      %v9440 = vrot.slane %v9438, 5
      %v9441 = vsel %vm346, %v9436, %v9440
      %v9443 = vshrl.u32 %v9247, 16
      %v9445 = vrot.slane %v9443, 4
      %v9446 = vshll.u32 %v9247, 16
      %v9448 = vrot.slane %v9446, 5
      %v9449 = vor.u32 %v9445, %v9448
      %v9450 = vrot.slane %v9449, 4
      %v9452 = vshll.u32 %v9248, 16
      %v9454 = vrot.slane %v9452, 5
      %v9455 = vsel %vm346, %v9450, %v9454
      %v9456 = vshrl.u32 %v9248, 16
      %v9458 = vrot.slane %v9456, 4
      %v9459 = vor.u32 %v9458, %v9454
      %v9460 = vrot.slane %v9459, 4
      %v9462 = vshll.u32 %v9249, 16
      %v9464 = vrot.slane %v9462, 5
      %v9465 = vsel %vm346, %v9460, %v9464
      %v9467 = vshrl.u32 %v9250, 16
      %v9469 = vrot.slane %v9467, 4
      %v9470 = vshll.u32 %v9250, 16
      %v9472 = vrot.slane %v9470, 5
      %v9473 = vor.u32 %v9469, %v9472
      %v9474 = vrot.slane %v9473, 4
      %v9476 = vshll.u32 %v9251, 16
      %v9478 = vrot.slane %v9476, 5
      %v9479 = vsel %vm346, %v9474, %v9478
      %v9480 = vshrl.u32 %v9251, 16
      %v9482 = vrot.slane %v9480, 4
      %v9483 = vor.u32 %v9482, %v9478
      %v9484 = vrot.slane %v9483, 4
      %v9486 = vshll.u32 %v9252, 16
      %v9488 = vrot.slane %v9486, 5
      %v9489 = vsel %vm346, %v9484, %v9488
      %v9491 = vshrl.u32 %v9253, 16
      %v9493 = vrot.slane %v9491, 4
      %v9494 = vshll.u32 %v9253, 16
      %v9496 = vrot.slane %v9494, 5
      %v9497 = vor.u32 %v9493, %v9496
      %v9498 = vrot.slane %v9497, 4
      %v9500 = vshll.u32 %v9254, 16
      %v9502 = vrot.slane %v9500, 5
      %v9503 = vsel %vm346, %v9498, %v9502
      %v9504 = vshrl.u32 %v9254, 16
      %v9506 = vrot.slane %v9504, 4
      %v9507 = vor.u32 %v9506, %v9502
      %v9508 = vrot.slane %v9507, 4
      %v9510 = vshll.u32 %v9255, 16
      %v9512 = vrot.slane %v9510, 5
      %v9513 = vsel %vm346, %v9508, %v9512
      %v9515 = vshrl.u32 %v9256, 16
      %v9517 = vrot.slane %v9515, 4
      %v9518 = vshll.u32 %v9256, 16
      %v9520 = vrot.slane %v9518, 5
      %v9521 = vor.u32 %v9517, %v9520
      %v9522 = vrot.slane %v9521, 4
      %v9524 = vshll.u32 %v9257, 16
      %v9526 = vrot.slane %v9524, 5
      %v9527 = vsel %vm346, %v9522, %v9526
      %v9528 = vshrl.u32 %v9257, 16
      %v9530 = vrot.slane %v9528, 4
      %v9531 = vor.u32 %v9530, %v9526
      %v9532 = vrot.slane %v9531, 4
      %v9534 = vshll.u32 %v9258, 16
      %v9536 = vrot.slane %v9534, 5
      %v9537 = vsel %vm346, %v9532, %v9536
      %v9539 = vshrl.u32 %v9259, 16
      %v9541 = vrot.slane %v9539, 4
      %v9542 = vshll.u32 %v9259, 16
      %v9544 = vrot.slane %v9542, 5
      %v9545 = vor.u32 %v9541, %v9544
      %v9546 = vrot.slane %v9545, 4
      %v9548 = vshll.u32 %v9260, 16
      %v9550 = vrot.slane %v9548, 5
      %v9551 = vsel %vm346, %v9546, %v9550
      %v9552 = vshrl.u32 %v9260, 16
      %v9554 = vrot.slane %v9552, 4
      %v9555 = vor.u32 %v9554, %v9550
      %v9556 = vrot.slane %v9555, 4
      %v9558 = vshll.u32 %v9261, 16
      %v9560 = vrot.slane %v9558, 5
      %v9561 = vsel %vm346, %v9556, %v9560
      %v9563 = vshrl.u32 %v9262, 16
      %v9565 = vrot.slane %v9563, 4
      %v9566 = vshll.u32 %v9262, 16
      %v9568 = vrot.slane %v9566, 5
      %v9569 = vor.u32 %v9565, %v9568
      %v9570 = vrot.slane %v9569, 4
      %v9572 = vshll.u32 %v9263, 16
      %v9574 = vrot.slane %v9572, 5
      %v9575 = vsel %vm346, %v9570, %v9574
      %v9576 = vshrl.u32 %v9263, 16
      %v9578 = vrot.slane %v9576, 4
      %v9579 = vor.u32 %v9578, %v9574
      %v9580 = vrot.slane %v9579, 4
      %v9582 = vshll.u32 %v9264, 16
      %v9584 = vrot.slane %v9582, 5
      %v9585 = vsel %vm346, %v9580, %v9584
      %v9587 = vshrl.u32 %v9265, 16
      %v9589 = vrot.slane %v9587, 4
      %v9590 = vshll.u32 %v9265, 16
      %v9592 = vrot.slane %v9590, 5
      %v9593 = vor.u32 %v9589, %v9592
      %v9594 = vrot.slane %v9593, 4
      %v9596 = vshll.u32 %v9266, 16
      %v9598 = vrot.slane %v9596, 5
      %v9599 = vsel %vm346, %v9594, %v9598
      %v9600 = vshrl.u32 %v9266, 16
      %v9602 = vrot.slane %v9600, 4
      %v9603 = vor.u32 %v9602, %v9598
      %v9604 = vrot.slane %v9603, 4
      %v9606 = vshll.u32 %v9267, 16
      %v9608 = vrot.slane %v9606, 5
      %v9609 = vsel %vm346, %v9604, %v9608
      %v9611 = vshrl.u32 %v9268, 16
      %v9613 = vrot.slane %v9611, 4
      %v9614 = vshll.u32 %v9268, 16
      %v9616 = vrot.slane %v9614, 5
      %v9617 = vor.u32 %v9613, %v9616
      %v9618 = vrot.slane %v9617, 4
      %v9620 = vshll.u32 %v9269, 16
      %v9622 = vrot.slane %v9620, 5
      %v9623 = vsel %vm346, %v9618, %v9622
      %v9624 = vshrl.u32 %v9269, 16
      %v9626 = vrot.slane %v9624, 4
      %v9627 = vor.u32 %v9626, %v9622
      %v9628 = vrot.slane %v9627, 4
      %v9630 = vshll.u32 %v9270, 16
      %v9632 = vrot.slane %v9630, 5
      %v9633 = vsel %vm346, %v9628, %v9632
      %v9635 = vshrl.u32 %v9271, 16
      %v9637 = vrot.slane %v9635, 4
      %v9638 = vshll.u32 %v9271, 16
      %v9640 = vrot.slane %v9638, 5
      %v9641 = vor.u32 %v9637, %v9640
      %v9642 = vrot.slane %v9641, 4
      %v9644 = vshll.u32 %v9272, 16
      %v9646 = vrot.slane %v9644, 5
      %v9647 = vsel %vm346, %v9642, %v9646
      %v9648 = vshrl.u32 %v9272, 16
      %v9650 = vrot.slane %v9648, 4
      %v9651 = vor.u32 %v9650, %v9646
      %v9652 = vrot.slane %v9651, 4
      %v9654 = vshll.u32 %v9273, 16
      %v9656 = vrot.slane %v9654, 5
      %v9657 = vsel %vm346, %v9652, %v9656
      %v9658 = vld [vmem:[%s5] sm:$0xf]
      %v9659 = vld [vmem:[%s5 + $0x4] sm:$0xf]
      %v9660 = vld [vmem:[%s5 + $0x8] sm:$0xf]
      %v9661 = vld [vmem:[%s5 + $0xc] sm:$0xf]
      %v9662 = vld [vmem:[%s5 + $0x10] sm:$0xf]
      %v9663 = vld [vmem:[%s5 + $0x14] sm:$0xf]
      %v9664 = vld [vmem:[%s5 + $0x18] sm:$0xf]
      %v9665 = vld [vmem:[%s5 + $0x1c] sm:$0xf]
      %v9666 = vld [vmem:[%s5 + $0x20] sm:$0xf]
      %v9667 = vld [vmem:[%s5 + $0x24] sm:$0xf]
      %v9668 = vld [vmem:[%s5 + $0x28] sm:$0xf]
      %v9669 = vld [vmem:[%s5 + $0x2c] sm:$0xf]
      %v9670 = vld [vmem:[%s5 + $0x30] sm:$0xf]
      %v9671 = vld [vmem:[%s5 + $0x34] sm:$0xf]
      %v9672 = vld [vmem:[%s5 + $0x38] sm:$0xf]
      %v9673 = vld [vmem:[%s5 + $0x3c] sm:$0xf]
      %v9674 = vld [vmem:[%s6] sm:$0x1]
      %v9676 = vperm.slane %v9674, 0
      %v9678 = vunpack.c.l.b16 %v9287
      %v9679 = vunpack.c.l.b16 %v9297
      %v9680 = vunpack.c.l.b16 %v9311
      %v9681 = vunpack.c.l.b16 %v9321
      %v9682 = vunpack.c.l.b16 %v9335
      %v9683 = vunpack.c.l.b16 %v9345
      %v9684 = vunpack.c.l.b16 %v9359
      %v9685 = vunpack.c.l.b16 %v9369
      %v9686 = vunpack.c.l.b16 %v9383
      %v9687 = vunpack.c.l.b16 %v9393
      %v9688 = vunpack.c.l.b16 %v9407
      %v9689 = vunpack.c.l.b16 %v9417
      %v9690 = vunpack.c.l.b16 %v9431
      %v9691 = vunpack.c.l.b16 %v9441
      %v9692 = vunpack.c.l.b16 %v9455
      %v9693 = vunpack.c.l.b16 %v9465
      %v9694 = vunpack.c.l.b16 %v9479
      %v9695 = vunpack.c.l.b16 %v9489
      %v9696 = vunpack.c.l.b16 %v9503
      %v9697 = vunpack.c.l.b16 %v9513
      %v9698 = vunpack.c.l.b16 %v9527
      %v9699 = vunpack.c.l.b16 %v9537
      %v9700 = vunpack.c.l.b16 %v9551
      %v9701 = vunpack.c.l.b16 %v9561
      %v9702 = vunpack.c.l.b16 %v9575
      %v9703 = vunpack.c.l.b16 %v9585
      %v9704 = vunpack.c.l.b16 %v9599
      %v9705 = vunpack.c.l.b16 %v9609
      %v9706 = vunpack.c.l.b16 %v9623
      %v9707 = vunpack.c.l.b16 %v9633
      %v9708 = vunpack.c.l.b16 %v9647
      %v9709 = vunpack.c.l.b16 %v9657
      %v9710 = vpack.c.b16 %v9679, %v9678
      %v9711 = vpack.c.b16 %v9681, %v9680
      %v9712 = vpack.c.b16 %v9683, %v9682
      %v9713 = vpack.c.b16 %v9685, %v9684
      %v9714 = vpack.c.b16 %v9687, %v9686
      %v9715 = vpack.c.b16 %v9689, %v9688
      %v9716 = vpack.c.b16 %v9691, %v9690
      %v9717 = vpack.c.b16 %v9693, %v9692
      %v9718 = vpack.c.b16 %v9695, %v9694
      %v9719 = vpack.c.b16 %v9697, %v9696
      %v9720 = vpack.c.b16 %v9699, %v9698
      %v9721 = vpack.c.b16 %v9701, %v9700
      %v9722 = vpack.c.b16 %v9703, %v9702
      %v9723 = vpack.c.b16 %v9705, %v9704
      %v9724 = vpack.c.b16 %v9707, %v9706
      %v9725 = vpack.c.b16 %v9709, %v9708
      %v9758 = vunpack.c.l.b16 %v9658
      %v9759 = vunpack.c.l.b16 %v9659
      %v9760 = vunpack.c.l.b16 %v9660
      %v9761 = vunpack.c.l.b16 %v9661
      %v9762 = vunpack.c.l.b16 %v9662
      %v9763 = vunpack.c.l.b16 %v9663
      %v9764 = vunpack.c.l.b16 %v9664
      %v9765 = vunpack.c.l.b16 %v9665
      %v9766 = vunpack.c.l.b16 %v9666
      %v9767 = vunpack.c.l.b16 %v9667
      %v9768 = vunpack.c.l.b16 %v9668
      %v9769 = vunpack.c.l.b16 %v9669
      %v9770 = vunpack.c.l.b16 %v9670
      %v9771 = vunpack.c.l.b16 %v9671
      %v9772 = vunpack.c.l.b16 %v9672
      %v9773 = vunpack.c.l.b16 %v9673
      %v9774 = vpack.c.b16 %v9759, %v9758
      %v9775 = vpack.c.b16 %v9761, %v9760
      %v9776 = vpack.c.b16 %v9763, %v9762
      %v9777 = vpack.c.b16 %v9765, %v9764
      %v9778 = vpack.c.b16 %v9767, %v9766
      %v9779 = vpack.c.b16 %v9769, %v9768
      %v9780 = vpack.c.b16 %v9771, %v9770
      %v9781 = vpack.c.b16 %v9773, %v9772
      %9790 = vmatpush.bf16.msra.mxu0 %v9781
      %9791 = vmatpush.bf16.msra.mxu0 %v9780
      %9792 = vmatpush.bf16.msra.mxu0 %v9779
      %9793 = vmatpush.bf16.msra.mxu0 %v9778
      %9794 = vmatpush.bf16.msra.mxu0 %v9777
      %9795 = vmatpush.bf16.msra.mxu0 %v9776
      %9796 = vmatpush.bf16.msra.mxu0 %v9775
      %9797 = vmatpush.bf16.msra.mxu0 %v9774
      %9798 = vmatmul.bf16.gmra.mxu0 %v9710
      %v9799 = vpop.f32.mrf.mxu0
      %v9800 = vadd.f32 %v9676, %v9799
      %v9801 = vpop.f32.mrf.mxu0
      %v9802 = vadd.f32 %v9676, %v9801
      %9803 = vmatmul.bf16.gmra.mxu0 %v9711
      %v9804 = vpop.f32.mrf.mxu0
      %v9805 = vadd.f32 %v9676, %v9804
      %v9806 = vpop.f32.mrf.mxu0
      %v9807 = vadd.f32 %v9676, %v9806
      %9808 = vmatmul.bf16.gmra.mxu0 %v9712
      %v9809 = vpop.f32.mrf.mxu0
      %v9810 = vadd.f32 %v9676, %v9809
      %v9811 = vpop.f32.mrf.mxu0
      %v9812 = vadd.f32 %v9676, %v9811
      %9813 = vmatmul.bf16.gmra.mxu0 %v9713
      %v9814 = vpop.f32.mrf.mxu0
      %v9815 = vadd.f32 %v9676, %v9814
      %v9816 = vpop.f32.mrf.mxu0
      %v9817 = vadd.f32 %v9676, %v9816
      %9818 = vmatmul.bf16.gmra.mxu0 %v9714
      %v9819 = vpop.f32.mrf.mxu0
      %v9820 = vadd.f32 %v9676, %v9819
      %v9821 = vpop.f32.mrf.mxu0
      %v9822 = vadd.f32 %v9676, %v9821
      %9823 = vmatmul.bf16.gmra.mxu0 %v9715
      %v9824 = vpop.f32.mrf.mxu0
      %v9825 = vadd.f32 %v9676, %v9824
      %v9826 = vpop.f32.mrf.mxu0
      %v9827 = vadd.f32 %v9676, %v9826
      %9828 = vmatmul.bf16.gmra.mxu0 %v9716
      %v9829 = vpop.f32.mrf.mxu0
      %v9830 = vadd.f32 %v9676, %v9829
      %v9831 = vpop.f32.mrf.mxu0
      %v9832 = vadd.f32 %v9676, %v9831
      %9833 = vmatmul.bf16.gmra.mxu0 %v9717
      %v9834 = vpop.f32.mrf.mxu0
      %v9835 = vadd.f32 %v9676, %v9834
      %v9836 = vpop.f32.mrf.mxu0
      %v9837 = vadd.f32 %v9676, %v9836
      %9838 = vmatmul.bf16.gmra.mxu0 %v9718
      %v9839 = vpop.f32.mrf.mxu0
      %v9840 = vadd.f32 %v9676, %v9839
      %v9841 = vpop.f32.mrf.mxu0
      %v9842 = vadd.f32 %v9676, %v9841
      %9843 = vmatmul.bf16.gmra.mxu0 %v9719
      %v9844 = vpop.f32.mrf.mxu0
      %v9845 = vadd.f32 %v9676, %v9844
      %v9846 = vpop.f32.mrf.mxu0
      %v9847 = vadd.f32 %v9676, %v9846
      %9848 = vmatmul.bf16.gmra.mxu0 %v9720
      %v9849 = vpop.f32.mrf.mxu0
      %v9850 = vadd.f32 %v9676, %v9849
      %v9851 = vpop.f32.mrf.mxu0
      %v9852 = vadd.f32 %v9676, %v9851
      %9853 = vmatmul.bf16.gmra.mxu0 %v9721
      %v9854 = vpop.f32.mrf.mxu0
      %v9855 = vadd.f32 %v9676, %v9854
      %v9856 = vpop.f32.mrf.mxu0
      %v9857 = vadd.f32 %v9676, %v9856
      %9858 = vmatmul.bf16.gmra.mxu0 %v9722
      %v9859 = vpop.f32.mrf.mxu0
      %v9860 = vadd.f32 %v9676, %v9859
      %v9861 = vpop.f32.mrf.mxu0
      %v9862 = vadd.f32 %v9676, %v9861
      %9863 = vmatmul.bf16.gmra.mxu0 %v9723
      %v9864 = vpop.f32.mrf.mxu0
      %v9865 = vadd.f32 %v9676, %v9864
      %v9866 = vpop.f32.mrf.mxu0
      %v9867 = vadd.f32 %v9676, %v9866
      %9868 = vmatmul.bf16.gmra.mxu0 %v9724
      %v9869 = vpop.f32.mrf.mxu0
      %v9870 = vadd.f32 %v9676, %v9869
      %v9871 = vpop.f32.mrf.mxu0
      %v9872 = vadd.f32 %v9676, %v9871
      %9873 = vmatmul.bf16.gmra.mxu0 %v9725
      %v9874 = vpop.f32.mrf.mxu0
      %v9875 = vadd.f32 %v9676, %v9874
      %v9876 = vpop.f32.mrf.mxu0
      %v9877 = vadd.f32 %v9676, %v9876
      %9878 = vdwg.mxu0
      %v9879 = vadd.f32 %v9194, %v9800
      %v9880 = vadd.f32 %v9195, %v9802
      %v9881 = vadd.f32 %v9196, %v9805
      %v9882 = vadd.f32 %v9197, %v9807
      %v9883 = vadd.f32 %v9198, %v9810
      %v9884 = vadd.f32 %v9199, %v9812
      %v9885 = vadd.f32 %v9200, %v9815
      %v9886 = vadd.f32 %v9201, %v9817
      %v9887 = vadd.f32 %v9202, %v9820
      %v9888 = vadd.f32 %v9203, %v9822
      %v9889 = vadd.f32 %v9204, %v9825
      %v9890 = vadd.f32 %v9205, %v9827
      %v9891 = vadd.f32 %v9206, %v9830
      %v9892 = vadd.f32 %v9207, %v9832
      %v9893 = vadd.f32 %v9208, %v9835
      %v9894 = vadd.f32 %v9209, %v9837
      %v9895 = vadd.f32 %v9210, %v9840
      %v9896 = vadd.f32 %v9211, %v9842
      %v9897 = vadd.f32 %v9212, %v9845
      %v9898 = vadd.f32 %v9213, %v9847
      %v9899 = vadd.f32 %v9214, %v9850
      %v9900 = vadd.f32 %v9215, %v9852
      %v9901 = vadd.f32 %v9216, %v9855
      %v9902 = vadd.f32 %v9217, %v9857
      %v9903 = vadd.f32 %v9218, %v9860
      %v9904 = vadd.f32 %v9219, %v9862
      %v9905 = vadd.f32 %v9220, %v9865
      %v9906 = vadd.f32 %v9221, %v9867
      %v9907 = vadd.f32 %v9222, %v9870
      %v9908 = vadd.f32 %v9223, %v9872
      %v9909 = vadd.f32 %v9224, %v9875
      %v9910 = vadd.f32 %v9225, %v9877
      %v9911 = vmax.f32 %v9879, 0.0
      %v9912 = vmax.f32 %v9880, 0.0
      %v9913 = vmax.f32 %v9881, 0.0
      %v9914 = vmax.f32 %v9882, 0.0
      %v9915 = vmax.f32 %v9883, 0.0
      %v9916 = vmax.f32 %v9884, 0.0
      %v9917 = vmax.f32 %v9885, 0.0
      %v9918 = vmax.f32 %v9886, 0.0
      %v9919 = vmax.f32 %v9887, 0.0
      %v9920 = vmax.f32 %v9888, 0.0
      %v9921 = vmax.f32 %v9889, 0.0
      %v9922 = vmax.f32 %v9890, 0.0
      %v9923 = vmax.f32 %v9891, 0.0
      %v9924 = vmax.f32 %v9892, 0.0
      %v9925 = vmax.f32 %v9893, 0.0
      %v9926 = vmax.f32 %v9894, 0.0
      %v9927 = vmax.f32 %v9895, 0.0
      %v9928 = vmax.f32 %v9896, 0.0
      %v9929 = vmax.f32 %v9897, 0.0
      %v9930 = vmax.f32 %v9898, 0.0
      %v9931 = vmax.f32 %v9899, 0.0
      %v9932 = vmax.f32 %v9900, 0.0
      %v9933 = vmax.f32 %v9901, 0.0
      %v9934 = vmax.f32 %v9902, 0.0
      %v9935 = vmax.f32 %v9903, 0.0
      %v9936 = vmax.f32 %v9904, 0.0
      %v9937 = vmax.f32 %v9905, 0.0
      %v9938 = vmax.f32 %v9906, 0.0
      %v9939 = vmax.f32 %v9907, 0.0
      %v9940 = vmax.f32 %v9908, 0.0
      %v9941 = vmax.f32 %v9909, 0.0
      %v9942 = vmax.f32 %v9910, 0.0
      %9943 = vst [vmem:[%s278] sm:$0xff] %v9911
      %9944 = vst [vmem:[%s278 + $0x8] sm:$0xff] %v9912
      %9945 = vst [vmem:[%s278 + $0x10] sm:$0xff] %v9913
      %9946 = vst [vmem:[%s278 + $0x18] sm:$0xff] %v9914
      %9947 = vst [vmem:[%s278 + $0x20] sm:$0xff] %v9915
      %9948 = vst [vmem:[%s278 + $0x28] sm:$0xff] %v9916
      %9949 = vst [vmem:[%s278 + $0x30] sm:$0xff] %v9917
      %9950 = vst [vmem:[%s278 + $0x38] sm:$0xff] %v9918
      %9951 = vst [vmem:[%s278 + $0x40] sm:$0xff] %v9919
      %9952 = vst [vmem:[%s278 + $0x48] sm:$0xff] %v9920
      %9953 = vst [vmem:[%s278 + $0x50] sm:$0xff] %v9921
      %9954 = vst [vmem:[%s278 + $0x58] sm:$0xff] %v9922
      %9955 = vst [vmem:[%s278 + $0x60] sm:$0xff] %v9923
      %9956 = vst [vmem:[%s278 + $0x68] sm:$0xff] %v9924
      %9957 = vst [vmem:[%s278 + $0x70] sm:$0xff] %v9925
      %9958 = vst [vmem:[%s278 + $0x78] sm:$0xff] %v9926
      %9959 = vst [vmem:[%s278 + $0x80] sm:$0xff] %v9927
      %9960 = vst [vmem:[%s278 + $0x88] sm:$0xff] %v9928
      %9961 = vst [vmem:[%s278 + $0x90] sm:$0xff] %v9929
      %9962 = vst [vmem:[%s278 + $0x98] sm:$0xff] %v9930
      %9963 = vst [vmem:[%s278 + $0xa0] sm:$0xff] %v9931
      %9964 = vst [vmem:[%s278 + $0xa8] sm:$0xff] %v9932
      %9965 = vst [vmem:[%s278 + $0xb0] sm:$0xff] %v9933
      %9966 = vst [vmem:[%s278 + $0xb8] sm:$0xff] %v9934
      %9967 = vst [vmem:[%s278 + $0xc0] sm:$0xff] %v9935
      %9968 = vst [vmem:[%s278 + $0xc8] sm:$0xff] %v9936
      %9969 = vst [vmem:[%s278 + $0xd0] sm:$0xff] %v9937
      %9970 = vst [vmem:[%s278 + $0xd8] sm:$0xff] %v9938
      %9971 = vst [vmem:[%s278 + $0xe0] sm:$0xff] %v9939
      %9972 = vst [vmem:[%s278 + $0xe8] sm:$0xff] %v9940
      %9973 = vst [vmem:[%s278 + $0xf0] sm:$0xff] %v9941
      %9974 = vst [vmem:[%s278 + $0xf8] sm:$0xff] %v9942
      %p9975 = scmp.lt.s32.totalorder %s18, 1
      %s9976 = scalar_select %p9975, %s18, 1
      %s9977 = smul.addr %s9976, 32
      %s9978 = smul.addr %s9977, 8
      %s9979 = scalar_lea.vmem %s7, %s9978
      // Predicated region
      $region49: #{basic_block_forward.1} parent=47 // pred_check
        %p9980 = pneg %p188
      $region50: #{basic_block_forward.1} parent=47 // pred_check_branch
        %9982 = sbr.rel (%p9980) target = $region52
      $region51: #{basic_block_forward.1} parent=47 // pred_region
        _
      $region52: #{basic_block_forward.1} parent=47 // pred_fallthru
        _
    $region48: #{basic_block_forward.1} parent=5 // pred_fallthru
      _
    %p9983 = scmp.le.s32.totalorder 2, %s13
    // Predicated region
    $region53: #{basic_block_forward.1} parent=5 // pred_check
      %p9984 = pneg %p9983
    $region54: #{basic_block_forward.1} parent=5 // pred_check_branch
      %9986 = sbr.rel (%p9984) target = $region56
    $region55: #{basic_block_forward.1} parent=5 // pred_region
      %s9987 = ssub.s32 %s13, 2
      // Predicated region
      $region57: #{basic_block_forward.1} parent=55 // pred_check
        %p9988 = pneg %p194
      $region58: #{basic_block_forward.1} parent=55 // pred_check_branch
        %9990 = sbr.rel (%p9988) target = $region60
      $region59: #{basic_block_forward.1} parent=55 // pred_region
        %p9991 = scmp.lt.s32.totalorder %s19, 1
        %s9992 = scalar_select %p9991, %s19, 1
        %s9993 = smul.addr %s9992, 32
        %s9994 = smul.addr %s9993, 8
        %s9995 = scalar_lea.vmem %s7, %s9994
      $region60: #{basic_block_forward.1} parent=55 // pred_fallthru
        _
    $region56: #{basic_block_forward.1} parent=5 // pred_fallthru
      _
  $region6: #{basic_block_forward.1} parent=0 // loop_footer
    %s17 = sadd.s32 1, %s13
  $region7: #{basic_block_forward.1} parent=0 // loop_footer_branch
    %12 = sbr.rel target = $region3
  $region8: #{basic_block_forward.1} parent=0 // loop_exit
    _

</llo_original>
